<compile_context>
chip_gen: v7x
topology: tpu7x:2x2x1
jax: 0.10.0
libtpu: 0.0.40
codegen_flags: <defaults>
</compile_context>

<pallas_src>
import numpy as np
import jax
import jax.numpy as jnp
from jax.experimental import pallas as pl
from jax.experimental.pallas import tpu as pltpu

# ------------------------- model hyper-parameters -------------------------- #
L_LAYERS = 2          # transformer encoder layers
N_HEADS = 2           # attention heads
HEAD_DIM = 64         # per-head dim
HIDDEN = N_HEADS * HEAD_DIM      # 128  (lane-dense)
FFN = 256             # feed-forward inner dim
NOUT = 128            # projection dim (lane-dense output)
SEQ = 16              # sequence length
VOCAB = 512
LN_EPS = 1e-5

# Sequences per grid step.  TILE_B*SEQ = 128 rows fills v5e's 128x128 MXU and keeps
# >=2 parallel grid steps on v7x for B>=16.  (On v6e, TILE_B=16 would fill the
# 256-row MXU; 8 is the portable middle ground.)
TILE_B = 8
ROWS = TILE_B * SEQ   # 128


# ------------------------------ kernel helpers ------------------------------ #

def _ln(y, gamma, beta, eps=LN_EPS):
    """LayerNorm over the last axis, f32 math."""
    mu = jnp.mean(y, axis=-1, keepdims=True)
    d = y - mu
    var = jnp.mean(d * d, axis=-1, keepdims=True)
    return d * jax.lax.rsqrt(var + eps) * gamma + beta


def _mm(a, b):
    """a @ b with bf16 MXU operands, f32 accumulate."""
    return jnp.dot(a.astype(jnp.bfloat16), b.astype(jnp.bfloat16),
                   preferred_element_type=jnp.float32)


def _mm_nt(a, b):
    """a @ b.T (contract last dims) with bf16 MXU operands, f32 accumulate."""
    return jax.lax.dot_general(a.astype(jnp.bfloat16), b.astype(jnp.bfloat16),
                               (((1,), (1,)), ((), ())),
                               preferred_element_type=jnp.float32)


# ------------------------------- fused kernel ------------------------------- #
#
# Packed-parameter layout:
#   gp  : (8, 128)  rows = [lne_g, lne_b, b_lin, lno_g*e^t, lno_b*e^t, hm0, hm1, 0]
#   lp  : (L, 8, H) rows = [bo, b2, ln1_g, ln1_b, ln2_g, ln2_b, 0, 0]
#   wqkv: (L, H, 3H) bf16   (wq pre-scaled by 1/sqrt(head_dim))
#   bqkv: (L, 1, 3H) f32    (bq pre-scaled)

def text_encoder_kernel(emb_ref, bias_ref, gp_ref,
                        wqkv_ref, bqkv_ref, wo_ref, w1_ref, b1_ref, w2_ref,
                        lp_ref, wlin_ref, out_ref):
    """TILE_B sequences per grid step: emb-LN -> L encoder layers -> CLS head."""
    gp = gp_ref[...]                                       # (8, 128) f32
    # embedding LayerNorm (emb arrives bf16, upcast once)
    x = _ln(emb_ref[...].astype(jnp.float32), gp[0:1], gp[1:2])   # (ROWS, H) f32

    for l in range(L_LAYERS):                              # static unroll
        lp = lp_ref[l]                                     # (8, H) f32

        # --- fused q/k/v projection: (ROWS, H) @ (H, 3H), one MXU pass --------
        xb = x.astype(jnp.bfloat16)                        # hoisted cast
        qkv = jnp.dot(xb, wqkv_ref[l],
                      preferred_element_type=jnp.float32) + bqkv_ref[l]
        q = qkv[:, 0:HIDDEN]                               # already *1/sqrt(d)
        k = qkv[:, HIDDEN:2 * HIDDEN]
        v = qkv[:, 2 * HIDDEN:3 * HIDDEN]

        # --- attention: per-sequence (block-diagonal), per-head via lane masks -
        ctx_parts = []
        for t in range(TILE_B):
            r0 = t * SEQ
            qt = q[r0:r0 + SEQ, :]
            kt = k[r0:r0 + SEQ, :].astype(jnp.bfloat16)    # cast once, reused per head
            vt = v[r0:r0 + SEQ, :]
            kbias = bias_ref[t]                            # (1, SEQ) additive key mask
            ctx_t = jnp.zeros((SEQ, HIDDEN), jnp.float32)
            for h in range(N_HEADS):
                hm = gp[5 + h:6 + h]                       # (1, H) 0/1 head-lane mask
                s = jax.lax.dot_general((qt * hm).astype(jnp.bfloat16), kt,
                                        (((1,), (1,)), ((), ())),
                                        preferred_element_type=jnp.float32) + kbias
                s = s - jnp.max(s, axis=-1, keepdims=True)
                p = jnp.exp(s)
                p = p * pl.reciprocal(jnp.sum(p, axis=-1, keepdims=True), approx=True)
                ctx_t = ctx_t + _mm(p, vt * hm)            # fills only head-h lanes
            ctx_parts.append(ctx_t)
        ctx = jnp.concatenate(ctx_parts, axis=0)           # (ROWS, H)

        attn = _mm(ctx, wo_ref[l]) + lp[0:1]               # bo
        x = _ln(x + attn, lp[2:3], lp[3:4])                # residual + LN1

        # --- GELU FFN at full MXU height --------------------------------------
        xb2 = x.astype(jnp.bfloat16)
        hdn = jax.nn.gelu(jnp.dot(xb2, w1_ref[l],
                                  preferred_element_type=jnp.float32) + b1_ref[l],
                          approximate=True)
        ff = _mm(hdn, w2_ref[l]) + lp[1:2]                 # b2
        x = _ln(x + ff, lp[4:5], lp[5:6])                  # residual + LN2

    # --- CLS head: dense (TILE_B, H) gather -> (TILE_B, NOUT) dense store ------
    cls = jnp.concatenate([x[t * SEQ:t * SEQ + 1, :] for t in range(TILE_B)], axis=0)
    z = _mm(cls, wlin_ref[...]) + gp[2:3]                  # linear head (b_lin)
    out_ref[...] = _ln(z, gp[3:4], gp[4:5])                # final LN (exp(temp) folded)


# --------------------------- host-side param packing ------------------------ #

def pack_params(p):
    """Fold scale/exp(temp) and pack small per-layer params into few tensors."""
    scale = 1.0 / (HEAD_DIM ** 0.5)
    exp_t = jnp.exp(p["temp"])

    wq = (p["wq"].astype(jnp.float32) * scale).astype(jnp.bfloat16)
    bq = p["bq"] * scale
    w_qkv = jnp.concatenate([wq, p["wk"], p["wv"]], axis=2)          # (L, H, 3H) bf16
    b_qkv = jnp.concatenate([bq, p["bk"], p["bv"]], axis=2)          # (L, 1, 3H) f32

    zrow = jnp.zeros((L_LAYERS, 1, HIDDEN), jnp.float32)
    lp = jnp.concatenate([p["bo"], p["b2"], p["ln1_g"], p["ln1_b"],
                          p["ln2_g"], p["ln2_b"], zrow, zrow], axis=1)  # (L, 8, H)

    hm = np.zeros((N_HEADS, HIDDEN), np.float32)
    for h in range(N_HEADS):
        hm[h, h * HEAD_DIM:(h + 1) * HEAD_DIM] = 1.0
    gp = jnp.concatenate([p["ln_emb_g"], p["ln_emb_b"], p["b_lin"],
                          p["norm_g"] * exp_t, p["norm_b"] * exp_t,
                          jnp.asarray(hm),
                          jnp.zeros((1, HIDDEN), jnp.float32)], axis=0)  # (8, 128)

    return {
        "word_emb": p["word_emb"].astype(jnp.bfloat16),
        "pos_emb": p["pos_emb"].astype(jnp.bfloat16),
        "gp": gp, "w_qkv": w_qkv, "b_qkv": b_qkv,
        "wo": p["wo"], "w1": p["w1"], "b1": p["b1"], "w2": p["w2"],
        "lp": lp, "w_lin": p["w_lin"],
    }


# ------------------------------ forward wrapper ----------------------------- #

def _text_encoder_forward(input_ids, attention_mask, pp):
    B, S = input_ids.shape
    TB = TILE_B
    Bp = ((B + TB - 1) // TB) * TB                         # pad batch to TILE_B

    # embedding lookup (gather) stays in plain JAX under the same jit; bf16 output
    emb = (pp["word_emb"][input_ids] + pp["pos_emb"][None, :, :])     # (B,S,H) bf16
    bias = (1.0 - attention_mask.astype(jnp.float32))[:, None, :] * (-1e9)   # (B,1,S)
    if Bp != B:
        emb = jnp.pad(emb, ((0, Bp - B), (0, 0), (0, 0)))
        bias = jnp.pad(bias, ((0, Bp - B), (0, 0), (0, 0)))
    emb2 = emb.reshape(Bp * SEQ, HIDDEN)                   # lane/sublane-dense slab

    def shared(a):
        nd = a.ndim
        return pl.BlockSpec(a.shape, lambda b, nd=nd: (0,) * nd)

    in_specs = [
        pl.BlockSpec((TB * SEQ, HIDDEN), lambda b: (b, 0)),      # activations
        pl.BlockSpec((TB, 1, SEQ), lambda b: (b, 0, 0)),         # key bias
        shared(pp["gp"]), shared(pp["w_qkv"]), shared(pp["b_qkv"]),
        shared(pp["wo"]), shared(pp["w1"]), shared(pp["b1"]),
        shared(pp["w2"]), shared(pp["lp"]), shared(pp["w_lin"]),
    ]
    out_specs = pl.BlockSpec((TB, NOUT), lambda b: (b, 0))

    out = pl.pallas_call(
        text_encoder_kernel,
        out_shape=jax.ShapeDtypeStruct((Bp, NOUT), jnp.float32),
        grid=(Bp // TB,),
        in_specs=in_specs,
        out_specs=out_specs,
        compiler_params=pltpu.CompilerParams(dimension_semantics=("parallel",)),
    )(emb2, bias, pp["gp"], pp["w_qkv"], pp["b_qkv"], pp["wo"],
      pp["w1"], pp["b1"], pp["w2"], pp["lp"], pp["w_lin"])
    return out[:B]                                         # (B, NOUT)


text_encoder_forward = jax.jit(_text_encoder_forward)


# ----------------------------------- main ----------------------------------- #

if __name__ == "__main__":
    B = 16                       # 2 grid steps of 8 sequences (keeps both v7x TCs busy)
    TEMP_TEXT = 0.07

    key = jax.random.PRNGKey(0)
    ks = iter(jax.random.split(key, 64))

    def rnd(shape, scale=0.02, dtype=jnp.float32):
        return (scale * jax.random.normal(next(ks), shape, jnp.float32)).astype(dtype)

    # --- deterministic mini-BERT parameters ---
    raw = {
        "word_emb": rnd((VOCAB, HIDDEN), 0.05),
        "pos_emb": rnd((SEQ, HIDDEN), 0.05),
        "ln_emb_g": 1.0 + rnd((1, HIDDEN), 0.1),
        "ln_emb_b": rnd((1, HIDDEN), 0.1),
        "wq": rnd((L_LAYERS, HIDDEN, HIDDEN), dtype=jnp.bfloat16),
        "bq": rnd((L_LAYERS, 1, HIDDEN)),
        "wk": rnd((L_LAYERS, HIDDEN, HIDDEN), dtype=jnp.bfloat16),
        "bk": rnd((L_LAYERS, 1, HIDDEN)),
        "wv": rnd((L_LAYERS, HIDDEN, HIDDEN), dtype=jnp.bfloat16),
        "bv": rnd((L_LAYERS, 1, HIDDEN)),
        "wo": rnd((L_LAYERS, HIDDEN, HIDDEN), dtype=jnp.bfloat16),
        "bo": rnd((L_LAYERS, 1, HIDDEN)),
        "ln1_g": 1.0 + rnd((L_LAYERS, 1, HIDDEN), 0.1),
        "ln1_b": rnd((L_LAYERS, 1, HIDDEN), 0.1),
        "w1": rnd((L_LAYERS, HIDDEN, FFN), dtype=jnp.bfloat16),
        "b1": rnd((L_LAYERS, 1, FFN)),
        "w2": rnd((L_LAYERS, FFN, HIDDEN), dtype=jnp.bfloat16),
        "b2": rnd((L_LAYERS, 1, HIDDEN)),
        "ln2_g": 1.0 + rnd((L_LAYERS, 1, HIDDEN), 0.1),
        "ln2_b": rnd((L_LAYERS, 1, HIDDEN), 0.1),
        # CLS head: Linear(hidden -> nout) + LayerNorm(nout), then * exp(temp)
        "w_lin": rnd((HIDDEN, NOUT), dtype=jnp.bfloat16),
        "b_lin": rnd((1, NOUT)),
        "norm_g": 1.0 + rnd((1, NOUT), 0.1),
        "norm_b": rnd((1, NOUT), 0.1),
        "temp": jnp.full((1, 1), TEMP_TEXT, jnp.float32),
    }
    pp = pack_params(raw)

    # --- deterministic synthetic inputs ---
    input_ids = jax.random.randint(next(ks), (B, SEQ), 0, VOCAB, dtype=jnp.int32)
    input_ids = input_ids.at[:, 0].set(1)                  # CLS-like token at position 0
    attn_mask = np.ones((B, SEQ), np.int32)
    attn_mask[1, 12:] = 0                                  # one padded sequence
    attn_mask = jnp.asarray(attn_mask)

    out = text_encoder_forward(input_ids, attn_mask, pp)
    out = jax.block_until_ready(out)
    assert out.shape == (B, NOUT) and bool(jnp.all(jnp.isfinite(out)))
    print("KERNEL_OK")
</pallas_src>

<mosaic_0001>
module attributes {stable_mosaic.version = 11 : i64} {
  func.func @text_encoder_kernel(%arg0: i32, %arg1: memref<128x128xbf16, #tpu.memory_space<vmem>>, %arg2: memref<8x1x16xf32, #tpu.memory_space<vmem>>, %arg3: memref<8x128xf32, #tpu.memory_space<vmem>>, %arg4: memref<2x128x384xbf16, #tpu.memory_space<vmem>>, %arg5: memref<2x1x384xf32, #tpu.memory_space<vmem>>, %arg6: memref<2x128x128xbf16, #tpu.memory_space<vmem>>, %arg7: memref<2x128x256xbf16, #tpu.memory_space<vmem>>, %arg8: memref<2x1x256xf32, #tpu.memory_space<vmem>>, %arg9: memref<2x256x128xbf16, #tpu.memory_space<vmem>>, %arg10: memref<2x8x128xf32, #tpu.memory_space<vmem>>, %arg11: memref<128x128xbf16, #tpu.memory_space<vmem>>, %arg12: memref<8x128xf32, #tpu.memory_space<vmem>>) attributes {dimension_semantics = [#tpu.dimension_semantics<parallel>], iteration_bounds = array<i64: 2>, scalar_prefetch = 0 : i64, scratch_operands = 0 : i64, tpu.core_type = #tpu.core_type<tc>, window_params = [{transform_indices = @transform_0, window_bounds = array<i64: 128, 128>}, {transform_indices = @transform_1, window_bounds = array<i64: 8, 1, 16>}, {pipeline_mode = #tpu.pipeline_mode<synchronous>, transform_indices = @transform_2, window_bounds = array<i64: 8, 128>}, {pipeline_mode = #tpu.pipeline_mode<synchronous>, transform_indices = @transform_3, window_bounds = array<i64: 2, 128, 384>}, {pipeline_mode = #tpu.pipeline_mode<synchronous>, transform_indices = @transform_4, window_bounds = array<i64: 2, 1, 384>}, {pipeline_mode = #tpu.pipeline_mode<synchronous>, transform_indices = @transform_5, window_bounds = array<i64: 2, 128, 128>}, {pipeline_mode = #tpu.pipeline_mode<synchronous>, transform_indices = @transform_6, window_bounds = array<i64: 2, 128, 256>}, {pipeline_mode = #tpu.pipeline_mode<synchronous>, transform_indices = @transform_7, window_bounds = array<i64: 2, 1, 256>}, {pipeline_mode = #tpu.pipeline_mode<synchronous>, transform_indices = @transform_8, window_bounds = array<i64: 2, 256, 128>}, {pipeline_mode = #tpu.pipeline_mode<synchronous>, transform_indices = @transform_9, window_bounds = array<i64: 2, 8, 128>}, {pipeline_mode = #tpu.pipeline_mode<synchronous>, transform_indices = @transform_10, window_bounds = array<i64: 128, 128>}, {transform_indices = @transform_11, window_bounds = array<i64: 8, 128>}]} {
    %c0 = arith.constant 0 : index
    %c0_0 = arith.constant 0 : index
    %0 = vector.load %arg3[%c0, %c0_0] : memref<8x128xf32, #tpu.memory_space<vmem>>, vector<8x128xf32>
    %c0_1 = arith.constant 0 : index
    %c0_2 = arith.constant 0 : index
    %1 = vector.load %arg1[%c0_1, %c0_2] : memref<128x128xbf16, #tpu.memory_space<vmem>>, vector<128x128xbf16>
    %2 = arith.extf %1 : vector<128x128xbf16> to vector<128x128xf32>
    %3 = vector.extract_strided_slice %0 {offsets = [0, 0], sizes = [1, 128], strides = [1, 1]} : vector<8x128xf32> to vector<1x128xf32>
    %4 = vector.extract_strided_slice %0 {offsets = [1, 0], sizes = [1, 128], strides = [1, 1]} : vector<8x128xf32> to vector<1x128xf32>
    %cst = arith.constant dense<0.000000e+00> : vector<128xf32>
    %5 = vector.multi_reduction <add>, %2, %cst [1] : vector<128x128xf32> to vector<128xf32>
    %6 = vector.shape_cast %5 : vector<128xf32> to vector<128x1xf32>
    %cst_3 = arith.constant 1.280000e+02 : f32
    %7 = vector.broadcast %cst_3 : f32 to vector<128x1xf32>
    %8 = arith.divf %6, %7 : vector<128x1xf32>
    %9 = vector.broadcast %8 : vector<128x1xf32> to vector<128x128xf32>
    %10 = arith.subf %2, %9 : vector<128x128xf32>
    %11 = arith.mulf %10, %10 : vector<128x128xf32>
    %cst_4 = arith.constant dense<0.000000e+00> : vector<128xf32>
    %12 = vector.multi_reduction <add>, %11, %cst_4 [1] : vector<128x128xf32> to vector<128xf32>
    %13 = vector.shape_cast %12 : vector<128xf32> to vector<128x1xf32>
    %cst_5 = arith.constant 1.280000e+02 : f32
    %14 = vector.broadcast %cst_5 : f32 to vector<128x1xf32>
    %15 = arith.divf %13, %14 : vector<128x1xf32>
    %cst_6 = arith.constant 9.99999974E-6 : f32
    %16 = vector.broadcast %cst_6 : f32 to vector<128x1xf32>
    %17 = arith.addf %15, %16 : vector<128x1xf32>
    %18 = math.rsqrt %17 : vector<128x1xf32>
    %19 = vector.broadcast %18 : vector<128x1xf32> to vector<128x128xf32>
    %20 = arith.mulf %10, %19 : vector<128x128xf32>
    %21 = vector.broadcast %3 : vector<1x128xf32> to vector<128x128xf32>
    %22 = arith.mulf %20, %21 : vector<128x128xf32>
    %23 = vector.broadcast %4 : vector<1x128xf32> to vector<128x128xf32>
    %24 = arith.addf %22, %23 : vector<128x128xf32>
    %c0_7 = arith.constant 0 : index
    %c0_8 = arith.constant 0 : index
    %c0_9 = arith.constant 0 : index
    %25 = vector.load %arg10[%c0_7, %c0_8, %c0_9] : memref<2x8x128xf32, #tpu.memory_space<vmem>>, vector<1x8x128xf32>
    %26 = vector.shape_cast %25 : vector<1x8x128xf32> to vector<8x128xf32>
    %27 = arith.truncf %24 : vector<128x128xf32> to vector<128x128xbf16>
    %c0_10 = arith.constant 0 : index
    %c0_11 = arith.constant 0 : index
    %c0_12 = arith.constant 0 : index
    %28 = vector.load %arg4[%c0_10, %c0_11, %c0_12] : memref<2x128x384xbf16, #tpu.memory_space<vmem>>, vector<1x128x384xbf16>
    %29 = vector.shape_cast %28 : vector<1x128x384xbf16> to vector<128x384xbf16>
    %cst_13 = arith.constant dense<0.000000e+00> : vector<128x384xf32>
    %30 = tpu.matmul %27, %29, %cst_13 {dimension_numbers = #tpu.dot_dimension_numbers<[1], [0], [0], [1], [0, 0, 1, 1], [], []>} : vector<128x128xbf16>, vector<128x384xbf16>, vector<128x384xf32> -> vector<128x384xf32>
    %c0_14 = arith.constant 0 : index
    %c0_15 = arith.constant 0 : index
    %c0_16 = arith.constant 0 : index
    %31 = vector.load %arg5[%c0_14, %c0_15, %c0_16] : memref<2x1x384xf32, #tpu.memory_space<vmem>>, vector<1x1x384xf32>
    %32 = vector.shape_cast %31 : vector<1x1x384xf32> to vector<1x384xf32>
    %33 = vector.broadcast %32 : vector<1x384xf32> to vector<128x384xf32>
    %34 = arith.addf %30, %33 : vector<128x384xf32>
    %35 = vector.extract_strided_slice %34 {offsets = [0, 0], sizes = [128, 128], strides = [1, 1]} : vector<128x384xf32> to vector<128x128xf32>
    %36 = vector.extract_strided_slice %34 {offsets = [0, 128], sizes = [128, 128], strides = [1, 1]} : vector<128x384xf32> to vector<128x128xf32>
    %37 = vector.extract_strided_slice %34 {offsets = [0, 256], sizes = [128, 128], strides = [1, 1]} : vector<128x384xf32> to vector<128x128xf32>
    %38 = vector.extract_strided_slice %35 {offsets = [0, 0], sizes = [16, 128], strides = [1, 1]} : vector<128x128xf32> to vector<16x128xf32>
    %39 = vector.extract_strided_slice %36 {offsets = [0, 0], sizes = [16, 128], strides = [1, 1]} : vector<128x128xf32> to vector<16x128xf32>
    %40 = arith.truncf %39 : vector<16x128xf32> to vector<16x128xbf16>
    %41 = vector.extract_strided_slice %37 {offsets = [0, 0], sizes = [16, 128], strides = [1, 1]} : vector<128x128xf32> to vector<16x128xf32>
    %c0_17 = arith.constant 0 : index
    %c0_18 = arith.constant 0 : index
    %c0_19 = arith.constant 0 : index
    %42 = vector.load %arg2[%c0_17, %c0_18, %c0_19] : memref<8x1x16xf32, #tpu.memory_space<vmem>>, vector<1x1x16xf32>
    %43 = vector.shape_cast %42 : vector<1x1x16xf32> to vector<1x16xf32>
    %cst_20 = arith.constant 0.000000e+00 : f32
    %44 = vector.broadcast %cst_20 : f32 to vector<16x128xf32>
    %45 = vector.extract_strided_slice %0 {offsets = [5, 0], sizes = [1, 128], strides = [1, 1]} : vector<8x128xf32> to vector<1x128xf32>
    %46 = vector.broadcast %45 : vector<1x128xf32> to vector<16x128xf32>
    %47 = arith.mulf %38, %46 : vector<16x128xf32>
    %48 = arith.truncf %47 : vector<16x128xf32> to vector<16x128xbf16>
    %cst_21 = arith.constant dense<0.000000e+00> : vector<16x16xf32>
    %49 = tpu.matmul %48, %40, %cst_21 {dimension_numbers = #tpu.dot_dimension_numbers<[1], [1], [0], [0], [0, 0, 1, 0], [], []>} : vector<16x128xbf16>, vector<16x128xbf16>, vector<16x16xf32> -> vector<16x16xf32>
    %50 = vector.broadcast %43 : vector<1x16xf32> to vector<16x16xf32>
    %51 = arith.addf %49, %50 : vector<16x16xf32>
    %cst_22 = arith.constant dense<0xFF800000> : vector<16xf32>
    %52 = vector.multi_reduction <maximumf>, %51, %cst_22 [1] : vector<16x16xf32> to vector<16xf32>
    %53 = vector.shape_cast %52 : vector<16xf32> to vector<16x1xf32>
    %54 = vector.broadcast %53 : vector<16x1xf32> to vector<16x16xf32>
    %55 = arith.subf %51, %54 : vector<16x16xf32>
    %56 = math.exp %55 : vector<16x16xf32>
    %cst_23 = arith.constant dense<0.000000e+00> : vector<16xf32>
    %57 = vector.multi_reduction <add>, %56, %cst_23 [1] : vector<16x16xf32> to vector<16xf32>
    %58 = vector.shape_cast %57 : vector<16xf32> to vector<16x1xf32>
    %59 = tpu.reciprocal %58 {approx = true} : vector<16x1xf32> -> vector<16x1xf32>
    %60 = vector.broadcast %59 : vector<16x1xf32> to vector<16x16xf32>
    %61 = arith.mulf %56, %60 : vector<16x16xf32>
    %62 = vector.broadcast %45 : vector<1x128xf32> to vector<16x128xf32>
    %63 = arith.mulf %41, %62 : vector<16x128xf32>
    %64 = arith.truncf %61 : vector<16x16xf32> to vector<16x16xbf16>
    %65 = arith.truncf %63 : vector<16x128xf32> to vector<16x128xbf16>
    %cst_24 = arith.constant dense<0.000000e+00> : vector<16x128xf32>
    %66 = tpu.matmul %64, %65, %cst_24 {dimension_numbers = #tpu.dot_dimension_numbers<[1], [0], [0], [1], [0, 0, 1, 1], [], []>} : vector<16x16xbf16>, vector<16x128xbf16>, vector<16x128xf32> -> vector<16x128xf32>
    %67 = arith.addf %44, %66 : vector<16x128xf32>
    %68 = vector.extract_strided_slice %0 {offsets = [6, 0], sizes = [1, 128], strides = [1, 1]} : vector<8x128xf32> to vector<1x128xf32>
    %69 = vector.broadcast %68 : vector<1x128xf32> to vector<16x128xf32>
    %70 = arith.mulf %38, %69 : vector<16x128xf32>
    %71 = arith.truncf %70 : vector<16x128xf32> to vector<16x128xbf16>
    %cst_25 = arith.constant dense<0.000000e+00> : vector<16x16xf32>
    %72 = tpu.matmul %71, %40, %cst_25 {dimension_numbers = #tpu.dot_dimension_numbers<[1], [1], [0], [0], [0, 0, 1, 0], [], []>} : vector<16x128xbf16>, vector<16x128xbf16>, vector<16x16xf32> -> vector<16x16xf32>
    %73 = vector.broadcast %43 : vector<1x16xf32> to vector<16x16xf32>
    %74 = arith.addf %72, %73 : vector<16x16xf32>
    %cst_26 = arith.constant dense<0xFF800000> : vector<16xf32>
    %75 = vector.multi_reduction <maximumf>, %74, %cst_26 [1] : vector<16x16xf32> to vector<16xf32>
    %76 = vector.shape_cast %75 : vector<16xf32> to vector<16x1xf32>
    %77 = vector.broadcast %76 : vector<16x1xf32> to vector<16x16xf32>
    %78 = arith.subf %74, %77 : vector<16x16xf32>
    %79 = math.exp %78 : vector<16x16xf32>
    %cst_27 = arith.constant dense<0.000000e+00> : vector<16xf32>
    %80 = vector.multi_reduction <add>, %79, %cst_27 [1] : vector<16x16xf32> to vector<16xf32>
    %81 = vector.shape_cast %80 : vector<16xf32> to vector<16x1xf32>
    %82 = tpu.reciprocal %81 {approx = true} : vector<16x1xf32> -> vector<16x1xf32>
    %83 = vector.broadcast %82 : vector<16x1xf32> to vector<16x16xf32>
    %84 = arith.mulf %79, %83 : vector<16x16xf32>
    %85 = vector.broadcast %68 : vector<1x128xf32> to vector<16x128xf32>
    %86 = arith.mulf %41, %85 : vector<16x128xf32>
    %87 = arith.truncf %84 : vector<16x16xf32> to vector<16x16xbf16>
    %88 = arith.truncf %86 : vector<16x128xf32> to vector<16x128xbf16>
    %cst_28 = arith.constant dense<0.000000e+00> : vector<16x128xf32>
    %89 = tpu.matmul %87, %88, %cst_28 {dimension_numbers = #tpu.dot_dimension_numbers<[1], [0], [0], [1], [0, 0, 1, 1], [], []>} : vector<16x16xbf16>, vector<16x128xbf16>, vector<16x128xf32> -> vector<16x128xf32>
    %90 = arith.addf %67, %89 : vector<16x128xf32>
    %91 = vector.extract_strided_slice %35 {offsets = [16, 0], sizes = [16, 128], strides = [1, 1]} : vector<128x128xf32> to vector<16x128xf32>
    %92 = vector.extract_strided_slice %36 {offsets = [16, 0], sizes = [16, 128], strides = [1, 1]} : vector<128x128xf32> to vector<16x128xf32>
    %93 = arith.truncf %92 : vector<16x128xf32> to vector<16x128xbf16>
    %94 = vector.extract_strided_slice %37 {offsets = [16, 0], sizes = [16, 128], strides = [1, 1]} : vector<128x128xf32> to vector<16x128xf32>
    %c1 = arith.constant 1 : index
    %c0_29 = arith.constant 0 : index
    %c0_30 = arith.constant 0 : index
    %95 = vector.load %arg2[%c1, %c0_29, %c0_30] : memref<8x1x16xf32, #tpu.memory_space<vmem>>, vector<1x1x16xf32>
    %96 = vector.shape_cast %95 : vector<1x1x16xf32> to vector<1x16xf32>
    %cst_31 = arith.constant 0.000000e+00 : f32
    %97 = vector.broadcast %cst_31 : f32 to vector<16x128xf32>
    %98 = vector.extract_strided_slice %0 {offsets = [5, 0], sizes = [1, 128], strides = [1, 1]} : vector<8x128xf32> to vector<1x128xf32>
    %99 = vector.broadcast %98 : vector<1x128xf32> to vector<16x128xf32>
    %100 = arith.mulf %91, %99 : vector<16x128xf32>
    %101 = arith.truncf %100 : vector<16x128xf32> to vector<16x128xbf16>
    %cst_32 = arith.constant dense<0.000000e+00> : vector<16x16xf32>
    %102 = tpu.matmul %101, %93, %cst_32 {dimension_numbers = #tpu.dot_dimension_numbers<[1], [1], [0], [0], [0, 0, 1, 0], [], []>} : vector<16x128xbf16>, vector<16x128xbf16>, vector<16x16xf32> -> vector<16x16xf32>
    %103 = vector.broadcast %96 : vector<1x16xf32> to vector<16x16xf32>
    %104 = arith.addf %102, %103 : vector<16x16xf32>
    %cst_33 = arith.constant dense<0xFF800000> : vector<16xf32>
    %105 = vector.multi_reduction <maximumf>, %104, %cst_33 [1] : vector<16x16xf32> to vector<16xf32>
    %106 = vector.shape_cast %105 : vector<16xf32> to vector<16x1xf32>
    %107 = vector.broadcast %106 : vector<16x1xf32> to vector<16x16xf32>
    %108 = arith.subf %104, %107 : vector<16x16xf32>
    %109 = math.exp %108 : vector<16x16xf32>
    %cst_34 = arith.constant dense<0.000000e+00> : vector<16xf32>
    %110 = vector.multi_reduction <add>, %109, %cst_34 [1] : vector<16x16xf32> to vector<16xf32>
    %111 = vector.shape_cast %110 : vector<16xf32> to vector<16x1xf32>
    %112 = tpu.reciprocal %111 {approx = true} : vector<16x1xf32> -> vector<16x1xf32>
    %113 = vector.broadcast %112 : vector<16x1xf32> to vector<16x16xf32>
    %114 = arith.mulf %109, %113 : vector<16x16xf32>
    %115 = vector.broadcast %98 : vector<1x128xf32> to vector<16x128xf32>
    %116 = arith.mulf %94, %115 : vector<16x128xf32>
    %117 = arith.truncf %114 : vector<16x16xf32> to vector<16x16xbf16>
    %118 = arith.truncf %116 : vector<16x128xf32> to vector<16x128xbf16>
    %cst_35 = arith.constant dense<0.000000e+00> : vector<16x128xf32>
    %119 = tpu.matmul %117, %118, %cst_35 {dimension_numbers = #tpu.dot_dimension_numbers<[1], [0], [0], [1], [0, 0, 1, 1], [], []>} : vector<16x16xbf16>, vector<16x128xbf16>, vector<16x128xf32> -> vector<16x128xf32>
    %120 = arith.addf %97, %119 : vector<16x128xf32>
    %121 = vector.extract_strided_slice %0 {offsets = [6, 0], sizes = [1, 128], strides = [1, 1]} : vector<8x128xf32> to vector<1x128xf32>
    %122 = vector.broadcast %121 : vector<1x128xf32> to vector<16x128xf32>
    %123 = arith.mulf %91, %122 : vector<16x128xf32>
    %124 = arith.truncf %123 : vector<16x128xf32> to vector<16x128xbf16>
    %cst_36 = arith.constant dense<0.000000e+00> : vector<16x16xf32>
    %125 = tpu.matmul %124, %93, %cst_36 {dimension_numbers = #tpu.dot_dimension_numbers<[1], [1], [0], [0], [0, 0, 1, 0], [], []>} : vector<16x128xbf16>, vector<16x128xbf16>, vector<16x16xf32> -> vector<16x16xf32>
    %126 = vector.broadcast %96 : vector<1x16xf32> to vector<16x16xf32>
    %127 = arith.addf %125, %126 : vector<16x16xf32>
    %cst_37 = arith.constant dense<0xFF800000> : vector<16xf32>
    %128 = vector.multi_reduction <maximumf>, %127, %cst_37 [1] : vector<16x16xf32> to vector<16xf32>
    %129 = vector.shape_cast %128 : vector<16xf32> to vector<16x1xf32>
    %130 = vector.broadcast %129 : vector<16x1xf32> to vector<16x16xf32>
    %131 = arith.subf %127, %130 : vector<16x16xf32>
    %132 = math.exp %131 : vector<16x16xf32>
    %cst_38 = arith.constant dense<0.000000e+00> : vector<16xf32>
    %133 = vector.multi_reduction <add>, %132, %cst_38 [1] : vector<16x16xf32> to vector<16xf32>
    %134 = vector.shape_cast %133 : vector<16xf32> to vector<16x1xf32>
    %135 = tpu.reciprocal %134 {approx = true} : vector<16x1xf32> -> vector<16x1xf32>
    %136 = vector.broadcast %135 : vector<16x1xf32> to vector<16x16xf32>
    %137 = arith.mulf %132, %136 : vector<16x16xf32>
    %138 = vector.broadcast %121 : vector<1x128xf32> to vector<16x128xf32>
    %139 = arith.mulf %94, %138 : vector<16x128xf32>
    %140 = arith.truncf %137 : vector<16x16xf32> to vector<16x16xbf16>
    %141 = arith.truncf %139 : vector<16x128xf32> to vector<16x128xbf16>
    %cst_39 = arith.constant dense<0.000000e+00> : vector<16x128xf32>
    %142 = tpu.matmul %140, %141, %cst_39 {dimension_numbers = #tpu.dot_dimension_numbers<[1], [0], [0], [1], [0, 0, 1, 1], [], []>} : vector<16x16xbf16>, vector<16x128xbf16>, vector<16x128xf32> -> vector<16x128xf32>
    %143 = arith.addf %120, %142 : vector<16x128xf32>
    %144 = vector.extract_strided_slice %35 {offsets = [32, 0], sizes = [16, 128], strides = [1, 1]} : vector<128x128xf32> to vector<16x128xf32>
    %145 = vector.extract_strided_slice %36 {offsets = [32, 0], sizes = [16, 128], strides = [1, 1]} : vector<128x128xf32> to vector<16x128xf32>
    %146 = arith.truncf %145 : vector<16x128xf32> to vector<16x128xbf16>
    %147 = vector.extract_strided_slice %37 {offsets = [32, 0], sizes = [16, 128], strides = [1, 1]} : vector<128x128xf32> to vector<16x128xf32>
    %c2 = arith.constant 2 : index
    %c0_40 = arith.constant 0 : index
    %c0_41 = arith.constant 0 : index
    %148 = vector.load %arg2[%c2, %c0_40, %c0_41] : memref<8x1x16xf32, #tpu.memory_space<vmem>>, vector<1x1x16xf32>
    %149 = vector.shape_cast %148 : vector<1x1x16xf32> to vector<1x16xf32>
    %cst_42 = arith.constant 0.000000e+00 : f32
    %150 = vector.broadcast %cst_42 : f32 to vector<16x128xf32>
    %151 = vector.extract_strided_slice %0 {offsets = [5, 0], sizes = [1, 128], strides = [1, 1]} : vector<8x128xf32> to vector<1x128xf32>
    %152 = vector.broadcast %151 : vector<1x128xf32> to vector<16x128xf32>
    %153 = arith.mulf %144, %152 : vector<16x128xf32>
    %154 = arith.truncf %153 : vector<16x128xf32> to vector<16x128xbf16>
    %cst_43 = arith.constant dense<0.000000e+00> : vector<16x16xf32>
    %155 = tpu.matmul %154, %146, %cst_43 {dimension_numbers = #tpu.dot_dimension_numbers<[1], [1], [0], [0], [0, 0, 1, 0], [], []>} : vector<16x128xbf16>, vector<16x128xbf16>, vector<16x16xf32> -> vector<16x16xf32>
    %156 = vector.broadcast %149 : vector<1x16xf32> to vector<16x16xf32>
    %157 = arith.addf %155, %156 : vector<16x16xf32>
    %cst_44 = arith.constant dense<0xFF800000> : vector<16xf32>
    %158 = vector.multi_reduction <maximumf>, %157, %cst_44 [1] : vector<16x16xf32> to vector<16xf32>
    %159 = vector.shape_cast %158 : vector<16xf32> to vector<16x1xf32>
    %160 = vector.broadcast %159 : vector<16x1xf32> to vector<16x16xf32>
    %161 = arith.subf %157, %160 : vector<16x16xf32>
    %162 = math.exp %161 : vector<16x16xf32>
    %cst_45 = arith.constant dense<0.000000e+00> : vector<16xf32>
    %163 = vector.multi_reduction <add>, %162, %cst_45 [1] : vector<16x16xf32> to vector<16xf32>
    %164 = vector.shape_cast %163 : vector<16xf32> to vector<16x1xf32>
    %165 = tpu.reciprocal %164 {approx = true} : vector<16x1xf32> -> vector<16x1xf32>
    %166 = vector.broadcast %165 : vector<16x1xf32> to vector<16x16xf32>
    %167 = arith.mulf %162, %166 : vector<16x16xf32>
    %168 = vector.broadcast %151 : vector<1x128xf32> to vector<16x128xf32>
    %169 = arith.mulf %147, %168 : vector<16x128xf32>
    %170 = arith.truncf %167 : vector<16x16xf32> to vector<16x16xbf16>
    %171 = arith.truncf %169 : vector<16x128xf32> to vector<16x128xbf16>
    %cst_46 = arith.constant dense<0.000000e+00> : vector<16x128xf32>
    %172 = tpu.matmul %170, %171, %cst_46 {dimension_numbers = #tpu.dot_dimension_numbers<[1], [0], [0], [1], [0, 0, 1, 1], [], []>} : vector<16x16xbf16>, vector<16x128xbf16>, vector<16x128xf32> -> vector<16x128xf32>
    %173 = arith.addf %150, %172 : vector<16x128xf32>
    %174 = vector.extract_strided_slice %0 {offsets = [6, 0], sizes = [1, 128], strides = [1, 1]} : vector<8x128xf32> to vector<1x128xf32>
    %175 = vector.broadcast %174 : vector<1x128xf32> to vector<16x128xf32>
    %176 = arith.mulf %144, %175 : vector<16x128xf32>
    %177 = arith.truncf %176 : vector<16x128xf32> to vector<16x128xbf16>
    %cst_47 = arith.constant dense<0.000000e+00> : vector<16x16xf32>
    %178 = tpu.matmul %177, %146, %cst_47 {dimension_numbers = #tpu.dot_dimension_numbers<[1], [1], [0], [0], [0, 0, 1, 0], [], []>} : vector<16x128xbf16>, vector<16x128xbf16>, vector<16x16xf32> -> vector<16x16xf32>
    %179 = vector.broadcast %149 : vector<1x16xf32> to vector<16x16xf32>
    %180 = arith.addf %178, %179 : vector<16x16xf32>
    %cst_48 = arith.constant dense<0xFF800000> : vector<16xf32>
    %181 = vector.multi_reduction <maximumf>, %180, %cst_48 [1] : vector<16x16xf32> to vector<16xf32>
    %182 = vector.shape_cast %181 : vector<16xf32> to vector<16x1xf32>
    %183 = vector.broadcast %182 : vector<16x1xf32> to vector<16x16xf32>
    %184 = arith.subf %180, %183 : vector<16x16xf32>
    %185 = math.exp %184 : vector<16x16xf32>
    %cst_49 = arith.constant dense<0.000000e+00> : vector<16xf32>
    %186 = vector.multi_reduction <add>, %185, %cst_49 [1] : vector<16x16xf32> to vector<16xf32>
    %187 = vector.shape_cast %186 : vector<16xf32> to vector<16x1xf32>
    %188 = tpu.reciprocal %187 {approx = true} : vector<16x1xf32> -> vector<16x1xf32>
    %189 = vector.broadcast %188 : vector<16x1xf32> to vector<16x16xf32>
    %190 = arith.mulf %185, %189 : vector<16x16xf32>
    %191 = vector.broadcast %174 : vector<1x128xf32> to vector<16x128xf32>
    %192 = arith.mulf %147, %191 : vector<16x128xf32>
    %193 = arith.truncf %190 : vector<16x16xf32> to vector<16x16xbf16>
    %194 = arith.truncf %192 : vector<16x128xf32> to vector<16x128xbf16>
    %cst_50 = arith.constant dense<0.000000e+00> : vector<16x128xf32>
    %195 = tpu.matmul %193, %194, %cst_50 {dimension_numbers = #tpu.dot_dimension_numbers<[1], [0], [0], [1], [0, 0, 1, 1], [], []>} : vector<16x16xbf16>, vector<16x128xbf16>, vector<16x128xf32> -> vector<16x128xf32>
    %196 = arith.addf %173, %195 : vector<16x128xf32>
    %197 = vector.extract_strided_slice %35 {offsets = [48, 0], sizes = [16, 128], strides = [1, 1]} : vector<128x128xf32> to vector<16x128xf32>
    %198 = vector.extract_strided_slice %36 {offsets = [48, 0], sizes = [16, 128], strides = [1, 1]} : vector<128x128xf32> to vector<16x128xf32>
    %199 = arith.truncf %198 : vector<16x128xf32> to vector<16x128xbf16>
    %200 = vector.extract_strided_slice %37 {offsets = [48, 0], sizes = [16, 128], strides = [1, 1]} : vector<128x128xf32> to vector<16x128xf32>
    %c3 = arith.constant 3 : index
    %c0_51 = arith.constant 0 : index
    %c0_52 = arith.constant 0 : index
    %201 = vector.load %arg2[%c3, %c0_51, %c0_52] : memref<8x1x16xf32, #tpu.memory_space<vmem>>, vector<1x1x16xf32>
    %202 = vector.shape_cast %201 : vector<1x1x16xf32> to vector<1x16xf32>
    %cst_53 = arith.constant 0.000000e+00 : f32
    %203 = vector.broadcast %cst_53 : f32 to vector<16x128xf32>
    %204 = vector.extract_strided_slice %0 {offsets = [5, 0], sizes = [1, 128], strides = [1, 1]} : vector<8x128xf32> to vector<1x128xf32>
    %205 = vector.broadcast %204 : vector<1x128xf32> to vector<16x128xf32>
    %206 = arith.mulf %197, %205 : vector<16x128xf32>
    %207 = arith.truncf %206 : vector<16x128xf32> to vector<16x128xbf16>
    %cst_54 = arith.constant dense<0.000000e+00> : vector<16x16xf32>
    %208 = tpu.matmul %207, %199, %cst_54 {dimension_numbers = #tpu.dot_dimension_numbers<[1], [1], [0], [0], [0, 0, 1, 0], [], []>} : vector<16x128xbf16>, vector<16x128xbf16>, vector<16x16xf32> -> vector<16x16xf32>
    %209 = vector.broadcast %202 : vector<1x16xf32> to vector<16x16xf32>
    %210 = arith.addf %208, %209 : vector<16x16xf32>
    %cst_55 = arith.constant dense<0xFF800000> : vector<16xf32>
    %211 = vector.multi_reduction <maximumf>, %210, %cst_55 [1] : vector<16x16xf32> to vector<16xf32>
    %212 = vector.shape_cast %211 : vector<16xf32> to vector<16x1xf32>
    %213 = vector.broadcast %212 : vector<16x1xf32> to vector<16x16xf32>
    %214 = arith.subf %210, %213 : vector<16x16xf32>
    %215 = math.exp %214 : vector<16x16xf32>
    %cst_56 = arith.constant dense<0.000000e+00> : vector<16xf32>
    %216 = vector.multi_reduction <add>, %215, %cst_56 [1] : vector<16x16xf32> to vector<16xf32>
    %217 = vector.shape_cast %216 : vector<16xf32> to vector<16x1xf32>
    %218 = tpu.reciprocal %217 {approx = true} : vector<16x1xf32> -> vector<16x1xf32>
    %219 = vector.broadcast %218 : vector<16x1xf32> to vector<16x16xf32>
    %220 = arith.mulf %215, %219 : vector<16x16xf32>
    %221 = vector.broadcast %204 : vector<1x128xf32> to vector<16x128xf32>
    %222 = arith.mulf %200, %221 : vector<16x128xf32>
    %223 = arith.truncf %220 : vector<16x16xf32> to vector<16x16xbf16>
    %224 = arith.truncf %222 : vector<16x128xf32> to vector<16x128xbf16>
    %cst_57 = arith.constant dense<0.000000e+00> : vector<16x128xf32>
    %225 = tpu.matmul %223, %224, %cst_57 {dimension_numbers = #tpu.dot_dimension_numbers<[1], [0], [0], [1], [0, 0, 1, 1], [], []>} : vector<16x16xbf16>, vector<16x128xbf16>, vector<16x128xf32> -> vector<16x128xf32>
    %226 = arith.addf %203, %225 : vector<16x128xf32>
    %227 = vector.extract_strided_slice %0 {offsets = [6, 0], sizes = [1, 128], strides = [1, 1]} : vector<8x128xf32> to vector<1x128xf32>
    %228 = vector.broadcast %227 : vector<1x128xf32> to vector<16x128xf32>
    %229 = arith.mulf %197, %228 : vector<16x128xf32>
    %230 = arith.truncf %229 : vector<16x128xf32> to vector<16x128xbf16>
    %cst_58 = arith.constant dense<0.000000e+00> : vector<16x16xf32>
    %231 = tpu.matmul %230, %199, %cst_58 {dimension_numbers = #tpu.dot_dimension_numbers<[1], [1], [0], [0], [0, 0, 1, 0], [], []>} : vector<16x128xbf16>, vector<16x128xbf16>, vector<16x16xf32> -> vector<16x16xf32>
    %232 = vector.broadcast %202 : vector<1x16xf32> to vector<16x16xf32>
    %233 = arith.addf %231, %232 : vector<16x16xf32>
    %cst_59 = arith.constant dense<0xFF800000> : vector<16xf32>
    %234 = vector.multi_reduction <maximumf>, %233, %cst_59 [1] : vector<16x16xf32> to vector<16xf32>
    %235 = vector.shape_cast %234 : vector<16xf32> to vector<16x1xf32>
    %236 = vector.broadcast %235 : vector<16x1xf32> to vector<16x16xf32>
    %237 = arith.subf %233, %236 : vector<16x16xf32>
    %238 = math.exp %237 : vector<16x16xf32>
    %cst_60 = arith.constant dense<0.000000e+00> : vector<16xf32>
    %239 = vector.multi_reduction <add>, %238, %cst_60 [1] : vector<16x16xf32> to vector<16xf32>
    %240 = vector.shape_cast %239 : vector<16xf32> to vector<16x1xf32>
    %241 = tpu.reciprocal %240 {approx = true} : vector<16x1xf32> -> vector<16x1xf32>
    %242 = vector.broadcast %241 : vector<16x1xf32> to vector<16x16xf32>
    %243 = arith.mulf %238, %242 : vector<16x16xf32>
    %244 = vector.broadcast %227 : vector<1x128xf32> to vector<16x128xf32>
    %245 = arith.mulf %200, %244 : vector<16x128xf32>
    %246 = arith.truncf %243 : vector<16x16xf32> to vector<16x16xbf16>
    %247 = arith.truncf %245 : vector<16x128xf32> to vector<16x128xbf16>
    %cst_61 = arith.constant dense<0.000000e+00> : vector<16x128xf32>
    %248 = tpu.matmul %246, %247, %cst_61 {dimension_numbers = #tpu.dot_dimension_numbers<[1], [0], [0], [1], [0, 0, 1, 1], [], []>} : vector<16x16xbf16>, vector<16x128xbf16>, vector<16x128xf32> -> vector<16x128xf32>
    %249 = arith.addf %226, %248 : vector<16x128xf32>
    %250 = vector.extract_strided_slice %35 {offsets = [64, 0], sizes = [16, 128], strides = [1, 1]} : vector<128x128xf32> to vector<16x128xf32>
    %251 = vector.extract_strided_slice %36 {offsets = [64, 0], sizes = [16, 128], strides = [1, 1]} : vector<128x128xf32> to vector<16x128xf32>
    %252 = arith.truncf %251 : vector<16x128xf32> to vector<16x128xbf16>
    %253 = vector.extract_strided_slice %37 {offsets = [64, 0], sizes = [16, 128], strides = [1, 1]} : vector<128x128xf32> to vector<16x128xf32>
    %c4 = arith.constant 4 : index
    %c0_62 = arith.constant 0 : index
    %c0_63 = arith.constant 0 : index
    %254 = vector.load %arg2[%c4, %c0_62, %c0_63] : memref<8x1x16xf32, #tpu.memory_space<vmem>>, vector<1x1x16xf32>
    %255 = vector.shape_cast %254 : vector<1x1x16xf32> to vector<1x16xf32>
    %cst_64 = arith.constant 0.000000e+00 : f32
    %256 = vector.broadcast %cst_64 : f32 to vector<16x128xf32>
    %257 = vector.extract_strided_slice %0 {offsets = [5, 0], sizes = [1, 128], strides = [1, 1]} : vector<8x128xf32> to vector<1x128xf32>
    %258 = vector.broadcast %257 : vector<1x128xf32> to vector<16x128xf32>
    %259 = arith.mulf %250, %258 : vector<16x128xf32>
    %260 = arith.truncf %259 : vector<16x128xf32> to vector<16x128xbf16>
    %cst_65 = arith.constant dense<0.000000e+00> : vector<16x16xf32>
    %261 = tpu.matmul %260, %252, %cst_65 {dimension_numbers = #tpu.dot_dimension_numbers<[1], [1], [0], [0], [0, 0, 1, 0], [], []>} : vector<16x128xbf16>, vector<16x128xbf16>, vector<16x16xf32> -> vector<16x16xf32>
    %262 = vector.broadcast %255 : vector<1x16xf32> to vector<16x16xf32>
    %263 = arith.addf %261, %262 : vector<16x16xf32>
    %cst_66 = arith.constant dense<0xFF800000> : vector<16xf32>
    %264 = vector.multi_reduction <maximumf>, %263, %cst_66 [1] : vector<16x16xf32> to vector<16xf32>
    %265 = vector.shape_cast %264 : vector<16xf32> to vector<16x1xf32>
    %266 = vector.broadcast %265 : vector<16x1xf32> to vector<16x16xf32>
    %267 = arith.subf %263, %266 : vector<16x16xf32>
    %268 = math.exp %267 : vector<16x16xf32>
    %cst_67 = arith.constant dense<0.000000e+00> : vector<16xf32>
    %269 = vector.multi_reduction <add>, %268, %cst_67 [1] : vector<16x16xf32> to vector<16xf32>
    %270 = vector.shape_cast %269 : vector<16xf32> to vector<16x1xf32>
    %271 = tpu.reciprocal %270 {approx = true} : vector<16x1xf32> -> vector<16x1xf32>
    %272 = vector.broadcast %271 : vector<16x1xf32> to vector<16x16xf32>
    %273 = arith.mulf %268, %272 : vector<16x16xf32>
    %274 = vector.broadcast %257 : vector<1x128xf32> to vector<16x128xf32>
    %275 = arith.mulf %253, %274 : vector<16x128xf32>
    %276 = arith.truncf %273 : vector<16x16xf32> to vector<16x16xbf16>
    %277 = arith.truncf %275 : vector<16x128xf32> to vector<16x128xbf16>
    %cst_68 = arith.constant dense<0.000000e+00> : vector<16x128xf32>
    %278 = tpu.matmul %276, %277, %cst_68 {dimension_numbers = #tpu.dot_dimension_numbers<[1], [0], [0], [1], [0, 0, 1, 1], [], []>} : vector<16x16xbf16>, vector<16x128xbf16>, vector<16x128xf32> -> vector<16x128xf32>
    %279 = arith.addf %256, %278 : vector<16x128xf32>
    %280 = vector.extract_strided_slice %0 {offsets = [6, 0], sizes = [1, 128], strides = [1, 1]} : vector<8x128xf32> to vector<1x128xf32>
    %281 = vector.broadcast %280 : vector<1x128xf32> to vector<16x128xf32>
    %282 = arith.mulf %250, %281 : vector<16x128xf32>
    %283 = arith.truncf %282 : vector<16x128xf32> to vector<16x128xbf16>
    %cst_69 = arith.constant dense<0.000000e+00> : vector<16x16xf32>
    %284 = tpu.matmul %283, %252, %cst_69 {dimension_numbers = #tpu.dot_dimension_numbers<[1], [1], [0], [0], [0, 0, 1, 0], [], []>} : vector<16x128xbf16>, vector<16x128xbf16>, vector<16x16xf32> -> vector<16x16xf32>
    %285 = vector.broadcast %255 : vector<1x16xf32> to vector<16x16xf32>
    %286 = arith.addf %284, %285 : vector<16x16xf32>
    %cst_70 = arith.constant dense<0xFF800000> : vector<16xf32>
    %287 = vector.multi_reduction <maximumf>, %286, %cst_70 [1] : vector<16x16xf32> to vector<16xf32>
    %288 = vector.shape_cast %287 : vector<16xf32> to vector<16x1xf32>
    %289 = vector.broadcast %288 : vector<16x1xf32> to vector<16x16xf32>
    %290 = arith.subf %286, %289 : vector<16x16xf32>
    %291 = math.exp %290 : vector<16x16xf32>
    %cst_71 = arith.constant dense<0.000000e+00> : vector<16xf32>
    %292 = vector.multi_reduction <add>, %291, %cst_71 [1] : vector<16x16xf32> to vector<16xf32>
    %293 = vector.shape_cast %292 : vector<16xf32> to vector<16x1xf32>
    %294 = tpu.reciprocal %293 {approx = true} : vector<16x1xf32> -> vector<16x1xf32>
    %295 = vector.broadcast %294 : vector<16x1xf32> to vector<16x16xf32>
    %296 = arith.mulf %291, %295 : vector<16x16xf32>
    %297 = vector.broadcast %280 : vector<1x128xf32> to vector<16x128xf32>
    %298 = arith.mulf %253, %297 : vector<16x128xf32>
    %299 = arith.truncf %296 : vector<16x16xf32> to vector<16x16xbf16>
    %300 = arith.truncf %298 : vector<16x128xf32> to vector<16x128xbf16>
    %cst_72 = arith.constant dense<0.000000e+00> : vector<16x128xf32>
    %301 = tpu.matmul %299, %300, %cst_72 {dimension_numbers = #tpu.dot_dimension_numbers<[1], [0], [0], [1], [0, 0, 1, 1], [], []>} : vector<16x16xbf16>, vector<16x128xbf16>, vector<16x128xf32> -> vector<16x128xf32>
    %302 = arith.addf %279, %301 : vector<16x128xf32>
    %303 = vector.extract_strided_slice %35 {offsets = [80, 0], sizes = [16, 128], strides = [1, 1]} : vector<128x128xf32> to vector<16x128xf32>
    %304 = vector.extract_strided_slice %36 {offsets = [80, 0], sizes = [16, 128], strides = [1, 1]} : vector<128x128xf32> to vector<16x128xf32>
    %305 = arith.truncf %304 : vector<16x128xf32> to vector<16x128xbf16>
    %306 = vector.extract_strided_slice %37 {offsets = [80, 0], sizes = [16, 128], strides = [1, 1]} : vector<128x128xf32> to vector<16x128xf32>
    %c5 = arith.constant 5 : index
    %c0_73 = arith.constant 0 : index
    %c0_74 = arith.constant 0 : index
    %307 = vector.load %arg2[%c5, %c0_73, %c0_74] : memref<8x1x16xf32, #tpu.memory_space<vmem>>, vector<1x1x16xf32>
    %308 = vector.shape_cast %307 : vector<1x1x16xf32> to vector<1x16xf32>
    %cst_75 = arith.constant 0.000000e+00 : f32
    %309 = vector.broadcast %cst_75 : f32 to vector<16x128xf32>
    %310 = vector.extract_strided_slice %0 {offsets = [5, 0], sizes = [1, 128], strides = [1, 1]} : vector<8x128xf32> to vector<1x128xf32>
    %311 = vector.broadcast %310 : vector<1x128xf32> to vector<16x128xf32>
    %312 = arith.mulf %303, %311 : vector<16x128xf32>
    %313 = arith.truncf %312 : vector<16x128xf32> to vector<16x128xbf16>
    %cst_76 = arith.constant dense<0.000000e+00> : vector<16x16xf32>
    %314 = tpu.matmul %313, %305, %cst_76 {dimension_numbers = #tpu.dot_dimension_numbers<[1], [1], [0], [0], [0, 0, 1, 0], [], []>} : vector<16x128xbf16>, vector<16x128xbf16>, vector<16x16xf32> -> vector<16x16xf32>
    %315 = vector.broadcast %308 : vector<1x16xf32> to vector<16x16xf32>
    %316 = arith.addf %314, %315 : vector<16x16xf32>
    %cst_77 = arith.constant dense<0xFF800000> : vector<16xf32>
    %317 = vector.multi_reduction <maximumf>, %316, %cst_77 [1] : vector<16x16xf32> to vector<16xf32>
    %318 = vector.shape_cast %317 : vector<16xf32> to vector<16x1xf32>
    %319 = vector.broadcast %318 : vector<16x1xf32> to vector<16x16xf32>
    %320 = arith.subf %316, %319 : vector<16x16xf32>
    %321 = math.exp %320 : vector<16x16xf32>
    %cst_78 = arith.constant dense<0.000000e+00> : vector<16xf32>
    %322 = vector.multi_reduction <add>, %321, %cst_78 [1] : vector<16x16xf32> to vector<16xf32>
    %323 = vector.shape_cast %322 : vector<16xf32> to vector<16x1xf32>
    %324 = tpu.reciprocal %323 {approx = true} : vector<16x1xf32> -> vector<16x1xf32>
    %325 = vector.broadcast %324 : vector<16x1xf32> to vector<16x16xf32>
    %326 = arith.mulf %321, %325 : vector<16x16xf32>
    %327 = vector.broadcast %310 : vector<1x128xf32> to vector<16x128xf32>
    %328 = arith.mulf %306, %327 : vector<16x128xf32>
    %329 = arith.truncf %326 : vector<16x16xf32> to vector<16x16xbf16>
    %330 = arith.truncf %328 : vector<16x128xf32> to vector<16x128xbf16>
    %cst_79 = arith.constant dense<0.000000e+00> : vector<16x128xf32>
    %331 = tpu.matmul %329, %330, %cst_79 {dimension_numbers = #tpu.dot_dimension_numbers<[1], [0], [0], [1], [0, 0, 1, 1], [], []>} : vector<16x16xbf16>, vector<16x128xbf16>, vector<16x128xf32> -> vector<16x128xf32>
    %332 = arith.addf %309, %331 : vector<16x128xf32>
    %333 = vector.extract_strided_slice %0 {offsets = [6, 0], sizes = [1, 128], strides = [1, 1]} : vector<8x128xf32> to vector<1x128xf32>
    %334 = vector.broadcast %333 : vector<1x128xf32> to vector<16x128xf32>
    %335 = arith.mulf %303, %334 : vector<16x128xf32>
    %336 = arith.truncf %335 : vector<16x128xf32> to vector<16x128xbf16>
    %cst_80 = arith.constant dense<0.000000e+00> : vector<16x16xf32>
    %337 = tpu.matmul %336, %305, %cst_80 {dimension_numbers = #tpu.dot_dimension_numbers<[1], [1], [0], [0], [0, 0, 1, 0], [], []>} : vector<16x128xbf16>, vector<16x128xbf16>, vector<16x16xf32> -> vector<16x16xf32>
    %338 = vector.broadcast %308 : vector<1x16xf32> to vector<16x16xf32>
    %339 = arith.addf %337, %338 : vector<16x16xf32>
    %cst_81 = arith.constant dense<0xFF800000> : vector<16xf32>
    %340 = vector.multi_reduction <maximumf>, %339, %cst_81 [1] : vector<16x16xf32> to vector<16xf32>
    %341 = vector.shape_cast %340 : vector<16xf32> to vector<16x1xf32>
    %342 = vector.broadcast %341 : vector<16x1xf32> to vector<16x16xf32>
    %343 = arith.subf %339, %342 : vector<16x16xf32>
    %344 = math.exp %343 : vector<16x16xf32>
    %cst_82 = arith.constant dense<0.000000e+00> : vector<16xf32>
    %345 = vector.multi_reduction <add>, %344, %cst_82 [1] : vector<16x16xf32> to vector<16xf32>
    %346 = vector.shape_cast %345 : vector<16xf32> to vector<16x1xf32>
    %347 = tpu.reciprocal %346 {approx = true} : vector<16x1xf32> -> vector<16x1xf32>
    %348 = vector.broadcast %347 : vector<16x1xf32> to vector<16x16xf32>
    %349 = arith.mulf %344, %348 : vector<16x16xf32>
    %350 = vector.broadcast %333 : vector<1x128xf32> to vector<16x128xf32>
    %351 = arith.mulf %306, %350 : vector<16x128xf32>
    %352 = arith.truncf %349 : vector<16x16xf32> to vector<16x16xbf16>
    %353 = arith.truncf %351 : vector<16x128xf32> to vector<16x128xbf16>
    %cst_83 = arith.constant dense<0.000000e+00> : vector<16x128xf32>
    %354 = tpu.matmul %352, %353, %cst_83 {dimension_numbers = #tpu.dot_dimension_numbers<[1], [0], [0], [1], [0, 0, 1, 1], [], []>} : vector<16x16xbf16>, vector<16x128xbf16>, vector<16x128xf32> -> vector<16x128xf32>
    %355 = arith.addf %332, %354 : vector<16x128xf32>
    %356 = vector.extract_strided_slice %35 {offsets = [96, 0], sizes = [16, 128], strides = [1, 1]} : vector<128x128xf32> to vector<16x128xf32>
    %357 = vector.extract_strided_slice %36 {offsets = [96, 0], sizes = [16, 128], strides = [1, 1]} : vector<128x128xf32> to vector<16x128xf32>
    %358 = arith.truncf %357 : vector<16x128xf32> to vector<16x128xbf16>
    %359 = vector.extract_strided_slice %37 {offsets = [96, 0], sizes = [16, 128], strides = [1, 1]} : vector<128x128xf32> to vector<16x128xf32>
    %c6 = arith.constant 6 : index
    %c0_84 = arith.constant 0 : index
    %c0_85 = arith.constant 0 : index
    %360 = vector.load %arg2[%c6, %c0_84, %c0_85] : memref<8x1x16xf32, #tpu.memory_space<vmem>>, vector<1x1x16xf32>
    %361 = vector.shape_cast %360 : vector<1x1x16xf32> to vector<1x16xf32>
    %cst_86 = arith.constant 0.000000e+00 : f32
    %362 = vector.broadcast %cst_86 : f32 to vector<16x128xf32>
    %363 = vector.extract_strided_slice %0 {offsets = [5, 0], sizes = [1, 128], strides = [1, 1]} : vector<8x128xf32> to vector<1x128xf32>
    %364 = vector.broadcast %363 : vector<1x128xf32> to vector<16x128xf32>
    %365 = arith.mulf %356, %364 : vector<16x128xf32>
    %366 = arith.truncf %365 : vector<16x128xf32> to vector<16x128xbf16>
    %cst_87 = arith.constant dense<0.000000e+00> : vector<16x16xf32>
    %367 = tpu.matmul %366, %358, %cst_87 {dimension_numbers = #tpu.dot_dimension_numbers<[1], [1], [0], [0], [0, 0, 1, 0], [], []>} : vector<16x128xbf16>, vector<16x128xbf16>, vector<16x16xf32> -> vector<16x16xf32>
    %368 = vector.broadcast %361 : vector<1x16xf32> to vector<16x16xf32>
    %369 = arith.addf %367, %368 : vector<16x16xf32>
    %cst_88 = arith.constant dense<0xFF800000> : vector<16xf32>
    %370 = vector.multi_reduction <maximumf>, %369, %cst_88 [1] : vector<16x16xf32> to vector<16xf32>
    %371 = vector.shape_cast %370 : vector<16xf32> to vector<16x1xf32>
    %372 = vector.broadcast %371 : vector<16x1xf32> to vector<16x16xf32>
    %373 = arith.subf %369, %372 : vector<16x16xf32>
    %374 = math.exp %373 : vector<16x16xf32>
    %cst_89 = arith.constant dense<0.000000e+00> : vector<16xf32>
    %375 = vector.multi_reduction <add>, %374, %cst_89 [1] : vector<16x16xf32> to vector<16xf32>
    %376 = vector.shape_cast %375 : vector<16xf32> to vector<16x1xf32>
    %377 = tpu.reciprocal %376 {approx = true} : vector<16x1xf32> -> vector<16x1xf32>
    %378 = vector.broadcast %377 : vector<16x1xf32> to vector<16x16xf32>
    %379 = arith.mulf %374, %378 : vector<16x16xf32>
    %380 = vector.broadcast %363 : vector<1x128xf32> to vector<16x128xf32>
    %381 = arith.mulf %359, %380 : vector<16x128xf32>
    %382 = arith.truncf %379 : vector<16x16xf32> to vector<16x16xbf16>
    %383 = arith.truncf %381 : vector<16x128xf32> to vector<16x128xbf16>
    %cst_90 = arith.constant dense<0.000000e+00> : vector<16x128xf32>
    %384 = tpu.matmul %382, %383, %cst_90 {dimension_numbers = #tpu.dot_dimension_numbers<[1], [0], [0], [1], [0, 0, 1, 1], [], []>} : vector<16x16xbf16>, vector<16x128xbf16>, vector<16x128xf32> -> vector<16x128xf32>
    %385 = arith.addf %362, %384 : vector<16x128xf32>
    %386 = vector.extract_strided_slice %0 {offsets = [6, 0], sizes = [1, 128], strides = [1, 1]} : vector<8x128xf32> to vector<1x128xf32>
    %387 = vector.broadcast %386 : vector<1x128xf32> to vector<16x128xf32>
    %388 = arith.mulf %356, %387 : vector<16x128xf32>
    %389 = arith.truncf %388 : vector<16x128xf32> to vector<16x128xbf16>
    %cst_91 = arith.constant dense<0.000000e+00> : vector<16x16xf32>
    %390 = tpu.matmul %389, %358, %cst_91 {dimension_numbers = #tpu.dot_dimension_numbers<[1], [1], [0], [0], [0, 0, 1, 0], [], []>} : vector<16x128xbf16>, vector<16x128xbf16>, vector<16x16xf32> -> vector<16x16xf32>
    %391 = vector.broadcast %361 : vector<1x16xf32> to vector<16x16xf32>
    %392 = arith.addf %390, %391 : vector<16x16xf32>
    %cst_92 = arith.constant dense<0xFF800000> : vector<16xf32>
    %393 = vector.multi_reduction <maximumf>, %392, %cst_92 [1] : vector<16x16xf32> to vector<16xf32>
    %394 = vector.shape_cast %393 : vector<16xf32> to vector<16x1xf32>
    %395 = vector.broadcast %394 : vector<16x1xf32> to vector<16x16xf32>
    %396 = arith.subf %392, %395 : vector<16x16xf32>
    %397 = math.exp %396 : vector<16x16xf32>
    %cst_93 = arith.constant dense<0.000000e+00> : vector<16xf32>
    %398 = vector.multi_reduction <add>, %397, %cst_93 [1] : vector<16x16xf32> to vector<16xf32>
    %399 = vector.shape_cast %398 : vector<16xf32> to vector<16x1xf32>
    %400 = tpu.reciprocal %399 {approx = true} : vector<16x1xf32> -> vector<16x1xf32>
    %401 = vector.broadcast %400 : vector<16x1xf32> to vector<16x16xf32>
    %402 = arith.mulf %397, %401 : vector<16x16xf32>
    %403 = vector.broadcast %386 : vector<1x128xf32> to vector<16x128xf32>
    %404 = arith.mulf %359, %403 : vector<16x128xf32>
    %405 = arith.truncf %402 : vector<16x16xf32> to vector<16x16xbf16>
    %406 = arith.truncf %404 : vector<16x128xf32> to vector<16x128xbf16>
    %cst_94 = arith.constant dense<0.000000e+00> : vector<16x128xf32>
    %407 = tpu.matmul %405, %406, %cst_94 {dimension_numbers = #tpu.dot_dimension_numbers<[1], [0], [0], [1], [0, 0, 1, 1], [], []>} : vector<16x16xbf16>, vector<16x128xbf16>, vector<16x128xf32> -> vector<16x128xf32>
    %408 = arith.addf %385, %407 : vector<16x128xf32>
    %409 = vector.extract_strided_slice %35 {offsets = [112, 0], sizes = [16, 128], strides = [1, 1]} : vector<128x128xf32> to vector<16x128xf32>
    %410 = vector.extract_strided_slice %36 {offsets = [112, 0], sizes = [16, 128], strides = [1, 1]} : vector<128x128xf32> to vector<16x128xf32>
    %411 = arith.truncf %410 : vector<16x128xf32> to vector<16x128xbf16>
    %412 = vector.extract_strided_slice %37 {offsets = [112, 0], sizes = [16, 128], strides = [1, 1]} : vector<128x128xf32> to vector<16x128xf32>
    %c7 = arith.constant 7 : index
    %c0_95 = arith.constant 0 : index
    %c0_96 = arith.constant 0 : index
    %413 = vector.load %arg2[%c7, %c0_95, %c0_96] : memref<8x1x16xf32, #tpu.memory_space<vmem>>, vector<1x1x16xf32>
    %414 = vector.shape_cast %413 : vector<1x1x16xf32> to vector<1x16xf32>
    %cst_97 = arith.constant 0.000000e+00 : f32
    %415 = vector.broadcast %cst_97 : f32 to vector<16x128xf32>
    %416 = vector.extract_strided_slice %0 {offsets = [5, 0], sizes = [1, 128], strides = [1, 1]} : vector<8x128xf32> to vector<1x128xf32>
    %417 = vector.broadcast %416 : vector<1x128xf32> to vector<16x128xf32>
    %418 = arith.mulf %409, %417 : vector<16x128xf32>
    %419 = arith.truncf %418 : vector<16x128xf32> to vector<16x128xbf16>
    %cst_98 = arith.constant dense<0.000000e+00> : vector<16x16xf32>
    %420 = tpu.matmul %419, %411, %cst_98 {dimension_numbers = #tpu.dot_dimension_numbers<[1], [1], [0], [0], [0, 0, 1, 0], [], []>} : vector<16x128xbf16>, vector<16x128xbf16>, vector<16x16xf32> -> vector<16x16xf32>
    %421 = vector.broadcast %414 : vector<1x16xf32> to vector<16x16xf32>
    %422 = arith.addf %420, %421 : vector<16x16xf32>
    %cst_99 = arith.constant dense<0xFF800000> : vector<16xf32>
    %423 = vector.multi_reduction <maximumf>, %422, %cst_99 [1] : vector<16x16xf32> to vector<16xf32>
    %424 = vector.shape_cast %423 : vector<16xf32> to vector<16x1xf32>
    %425 = vector.broadcast %424 : vector<16x1xf32> to vector<16x16xf32>
    %426 = arith.subf %422, %425 : vector<16x16xf32>
    %427 = math.exp %426 : vector<16x16xf32>
    %cst_100 = arith.constant dense<0.000000e+00> : vector<16xf32>
    %428 = vector.multi_reduction <add>, %427, %cst_100 [1] : vector<16x16xf32> to vector<16xf32>
    %429 = vector.shape_cast %428 : vector<16xf32> to vector<16x1xf32>
    %430 = tpu.reciprocal %429 {approx = true} : vector<16x1xf32> -> vector<16x1xf32>
    %431 = vector.broadcast %430 : vector<16x1xf32> to vector<16x16xf32>
    %432 = arith.mulf %427, %431 : vector<16x16xf32>
    %433 = vector.broadcast %416 : vector<1x128xf32> to vector<16x128xf32>
    %434 = arith.mulf %412, %433 : vector<16x128xf32>
    %435 = arith.truncf %432 : vector<16x16xf32> to vector<16x16xbf16>
    %436 = arith.truncf %434 : vector<16x128xf32> to vector<16x128xbf16>
    %cst_101 = arith.constant dense<0.000000e+00> : vector<16x128xf32>
    %437 = tpu.matmul %435, %436, %cst_101 {dimension_numbers = #tpu.dot_dimension_numbers<[1], [0], [0], [1], [0, 0, 1, 1], [], []>} : vector<16x16xbf16>, vector<16x128xbf16>, vector<16x128xf32> -> vector<16x128xf32>
    %438 = arith.addf %415, %437 : vector<16x128xf32>
    %439 = vector.extract_strided_slice %0 {offsets = [6, 0], sizes = [1, 128], strides = [1, 1]} : vector<8x128xf32> to vector<1x128xf32>
    %440 = vector.broadcast %439 : vector<1x128xf32> to vector<16x128xf32>
    %441 = arith.mulf %409, %440 : vector<16x128xf32>
    %442 = arith.truncf %441 : vector<16x128xf32> to vector<16x128xbf16>
    %cst_102 = arith.constant dense<0.000000e+00> : vector<16x16xf32>
    %443 = tpu.matmul %442, %411, %cst_102 {dimension_numbers = #tpu.dot_dimension_numbers<[1], [1], [0], [0], [0, 0, 1, 0], [], []>} : vector<16x128xbf16>, vector<16x128xbf16>, vector<16x16xf32> -> vector<16x16xf32>
    %444 = vector.broadcast %414 : vector<1x16xf32> to vector<16x16xf32>
    %445 = arith.addf %443, %444 : vector<16x16xf32>
    %cst_103 = arith.constant dense<0xFF800000> : vector<16xf32>
    %446 = vector.multi_reduction <maximumf>, %445, %cst_103 [1] : vector<16x16xf32> to vector<16xf32>
    %447 = vector.shape_cast %446 : vector<16xf32> to vector<16x1xf32>
    %448 = vector.broadcast %447 : vector<16x1xf32> to vector<16x16xf32>
    %449 = arith.subf %445, %448 : vector<16x16xf32>
    %450 = math.exp %449 : vector<16x16xf32>
    %cst_104 = arith.constant dense<0.000000e+00> : vector<16xf32>
    %451 = vector.multi_reduction <add>, %450, %cst_104 [1] : vector<16x16xf32> to vector<16xf32>
    %452 = vector.shape_cast %451 : vector<16xf32> to vector<16x1xf32>
    %453 = tpu.reciprocal %452 {approx = true} : vector<16x1xf32> -> vector<16x1xf32>
    %454 = vector.broadcast %453 : vector<16x1xf32> to vector<16x16xf32>
    %455 = arith.mulf %450, %454 : vector<16x16xf32>
    %456 = vector.broadcast %439 : vector<1x128xf32> to vector<16x128xf32>
    %457 = arith.mulf %412, %456 : vector<16x128xf32>
    %458 = arith.truncf %455 : vector<16x16xf32> to vector<16x16xbf16>
    %459 = arith.truncf %457 : vector<16x128xf32> to vector<16x128xbf16>
    %cst_105 = arith.constant dense<0.000000e+00> : vector<16x128xf32>
    %460 = tpu.matmul %458, %459, %cst_105 {dimension_numbers = #tpu.dot_dimension_numbers<[1], [0], [0], [1], [0, 0, 1, 1], [], []>} : vector<16x16xbf16>, vector<16x128xbf16>, vector<16x128xf32> -> vector<16x128xf32>
    %461 = arith.addf %438, %460 : vector<16x128xf32>
    %462 = tpu.concatenate %90, %143, %196, %249, %302, %355, %408, %461 in 0 : vector<16x128xf32>, vector<16x128xf32>, vector<16x128xf32>, vector<16x128xf32>, vector<16x128xf32>, vector<16x128xf32>, vector<16x128xf32>, vector<16x128xf32> -> vector<128x128xf32>
    %c0_106 = arith.constant 0 : index
    %c0_107 = arith.constant 0 : index
    %c0_108 = arith.constant 0 : index
    %463 = vector.load %arg6[%c0_106, %c0_107, %c0_108] : memref<2x128x128xbf16, #tpu.memory_space<vmem>>, vector<1x128x128xbf16>
    %464 = vector.shape_cast %463 : vector<1x128x128xbf16> to vector<128x128xbf16>
    %465 = arith.truncf %462 : vector<128x128xf32> to vector<128x128xbf16>
    %cst_109 = arith.constant dense<0.000000e+00> : vector<128x128xf32>
    %466 = tpu.matmul %465, %464, %cst_109 {dimension_numbers = #tpu.dot_dimension_numbers<[1], [0], [0], [1], [0, 0, 1, 1], [], []>} : vector<128x128xbf16>, vector<128x128xbf16>, vector<128x128xf32> -> vector<128x128xf32>
    %467 = vector.extract_strided_slice %26 {offsets = [0, 0], sizes = [1, 128], strides = [1, 1]} : vector<8x128xf32> to vector<1x128xf32>
    %468 = vector.broadcast %467 : vector<1x128xf32> to vector<128x128xf32>
    %469 = arith.addf %466, %468 : vector<128x128xf32>
    %470 = arith.addf %24, %469 : vector<128x128xf32>
    %471 = vector.extract_strided_slice %26 {offsets = [2, 0], sizes = [1, 128], strides = [1, 1]} : vector<8x128xf32> to vector<1x128xf32>
    %472 = vector.extract_strided_slice %26 {offsets = [3, 0], sizes = [1, 128], strides = [1, 1]} : vector<8x128xf32> to vector<1x128xf32>
    %cst_110 = arith.constant dense<0.000000e+00> : vector<128xf32>
    %473 = vector.multi_reduction <add>, %470, %cst_110 [1] : vector<128x128xf32> to vector<128xf32>
    %474 = vector.shape_cast %473 : vector<128xf32> to vector<128x1xf32>
    %cst_111 = arith.constant 1.280000e+02 : f32
    %475 = vector.broadcast %cst_111 : f32 to vector<128x1xf32>
    %476 = arith.divf %474, %475 : vector<128x1xf32>
    %477 = vector.broadcast %476 : vector<128x1xf32> to vector<128x128xf32>
    %478 = arith.subf %470, %477 : vector<128x128xf32>
    %479 = arith.mulf %478, %478 : vector<128x128xf32>
    %cst_112 = arith.constant dense<0.000000e+00> : vector<128xf32>
    %480 = vector.multi_reduction <add>, %479, %cst_112 [1] : vector<128x128xf32> to vector<128xf32>
    %481 = vector.shape_cast %480 : vector<128xf32> to vector<128x1xf32>
    %cst_113 = arith.constant 1.280000e+02 : f32
    %482 = vector.broadcast %cst_113 : f32 to vector<128x1xf32>
    %483 = arith.divf %481, %482 : vector<128x1xf32>
    %cst_114 = arith.constant 9.99999974E-6 : f32
    %484 = vector.broadcast %cst_114 : f32 to vector<128x1xf32>
    %485 = arith.addf %483, %484 : vector<128x1xf32>
    %486 = math.rsqrt %485 : vector<128x1xf32>
    %487 = vector.broadcast %486 : vector<128x1xf32> to vector<128x128xf32>
    %488 = arith.mulf %478, %487 : vector<128x128xf32>
    %489 = vector.broadcast %471 : vector<1x128xf32> to vector<128x128xf32>
    %490 = arith.mulf %488, %489 : vector<128x128xf32>
    %491 = vector.broadcast %472 : vector<1x128xf32> to vector<128x128xf32>
    %492 = arith.addf %490, %491 : vector<128x128xf32>
    %493 = arith.truncf %492 : vector<128x128xf32> to vector<128x128xbf16>
    %c0_115 = arith.constant 0 : index
    %c0_116 = arith.constant 0 : index
    %c0_117 = arith.constant 0 : index
    %494 = vector.load %arg7[%c0_115, %c0_116, %c0_117] : memref<2x128x256xbf16, #tpu.memory_space<vmem>>, vector<1x128x256xbf16>
    %495 = vector.shape_cast %494 : vector<1x128x256xbf16> to vector<128x256xbf16>
    %cst_118 = arith.constant dense<0.000000e+00> : vector<128x256xf32>
    %496 = tpu.matmul %493, %495, %cst_118 {dimension_numbers = #tpu.dot_dimension_numbers<[1], [0], [0], [1], [0, 0, 1, 1], [], []>} : vector<128x128xbf16>, vector<128x256xbf16>, vector<128x256xf32> -> vector<128x256xf32>
    %c0_119 = arith.constant 0 : index
    %c0_120 = arith.constant 0 : index
    %c0_121 = arith.constant 0 : index
    %497 = vector.load %arg8[%c0_119, %c0_120, %c0_121] : memref<2x1x256xf32, #tpu.memory_space<vmem>>, vector<1x1x256xf32>
    %498 = vector.shape_cast %497 : vector<1x1x256xf32> to vector<1x256xf32>
    %499 = vector.broadcast %498 : vector<1x256xf32> to vector<128x256xf32>
    %500 = arith.addf %496, %499 : vector<128x256xf32>
    %501 = arith.mulf %500, %500 : vector<128x256xf32>
    %502 = arith.mulf %500, %501 : vector<128x256xf32>
    %cst_122 = arith.constant 4.471500e-02 : f32
    %503 = vector.broadcast %cst_122 : f32 to vector<128x256xf32>
    %504 = arith.mulf %503, %502 : vector<128x256xf32>
    %505 = arith.addf %500, %504 : vector<128x256xf32>
    %cst_123 = arith.constant 0.797884583 : f32
    %506 = vector.broadcast %cst_123 : f32 to vector<128x256xf32>
    %507 = arith.mulf %506, %505 : vector<128x256xf32>
    %508 = math.tanh %507 : vector<128x256xf32>
    %cst_124 = arith.constant 1.000000e+00 : f32
    %509 = vector.broadcast %cst_124 : f32 to vector<128x256xf32>
    %510 = arith.addf %509, %508 : vector<128x256xf32>
    %cst_125 = arith.constant 5.000000e-01 : f32
    %511 = vector.broadcast %cst_125 : f32 to vector<128x256xf32>
    %512 = arith.mulf %511, %510 : vector<128x256xf32>
    %513 = arith.mulf %500, %512 : vector<128x256xf32>
    %c0_126 = arith.constant 0 : index
    %c0_127 = arith.constant 0 : index
    %c0_128 = arith.constant 0 : index
    %514 = vector.load %arg9[%c0_126, %c0_127, %c0_128] : memref<2x256x128xbf16, #tpu.memory_space<vmem>>, vector<1x256x128xbf16>
    %515 = vector.shape_cast %514 : vector<1x256x128xbf16> to vector<256x128xbf16>
    %516 = arith.truncf %513 : vector<128x256xf32> to vector<128x256xbf16>
    %cst_129 = arith.constant dense<0.000000e+00> : vector<128x128xf32>
    %517 = tpu.matmul %516, %515, %cst_129 {dimension_numbers = #tpu.dot_dimension_numbers<[1], [0], [0], [1], [0, 0, 1, 1], [], []>} : vector<128x256xbf16>, vector<256x128xbf16>, vector<128x128xf32> -> vector<128x128xf32>
    %518 = vector.extract_strided_slice %26 {offsets = [1, 0], sizes = [1, 128], strides = [1, 1]} : vector<8x128xf32> to vector<1x128xf32>
    %519 = vector.broadcast %518 : vector<1x128xf32> to vector<128x128xf32>
    %520 = arith.addf %517, %519 : vector<128x128xf32>
    %521 = arith.addf %492, %520 : vector<128x128xf32>
    %522 = vector.extract_strided_slice %26 {offsets = [4, 0], sizes = [1, 128], strides = [1, 1]} : vector<8x128xf32> to vector<1x128xf32>
    %523 = vector.extract_strided_slice %26 {offsets = [5, 0], sizes = [1, 128], strides = [1, 1]} : vector<8x128xf32> to vector<1x128xf32>
    %cst_130 = arith.constant dense<0.000000e+00> : vector<128xf32>
    %524 = vector.multi_reduction <add>, %521, %cst_130 [1] : vector<128x128xf32> to vector<128xf32>
    %525 = vector.shape_cast %524 : vector<128xf32> to vector<128x1xf32>
    %cst_131 = arith.constant 1.280000e+02 : f32
    %526 = vector.broadcast %cst_131 : f32 to vector<128x1xf32>
    %527 = arith.divf %525, %526 : vector<128x1xf32>
    %528 = vector.broadcast %527 : vector<128x1xf32> to vector<128x128xf32>
    %529 = arith.subf %521, %528 : vector<128x128xf32>
    %530 = arith.mulf %529, %529 : vector<128x128xf32>
    %cst_132 = arith.constant dense<0.000000e+00> : vector<128xf32>
    %531 = vector.multi_reduction <add>, %530, %cst_132 [1] : vector<128x128xf32> to vector<128xf32>
    %532 = vector.shape_cast %531 : vector<128xf32> to vector<128x1xf32>
    %cst_133 = arith.constant 1.280000e+02 : f32
    %533 = vector.broadcast %cst_133 : f32 to vector<128x1xf32>
    %534 = arith.divf %532, %533 : vector<128x1xf32>
    %cst_134 = arith.constant 9.99999974E-6 : f32
    %535 = vector.broadcast %cst_134 : f32 to vector<128x1xf32>
    %536 = arith.addf %534, %535 : vector<128x1xf32>
    %537 = math.rsqrt %536 : vector<128x1xf32>
    %538 = vector.broadcast %537 : vector<128x1xf32> to vector<128x128xf32>
    %539 = arith.mulf %529, %538 : vector<128x128xf32>
    %540 = vector.broadcast %522 : vector<1x128xf32> to vector<128x128xf32>
    %541 = arith.mulf %539, %540 : vector<128x128xf32>
    %542 = vector.broadcast %523 : vector<1x128xf32> to vector<128x128xf32>
    %543 = arith.addf %541, %542 : vector<128x128xf32>
    %c1_135 = arith.constant 1 : index
    %c0_136 = arith.constant 0 : index
    %c0_137 = arith.constant 0 : index
    %544 = vector.load %arg10[%c1_135, %c0_136, %c0_137] : memref<2x8x128xf32, #tpu.memory_space<vmem>>, vector<1x8x128xf32>
    %545 = vector.shape_cast %544 : vector<1x8x128xf32> to vector<8x128xf32>
    %546 = arith.truncf %543 : vector<128x128xf32> to vector<128x128xbf16>
    %c1_138 = arith.constant 1 : index
    %c0_139 = arith.constant 0 : index
    %c0_140 = arith.constant 0 : index
    %547 = vector.load %arg4[%c1_138, %c0_139, %c0_140] : memref<2x128x384xbf16, #tpu.memory_space<vmem>>, vector<1x128x384xbf16>
    %548 = vector.shape_cast %547 : vector<1x128x384xbf16> to vector<128x384xbf16>
    %cst_141 = arith.constant dense<0.000000e+00> : vector<128x384xf32>
    %549 = tpu.matmul %546, %548, %cst_141 {dimension_numbers = #tpu.dot_dimension_numbers<[1], [0], [0], [1], [0, 0, 1, 1], [], []>} : vector<128x128xbf16>, vector<128x384xbf16>, vector<128x384xf32> -> vector<128x384xf32>
    %c1_142 = arith.constant 1 : index
    %c0_143 = arith.constant 0 : index
    %c0_144 = arith.constant 0 : index
    %550 = vector.load %arg5[%c1_142, %c0_143, %c0_144] : memref<2x1x384xf32, #tpu.memory_space<vmem>>, vector<1x1x384xf32>
    %551 = vector.shape_cast %550 : vector<1x1x384xf32> to vector<1x384xf32>
    %552 = vector.broadcast %551 : vector<1x384xf32> to vector<128x384xf32>
    %553 = arith.addf %549, %552 : vector<128x384xf32>
    %554 = vector.extract_strided_slice %553 {offsets = [0, 0], sizes = [128, 128], strides = [1, 1]} : vector<128x384xf32> to vector<128x128xf32>
    %555 = vector.extract_strided_slice %553 {offsets = [0, 128], sizes = [128, 128], strides = [1, 1]} : vector<128x384xf32> to vector<128x128xf32>
    %556 = vector.extract_strided_slice %553 {offsets = [0, 256], sizes = [128, 128], strides = [1, 1]} : vector<128x384xf32> to vector<128x128xf32>
    %557 = vector.extract_strided_slice %554 {offsets = [0, 0], sizes = [16, 128], strides = [1, 1]} : vector<128x128xf32> to vector<16x128xf32>
    %558 = vector.extract_strided_slice %555 {offsets = [0, 0], sizes = [16, 128], strides = [1, 1]} : vector<128x128xf32> to vector<16x128xf32>
    %559 = arith.truncf %558 : vector<16x128xf32> to vector<16x128xbf16>
    %560 = vector.extract_strided_slice %556 {offsets = [0, 0], sizes = [16, 128], strides = [1, 1]} : vector<128x128xf32> to vector<16x128xf32>
    %c0_145 = arith.constant 0 : index
    %c0_146 = arith.constant 0 : index
    %c0_147 = arith.constant 0 : index
    %561 = vector.load %arg2[%c0_145, %c0_146, %c0_147] : memref<8x1x16xf32, #tpu.memory_space<vmem>>, vector<1x1x16xf32>
    %562 = vector.shape_cast %561 : vector<1x1x16xf32> to vector<1x16xf32>
    %cst_148 = arith.constant 0.000000e+00 : f32
    %563 = vector.broadcast %cst_148 : f32 to vector<16x128xf32>
    %564 = vector.extract_strided_slice %0 {offsets = [5, 0], sizes = [1, 128], strides = [1, 1]} : vector<8x128xf32> to vector<1x128xf32>
    %565 = vector.broadcast %564 : vector<1x128xf32> to vector<16x128xf32>
    %566 = arith.mulf %557, %565 : vector<16x128xf32>
    %567 = arith.truncf %566 : vector<16x128xf32> to vector<16x128xbf16>
    %cst_149 = arith.constant dense<0.000000e+00> : vector<16x16xf32>
    %568 = tpu.matmul %567, %559, %cst_149 {dimension_numbers = #tpu.dot_dimension_numbers<[1], [1], [0], [0], [0, 0, 1, 0], [], []>} : vector<16x128xbf16>, vector<16x128xbf16>, vector<16x16xf32> -> vector<16x16xf32>
    %569 = vector.broadcast %562 : vector<1x16xf32> to vector<16x16xf32>
    %570 = arith.addf %568, %569 : vector<16x16xf32>
    %cst_150 = arith.constant dense<0xFF800000> : vector<16xf32>
    %571 = vector.multi_reduction <maximumf>, %570, %cst_150 [1] : vector<16x16xf32> to vector<16xf32>
    %572 = vector.shape_cast %571 : vector<16xf32> to vector<16x1xf32>
    %573 = vector.broadcast %572 : vector<16x1xf32> to vector<16x16xf32>
    %574 = arith.subf %570, %573 : vector<16x16xf32>
    %575 = math.exp %574 : vector<16x16xf32>
    %cst_151 = arith.constant dense<0.000000e+00> : vector<16xf32>
    %576 = vector.multi_reduction <add>, %575, %cst_151 [1] : vector<16x16xf32> to vector<16xf32>
    %577 = vector.shape_cast %576 : vector<16xf32> to vector<16x1xf32>
    %578 = tpu.reciprocal %577 {approx = true} : vector<16x1xf32> -> vector<16x1xf32>
    %579 = vector.broadcast %578 : vector<16x1xf32> to vector<16x16xf32>
    %580 = arith.mulf %575, %579 : vector<16x16xf32>
    %581 = vector.broadcast %564 : vector<1x128xf32> to vector<16x128xf32>
    %582 = arith.mulf %560, %581 : vector<16x128xf32>
    %583 = arith.truncf %580 : vector<16x16xf32> to vector<16x16xbf16>
    %584 = arith.truncf %582 : vector<16x128xf32> to vector<16x128xbf16>
    %cst_152 = arith.constant dense<0.000000e+00> : vector<16x128xf32>
    %585 = tpu.matmul %583, %584, %cst_152 {dimension_numbers = #tpu.dot_dimension_numbers<[1], [0], [0], [1], [0, 0, 1, 1], [], []>} : vector<16x16xbf16>, vector<16x128xbf16>, vector<16x128xf32> -> vector<16x128xf32>
    %586 = arith.addf %563, %585 : vector<16x128xf32>
    %587 = vector.extract_strided_slice %0 {offsets = [6, 0], sizes = [1, 128], strides = [1, 1]} : vector<8x128xf32> to vector<1x128xf32>
    %588 = vector.broadcast %587 : vector<1x128xf32> to vector<16x128xf32>
    %589 = arith.mulf %557, %588 : vector<16x128xf32>
    %590 = arith.truncf %589 : vector<16x128xf32> to vector<16x128xbf16>
    %cst_153 = arith.constant dense<0.000000e+00> : vector<16x16xf32>
    %591 = tpu.matmul %590, %559, %cst_153 {dimension_numbers = #tpu.dot_dimension_numbers<[1], [1], [0], [0], [0, 0, 1, 0], [], []>} : vector<16x128xbf16>, vector<16x128xbf16>, vector<16x16xf32> -> vector<16x16xf32>
    %592 = vector.broadcast %562 : vector<1x16xf32> to vector<16x16xf32>
    %593 = arith.addf %591, %592 : vector<16x16xf32>
    %cst_154 = arith.constant dense<0xFF800000> : vector<16xf32>
    %594 = vector.multi_reduction <maximumf>, %593, %cst_154 [1] : vector<16x16xf32> to vector<16xf32>
    %595 = vector.shape_cast %594 : vector<16xf32> to vector<16x1xf32>
    %596 = vector.broadcast %595 : vector<16x1xf32> to vector<16x16xf32>
    %597 = arith.subf %593, %596 : vector<16x16xf32>
    %598 = math.exp %597 : vector<16x16xf32>
    %cst_155 = arith.constant dense<0.000000e+00> : vector<16xf32>
    %599 = vector.multi_reduction <add>, %598, %cst_155 [1] : vector<16x16xf32> to vector<16xf32>
    %600 = vector.shape_cast %599 : vector<16xf32> to vector<16x1xf32>
    %601 = tpu.reciprocal %600 {approx = true} : vector<16x1xf32> -> vector<16x1xf32>
    %602 = vector.broadcast %601 : vector<16x1xf32> to vector<16x16xf32>
    %603 = arith.mulf %598, %602 : vector<16x16xf32>
    %604 = vector.broadcast %587 : vector<1x128xf32> to vector<16x128xf32>
    %605 = arith.mulf %560, %604 : vector<16x128xf32>
    %606 = arith.truncf %603 : vector<16x16xf32> to vector<16x16xbf16>
    %607 = arith.truncf %605 : vector<16x128xf32> to vector<16x128xbf16>
    %cst_156 = arith.constant dense<0.000000e+00> : vector<16x128xf32>
    %608 = tpu.matmul %606, %607, %cst_156 {dimension_numbers = #tpu.dot_dimension_numbers<[1], [0], [0], [1], [0, 0, 1, 1], [], []>} : vector<16x16xbf16>, vector<16x128xbf16>, vector<16x128xf32> -> vector<16x128xf32>
    %609 = arith.addf %586, %608 : vector<16x128xf32>
    %610 = vector.extract_strided_slice %554 {offsets = [16, 0], sizes = [16, 128], strides = [1, 1]} : vector<128x128xf32> to vector<16x128xf32>
    %611 = vector.extract_strided_slice %555 {offsets = [16, 0], sizes = [16, 128], strides = [1, 1]} : vector<128x128xf32> to vector<16x128xf32>
    %612 = arith.truncf %611 : vector<16x128xf32> to vector<16x128xbf16>
    %613 = vector.extract_strided_slice %556 {offsets = [16, 0], sizes = [16, 128], strides = [1, 1]} : vector<128x128xf32> to vector<16x128xf32>
    %c1_157 = arith.constant 1 : index
    %c0_158 = arith.constant 0 : index
    %c0_159 = arith.constant 0 : index
    %614 = vector.load %arg2[%c1_157, %c0_158, %c0_159] : memref<8x1x16xf32, #tpu.memory_space<vmem>>, vector<1x1x16xf32>
    %615 = vector.shape_cast %614 : vector<1x1x16xf32> to vector<1x16xf32>
    %cst_160 = arith.constant 0.000000e+00 : f32
    %616 = vector.broadcast %cst_160 : f32 to vector<16x128xf32>
    %617 = vector.extract_strided_slice %0 {offsets = [5, 0], sizes = [1, 128], strides = [1, 1]} : vector<8x128xf32> to vector<1x128xf32>
    %618 = vector.broadcast %617 : vector<1x128xf32> to vector<16x128xf32>
    %619 = arith.mulf %610, %618 : vector<16x128xf32>
    %620 = arith.truncf %619 : vector<16x128xf32> to vector<16x128xbf16>
    %cst_161 = arith.constant dense<0.000000e+00> : vector<16x16xf32>
    %621 = tpu.matmul %620, %612, %cst_161 {dimension_numbers = #tpu.dot_dimension_numbers<[1], [1], [0], [0], [0, 0, 1, 0], [], []>} : vector<16x128xbf16>, vector<16x128xbf16>, vector<16x16xf32> -> vector<16x16xf32>
    %622 = vector.broadcast %615 : vector<1x16xf32> to vector<16x16xf32>
    %623 = arith.addf %621, %622 : vector<16x16xf32>
    %cst_162 = arith.constant dense<0xFF800000> : vector<16xf32>
    %624 = vector.multi_reduction <maximumf>, %623, %cst_162 [1] : vector<16x16xf32> to vector<16xf32>
    %625 = vector.shape_cast %624 : vector<16xf32> to vector<16x1xf32>
    %626 = vector.broadcast %625 : vector<16x1xf32> to vector<16x16xf32>
    %627 = arith.subf %623, %626 : vector<16x16xf32>
    %628 = math.exp %627 : vector<16x16xf32>
    %cst_163 = arith.constant dense<0.000000e+00> : vector<16xf32>
    %629 = vector.multi_reduction <add>, %628, %cst_163 [1] : vector<16x16xf32> to vector<16xf32>
    %630 = vector.shape_cast %629 : vector<16xf32> to vector<16x1xf32>
    %631 = tpu.reciprocal %630 {approx = true} : vector<16x1xf32> -> vector<16x1xf32>
    %632 = vector.broadcast %631 : vector<16x1xf32> to vector<16x16xf32>
    %633 = arith.mulf %628, %632 : vector<16x16xf32>
    %634 = vector.broadcast %617 : vector<1x128xf32> to vector<16x128xf32>
    %635 = arith.mulf %613, %634 : vector<16x128xf32>
    %636 = arith.truncf %633 : vector<16x16xf32> to vector<16x16xbf16>
    %637 = arith.truncf %635 : vector<16x128xf32> to vector<16x128xbf16>
    %cst_164 = arith.constant dense<0.000000e+00> : vector<16x128xf32>
    %638 = tpu.matmul %636, %637, %cst_164 {dimension_numbers = #tpu.dot_dimension_numbers<[1], [0], [0], [1], [0, 0, 1, 1], [], []>} : vector<16x16xbf16>, vector<16x128xbf16>, vector<16x128xf32> -> vector<16x128xf32>
    %639 = arith.addf %616, %638 : vector<16x128xf32>
    %640 = vector.extract_strided_slice %0 {offsets = [6, 0], sizes = [1, 128], strides = [1, 1]} : vector<8x128xf32> to vector<1x128xf32>
    %641 = vector.broadcast %640 : vector<1x128xf32> to vector<16x128xf32>
    %642 = arith.mulf %610, %641 : vector<16x128xf32>
    %643 = arith.truncf %642 : vector<16x128xf32> to vector<16x128xbf16>
    %cst_165 = arith.constant dense<0.000000e+00> : vector<16x16xf32>
    %644 = tpu.matmul %643, %612, %cst_165 {dimension_numbers = #tpu.dot_dimension_numbers<[1], [1], [0], [0], [0, 0, 1, 0], [], []>} : vector<16x128xbf16>, vector<16x128xbf16>, vector<16x16xf32> -> vector<16x16xf32>
    %645 = vector.broadcast %615 : vector<1x16xf32> to vector<16x16xf32>
    %646 = arith.addf %644, %645 : vector<16x16xf32>
    %cst_166 = arith.constant dense<0xFF800000> : vector<16xf32>
    %647 = vector.multi_reduction <maximumf>, %646, %cst_166 [1] : vector<16x16xf32> to vector<16xf32>
    %648 = vector.shape_cast %647 : vector<16xf32> to vector<16x1xf32>
    %649 = vector.broadcast %648 : vector<16x1xf32> to vector<16x16xf32>
    %650 = arith.subf %646, %649 : vector<16x16xf32>
    %651 = math.exp %650 : vector<16x16xf32>
    %cst_167 = arith.constant dense<0.000000e+00> : vector<16xf32>
    %652 = vector.multi_reduction <add>, %651, %cst_167 [1] : vector<16x16xf32> to vector<16xf32>
    %653 = vector.shape_cast %652 : vector<16xf32> to vector<16x1xf32>
    %654 = tpu.reciprocal %653 {approx = true} : vector<16x1xf32> -> vector<16x1xf32>
    %655 = vector.broadcast %654 : vector<16x1xf32> to vector<16x16xf32>
    %656 = arith.mulf %651, %655 : vector<16x16xf32>
    %657 = vector.broadcast %640 : vector<1x128xf32> to vector<16x128xf32>
    %658 = arith.mulf %613, %657 : vector<16x128xf32>
    %659 = arith.truncf %656 : vector<16x16xf32> to vector<16x16xbf16>
    %660 = arith.truncf %658 : vector<16x128xf32> to vector<16x128xbf16>
    %cst_168 = arith.constant dense<0.000000e+00> : vector<16x128xf32>
    %661 = tpu.matmul %659, %660, %cst_168 {dimension_numbers = #tpu.dot_dimension_numbers<[1], [0], [0], [1], [0, 0, 1, 1], [], []>} : vector<16x16xbf16>, vector<16x128xbf16>, vector<16x128xf32> -> vector<16x128xf32>
    %662 = arith.addf %639, %661 : vector<16x128xf32>
    %663 = vector.extract_strided_slice %554 {offsets = [32, 0], sizes = [16, 128], strides = [1, 1]} : vector<128x128xf32> to vector<16x128xf32>
    %664 = vector.extract_strided_slice %555 {offsets = [32, 0], sizes = [16, 128], strides = [1, 1]} : vector<128x128xf32> to vector<16x128xf32>
    %665 = arith.truncf %664 : vector<16x128xf32> to vector<16x128xbf16>
    %666 = vector.extract_strided_slice %556 {offsets = [32, 0], sizes = [16, 128], strides = [1, 1]} : vector<128x128xf32> to vector<16x128xf32>
    %c2_169 = arith.constant 2 : index
    %c0_170 = arith.constant 0 : index
    %c0_171 = arith.constant 0 : index
    %667 = vector.load %arg2[%c2_169, %c0_170, %c0_171] : memref<8x1x16xf32, #tpu.memory_space<vmem>>, vector<1x1x16xf32>
    %668 = vector.shape_cast %667 : vector<1x1x16xf32> to vector<1x16xf32>
    %cst_172 = arith.constant 0.000000e+00 : f32
    %669 = vector.broadcast %cst_172 : f32 to vector<16x128xf32>
    %670 = vector.extract_strided_slice %0 {offsets = [5, 0], sizes = [1, 128], strides = [1, 1]} : vector<8x128xf32> to vector<1x128xf32>
    %671 = vector.broadcast %670 : vector<1x128xf32> to vector<16x128xf32>
    %672 = arith.mulf %663, %671 : vector<16x128xf32>
    %673 = arith.truncf %672 : vector<16x128xf32> to vector<16x128xbf16>
    %cst_173 = arith.constant dense<0.000000e+00> : vector<16x16xf32>
    %674 = tpu.matmul %673, %665, %cst_173 {dimension_numbers = #tpu.dot_dimension_numbers<[1], [1], [0], [0], [0, 0, 1, 0], [], []>} : vector<16x128xbf16>, vector<16x128xbf16>, vector<16x16xf32> -> vector<16x16xf32>
    %675 = vector.broadcast %668 : vector<1x16xf32> to vector<16x16xf32>
    %676 = arith.addf %674, %675 : vector<16x16xf32>
    %cst_174 = arith.constant dense<0xFF800000> : vector<16xf32>
    %677 = vector.multi_reduction <maximumf>, %676, %cst_174 [1] : vector<16x16xf32> to vector<16xf32>
    %678 = vector.shape_cast %677 : vector<16xf32> to vector<16x1xf32>
    %679 = vector.broadcast %678 : vector<16x1xf32> to vector<16x16xf32>
    %680 = arith.subf %676, %679 : vector<16x16xf32>
    %681 = math.exp %680 : vector<16x16xf32>
    %cst_175 = arith.constant dense<0.000000e+00> : vector<16xf32>
    %682 = vector.multi_reduction <add>, %681, %cst_175 [1] : vector<16x16xf32> to vector<16xf32>
    %683 = vector.shape_cast %682 : vector<16xf32> to vector<16x1xf32>
    %684 = tpu.reciprocal %683 {approx = true} : vector<16x1xf32> -> vector<16x1xf32>
    %685 = vector.broadcast %684 : vector<16x1xf32> to vector<16x16xf32>
    %686 = arith.mulf %681, %685 : vector<16x16xf32>
    %687 = vector.broadcast %670 : vector<1x128xf32> to vector<16x128xf32>
    %688 = arith.mulf %666, %687 : vector<16x128xf32>
    %689 = arith.truncf %686 : vector<16x16xf32> to vector<16x16xbf16>
    %690 = arith.truncf %688 : vector<16x128xf32> to vector<16x128xbf16>
    %cst_176 = arith.constant dense<0.000000e+00> : vector<16x128xf32>
    %691 = tpu.matmul %689, %690, %cst_176 {dimension_numbers = #tpu.dot_dimension_numbers<[1], [0], [0], [1], [0, 0, 1, 1], [], []>} : vector<16x16xbf16>, vector<16x128xbf16>, vector<16x128xf32> -> vector<16x128xf32>
    %692 = arith.addf %669, %691 : vector<16x128xf32>
    %693 = vector.extract_strided_slice %0 {offsets = [6, 0], sizes = [1, 128], strides = [1, 1]} : vector<8x128xf32> to vector<1x128xf32>
    %694 = vector.broadcast %693 : vector<1x128xf32> to vector<16x128xf32>
    %695 = arith.mulf %663, %694 : vector<16x128xf32>
    %696 = arith.truncf %695 : vector<16x128xf32> to vector<16x128xbf16>
    %cst_177 = arith.constant dense<0.000000e+00> : vector<16x16xf32>
    %697 = tpu.matmul %696, %665, %cst_177 {dimension_numbers = #tpu.dot_dimension_numbers<[1], [1], [0], [0], [0, 0, 1, 0], [], []>} : vector<16x128xbf16>, vector<16x128xbf16>, vector<16x16xf32> -> vector<16x16xf32>
    %698 = vector.broadcast %668 : vector<1x16xf32> to vector<16x16xf32>
    %699 = arith.addf %697, %698 : vector<16x16xf32>
    %cst_178 = arith.constant dense<0xFF800000> : vector<16xf32>
    %700 = vector.multi_reduction <maximumf>, %699, %cst_178 [1] : vector<16x16xf32> to vector<16xf32>
    %701 = vector.shape_cast %700 : vector<16xf32> to vector<16x1xf32>
    %702 = vector.broadcast %701 : vector<16x1xf32> to vector<16x16xf32>
    %703 = arith.subf %699, %702 : vector<16x16xf32>
    %704 = math.exp %703 : vector<16x16xf32>
    %cst_179 = arith.constant dense<0.000000e+00> : vector<16xf32>
    %705 = vector.multi_reduction <add>, %704, %cst_179 [1] : vector<16x16xf32> to vector<16xf32>
    %706 = vector.shape_cast %705 : vector<16xf32> to vector<16x1xf32>
    %707 = tpu.reciprocal %706 {approx = true} : vector<16x1xf32> -> vector<16x1xf32>
    %708 = vector.broadcast %707 : vector<16x1xf32> to vector<16x16xf32>
    %709 = arith.mulf %704, %708 : vector<16x16xf32>
    %710 = vector.broadcast %693 : vector<1x128xf32> to vector<16x128xf32>
    %711 = arith.mulf %666, %710 : vector<16x128xf32>
    %712 = arith.truncf %709 : vector<16x16xf32> to vector<16x16xbf16>
    %713 = arith.truncf %711 : vector<16x128xf32> to vector<16x128xbf16>
    %cst_180 = arith.constant dense<0.000000e+00> : vector<16x128xf32>
    %714 = tpu.matmul %712, %713, %cst_180 {dimension_numbers = #tpu.dot_dimension_numbers<[1], [0], [0], [1], [0, 0, 1, 1], [], []>} : vector<16x16xbf16>, vector<16x128xbf16>, vector<16x128xf32> -> vector<16x128xf32>
    %715 = arith.addf %692, %714 : vector<16x128xf32>
    %716 = vector.extract_strided_slice %554 {offsets = [48, 0], sizes = [16, 128], strides = [1, 1]} : vector<128x128xf32> to vector<16x128xf32>
    %717 = vector.extract_strided_slice %555 {offsets = [48, 0], sizes = [16, 128], strides = [1, 1]} : vector<128x128xf32> to vector<16x128xf32>
    %718 = arith.truncf %717 : vector<16x128xf32> to vector<16x128xbf16>
    %719 = vector.extract_strided_slice %556 {offsets = [48, 0], sizes = [16, 128], strides = [1, 1]} : vector<128x128xf32> to vector<16x128xf32>
    %c3_181 = arith.constant 3 : index
    %c0_182 = arith.constant 0 : index
    %c0_183 = arith.constant 0 : index
    %720 = vector.load %arg2[%c3_181, %c0_182, %c0_183] : memref<8x1x16xf32, #tpu.memory_space<vmem>>, vector<1x1x16xf32>
    %721 = vector.shape_cast %720 : vector<1x1x16xf32> to vector<1x16xf32>
    %cst_184 = arith.constant 0.000000e+00 : f32
    %722 = vector.broadcast %cst_184 : f32 to vector<16x128xf32>
    %723 = vector.extract_strided_slice %0 {offsets = [5, 0], sizes = [1, 128], strides = [1, 1]} : vector<8x128xf32> to vector<1x128xf32>
    %724 = vector.broadcast %723 : vector<1x128xf32> to vector<16x128xf32>
    %725 = arith.mulf %716, %724 : vector<16x128xf32>
    %726 = arith.truncf %725 : vector<16x128xf32> to vector<16x128xbf16>
    %cst_185 = arith.constant dense<0.000000e+00> : vector<16x16xf32>
    %727 = tpu.matmul %726, %718, %cst_185 {dimension_numbers = #tpu.dot_dimension_numbers<[1], [1], [0], [0], [0, 0, 1, 0], [], []>} : vector<16x128xbf16>, vector<16x128xbf16>, vector<16x16xf32> -> vector<16x16xf32>
    %728 = vector.broadcast %721 : vector<1x16xf32> to vector<16x16xf32>
    %729 = arith.addf %727, %728 : vector<16x16xf32>
    %cst_186 = arith.constant dense<0xFF800000> : vector<16xf32>
    %730 = vector.multi_reduction <maximumf>, %729, %cst_186 [1] : vector<16x16xf32> to vector<16xf32>
    %731 = vector.shape_cast %730 : vector<16xf32> to vector<16x1xf32>
    %732 = vector.broadcast %731 : vector<16x1xf32> to vector<16x16xf32>
    %733 = arith.subf %729, %732 : vector<16x16xf32>
    %734 = math.exp %733 : vector<16x16xf32>
    %cst_187 = arith.constant dense<0.000000e+00> : vector<16xf32>
    %735 = vector.multi_reduction <add>, %734, %cst_187 [1] : vector<16x16xf32> to vector<16xf32>
    %736 = vector.shape_cast %735 : vector<16xf32> to vector<16x1xf32>
    %737 = tpu.reciprocal %736 {approx = true} : vector<16x1xf32> -> vector<16x1xf32>
    %738 = vector.broadcast %737 : vector<16x1xf32> to vector<16x16xf32>
    %739 = arith.mulf %734, %738 : vector<16x16xf32>
    %740 = vector.broadcast %723 : vector<1x128xf32> to vector<16x128xf32>
    %741 = arith.mulf %719, %740 : vector<16x128xf32>
    %742 = arith.truncf %739 : vector<16x16xf32> to vector<16x16xbf16>
    %743 = arith.truncf %741 : vector<16x128xf32> to vector<16x128xbf16>
    %cst_188 = arith.constant dense<0.000000e+00> : vector<16x128xf32>
    %744 = tpu.matmul %742, %743, %cst_188 {dimension_numbers = #tpu.dot_dimension_numbers<[1], [0], [0], [1], [0, 0, 1, 1], [], []>} : vector<16x16xbf16>, vector<16x128xbf16>, vector<16x128xf32> -> vector<16x128xf32>
    %745 = arith.addf %722, %744 : vector<16x128xf32>
    %746 = vector.extract_strided_slice %0 {offsets = [6, 0], sizes = [1, 128], strides = [1, 1]} : vector<8x128xf32> to vector<1x128xf32>
    %747 = vector.broadcast %746 : vector<1x128xf32> to vector<16x128xf32>
    %748 = arith.mulf %716, %747 : vector<16x128xf32>
    %749 = arith.truncf %748 : vector<16x128xf32> to vector<16x128xbf16>
    %cst_189 = arith.constant dense<0.000000e+00> : vector<16x16xf32>
    %750 = tpu.matmul %749, %718, %cst_189 {dimension_numbers = #tpu.dot_dimension_numbers<[1], [1], [0], [0], [0, 0, 1, 0], [], []>} : vector<16x128xbf16>, vector<16x128xbf16>, vector<16x16xf32> -> vector<16x16xf32>
    %751 = vector.broadcast %721 : vector<1x16xf32> to vector<16x16xf32>
    %752 = arith.addf %750, %751 : vector<16x16xf32>
    %cst_190 = arith.constant dense<0xFF800000> : vector<16xf32>
    %753 = vector.multi_reduction <maximumf>, %752, %cst_190 [1] : vector<16x16xf32> to vector<16xf32>
    %754 = vector.shape_cast %753 : vector<16xf32> to vector<16x1xf32>
    %755 = vector.broadcast %754 : vector<16x1xf32> to vector<16x16xf32>
    %756 = arith.subf %752, %755 : vector<16x16xf32>
    %757 = math.exp %756 : vector<16x16xf32>
    %cst_191 = arith.constant dense<0.000000e+00> : vector<16xf32>
    %758 = vector.multi_reduction <add>, %757, %cst_191 [1] : vector<16x16xf32> to vector<16xf32>
    %759 = vector.shape_cast %758 : vector<16xf32> to vector<16x1xf32>
    %760 = tpu.reciprocal %759 {approx = true} : vector<16x1xf32> -> vector<16x1xf32>
    %761 = vector.broadcast %760 : vector<16x1xf32> to vector<16x16xf32>
    %762 = arith.mulf %757, %761 : vector<16x16xf32>
    %763 = vector.broadcast %746 : vector<1x128xf32> to vector<16x128xf32>
    %764 = arith.mulf %719, %763 : vector<16x128xf32>
    %765 = arith.truncf %762 : vector<16x16xf32> to vector<16x16xbf16>
    %766 = arith.truncf %764 : vector<16x128xf32> to vector<16x128xbf16>
    %cst_192 = arith.constant dense<0.000000e+00> : vector<16x128xf32>
    %767 = tpu.matmul %765, %766, %cst_192 {dimension_numbers = #tpu.dot_dimension_numbers<[1], [0], [0], [1], [0, 0, 1, 1], [], []>} : vector<16x16xbf16>, vector<16x128xbf16>, vector<16x128xf32> -> vector<16x128xf32>
    %768 = arith.addf %745, %767 : vector<16x128xf32>
    %769 = vector.extract_strided_slice %554 {offsets = [64, 0], sizes = [16, 128], strides = [1, 1]} : vector<128x128xf32> to vector<16x128xf32>
    %770 = vector.extract_strided_slice %555 {offsets = [64, 0], sizes = [16, 128], strides = [1, 1]} : vector<128x128xf32> to vector<16x128xf32>
    %771 = arith.truncf %770 : vector<16x128xf32> to vector<16x128xbf16>
    %772 = vector.extract_strided_slice %556 {offsets = [64, 0], sizes = [16, 128], strides = [1, 1]} : vector<128x128xf32> to vector<16x128xf32>
    %c4_193 = arith.constant 4 : index
    %c0_194 = arith.constant 0 : index
    %c0_195 = arith.constant 0 : index
    %773 = vector.load %arg2[%c4_193, %c0_194, %c0_195] : memref<8x1x16xf32, #tpu.memory_space<vmem>>, vector<1x1x16xf32>
    %774 = vector.shape_cast %773 : vector<1x1x16xf32> to vector<1x16xf32>
    %cst_196 = arith.constant 0.000000e+00 : f32
    %775 = vector.broadcast %cst_196 : f32 to vector<16x128xf32>
    %776 = vector.extract_strided_slice %0 {offsets = [5, 0], sizes = [1, 128], strides = [1, 1]} : vector<8x128xf32> to vector<1x128xf32>
    %777 = vector.broadcast %776 : vector<1x128xf32> to vector<16x128xf32>
    %778 = arith.mulf %769, %777 : vector<16x128xf32>
    %779 = arith.truncf %778 : vector<16x128xf32> to vector<16x128xbf16>
    %cst_197 = arith.constant dense<0.000000e+00> : vector<16x16xf32>
    %780 = tpu.matmul %779, %771, %cst_197 {dimension_numbers = #tpu.dot_dimension_numbers<[1], [1], [0], [0], [0, 0, 1, 0], [], []>} : vector<16x128xbf16>, vector<16x128xbf16>, vector<16x16xf32> -> vector<16x16xf32>
    %781 = vector.broadcast %774 : vector<1x16xf32> to vector<16x16xf32>
    %782 = arith.addf %780, %781 : vector<16x16xf32>
    %cst_198 = arith.constant dense<0xFF800000> : vector<16xf32>
    %783 = vector.multi_reduction <maximumf>, %782, %cst_198 [1] : vector<16x16xf32> to vector<16xf32>
    %784 = vector.shape_cast %783 : vector<16xf32> to vector<16x1xf32>
    %785 = vector.broadcast %784 : vector<16x1xf32> to vector<16x16xf32>
    %786 = arith.subf %782, %785 : vector<16x16xf32>
    %787 = math.exp %786 : vector<16x16xf32>
    %cst_199 = arith.constant dense<0.000000e+00> : vector<16xf32>
    %788 = vector.multi_reduction <add>, %787, %cst_199 [1] : vector<16x16xf32> to vector<16xf32>
    %789 = vector.shape_cast %788 : vector<16xf32> to vector<16x1xf32>
    %790 = tpu.reciprocal %789 {approx = true} : vector<16x1xf32> -> vector<16x1xf32>
    %791 = vector.broadcast %790 : vector<16x1xf32> to vector<16x16xf32>
    %792 = arith.mulf %787, %791 : vector<16x16xf32>
    %793 = vector.broadcast %776 : vector<1x128xf32> to vector<16x128xf32>
    %794 = arith.mulf %772, %793 : vector<16x128xf32>
    %795 = arith.truncf %792 : vector<16x16xf32> to vector<16x16xbf16>
    %796 = arith.truncf %794 : vector<16x128xf32> to vector<16x128xbf16>
    %cst_200 = arith.constant dense<0.000000e+00> : vector<16x128xf32>
    %797 = tpu.matmul %795, %796, %cst_200 {dimension_numbers = #tpu.dot_dimension_numbers<[1], [0], [0], [1], [0, 0, 1, 1], [], []>} : vector<16x16xbf16>, vector<16x128xbf16>, vector<16x128xf32> -> vector<16x128xf32>
    %798 = arith.addf %775, %797 : vector<16x128xf32>
    %799 = vector.extract_strided_slice %0 {offsets = [6, 0], sizes = [1, 128], strides = [1, 1]} : vector<8x128xf32> to vector<1x128xf32>
    %800 = vector.broadcast %799 : vector<1x128xf32> to vector<16x128xf32>
    %801 = arith.mulf %769, %800 : vector<16x128xf32>
    %802 = arith.truncf %801 : vector<16x128xf32> to vector<16x128xbf16>
    %cst_201 = arith.constant dense<0.000000e+00> : vector<16x16xf32>
    %803 = tpu.matmul %802, %771, %cst_201 {dimension_numbers = #tpu.dot_dimension_numbers<[1], [1], [0], [0], [0, 0, 1, 0], [], []>} : vector<16x128xbf16>, vector<16x128xbf16>, vector<16x16xf32> -> vector<16x16xf32>
    %804 = vector.broadcast %774 : vector<1x16xf32> to vector<16x16xf32>
    %805 = arith.addf %803, %804 : vector<16x16xf32>
    %cst_202 = arith.constant dense<0xFF800000> : vector<16xf32>
    %806 = vector.multi_reduction <maximumf>, %805, %cst_202 [1] : vector<16x16xf32> to vector<16xf32>
    %807 = vector.shape_cast %806 : vector<16xf32> to vector<16x1xf32>
    %808 = vector.broadcast %807 : vector<16x1xf32> to vector<16x16xf32>
    %809 = arith.subf %805, %808 : vector<16x16xf32>
    %810 = math.exp %809 : vector<16x16xf32>
    %cst_203 = arith.constant dense<0.000000e+00> : vector<16xf32>
    %811 = vector.multi_reduction <add>, %810, %cst_203 [1] : vector<16x16xf32> to vector<16xf32>
    %812 = vector.shape_cast %811 : vector<16xf32> to vector<16x1xf32>
    %813 = tpu.reciprocal %812 {approx = true} : vector<16x1xf32> -> vector<16x1xf32>
    %814 = vector.broadcast %813 : vector<16x1xf32> to vector<16x16xf32>
    %815 = arith.mulf %810, %814 : vector<16x16xf32>
    %816 = vector.broadcast %799 : vector<1x128xf32> to vector<16x128xf32>
    %817 = arith.mulf %772, %816 : vector<16x128xf32>
    %818 = arith.truncf %815 : vector<16x16xf32> to vector<16x16xbf16>
    %819 = arith.truncf %817 : vector<16x128xf32> to vector<16x128xbf16>
    %cst_204 = arith.constant dense<0.000000e+00> : vector<16x128xf32>
    %820 = tpu.matmul %818, %819, %cst_204 {dimension_numbers = #tpu.dot_dimension_numbers<[1], [0], [0], [1], [0, 0, 1, 1], [], []>} : vector<16x16xbf16>, vector<16x128xbf16>, vector<16x128xf32> -> vector<16x128xf32>
    %821 = arith.addf %798, %820 : vector<16x128xf32>
    %822 = vector.extract_strided_slice %554 {offsets = [80, 0], sizes = [16, 128], strides = [1, 1]} : vector<128x128xf32> to vector<16x128xf32>
    %823 = vector.extract_strided_slice %555 {offsets = [80, 0], sizes = [16, 128], strides = [1, 1]} : vector<128x128xf32> to vector<16x128xf32>
    %824 = arith.truncf %823 : vector<16x128xf32> to vector<16x128xbf16>
    %825 = vector.extract_strided_slice %556 {offsets = [80, 0], sizes = [16, 128], strides = [1, 1]} : vector<128x128xf32> to vector<16x128xf32>
    %c5_205 = arith.constant 5 : index
    %c0_206 = arith.constant 0 : index
    %c0_207 = arith.constant 0 : index
    %826 = vector.load %arg2[%c5_205, %c0_206, %c0_207] : memref<8x1x16xf32, #tpu.memory_space<vmem>>, vector<1x1x16xf32>
    %827 = vector.shape_cast %826 : vector<1x1x16xf32> to vector<1x16xf32>
    %cst_208 = arith.constant 0.000000e+00 : f32
    %828 = vector.broadcast %cst_208 : f32 to vector<16x128xf32>
    %829 = vector.extract_strided_slice %0 {offsets = [5, 0], sizes = [1, 128], strides = [1, 1]} : vector<8x128xf32> to vector<1x128xf32>
    %830 = vector.broadcast %829 : vector<1x128xf32> to vector<16x128xf32>
    %831 = arith.mulf %822, %830 : vector<16x128xf32>
    %832 = arith.truncf %831 : vector<16x128xf32> to vector<16x128xbf16>
    %cst_209 = arith.constant dense<0.000000e+00> : vector<16x16xf32>
    %833 = tpu.matmul %832, %824, %cst_209 {dimension_numbers = #tpu.dot_dimension_numbers<[1], [1], [0], [0], [0, 0, 1, 0], [], []>} : vector<16x128xbf16>, vector<16x128xbf16>, vector<16x16xf32> -> vector<16x16xf32>
    %834 = vector.broadcast %827 : vector<1x16xf32> to vector<16x16xf32>
    %835 = arith.addf %833, %834 : vector<16x16xf32>
    %cst_210 = arith.constant dense<0xFF800000> : vector<16xf32>
    %836 = vector.multi_reduction <maximumf>, %835, %cst_210 [1] : vector<16x16xf32> to vector<16xf32>
    %837 = vector.shape_cast %836 : vector<16xf32> to vector<16x1xf32>
    %838 = vector.broadcast %837 : vector<16x1xf32> to vector<16x16xf32>
    %839 = arith.subf %835, %838 : vector<16x16xf32>
    %840 = math.exp %839 : vector<16x16xf32>
    %cst_211 = arith.constant dense<0.000000e+00> : vector<16xf32>
    %841 = vector.multi_reduction <add>, %840, %cst_211 [1] : vector<16x16xf32> to vector<16xf32>
    %842 = vector.shape_cast %841 : vector<16xf32> to vector<16x1xf32>
    %843 = tpu.reciprocal %842 {approx = true} : vector<16x1xf32> -> vector<16x1xf32>
    %844 = vector.broadcast %843 : vector<16x1xf32> to vector<16x16xf32>
    %845 = arith.mulf %840, %844 : vector<16x16xf32>
    %846 = vector.broadcast %829 : vector<1x128xf32> to vector<16x128xf32>
    %847 = arith.mulf %825, %846 : vector<16x128xf32>
    %848 = arith.truncf %845 : vector<16x16xf32> to vector<16x16xbf16>
    %849 = arith.truncf %847 : vector<16x128xf32> to vector<16x128xbf16>
    %cst_212 = arith.constant dense<0.000000e+00> : vector<16x128xf32>
    %850 = tpu.matmul %848, %849, %cst_212 {dimension_numbers = #tpu.dot_dimension_numbers<[1], [0], [0], [1], [0, 0, 1, 1], [], []>} : vector<16x16xbf16>, vector<16x128xbf16>, vector<16x128xf32> -> vector<16x128xf32>
    %851 = arith.addf %828, %850 : vector<16x128xf32>
    %852 = vector.extract_strided_slice %0 {offsets = [6, 0], sizes = [1, 128], strides = [1, 1]} : vector<8x128xf32> to vector<1x128xf32>
    %853 = vector.broadcast %852 : vector<1x128xf32> to vector<16x128xf32>
    %854 = arith.mulf %822, %853 : vector<16x128xf32>
    %855 = arith.truncf %854 : vector<16x128xf32> to vector<16x128xbf16>
    %cst_213 = arith.constant dense<0.000000e+00> : vector<16x16xf32>
    %856 = tpu.matmul %855, %824, %cst_213 {dimension_numbers = #tpu.dot_dimension_numbers<[1], [1], [0], [0], [0, 0, 1, 0], [], []>} : vector<16x128xbf16>, vector<16x128xbf16>, vector<16x16xf32> -> vector<16x16xf32>
    %857 = vector.broadcast %827 : vector<1x16xf32> to vector<16x16xf32>
    %858 = arith.addf %856, %857 : vector<16x16xf32>
    %cst_214 = arith.constant dense<0xFF800000> : vector<16xf32>
    %859 = vector.multi_reduction <maximumf>, %858, %cst_214 [1] : vector<16x16xf32> to vector<16xf32>
    %860 = vector.shape_cast %859 : vector<16xf32> to vector<16x1xf32>
    %861 = vector.broadcast %860 : vector<16x1xf32> to vector<16x16xf32>
    %862 = arith.subf %858, %861 : vector<16x16xf32>
    %863 = math.exp %862 : vector<16x16xf32>
    %cst_215 = arith.constant dense<0.000000e+00> : vector<16xf32>
    %864 = vector.multi_reduction <add>, %863, %cst_215 [1] : vector<16x16xf32> to vector<16xf32>
    %865 = vector.shape_cast %864 : vector<16xf32> to vector<16x1xf32>
    %866 = tpu.reciprocal %865 {approx = true} : vector<16x1xf32> -> vector<16x1xf32>
    %867 = vector.broadcast %866 : vector<16x1xf32> to vector<16x16xf32>
    %868 = arith.mulf %863, %867 : vector<16x16xf32>
    %869 = vector.broadcast %852 : vector<1x128xf32> to vector<16x128xf32>
    %870 = arith.mulf %825, %869 : vector<16x128xf32>
    %871 = arith.truncf %868 : vector<16x16xf32> to vector<16x16xbf16>
    %872 = arith.truncf %870 : vector<16x128xf32> to vector<16x128xbf16>
    %cst_216 = arith.constant dense<0.000000e+00> : vector<16x128xf32>
    %873 = tpu.matmul %871, %872, %cst_216 {dimension_numbers = #tpu.dot_dimension_numbers<[1], [0], [0], [1], [0, 0, 1, 1], [], []>} : vector<16x16xbf16>, vector<16x128xbf16>, vector<16x128xf32> -> vector<16x128xf32>
    %874 = arith.addf %851, %873 : vector<16x128xf32>
    %875 = vector.extract_strided_slice %554 {offsets = [96, 0], sizes = [16, 128], strides = [1, 1]} : vector<128x128xf32> to vector<16x128xf32>
    %876 = vector.extract_strided_slice %555 {offsets = [96, 0], sizes = [16, 128], strides = [1, 1]} : vector<128x128xf32> to vector<16x128xf32>
    %877 = arith.truncf %876 : vector<16x128xf32> to vector<16x128xbf16>
    %878 = vector.extract_strided_slice %556 {offsets = [96, 0], sizes = [16, 128], strides = [1, 1]} : vector<128x128xf32> to vector<16x128xf32>
    %c6_217 = arith.constant 6 : index
    %c0_218 = arith.constant 0 : index
    %c0_219 = arith.constant 0 : index
    %879 = vector.load %arg2[%c6_217, %c0_218, %c0_219] : memref<8x1x16xf32, #tpu.memory_space<vmem>>, vector<1x1x16xf32>
    %880 = vector.shape_cast %879 : vector<1x1x16xf32> to vector<1x16xf32>
    %cst_220 = arith.constant 0.000000e+00 : f32
    %881 = vector.broadcast %cst_220 : f32 to vector<16x128xf32>
    %882 = vector.extract_strided_slice %0 {offsets = [5, 0], sizes = [1, 128], strides = [1, 1]} : vector<8x128xf32> to vector<1x128xf32>
    %883 = vector.broadcast %882 : vector<1x128xf32> to vector<16x128xf32>
    %884 = arith.mulf %875, %883 : vector<16x128xf32>
    %885 = arith.truncf %884 : vector<16x128xf32> to vector<16x128xbf16>
    %cst_221 = arith.constant dense<0.000000e+00> : vector<16x16xf32>
    %886 = tpu.matmul %885, %877, %cst_221 {dimension_numbers = #tpu.dot_dimension_numbers<[1], [1], [0], [0], [0, 0, 1, 0], [], []>} : vector<16x128xbf16>, vector<16x128xbf16>, vector<16x16xf32> -> vector<16x16xf32>
    %887 = vector.broadcast %880 : vector<1x16xf32> to vector<16x16xf32>
    %888 = arith.addf %886, %887 : vector<16x16xf32>
    %cst_222 = arith.constant dense<0xFF800000> : vector<16xf32>
    %889 = vector.multi_reduction <maximumf>, %888, %cst_222 [1] : vector<16x16xf32> to vector<16xf32>
    %890 = vector.shape_cast %889 : vector<16xf32> to vector<16x1xf32>
    %891 = vector.broadcast %890 : vector<16x1xf32> to vector<16x16xf32>
    %892 = arith.subf %888, %891 : vector<16x16xf32>
    %893 = math.exp %892 : vector<16x16xf32>
    %cst_223 = arith.constant dense<0.000000e+00> : vector<16xf32>
    %894 = vector.multi_reduction <add>, %893, %cst_223 [1] : vector<16x16xf32> to vector<16xf32>
    %895 = vector.shape_cast %894 : vector<16xf32> to vector<16x1xf32>
    %896 = tpu.reciprocal %895 {approx = true} : vector<16x1xf32> -> vector<16x1xf32>
    %897 = vector.broadcast %896 : vector<16x1xf32> to vector<16x16xf32>
    %898 = arith.mulf %893, %897 : vector<16x16xf32>
    %899 = vector.broadcast %882 : vector<1x128xf32> to vector<16x128xf32>
    %900 = arith.mulf %878, %899 : vector<16x128xf32>
    %901 = arith.truncf %898 : vector<16x16xf32> to vector<16x16xbf16>
    %902 = arith.truncf %900 : vector<16x128xf32> to vector<16x128xbf16>
    %cst_224 = arith.constant dense<0.000000e+00> : vector<16x128xf32>
    %903 = tpu.matmul %901, %902, %cst_224 {dimension_numbers = #tpu.dot_dimension_numbers<[1], [0], [0], [1], [0, 0, 1, 1], [], []>} : vector<16x16xbf16>, vector<16x128xbf16>, vector<16x128xf32> -> vector<16x128xf32>
    %904 = arith.addf %881, %903 : vector<16x128xf32>
    %905 = vector.extract_strided_slice %0 {offsets = [6, 0], sizes = [1, 128], strides = [1, 1]} : vector<8x128xf32> to vector<1x128xf32>
    %906 = vector.broadcast %905 : vector<1x128xf32> to vector<16x128xf32>
    %907 = arith.mulf %875, %906 : vector<16x128xf32>
    %908 = arith.truncf %907 : vector<16x128xf32> to vector<16x128xbf16>
    %cst_225 = arith.constant dense<0.000000e+00> : vector<16x16xf32>
    %909 = tpu.matmul %908, %877, %cst_225 {dimension_numbers = #tpu.dot_dimension_numbers<[1], [1], [0], [0], [0, 0, 1, 0], [], []>} : vector<16x128xbf16>, vector<16x128xbf16>, vector<16x16xf32> -> vector<16x16xf32>
    %910 = vector.broadcast %880 : vector<1x16xf32> to vector<16x16xf32>
    %911 = arith.addf %909, %910 : vector<16x16xf32>
    %cst_226 = arith.constant dense<0xFF800000> : vector<16xf32>
    %912 = vector.multi_reduction <maximumf>, %911, %cst_226 [1] : vector<16x16xf32> to vector<16xf32>
    %913 = vector.shape_cast %912 : vector<16xf32> to vector<16x1xf32>
    %914 = vector.broadcast %913 : vector<16x1xf32> to vector<16x16xf32>
    %915 = arith.subf %911, %914 : vector<16x16xf32>
    %916 = math.exp %915 : vector<16x16xf32>
    %cst_227 = arith.constant dense<0.000000e+00> : vector<16xf32>
    %917 = vector.multi_reduction <add>, %916, %cst_227 [1] : vector<16x16xf32> to vector<16xf32>
    %918 = vector.shape_cast %917 : vector<16xf32> to vector<16x1xf32>
    %919 = tpu.reciprocal %918 {approx = true} : vector<16x1xf32> -> vector<16x1xf32>
    %920 = vector.broadcast %919 : vector<16x1xf32> to vector<16x16xf32>
    %921 = arith.mulf %916, %920 : vector<16x16xf32>
    %922 = vector.broadcast %905 : vector<1x128xf32> to vector<16x128xf32>
    %923 = arith.mulf %878, %922 : vector<16x128xf32>
    %924 = arith.truncf %921 : vector<16x16xf32> to vector<16x16xbf16>
    %925 = arith.truncf %923 : vector<16x128xf32> to vector<16x128xbf16>
    %cst_228 = arith.constant dense<0.000000e+00> : vector<16x128xf32>
    %926 = tpu.matmul %924, %925, %cst_228 {dimension_numbers = #tpu.dot_dimension_numbers<[1], [0], [0], [1], [0, 0, 1, 1], [], []>} : vector<16x16xbf16>, vector<16x128xbf16>, vector<16x128xf32> -> vector<16x128xf32>
    %927 = arith.addf %904, %926 : vector<16x128xf32>
    %928 = vector.extract_strided_slice %554 {offsets = [112, 0], sizes = [16, 128], strides = [1, 1]} : vector<128x128xf32> to vector<16x128xf32>
    %929 = vector.extract_strided_slice %555 {offsets = [112, 0], sizes = [16, 128], strides = [1, 1]} : vector<128x128xf32> to vector<16x128xf32>
    %930 = arith.truncf %929 : vector<16x128xf32> to vector<16x128xbf16>
    %931 = vector.extract_strided_slice %556 {offsets = [112, 0], sizes = [16, 128], strides = [1, 1]} : vector<128x128xf32> to vector<16x128xf32>
    %c7_229 = arith.constant 7 : index
    %c0_230 = arith.constant 0 : index
    %c0_231 = arith.constant 0 : index
    %932 = vector.load %arg2[%c7_229, %c0_230, %c0_231] : memref<8x1x16xf32, #tpu.memory_space<vmem>>, vector<1x1x16xf32>
    %933 = vector.shape_cast %932 : vector<1x1x16xf32> to vector<1x16xf32>
    %cst_232 = arith.constant 0.000000e+00 : f32
    %934 = vector.broadcast %cst_232 : f32 to vector<16x128xf32>
    %935 = vector.extract_strided_slice %0 {offsets = [5, 0], sizes = [1, 128], strides = [1, 1]} : vector<8x128xf32> to vector<1x128xf32>
    %936 = vector.broadcast %935 : vector<1x128xf32> to vector<16x128xf32>
    %937 = arith.mulf %928, %936 : vector<16x128xf32>
    %938 = arith.truncf %937 : vector<16x128xf32> to vector<16x128xbf16>
    %cst_233 = arith.constant dense<0.000000e+00> : vector<16x16xf32>
    %939 = tpu.matmul %938, %930, %cst_233 {dimension_numbers = #tpu.dot_dimension_numbers<[1], [1], [0], [0], [0, 0, 1, 0], [], []>} : vector<16x128xbf16>, vector<16x128xbf16>, vector<16x16xf32> -> vector<16x16xf32>
    %940 = vector.broadcast %933 : vector<1x16xf32> to vector<16x16xf32>
    %941 = arith.addf %939, %940 : vector<16x16xf32>
    %cst_234 = arith.constant dense<0xFF800000> : vector<16xf32>
    %942 = vector.multi_reduction <maximumf>, %941, %cst_234 [1] : vector<16x16xf32> to vector<16xf32>
    %943 = vector.shape_cast %942 : vector<16xf32> to vector<16x1xf32>
    %944 = vector.broadcast %943 : vector<16x1xf32> to vector<16x16xf32>
    %945 = arith.subf %941, %944 : vector<16x16xf32>
    %946 = math.exp %945 : vector<16x16xf32>
    %cst_235 = arith.constant dense<0.000000e+00> : vector<16xf32>
    %947 = vector.multi_reduction <add>, %946, %cst_235 [1] : vector<16x16xf32> to vector<16xf32>
    %948 = vector.shape_cast %947 : vector<16xf32> to vector<16x1xf32>
    %949 = tpu.reciprocal %948 {approx = true} : vector<16x1xf32> -> vector<16x1xf32>
    %950 = vector.broadcast %949 : vector<16x1xf32> to vector<16x16xf32>
    %951 = arith.mulf %946, %950 : vector<16x16xf32>
    %952 = vector.broadcast %935 : vector<1x128xf32> to vector<16x128xf32>
    %953 = arith.mulf %931, %952 : vector<16x128xf32>
    %954 = arith.truncf %951 : vector<16x16xf32> to vector<16x16xbf16>
    %955 = arith.truncf %953 : vector<16x128xf32> to vector<16x128xbf16>
    %cst_236 = arith.constant dense<0.000000e+00> : vector<16x128xf32>
    %956 = tpu.matmul %954, %955, %cst_236 {dimension_numbers = #tpu.dot_dimension_numbers<[1], [0], [0], [1], [0, 0, 1, 1], [], []>} : vector<16x16xbf16>, vector<16x128xbf16>, vector<16x128xf32> -> vector<16x128xf32>
    %957 = arith.addf %934, %956 : vector<16x128xf32>
    %958 = vector.extract_strided_slice %0 {offsets = [6, 0], sizes = [1, 128], strides = [1, 1]} : vector<8x128xf32> to vector<1x128xf32>
    %959 = vector.broadcast %958 : vector<1x128xf32> to vector<16x128xf32>
    %960 = arith.mulf %928, %959 : vector<16x128xf32>
    %961 = arith.truncf %960 : vector<16x128xf32> to vector<16x128xbf16>
    %cst_237 = arith.constant dense<0.000000e+00> : vector<16x16xf32>
    %962 = tpu.matmul %961, %930, %cst_237 {dimension_numbers = #tpu.dot_dimension_numbers<[1], [1], [0], [0], [0, 0, 1, 0], [], []>} : vector<16x128xbf16>, vector<16x128xbf16>, vector<16x16xf32> -> vector<16x16xf32>
    %963 = vector.broadcast %933 : vector<1x16xf32> to vector<16x16xf32>
    %964 = arith.addf %962, %963 : vector<16x16xf32>
    %cst_238 = arith.constant dense<0xFF800000> : vector<16xf32>
    %965 = vector.multi_reduction <maximumf>, %964, %cst_238 [1] : vector<16x16xf32> to vector<16xf32>
    %966 = vector.shape_cast %965 : vector<16xf32> to vector<16x1xf32>
    %967 = vector.broadcast %966 : vector<16x1xf32> to vector<16x16xf32>
    %968 = arith.subf %964, %967 : vector<16x16xf32>
    %969 = math.exp %968 : vector<16x16xf32>
    %cst_239 = arith.constant dense<0.000000e+00> : vector<16xf32>
    %970 = vector.multi_reduction <add>, %969, %cst_239 [1] : vector<16x16xf32> to vector<16xf32>
    %971 = vector.shape_cast %970 : vector<16xf32> to vector<16x1xf32>
    %972 = tpu.reciprocal %971 {approx = true} : vector<16x1xf32> -> vector<16x1xf32>
    %973 = vector.broadcast %972 : vector<16x1xf32> to vector<16x16xf32>
    %974 = arith.mulf %969, %973 : vector<16x16xf32>
    %975 = vector.broadcast %958 : vector<1x128xf32> to vector<16x128xf32>
    %976 = arith.mulf %931, %975 : vector<16x128xf32>
    %977 = arith.truncf %974 : vector<16x16xf32> to vector<16x16xbf16>
    %978 = arith.truncf %976 : vector<16x128xf32> to vector<16x128xbf16>
    %cst_240 = arith.constant dense<0.000000e+00> : vector<16x128xf32>
    %979 = tpu.matmul %977, %978, %cst_240 {dimension_numbers = #tpu.dot_dimension_numbers<[1], [0], [0], [1], [0, 0, 1, 1], [], []>} : vector<16x16xbf16>, vector<16x128xbf16>, vector<16x128xf32> -> vector<16x128xf32>
    %980 = arith.addf %957, %979 : vector<16x128xf32>
    %981 = tpu.concatenate %609, %662, %715, %768, %821, %874, %927, %980 in 0 : vector<16x128xf32>, vector<16x128xf32>, vector<16x128xf32>, vector<16x128xf32>, vector<16x128xf32>, vector<16x128xf32>, vector<16x128xf32>, vector<16x128xf32> -> vector<128x128xf32>
    %c1_241 = arith.constant 1 : index
    %c0_242 = arith.constant 0 : index
    %c0_243 = arith.constant 0 : index
    %982 = vector.load %arg6[%c1_241, %c0_242, %c0_243] : memref<2x128x128xbf16, #tpu.memory_space<vmem>>, vector<1x128x128xbf16>
    %983 = vector.shape_cast %982 : vector<1x128x128xbf16> to vector<128x128xbf16>
    %984 = arith.truncf %981 : vector<128x128xf32> to vector<128x128xbf16>
    %cst_244 = arith.constant dense<0.000000e+00> : vector<128x128xf32>
    %985 = tpu.matmul %984, %983, %cst_244 {dimension_numbers = #tpu.dot_dimension_numbers<[1], [0], [0], [1], [0, 0, 1, 1], [], []>} : vector<128x128xbf16>, vector<128x128xbf16>, vector<128x128xf32> -> vector<128x128xf32>
    %986 = vector.extract_strided_slice %545 {offsets = [0, 0], sizes = [1, 128], strides = [1, 1]} : vector<8x128xf32> to vector<1x128xf32>
    %987 = vector.broadcast %986 : vector<1x128xf32> to vector<128x128xf32>
    %988 = arith.addf %985, %987 : vector<128x128xf32>
    %989 = arith.addf %543, %988 : vector<128x128xf32>
    %990 = vector.extract_strided_slice %545 {offsets = [2, 0], sizes = [1, 128], strides = [1, 1]} : vector<8x128xf32> to vector<1x128xf32>
    %991 = vector.extract_strided_slice %545 {offsets = [3, 0], sizes = [1, 128], strides = [1, 1]} : vector<8x128xf32> to vector<1x128xf32>
    %cst_245 = arith.constant dense<0.000000e+00> : vector<128xf32>
    %992 = vector.multi_reduction <add>, %989, %cst_245 [1] : vector<128x128xf32> to vector<128xf32>
    %993 = vector.shape_cast %992 : vector<128xf32> to vector<128x1xf32>
    %cst_246 = arith.constant 1.280000e+02 : f32
    %994 = vector.broadcast %cst_246 : f32 to vector<128x1xf32>
    %995 = arith.divf %993, %994 : vector<128x1xf32>
    %996 = vector.broadcast %995 : vector<128x1xf32> to vector<128x128xf32>
    %997 = arith.subf %989, %996 : vector<128x128xf32>
    %998 = arith.mulf %997, %997 : vector<128x128xf32>
    %cst_247 = arith.constant dense<0.000000e+00> : vector<128xf32>
    %999 = vector.multi_reduction <add>, %998, %cst_247 [1] : vector<128x128xf32> to vector<128xf32>
    %1000 = vector.shape_cast %999 : vector<128xf32> to vector<128x1xf32>
    %cst_248 = arith.constant 1.280000e+02 : f32
    %1001 = vector.broadcast %cst_248 : f32 to vector<128x1xf32>
    %1002 = arith.divf %1000, %1001 : vector<128x1xf32>
    %cst_249 = arith.constant 9.99999974E-6 : f32
    %1003 = vector.broadcast %cst_249 : f32 to vector<128x1xf32>
    %1004 = arith.addf %1002, %1003 : vector<128x1xf32>
    %1005 = math.rsqrt %1004 : vector<128x1xf32>
    %1006 = vector.broadcast %1005 : vector<128x1xf32> to vector<128x128xf32>
    %1007 = arith.mulf %997, %1006 : vector<128x128xf32>
    %1008 = vector.broadcast %990 : vector<1x128xf32> to vector<128x128xf32>
    %1009 = arith.mulf %1007, %1008 : vector<128x128xf32>
    %1010 = vector.broadcast %991 : vector<1x128xf32> to vector<128x128xf32>
    %1011 = arith.addf %1009, %1010 : vector<128x128xf32>
    %1012 = arith.truncf %1011 : vector<128x128xf32> to vector<128x128xbf16>
    %c1_250 = arith.constant 1 : index
    %c0_251 = arith.constant 0 : index
    %c0_252 = arith.constant 0 : index
    %1013 = vector.load %arg7[%c1_250, %c0_251, %c0_252] : memref<2x128x256xbf16, #tpu.memory_space<vmem>>, vector<1x128x256xbf16>
    %1014 = vector.shape_cast %1013 : vector<1x128x256xbf16> to vector<128x256xbf16>
    %cst_253 = arith.constant dense<0.000000e+00> : vector<128x256xf32>
    %1015 = tpu.matmul %1012, %1014, %cst_253 {dimension_numbers = #tpu.dot_dimension_numbers<[1], [0], [0], [1], [0, 0, 1, 1], [], []>} : vector<128x128xbf16>, vector<128x256xbf16>, vector<128x256xf32> -> vector<128x256xf32>
    %c1_254 = arith.constant 1 : index
    %c0_255 = arith.constant 0 : index
    %c0_256 = arith.constant 0 : index
    %1016 = vector.load %arg8[%c1_254, %c0_255, %c0_256] : memref<2x1x256xf32, #tpu.memory_space<vmem>>, vector<1x1x256xf32>
    %1017 = vector.shape_cast %1016 : vector<1x1x256xf32> to vector<1x256xf32>
    %1018 = vector.broadcast %1017 : vector<1x256xf32> to vector<128x256xf32>
    %1019 = arith.addf %1015, %1018 : vector<128x256xf32>
    %1020 = arith.mulf %1019, %1019 : vector<128x256xf32>
    %1021 = arith.mulf %1019, %1020 : vector<128x256xf32>
    %cst_257 = arith.constant 4.471500e-02 : f32
    %1022 = vector.broadcast %cst_257 : f32 to vector<128x256xf32>
    %1023 = arith.mulf %1022, %1021 : vector<128x256xf32>
    %1024 = arith.addf %1019, %1023 : vector<128x256xf32>
    %cst_258 = arith.constant 0.797884583 : f32
    %1025 = vector.broadcast %cst_258 : f32 to vector<128x256xf32>
    %1026 = arith.mulf %1025, %1024 : vector<128x256xf32>
    %1027 = math.tanh %1026 : vector<128x256xf32>
    %cst_259 = arith.constant 1.000000e+00 : f32
    %1028 = vector.broadcast %cst_259 : f32 to vector<128x256xf32>
    %1029 = arith.addf %1028, %1027 : vector<128x256xf32>
    %cst_260 = arith.constant 5.000000e-01 : f32
    %1030 = vector.broadcast %cst_260 : f32 to vector<128x256xf32>
    %1031 = arith.mulf %1030, %1029 : vector<128x256xf32>
    %1032 = arith.mulf %1019, %1031 : vector<128x256xf32>
    %c1_261 = arith.constant 1 : index
    %c0_262 = arith.constant 0 : index
    %c0_263 = arith.constant 0 : index
    %1033 = vector.load %arg9[%c1_261, %c0_262, %c0_263] : memref<2x256x128xbf16, #tpu.memory_space<vmem>>, vector<1x256x128xbf16>
    %1034 = vector.shape_cast %1033 : vector<1x256x128xbf16> to vector<256x128xbf16>
    %1035 = arith.truncf %1032 : vector<128x256xf32> to vector<128x256xbf16>
    %cst_264 = arith.constant dense<0.000000e+00> : vector<128x128xf32>
    %1036 = tpu.matmul %1035, %1034, %cst_264 {dimension_numbers = #tpu.dot_dimension_numbers<[1], [0], [0], [1], [0, 0, 1, 1], [], []>} : vector<128x256xbf16>, vector<256x128xbf16>, vector<128x128xf32> -> vector<128x128xf32>
    %1037 = vector.extract_strided_slice %545 {offsets = [1, 0], sizes = [1, 128], strides = [1, 1]} : vector<8x128xf32> to vector<1x128xf32>
    %1038 = vector.broadcast %1037 : vector<1x128xf32> to vector<128x128xf32>
    %1039 = arith.addf %1036, %1038 : vector<128x128xf32>
    %1040 = arith.addf %1011, %1039 : vector<128x128xf32>
    %1041 = vector.extract_strided_slice %545 {offsets = [4, 0], sizes = [1, 128], strides = [1, 1]} : vector<8x128xf32> to vector<1x128xf32>
    %1042 = vector.extract_strided_slice %545 {offsets = [5, 0], sizes = [1, 128], strides = [1, 1]} : vector<8x128xf32> to vector<1x128xf32>
    %cst_265 = arith.constant dense<0.000000e+00> : vector<128xf32>
    %1043 = vector.multi_reduction <add>, %1040, %cst_265 [1] : vector<128x128xf32> to vector<128xf32>
    %1044 = vector.shape_cast %1043 : vector<128xf32> to vector<128x1xf32>
    %cst_266 = arith.constant 1.280000e+02 : f32
    %1045 = vector.broadcast %cst_266 : f32 to vector<128x1xf32>
    %1046 = arith.divf %1044, %1045 : vector<128x1xf32>
    %1047 = vector.broadcast %1046 : vector<128x1xf32> to vector<128x128xf32>
    %1048 = arith.subf %1040, %1047 : vector<128x128xf32>
    %1049 = arith.mulf %1048, %1048 : vector<128x128xf32>
    %cst_267 = arith.constant dense<0.000000e+00> : vector<128xf32>
    %1050 = vector.multi_reduction <add>, %1049, %cst_267 [1] : vector<128x128xf32> to vector<128xf32>
    %1051 = vector.shape_cast %1050 : vector<128xf32> to vector<128x1xf32>
    %cst_268 = arith.constant 1.280000e+02 : f32
    %1052 = vector.broadcast %cst_268 : f32 to vector<128x1xf32>
    %1053 = arith.divf %1051, %1052 : vector<128x1xf32>
    %cst_269 = arith.constant 9.99999974E-6 : f32
    %1054 = vector.broadcast %cst_269 : f32 to vector<128x1xf32>
    %1055 = arith.addf %1053, %1054 : vector<128x1xf32>
    %1056 = math.rsqrt %1055 : vector<128x1xf32>
    %1057 = vector.broadcast %1056 : vector<128x1xf32> to vector<128x128xf32>
    %1058 = arith.mulf %1048, %1057 : vector<128x128xf32>
    %1059 = vector.broadcast %1041 : vector<1x128xf32> to vector<128x128xf32>
    %1060 = arith.mulf %1058, %1059 : vector<128x128xf32>
    %1061 = vector.broadcast %1042 : vector<1x128xf32> to vector<128x128xf32>
    %1062 = arith.addf %1060, %1061 : vector<128x128xf32>
    %1063 = vector.extract_strided_slice %1062 {offsets = [0, 0], sizes = [1, 128], strides = [1, 1]} : vector<128x128xf32> to vector<1x128xf32>
    %1064 = vector.extract_strided_slice %1062 {offsets = [16, 0], sizes = [1, 128], strides = [1, 1]} : vector<128x128xf32> to vector<1x128xf32>
    %1065 = vector.extract_strided_slice %1062 {offsets = [32, 0], sizes = [1, 128], strides = [1, 1]} : vector<128x128xf32> to vector<1x128xf32>
    %1066 = vector.extract_strided_slice %1062 {offsets = [48, 0], sizes = [1, 128], strides = [1, 1]} : vector<128x128xf32> to vector<1x128xf32>
    %1067 = vector.extract_strided_slice %1062 {offsets = [64, 0], sizes = [1, 128], strides = [1, 1]} : vector<128x128xf32> to vector<1x128xf32>
    %1068 = vector.extract_strided_slice %1062 {offsets = [80, 0], sizes = [1, 128], strides = [1, 1]} : vector<128x128xf32> to vector<1x128xf32>
    %1069 = vector.extract_strided_slice %1062 {offsets = [96, 0], sizes = [1, 128], strides = [1, 1]} : vector<128x128xf32> to vector<1x128xf32>
    %1070 = vector.extract_strided_slice %1062 {offsets = [112, 0], sizes = [1, 128], strides = [1, 1]} : vector<128x128xf32> to vector<1x128xf32>
    %1071 = tpu.concatenate %1063, %1064, %1065, %1066, %1067, %1068, %1069, %1070 in 0 : vector<1x128xf32>, vector<1x128xf32>, vector<1x128xf32>, vector<1x128xf32>, vector<1x128xf32>, vector<1x128xf32>, vector<1x128xf32>, vector<1x128xf32> -> vector<8x128xf32>
    %c0_270 = arith.constant 0 : index
    %c0_271 = arith.constant 0 : index
    %1072 = vector.load %arg11[%c0_270, %c0_271] : memref<128x128xbf16, #tpu.memory_space<vmem>>, vector<128x128xbf16>
    %1073 = arith.truncf %1071 : vector<8x128xf32> to vector<8x128xbf16>
    %cst_272 = arith.constant dense<0.000000e+00> : vector<8x128xf32>
    %1074 = tpu.matmul %1073, %1072, %cst_272 {dimension_numbers = #tpu.dot_dimension_numbers<[1], [0], [0], [1], [0, 0, 1, 1], [], []>} : vector<8x128xbf16>, vector<128x128xbf16>, vector<8x128xf32> -> vector<8x128xf32>
    %1075 = vector.extract_strided_slice %0 {offsets = [2, 0], sizes = [1, 128], strides = [1, 1]} : vector<8x128xf32> to vector<1x128xf32>
    %1076 = vector.broadcast %1075 : vector<1x128xf32> to vector<8x128xf32>
    %1077 = arith.addf %1074, %1076 : vector<8x128xf32>
    %1078 = vector.extract_strided_slice %0 {offsets = [3, 0], sizes = [1, 128], strides = [1, 1]} : vector<8x128xf32> to vector<1x128xf32>
    %1079 = vector.extract_strided_slice %0 {offsets = [4, 0], sizes = [1, 128], strides = [1, 1]} : vector<8x128xf32> to vector<1x128xf32>
    %cst_273 = arith.constant dense<0.000000e+00> : vector<8xf32>
    %1080 = vector.multi_reduction <add>, %1077, %cst_273 [1] : vector<8x128xf32> to vector<8xf32>
    %1081 = vector.shape_cast %1080 : vector<8xf32> to vector<8x1xf32>
    %cst_274 = arith.constant 1.280000e+02 : f32
    %1082 = vector.broadcast %cst_274 : f32 to vector<8x1xf32>
    %1083 = arith.divf %1081, %1082 : vector<8x1xf32>
    %1084 = vector.broadcast %1083 : vector<8x1xf32> to vector<8x128xf32>
    %1085 = arith.subf %1077, %1084 : vector<8x128xf32>
    %1086 = arith.mulf %1085, %1085 : vector<8x128xf32>
    %cst_275 = arith.constant dense<0.000000e+00> : vector<8xf32>
    %1087 = vector.multi_reduction <add>, %1086, %cst_275 [1] : vector<8x128xf32> to vector<8xf32>
    %1088 = vector.shape_cast %1087 : vector<8xf32> to vector<8x1xf32>
    %cst_276 = arith.constant 1.280000e+02 : f32
    %1089 = vector.broadcast %cst_276 : f32 to vector<8x1xf32>
    %1090 = arith.divf %1088, %1089 : vector<8x1xf32>
    %cst_277 = arith.constant 9.99999974E-6 : f32
    %1091 = vector.broadcast %cst_277 : f32 to vector<8x1xf32>
    %1092 = arith.addf %1090, %1091 : vector<8x1xf32>
    %1093 = math.rsqrt %1092 : vector<8x1xf32>
    %1094 = vector.broadcast %1093 : vector<8x1xf32> to vector<8x128xf32>
    %1095 = arith.mulf %1085, %1094 : vector<8x128xf32>
    %1096 = vector.broadcast %1078 : vector<1x128xf32> to vector<8x128xf32>
    %1097 = arith.mulf %1095, %1096 : vector<8x128xf32>
    %1098 = vector.broadcast %1079 : vector<1x128xf32> to vector<8x128xf32>
    %1099 = arith.addf %1097, %1098 : vector<8x128xf32>
    %c0_278 = arith.constant 0 : index
    %c0_279 = arith.constant 0 : index
    %1100 = vector.load %arg12[%c0_278, %c0_279] : memref<8x128xf32, #tpu.memory_space<vmem>>, vector<8x128xf32>
    tpu.vector_store %arg12[%c0_278, %c0_279], %1099 {strides = array<i32>} : memref<8x128xf32, #tpu.memory_space<vmem>>, vector<8x128xf32>,
    return
  }
  func.func @transform_0(%arg0: i32) -> (i32, i32) {
    %c0_i32 = arith.constant 0 : i32
    %c0_i32_0 = arith.constant 0 : i32
    return %arg0, %c0_i32 : i32, i32
  }
  func.func @transform_1(%arg0: i32) -> (i32, i32, i32) {
    %c0_i32 = arith.constant 0 : i32
    %c0_i32_0 = arith.constant 0 : i32
    %c0_i32_1 = arith.constant 0 : i32
    return %arg0, %c0_i32, %c0_i32_0 : i32, i32, i32
  }
  func.func @transform_2(%arg0: i32) -> (i32, i32) {
    %c0_i32 = arith.constant 0 : i32
    %c0_i32_0 = arith.constant 0 : i32
    %c0_i32_1 = arith.constant 0 : i32
    return %c0_i32, %c0_i32_0 : i32, i32
  }
  func.func @transform_3(%arg0: i32) -> (i32, i32, i32) {
    %c0_i32 = arith.constant 0 : i32
    %c0_i32_0 = arith.constant 0 : i32
    %c0_i32_1 = arith.constant 0 : i32
    %c0_i32_2 = arith.constant 0 : i32
    return %c0_i32, %c0_i32_0, %c0_i32_1 : i32, i32, i32
  }
  func.func @transform_4(%arg0: i32) -> (i32, i32, i32) {
    %c0_i32 = arith.constant 0 : i32
    %c0_i32_0 = arith.constant 0 : i32
    %c0_i32_1 = arith.constant 0 : i32
    %c0_i32_2 = arith.constant 0 : i32
    return %c0_i32, %c0_i32_0, %c0_i32_1 : i32, i32, i32
  }
  func.func @transform_5(%arg0: i32) -> (i32, i32, i32) {
    %c0_i32 = arith.constant 0 : i32
    %c0_i32_0 = arith.constant 0 : i32
    %c0_i32_1 = arith.constant 0 : i32
    %c0_i32_2 = arith.constant 0 : i32
    return %c0_i32, %c0_i32_0, %c0_i32_1 : i32, i32, i32
  }
  func.func @transform_6(%arg0: i32) -> (i32, i32, i32) {
    %c0_i32 = arith.constant 0 : i32
    %c0_i32_0 = arith.constant 0 : i32
    %c0_i32_1 = arith.constant 0 : i32
    %c0_i32_2 = arith.constant 0 : i32
    return %c0_i32, %c0_i32_0, %c0_i32_1 : i32, i32, i32
  }
  func.func @transform_7(%arg0: i32) -> (i32, i32, i32) {
    %c0_i32 = arith.constant 0 : i32
    %c0_i32_0 = arith.constant 0 : i32
    %c0_i32_1 = arith.constant 0 : i32
    %c0_i32_2 = arith.constant 0 : i32
    return %c0_i32, %c0_i32_0, %c0_i32_1 : i32, i32, i32
  }
  func.func @transform_8(%arg0: i32) -> (i32, i32, i32) {
    %c0_i32 = arith.constant 0 : i32
    %c0_i32_0 = arith.constant 0 : i32
    %c0_i32_1 = arith.constant 0 : i32
    %c0_i32_2 = arith.constant 0 : i32
    return %c0_i32, %c0_i32_0, %c0_i32_1 : i32, i32, i32
  }
  func.func @transform_9(%arg0: i32) -> (i32, i32, i32) {
    %c0_i32 = arith.constant 0 : i32
    %c0_i32_0 = arith.constant 0 : i32
    %c0_i32_1 = arith.constant 0 : i32
    %c0_i32_2 = arith.constant 0 : i32
    return %c0_i32, %c0_i32_0, %c0_i32_1 : i32, i32, i32
  }
  func.func @transform_10(%arg0: i32) -> (i32, i32) {
    %c0_i32 = arith.constant 0 : i32
    %c0_i32_0 = arith.constant 0 : i32
    %c0_i32_1 = arith.constant 0 : i32
    return %c0_i32, %c0_i32_0 : i32, i32
  }
  func.func @transform_11(%arg0: i32) -> (i32, i32) {
    %c0_i32 = arith.constant 0 : i32
    %c0_i32_0 = arith.constant 0 : i32
    return %arg0, %c0_i32 : i32, i32
  }
}

</mosaic_0001>

<llo_original>
// kernel: _text_encoder_forward.1
$region0: #{_text_encoder_forward.1}
  #allocation0 [shape = 'u32[]', space=smem, size = 0x4, offset = 0x4, fixed_abs, tag = 'smem constant byte address 0x4 - core index']
  #allocation1 [shape = 'u32[144,128]{1,0:T(1,128)}', space=vmem, size = 0x12000, scoped, tag = 'internal scratch']
  %s0 = inlined_call_operand.vmem [shape: bf16[256,128], index: 0, kind: input, shape index: {}]
  %s1 = inlined_call_operand.vmem [shape: f32[16,1,16], index: 1, kind: input, shape index: {}]
  %s2 = inlined_call_operand.vmem [shape: f32[8,128], index: 2, kind: input, shape index: {}]
  %s3 = inlined_call_operand.vmem [shape: bf16[2,128,384], index: 3, kind: input, shape index: {}]
  %s4 = inlined_call_operand.vmem [shape: f32[2,1,384], index: 4, kind: input, shape index: {}]
  %s5 = inlined_call_operand.vmem [shape: bf16[2,128,128], index: 5, kind: input, shape index: {}]
  %s6 = inlined_call_operand.vmem [shape: bf16[2,128,256], index: 6, kind: input, shape index: {}]
  %s7 = inlined_call_operand.vmem [shape: f32[2,1,256], index: 7, kind: input, shape index: {}]
  %s8 = inlined_call_operand.vmem [shape: bf16[2,256,128], index: 8, kind: input, shape index: {}]
  %s9 = inlined_call_operand.vmem [shape: f32[2,8,128], index: 9, kind: input, shape index: {}]
  %s10 = inlined_call_operand.vmem [shape: bf16[128,128], index: 10, kind: input, shape index: {}]
  %s11 = inlined_call_operand.hbm [shape: f32[16,128], index: 11, kind: output, shape index: {}]
  %s12 = sld [smem:[#allocation0]]
  $region77: #{_text_encoder_forward.1} parent=0
    _
  %s14 = ssub.s32 1, %s12
  %s15 = scalar_select 0, %s14, %s12
  $region1: #{_text_encoder_forward.1} parent=0
    #allocation2 [shape = 'u8[8192]{0}', space=vmem, size = 0x2000, scoped, tag = 'output window, operand 0']
    #allocation3 [shape = 's32[2]{0}', space=sflag, size = 0x8, scoped, tag = 'scoped memory for _text_encoder_forward.1']
    %16 = vsyncpa [#allocation3], 0
    %s17 = scalar_lea.sflag [#allocation3], 1
    %18 = vsyncpa %s17, 0
    loop: start=0, step=1, limit=4
    $region2: #{_text_encoder_forward.1} parent=1 // loop_pre_header
      _
    $region3: #{_text_encoder_forward.1} parent=1 // loop_header
      %s20 = sphi 0, %s24
      %p21 = scmp.ge.s32.totalorder %s20, 4
      %s30 = sphi 0, %s32
      %s33 = sphi 0, %s30
      %s34 = sphi 0, %s33
      %s50 = sphi 0, %s34
      %s56 = sphi 0, %s58
      %s59 = sphi 0, %s56
      %s60 = sphi 0, %s59
      %s76 = sphi 0, %s60
      %s80 = sphi 0, %s80
      %s82 = sphi 0, %s80
      %s83 = sphi 0, %s82
      %s97 = sphi 0, %s83
      %s101 = sphi 0, %s101
      %s103 = sphi 0, %s101
      %s104 = sphi 0, %s103
      %s118 = sphi 0, %s104
      %s122 = sphi 0, %s122
      %s124 = sphi 0, %s122
      %s125 = sphi 0, %s124
      %s139 = sphi 0, %s125
      %s143 = sphi 0, %s143
      %s145 = sphi 0, %s143
      %s146 = sphi 0, %s145
      %s160 = sphi 0, %s146
      %s164 = sphi 0, %s164
      %s166 = sphi 0, %s164
      %s167 = sphi 0, %s166
      %s181 = sphi 0, %s167
      %s185 = sphi 0, %s185
      %s187 = sphi 0, %s185
      %s188 = sphi 0, %s187
      %s202 = sphi 0, %s188
      %s206 = sphi 0, %s206
      %s208 = sphi 0, %s206
      %s209 = sphi 0, %s208
      %s223 = sphi 0, %s209
      %s227 = sphi 0, %s227
      %s229 = sphi 0, %s227
      %s230 = sphi 0, %s229
      %s244 = sphi 0, %s230
      %s248 = sphi 0, %s248
      %s250 = sphi 0, %s248
      %s251 = sphi 0, %s250
      %s265 = sphi 0, %s251
      %s271 = sphi 0, %s273
      %s274 = sphi 0, %s271
      %s275 = sphi 0, %s274
      %s291 = sphi 0, %s275
    $region4: #{_text_encoder_forward.1} parent=1 // loop_header_branch
      %23 = sbr.rel (%p21) target = $region8
    $region5: #{_text_encoder_forward.1} parent=1 // loop_body
      %s25 = ssub.s32 %s20, 1
      %s26 = ssub.s32 %s20, 2
      %s27 = sadd.s32 %s20, 1
      %s28 = ssub.s32 %s20, %s27
      %p29 = scmp.eq.s32.totalorder %s28, 0
      %s31 = sadd.s32 %s30, 1
      %s32 = scalar_select %p29, %s30, %s31
      %p35 = pneg %p29
      %p36 = scmp.eq.s32.totalorder %s20, 1
      %p37 = por %p35, %p36
      %p38 = scmp.ne.s32.totalorder %s30, %s33
      %p39 = scmp.eq.s32.totalorder %s20, 0
      %p40 = por %p38, %p39
      %p41 = scmp.ne.s32.totalorder %s30, %s33
      %p42 = scmp.eq.s32.totalorder %s25, 1
      %p43 = por %p41, %p42
      %p44 = scmp.ne.s32.totalorder %s33, %s34
      %p45 = scmp.eq.s32.totalorder %s25, 0
      %p46 = por %p44, %p45
      %p47 = scmp.ne.s32.totalorder %s33, %s34
      %p48 = scmp.eq.s32.totalorder %s26, 1
      %p49 = por %p47, %p48
      %p51 = scmp.ne.s32.totalorder %s34, %s50
      %p52 = scmp.eq.s32.totalorder %s26, 0
      %p53 = por %p51, %p52
      %s54 = ssub.s32 %s20, %s27
      %p55 = scmp.eq.s32.totalorder %s54, 0
      %s57 = sadd.s32 %s56, 1
      %s58 = scalar_select %p55, %s56, %s57
      %p61 = pneg %p55
      %p62 = scmp.eq.s32.totalorder %s20, 1
      %p63 = por %p61, %p62
      %p64 = scmp.ne.s32.totalorder %s56, %s59
      %p65 = scmp.eq.s32.totalorder %s20, 0
      %p66 = por %p64, %p65
      %p67 = scmp.ne.s32.totalorder %s56, %s59
      %p68 = scmp.eq.s32.totalorder %s25, 1
      %p69 = por %p67, %p68
      %p70 = scmp.ne.s32.totalorder %s59, %s60
      %p71 = scmp.eq.s32.totalorder %s25, 0
      %p72 = por %p70, %p71
      %p73 = scmp.ne.s32.totalorder %s59, %s60
      %p74 = scmp.eq.s32.totalorder %s26, 1
      %p75 = por %p73, %p74
      %p77 = scmp.ne.s32.totalorder %s60, %s76
      %p78 = scmp.eq.s32.totalorder %s26, 0
      %p79 = por %p77, %p78
      %s81 = sadd.s32 %s80, 1
      %p84 = scmp.eq.s32.totalorder %s20, 1
      %p85 = scmp.ne.s32.totalorder %s80, %s82
      %p86 = scmp.eq.s32.totalorder %s20, 0
      %p87 = por %p85, %p86
      %p88 = scmp.ne.s32.totalorder %s80, %s82
      %p89 = scmp.eq.s32.totalorder %s25, 1
      %p90 = por %p88, %p89
      %p91 = scmp.ne.s32.totalorder %s82, %s83
      %p92 = scmp.eq.s32.totalorder %s25, 0
      %p93 = por %p91, %p92
      %p94 = scmp.ne.s32.totalorder %s82, %s83
      %p95 = scmp.eq.s32.totalorder %s26, 1
      %p96 = por %p94, %p95
      %p98 = scmp.ne.s32.totalorder %s83, %s97
      %p99 = scmp.eq.s32.totalorder %s26, 0
      %p100 = por %p98, %p99
      %s102 = sadd.s32 %s101, 1
      %p105 = scmp.eq.s32.totalorder %s20, 1
      %p106 = scmp.ne.s32.totalorder %s101, %s103
      %p107 = scmp.eq.s32.totalorder %s20, 0
      %p108 = por %p106, %p107
      %p109 = scmp.ne.s32.totalorder %s101, %s103
      %p110 = scmp.eq.s32.totalorder %s25, 1
      %p111 = por %p109, %p110
      %p112 = scmp.ne.s32.totalorder %s103, %s104
      %p113 = scmp.eq.s32.totalorder %s25, 0
      %p114 = por %p112, %p113
      %p115 = scmp.ne.s32.totalorder %s103, %s104
      %p116 = scmp.eq.s32.totalorder %s26, 1
      %p117 = por %p115, %p116
      %p119 = scmp.ne.s32.totalorder %s104, %s118
      %p120 = scmp.eq.s32.totalorder %s26, 0
      %p121 = por %p119, %p120
      %s123 = sadd.s32 %s122, 1
      %p126 = scmp.eq.s32.totalorder %s20, 1
      %p127 = scmp.ne.s32.totalorder %s122, %s124
      %p128 = scmp.eq.s32.totalorder %s20, 0
      %p129 = por %p127, %p128
      %p130 = scmp.ne.s32.totalorder %s122, %s124
      %p131 = scmp.eq.s32.totalorder %s25, 1
      %p132 = por %p130, %p131
      %p133 = scmp.ne.s32.totalorder %s124, %s125
      %p134 = scmp.eq.s32.totalorder %s25, 0
      %p135 = por %p133, %p134
      %p136 = scmp.ne.s32.totalorder %s124, %s125
      %p137 = scmp.eq.s32.totalorder %s26, 1
      %p138 = por %p136, %p137
      %p140 = scmp.ne.s32.totalorder %s125, %s139
      %p141 = scmp.eq.s32.totalorder %s26, 0
      %p142 = por %p140, %p141
      %s144 = sadd.s32 %s143, 1
      %p147 = scmp.eq.s32.totalorder %s20, 1
      %p148 = scmp.ne.s32.totalorder %s143, %s145
      %p149 = scmp.eq.s32.totalorder %s20, 0
      %p150 = por %p148, %p149
      %p151 = scmp.ne.s32.totalorder %s143, %s145
      %p152 = scmp.eq.s32.totalorder %s25, 1
      %p153 = por %p151, %p152
      %p154 = scmp.ne.s32.totalorder %s145, %s146
      %p155 = scmp.eq.s32.totalorder %s25, 0
      %p156 = por %p154, %p155
      %p157 = scmp.ne.s32.totalorder %s145, %s146
      %p158 = scmp.eq.s32.totalorder %s26, 1
      %p159 = por %p157, %p158
      %p161 = scmp.ne.s32.totalorder %s146, %s160
      %p162 = scmp.eq.s32.totalorder %s26, 0
      %p163 = por %p161, %p162
      %s165 = sadd.s32 %s164, 1
      %p168 = scmp.eq.s32.totalorder %s20, 1
      %p169 = scmp.ne.s32.totalorder %s164, %s166
      %p170 = scmp.eq.s32.totalorder %s20, 0
      %p171 = por %p169, %p170
      %p172 = scmp.ne.s32.totalorder %s164, %s166
      %p173 = scmp.eq.s32.totalorder %s25, 1
      %p174 = por %p172, %p173
      %p175 = scmp.ne.s32.totalorder %s166, %s167
      %p176 = scmp.eq.s32.totalorder %s25, 0
      %p177 = por %p175, %p176
      %p178 = scmp.ne.s32.totalorder %s166, %s167
      %p179 = scmp.eq.s32.totalorder %s26, 1
      %p180 = por %p178, %p179
      %p182 = scmp.ne.s32.totalorder %s167, %s181
      %p183 = scmp.eq.s32.totalorder %s26, 0
      %p184 = por %p182, %p183
      %s186 = sadd.s32 %s185, 1
      %p189 = scmp.eq.s32.totalorder %s20, 1
      %p190 = scmp.ne.s32.totalorder %s185, %s187
      %p191 = scmp.eq.s32.totalorder %s20, 0
      %p192 = por %p190, %p191
      %p193 = scmp.ne.s32.totalorder %s185, %s187
      %p194 = scmp.eq.s32.totalorder %s25, 1
      %p195 = por %p193, %p194
      %p196 = scmp.ne.s32.totalorder %s187, %s188
      %p197 = scmp.eq.s32.totalorder %s25, 0
      %p198 = por %p196, %p197
      %p199 = scmp.ne.s32.totalorder %s187, %s188
      %p200 = scmp.eq.s32.totalorder %s26, 1
      %p201 = por %p199, %p200
      %p203 = scmp.ne.s32.totalorder %s188, %s202
      %p204 = scmp.eq.s32.totalorder %s26, 0
      %p205 = por %p203, %p204
      %s207 = sadd.s32 %s206, 1
      %p210 = scmp.eq.s32.totalorder %s20, 1
      %p211 = scmp.ne.s32.totalorder %s206, %s208
      %p212 = scmp.eq.s32.totalorder %s20, 0
      %p213 = por %p211, %p212
      %p214 = scmp.ne.s32.totalorder %s206, %s208
      %p215 = scmp.eq.s32.totalorder %s25, 1
      %p216 = por %p214, %p215
      %p217 = scmp.ne.s32.totalorder %s208, %s209
      %p218 = scmp.eq.s32.totalorder %s25, 0
      %p219 = por %p217, %p218
      %p220 = scmp.ne.s32.totalorder %s208, %s209
      %p221 = scmp.eq.s32.totalorder %s26, 1
      %p222 = por %p220, %p221
      %p224 = scmp.ne.s32.totalorder %s209, %s223
      %p225 = scmp.eq.s32.totalorder %s26, 0
      %p226 = por %p224, %p225
      %s228 = sadd.s32 %s227, 1
      %p231 = scmp.eq.s32.totalorder %s20, 1
      %p232 = scmp.ne.s32.totalorder %s227, %s229
      %p233 = scmp.eq.s32.totalorder %s20, 0
      %p234 = por %p232, %p233
      %p235 = scmp.ne.s32.totalorder %s227, %s229
      %p236 = scmp.eq.s32.totalorder %s25, 1
      %p237 = por %p235, %p236
      %p238 = scmp.ne.s32.totalorder %s229, %s230
      %p239 = scmp.eq.s32.totalorder %s25, 0
      %p240 = por %p238, %p239
      %p241 = scmp.ne.s32.totalorder %s229, %s230
      %p242 = scmp.eq.s32.totalorder %s26, 1
      %p243 = por %p241, %p242
      %p245 = scmp.ne.s32.totalorder %s230, %s244
      %p246 = scmp.eq.s32.totalorder %s26, 0
      %p247 = por %p245, %p246
      %s249 = sadd.s32 %s248, 1
      %p252 = scmp.eq.s32.totalorder %s20, 1
      %p253 = scmp.ne.s32.totalorder %s248, %s250
      %p254 = scmp.eq.s32.totalorder %s20, 0
      %p255 = por %p253, %p254
      %p256 = scmp.ne.s32.totalorder %s248, %s250
      %p257 = scmp.eq.s32.totalorder %s25, 1
      %p258 = por %p256, %p257
      %p259 = scmp.ne.s32.totalorder %s250, %s251
      %p260 = scmp.eq.s32.totalorder %s25, 0
      %p261 = por %p259, %p260
      %p262 = scmp.ne.s32.totalorder %s250, %s251
      %p263 = scmp.eq.s32.totalorder %s26, 1
      %p264 = por %p262, %p263
      %p266 = scmp.ne.s32.totalorder %s251, %s265
      %p267 = scmp.eq.s32.totalorder %s26, 0
      %p268 = por %p266, %p267
      %s269 = ssub.s32 %s20, %s27
      %p270 = scmp.eq.s32.totalorder %s269, 0
      %s272 = sadd.s32 %s271, 1
      %s273 = scalar_select %p270, %s271, %s272
      %p276 = pneg %p270
      %p277 = scmp.eq.s32.totalorder %s20, 1
      %p278 = por %p276, %p277
      %p279 = scmp.ne.s32.totalorder %s271, %s274
      %p280 = scmp.eq.s32.totalorder %s20, 0
      %p281 = por %p279, %p280
      %p282 = scmp.ne.s32.totalorder %s271, %s274
      %p283 = scmp.eq.s32.totalorder %s25, 1
      %p284 = por %p282, %p283
      %p285 = scmp.ne.s32.totalorder %s274, %s275
      %p286 = scmp.eq.s32.totalorder %s25, 0
      %p287 = por %p285, %p286
      %p288 = scmp.ne.s32.totalorder %s274, %s275
      %p289 = scmp.eq.s32.totalorder %s26, 1
      %p290 = por %p288, %p289
      %p292 = scmp.ne.s32.totalorder %s275, %s291
      %p293 = scmp.eq.s32.totalorder %s26, 0
      %p294 = por %p292, %p293
      %p295 = scmp.le.s32.totalorder 1, %s20
      %p296 = scmp.lt.s32.totalorder %s20, 3
      %p297 = pnand %p295, %p296
      %p298 = pneg %p297
      // Predicated region
      $region9: #{_text_encoder_forward.1} parent=5 // pred_check
        _
      $region10: #{_text_encoder_forward.1} parent=5 // pred_check_branch
        %300 = sbr.rel (%p297) target = $region12
      $region11: #{_text_encoder_forward.1} parent=5 // pred_region
        %s301 = ssub.s32 %s20, 1
        // Predicated region
        $region13: #{_text_encoder_forward.1} parent=11 // pred_check
          %p302 = pneg %p93
        $region14: #{_text_encoder_forward.1} parent=11 // pred_check_branch
          %304 = sbr.rel (%p302) target = $region16
        $region15: #{_text_encoder_forward.1} parent=11 // pred_region
          _
        $region16: #{_text_encoder_forward.1} parent=11 // pred_fallthru
          _
        // Predicated region
        $region17: #{_text_encoder_forward.1} parent=11 // pred_check
          %p305 = pneg %p114
        $region18: #{_text_encoder_forward.1} parent=11 // pred_check_branch
          %307 = sbr.rel (%p305) target = $region20
        $region19: #{_text_encoder_forward.1} parent=11 // pred_region
          _
        $region20: #{_text_encoder_forward.1} parent=11 // pred_fallthru
          _
        // Predicated region
        $region21: #{_text_encoder_forward.1} parent=11 // pred_check
          %p308 = pneg %p135
        $region22: #{_text_encoder_forward.1} parent=11 // pred_check_branch
          %310 = sbr.rel (%p308) target = $region24
        $region23: #{_text_encoder_forward.1} parent=11 // pred_region
          _
        $region24: #{_text_encoder_forward.1} parent=11 // pred_fallthru
          _
        // Predicated region
        $region25: #{_text_encoder_forward.1} parent=11 // pred_check
          %p311 = pneg %p156
        $region26: #{_text_encoder_forward.1} parent=11 // pred_check_branch
          %313 = sbr.rel (%p311) target = $region28
        $region27: #{_text_encoder_forward.1} parent=11 // pred_region
          _
        $region28: #{_text_encoder_forward.1} parent=11 // pred_fallthru
          _
        // Predicated region
        $region29: #{_text_encoder_forward.1} parent=11 // pred_check
          %p314 = pneg %p177
        $region30: #{_text_encoder_forward.1} parent=11 // pred_check_branch
          %316 = sbr.rel (%p314) target = $region32
        $region31: #{_text_encoder_forward.1} parent=11 // pred_region
          _
        $region32: #{_text_encoder_forward.1} parent=11 // pred_fallthru
          _
        // Predicated region
        $region33: #{_text_encoder_forward.1} parent=11 // pred_check
          %p317 = pneg %p198
        $region34: #{_text_encoder_forward.1} parent=11 // pred_check_branch
          %319 = sbr.rel (%p317) target = $region36
        $region35: #{_text_encoder_forward.1} parent=11 // pred_region
          _
        $region36: #{_text_encoder_forward.1} parent=11 // pred_fallthru
          _
        // Predicated region
        $region37: #{_text_encoder_forward.1} parent=11 // pred_check
          %p320 = pneg %p219
        $region38: #{_text_encoder_forward.1} parent=11 // pred_check_branch
          %322 = sbr.rel (%p320) target = $region40
        $region39: #{_text_encoder_forward.1} parent=11 // pred_region
          _
        $region40: #{_text_encoder_forward.1} parent=11 // pred_fallthru
          _
        // Predicated region
        $region41: #{_text_encoder_forward.1} parent=11 // pred_check
          %p323 = pneg %p240
        $region42: #{_text_encoder_forward.1} parent=11 // pred_check_branch
          %325 = sbr.rel (%p323) target = $region44
        $region43: #{_text_encoder_forward.1} parent=11 // pred_region
          _
        $region44: #{_text_encoder_forward.1} parent=11 // pred_fallthru
          _
        // Predicated region
        $region45: #{_text_encoder_forward.1} parent=11 // pred_check
          %p326 = pneg %p261
        $region46: #{_text_encoder_forward.1} parent=11 // pred_check_branch
          %328 = sbr.rel (%p326) target = $region48
        $region47: #{_text_encoder_forward.1} parent=11 // pred_region
          _
        $region48: #{_text_encoder_forward.1} parent=11 // pred_fallthru
          _
      $region12: #{_text_encoder_forward.1} parent=5 // pred_fallthru
        _
      %p329 = scmp.lt.s32.totalorder %s20, 2
      // Predicated region
      $region49: #{_text_encoder_forward.1} parent=5 // pred_check
        %p330 = pneg %p329
      $region50: #{_text_encoder_forward.1} parent=5 // pred_check_branch
        %332 = sbr.rel (%p330) target = $region52
      $region51: #{_text_encoder_forward.1} parent=5 // pred_region
        // Predicated region
        $region53: #{_text_encoder_forward.1} parent=51 // pred_check
          %p333 = pneg %p40
        $region54: #{_text_encoder_forward.1} parent=51 // pred_check_branch
          %335 = sbr.rel (%p333) target = $region56
        $region55: #{_text_encoder_forward.1} parent=51 // pred_region
          %s336 = smul.u32 16, %s20
          %p337 = scmp.lt.s32.totalorder %s336, 31
          %s338 = scalar_select %p337, %s336, 31
          %s339 = smul.addr %s338, 4
          %s340 = scalar_lea.vmem %s0, %s339
          %s341 = smul.u32 16, %s20
        $region56: #{_text_encoder_forward.1} parent=51 // pred_fallthru
          _
        // Predicated region
        $region57: #{_text_encoder_forward.1} parent=51 // pred_check
          %p342 = pneg %p66
        $region58: #{_text_encoder_forward.1} parent=51 // pred_check_branch
          %344 = sbr.rel (%p342) target = $region60
        $region59: #{_text_encoder_forward.1} parent=51 // pred_region
          %s345 = smul.u32 8, %s20
          %p346 = scmp.lt.s32.totalorder %s345, 15
          %s347 = scalar_select %p346, %s345, 15
          %s348 = scalar_lea.vmem %s1, %s347
          %s349 = smul.u32 8, %s20
        $region60: #{_text_encoder_forward.1} parent=51 // pred_fallthru
          _
      $region52: #{_text_encoder_forward.1} parent=5 // pred_fallthru
        _
      %p350 = scmp.le.s32.totalorder 1, %s20
      %p351 = scmp.lt.s32.totalorder %s20, 3
      %p352 = pnand %p350, %p351
      %p353 = pneg %p352
      // Predicated region
      $region61: #{_text_encoder_forward.1} parent=5 // pred_check
        _
      $region62: #{_text_encoder_forward.1} parent=5 // pred_check_branch
        %355 = sbr.rel (%p352) target = $region64
      $region63: #{_text_encoder_forward.1} parent=5 // pred_region
        %s356 = ssub.s32 %s20, 1
        %s357 = smul.u32 16, %s25
        %p358 = scmp.lt.s32.totalorder %s357, 31
        %s359 = scalar_select %p358, %s357, 31
        %s360 = smul.addr %s359, 4
        %s361 = scalar_lea.vmem %s0, %s360
        %p362 = pneg %p46
        %p363 = pneg %p43
        %s364 = smul.u32 8, %s25
        %p365 = scmp.lt.s32.totalorder %s364, 15
        %s366 = scalar_select %p365, %s364, 15
        %s367 = scalar_lea.vmem %s1, %s366
        %p368 = pneg %p72
        %p369 = pneg %p69
        %p370 = pneg %p93
        %p371 = pneg %p90
        %p372 = pneg %p114
        %p373 = pneg %p111
        %p374 = pneg %p135
        %p375 = pneg %p132
        %p376 = pneg %p156
        %p377 = pneg %p153
        %p378 = pneg %p177
        %p379 = pneg %p174
        %p380 = pneg %p198
        %p381 = pneg %p195
        %p382 = pneg %p219
        %p383 = pneg %p216
        %p384 = pneg %p240
        %p385 = pneg %p237
        %p386 = pneg %p261
        %p387 = pneg %p258
        %p388 = pneg %p287
        %p389 = pneg %p284
        %s390 = sand.u32 %s274, 1
        %s391 = scalar_lea.sflag [#allocation3], %s390
        %s392 = sand.u32 %s274, 1
        %s393 = smul.addr %s392, 8
        %s394 = scalar_lea.vmem [#allocation2], %s393
        %s395 = smul.u32 16, %s25
        %p396 = scmp.lt.s32.totalorder %s395, 31
        %s397 = scalar_select %p396, %s395, 31
        %s398 = smul.addr %s397, 4
        %s399 = scalar_lea.vmem %s0, %s398
        %s400 = smul.u32 16, %s25
        %s401 = smul.u32 8, %s25
        %p402 = scmp.lt.s32.totalorder %s401, 15
        %s403 = scalar_select %p402, %s401, 15
        %s404 = scalar_lea.vmem %s1, %s403
        %s405 = smul.u32 8, %s25
        %v407 = vld [vmem:[%s2] sm:$0xff]
        %v408 = vld [vmem:[%s399] sm:$0xf]
        %v409 = vld [vmem:[%s399 + $0x4] sm:$0xf]
        %v410 = vld [vmem:[%s399 + $0x8] sm:$0xf]
        %v411 = vld [vmem:[%s399 + $0xc] sm:$0xf]
        %v412 = vld [vmem:[%s399 + $0x10] sm:$0xf]
        %v413 = vld [vmem:[%s399 + $0x14] sm:$0xf]
        %v414 = vld [vmem:[%s399 + $0x18] sm:$0xf]
        %v415 = vld [vmem:[%s399 + $0x1c] sm:$0xf]
        %v416 = vld [vmem:[%s399 + $0x20] sm:$0xf]
        %v417 = vld [vmem:[%s399 + $0x24] sm:$0xf]
        %v418 = vld [vmem:[%s399 + $0x28] sm:$0xf]
        %v419 = vld [vmem:[%s399 + $0x2c] sm:$0xf]
        %v420 = vld [vmem:[%s399 + $0x30] sm:$0xf]
        %v421 = vld [vmem:[%s399 + $0x34] sm:$0xf]
        %v422 = vld [vmem:[%s399 + $0x38] sm:$0xf]
        %v423 = vld [vmem:[%s399 + $0x3c] sm:$0xf]
        %v424 = vunpack.c.l.bf16 %v408
        %v425 = vunpack.c.l.bf16 %v409
        %v426 = vunpack.c.l.bf16 %v410
        %v427 = vunpack.c.l.bf16 %v411
        %v428 = vunpack.c.l.bf16 %v412
        %v429 = vunpack.c.l.bf16 %v413
        %v430 = vunpack.c.l.bf16 %v414
        %v431 = vunpack.c.l.bf16 %v415
        %v432 = vunpack.c.l.bf16 %v416
        %v433 = vunpack.c.l.bf16 %v417
        %v434 = vunpack.c.l.bf16 %v418
        %v435 = vunpack.c.l.bf16 %v419
        %v436 = vunpack.c.l.bf16 %v420
        %v437 = vunpack.c.l.bf16 %v421
        %v438 = vunpack.c.l.bf16 %v422
        %v439 = vunpack.c.l.bf16 %v423
        %440 = vadd.xlane.f32.xlu0 %v424
        %v441 = vpop.xlane.xlu0 %440
        %442 = vadd.xlane.f32.xlu0 %v425
        %v443 = vpop.xlane.xlu0 %442
        %444 = vadd.xlane.f32.xlu0 %v426
        %v445 = vpop.xlane.xlu0 %444
        %446 = vadd.xlane.f32.xlu0 %v427
        %v447 = vpop.xlane.xlu0 %446
        %448 = vadd.xlane.f32.xlu0 %v428
        %v449 = vpop.xlane.xlu0 %448
        %450 = vadd.xlane.f32.xlu0 %v429
        %v451 = vpop.xlane.xlu0 %450
        %452 = vadd.xlane.f32.xlu0 %v430
        %v453 = vpop.xlane.xlu0 %452
        %454 = vadd.xlane.f32.xlu0 %v431
        %v455 = vpop.xlane.xlu0 %454
        %456 = vadd.xlane.f32.xlu0 %v432
        %v457 = vpop.xlane.xlu0 %456
        %458 = vadd.xlane.f32.xlu0 %v433
        %v459 = vpop.xlane.xlu0 %458
        %460 = vadd.xlane.f32.xlu0 %v434
        %v461 = vpop.xlane.xlu0 %460
        %462 = vadd.xlane.f32.xlu0 %v435
        %v463 = vpop.xlane.xlu0 %462
        %464 = vadd.xlane.f32.xlu0 %v436
        %v465 = vpop.xlane.xlu0 %464
        %466 = vadd.xlane.f32.xlu0 %v437
        %v467 = vpop.xlane.xlu0 %466
        %468 = vadd.xlane.f32.xlu0 %v438
        %v469 = vpop.xlane.xlu0 %468
        %470 = vadd.xlane.f32.xlu0 %v439
        %v471 = vpop.xlane.xlu0 %470
        %v472 = vrcp.pop 128.0
        %v473 = vmul.f32 %v441, %v472
        %v474 = vmul.f32 %v443, %v472
        %v475 = vmul.f32 %v445, %v472
        %v476 = vmul.f32 %v447, %v472
        %v477 = vmul.f32 %v449, %v472
        %v478 = vmul.f32 %v451, %v472
        %v479 = vmul.f32 %v453, %v472
        %v480 = vmul.f32 %v455, %v472
        %v481 = vmul.f32 %v457, %v472
        %v482 = vmul.f32 %v459, %v472
        %v483 = vmul.f32 %v461, %v472
        %v484 = vmul.f32 %v463, %v472
        %v485 = vmul.f32 %v465, %v472
        %v486 = vmul.f32 %v467, %v472
        %v487 = vmul.f32 %v469, %v472
        %v488 = vmul.f32 %v471, %v472
        %v489 = vsub.f32 %v424, %v473
        %v490 = vsub.f32 %v425, %v474
        %v491 = vsub.f32 %v426, %v475
        %v492 = vsub.f32 %v427, %v476
        %v493 = vsub.f32 %v428, %v477
        %v494 = vsub.f32 %v429, %v478
        %v495 = vsub.f32 %v430, %v479
        %v496 = vsub.f32 %v431, %v480
        %v497 = vsub.f32 %v432, %v481
        %v498 = vsub.f32 %v433, %v482
        %v499 = vsub.f32 %v434, %v483
        %v500 = vsub.f32 %v435, %v484
        %v501 = vsub.f32 %v436, %v485
        %v502 = vsub.f32 %v437, %v486
        %v503 = vsub.f32 %v438, %v487
        %v504 = vsub.f32 %v439, %v488
        %v505 = vmul.f32 %v489, %v489
        %v506 = vmul.f32 %v490, %v490
        %v507 = vmul.f32 %v491, %v491
        %v508 = vmul.f32 %v492, %v492
        %v509 = vmul.f32 %v493, %v493
        %v510 = vmul.f32 %v494, %v494
        %v511 = vmul.f32 %v495, %v495
        %v512 = vmul.f32 %v496, %v496
        %v513 = vmul.f32 %v497, %v497
        %v514 = vmul.f32 %v498, %v498
        %v515 = vmul.f32 %v499, %v499
        %v516 = vmul.f32 %v500, %v500
        %v517 = vmul.f32 %v501, %v501
        %v518 = vmul.f32 %v502, %v502
        %v519 = vmul.f32 %v503, %v503
        %v520 = vmul.f32 %v504, %v504
        %521 = vadd.xlane.f32.xlu0 %v505
        %v522 = vpop.xlane.xlu0 %521
        %523 = vadd.xlane.f32.xlu0 %v506
        %v524 = vpop.xlane.xlu0 %523
        %525 = vadd.xlane.f32.xlu0 %v507
        %v526 = vpop.xlane.xlu0 %525
        %527 = vadd.xlane.f32.xlu0 %v508
        %v528 = vpop.xlane.xlu0 %527
        %529 = vadd.xlane.f32.xlu0 %v509
        %v530 = vpop.xlane.xlu0 %529
        %531 = vadd.xlane.f32.xlu0 %v510
        %v532 = vpop.xlane.xlu0 %531
        %533 = vadd.xlane.f32.xlu0 %v511
        %v534 = vpop.xlane.xlu0 %533
        %535 = vadd.xlane.f32.xlu0 %v512
        %v536 = vpop.xlane.xlu0 %535
        %537 = vadd.xlane.f32.xlu0 %v513
        %v538 = vpop.xlane.xlu0 %537
        %539 = vadd.xlane.f32.xlu0 %v514
        %v540 = vpop.xlane.xlu0 %539
        %541 = vadd.xlane.f32.xlu0 %v515
        %v542 = vpop.xlane.xlu0 %541
        %543 = vadd.xlane.f32.xlu0 %v516
        %v544 = vpop.xlane.xlu0 %543
        %545 = vadd.xlane.f32.xlu0 %v517
        %v546 = vpop.xlane.xlu0 %545
        %547 = vadd.xlane.f32.xlu0 %v518
        %v548 = vpop.xlane.xlu0 %547
        %549 = vadd.xlane.f32.xlu0 %v519
        %v550 = vpop.xlane.xlu0 %549
        %551 = vadd.xlane.f32.xlu0 %v520
        %v552 = vpop.xlane.xlu0 %551
        %v553 = vmul.f32 %v522, %v472
        %v554 = vmul.f32 %v524, %v472
        %v555 = vmul.f32 %v526, %v472
        %v556 = vmul.f32 %v528, %v472
        %v557 = vmul.f32 %v530, %v472
        %v558 = vmul.f32 %v532, %v472
        %v559 = vmul.f32 %v534, %v472
        %v560 = vmul.f32 %v536, %v472
        %v561 = vmul.f32 %v538, %v472
        %v562 = vmul.f32 %v540, %v472
        %v563 = vmul.f32 %v542, %v472
        %v564 = vmul.f32 %v544, %v472
        %v565 = vmul.f32 %v546, %v472
        %v566 = vmul.f32 %v548, %v472
        %v567 = vmul.f32 %v550, %v472
        %v568 = vmul.f32 %v552, %v472
        %v569 = vadd.f32 %v553, 1e-05
        %v570 = vadd.f32 %v554, 1e-05
        %v571 = vadd.f32 %v555, 1e-05
        %v572 = vadd.f32 %v556, 1e-05
        %v573 = vadd.f32 %v557, 1e-05
        %v574 = vadd.f32 %v558, 1e-05
        %v575 = vadd.f32 %v559, 1e-05
        %v576 = vadd.f32 %v560, 1e-05
        %v577 = vadd.f32 %v561, 1e-05
        %v578 = vadd.f32 %v562, 1e-05
        %v579 = vadd.f32 %v563, 1e-05
        %v580 = vadd.f32 %v564, 1e-05
        %v581 = vadd.f32 %v565, 1e-05
        %v582 = vadd.f32 %v566, 1e-05
        %v583 = vadd.f32 %v567, 1e-05
        %v584 = vadd.f32 %v568, 1e-05
        %v585 = vrsqrt.pop %v569
        %v586 = vrsqrt.pop %v570
        %v587 = vrsqrt.pop %v571
        %v588 = vrsqrt.pop %v572
        %v589 = vrsqrt.pop %v573
        %v590 = vrsqrt.pop %v574
        %v591 = vrsqrt.pop %v575
        %v592 = vrsqrt.pop %v576
        %v593 = vrsqrt.pop %v577
        %v594 = vrsqrt.pop %v578
        %v595 = vrsqrt.pop %v579
        %v596 = vrsqrt.pop %v580
        %v597 = vrsqrt.pop %v581
        %v598 = vrsqrt.pop %v582
        %v599 = vrsqrt.pop %v583
        %v600 = vrsqrt.pop %v584
        %v601 = vmul.f32 %v489, %v585
        %v602 = vmul.f32 %v490, %v586
        %v603 = vmul.f32 %v491, %v587
        %v604 = vmul.f32 %v492, %v588
        %v605 = vmul.f32 %v493, %v589
        %v606 = vmul.f32 %v494, %v590
        %v607 = vmul.f32 %v495, %v591
        %v608 = vmul.f32 %v496, %v592
        %v609 = vmul.f32 %v497, %v593
        %v610 = vmul.f32 %v498, %v594
        %v611 = vmul.f32 %v499, %v595
        %v612 = vmul.f32 %v500, %v596
        %v613 = vmul.f32 %v501, %v597
        %v614 = vmul.f32 %v502, %v598
        %v615 = vmul.f32 %v503, %v599
        %v616 = vmul.f32 %v504, %v600
        %v617 = vlaneseq
        %v618 = vshrl.u32 %v617, 7
        %v619 = vsub.s32 0, %v618
        %v620 = vrot.slane %v407, %v619
        %v621 = vmul.f32 %v601, %v620
        %v622 = vmul.f32 %v602, %v620
        %v623 = vmul.f32 %v603, %v620
        %v624 = vmul.f32 %v604, %v620
        %v625 = vmul.f32 %v605, %v620
        %v626 = vmul.f32 %v606, %v620
        %v627 = vmul.f32 %v607, %v620
        %v628 = vmul.f32 %v608, %v620
        %v629 = vmul.f32 %v609, %v620
        %v630 = vmul.f32 %v610, %v620
        %v631 = vmul.f32 %v611, %v620
        %v632 = vmul.f32 %v612, %v620
        %v633 = vmul.f32 %v613, %v620
        %v634 = vmul.f32 %v614, %v620
        %v635 = vmul.f32 %v615, %v620
        %v636 = vmul.f32 %v616, %v620
        %v637 = vlaneseq
        %v638 = vshrl.u32 %v637, 7
        %v639 = vsub.s32 1, %v638
        %v640 = vrot.slane %v407, %v639
        %v641 = vadd.f32 %v621, %v640
        %v642 = vadd.f32 %v622, %v640
        %v643 = vadd.f32 %v623, %v640
        %v644 = vadd.f32 %v624, %v640
        %v645 = vadd.f32 %v625, %v640
        %v646 = vadd.f32 %v626, %v640
        %v647 = vadd.f32 %v627, %v640
        %v648 = vadd.f32 %v628, %v640
        %v649 = vadd.f32 %v629, %v640
        %v650 = vadd.f32 %v630, %v640
        %v651 = vadd.f32 %v631, %v640
        %v652 = vadd.f32 %v632, %v640
        %v653 = vadd.f32 %v633, %v640
        %v654 = vadd.f32 %v634, %v640
        %v655 = vadd.f32 %v635, %v640
        %v656 = vadd.f32 %v636, %v640
        %v657 = vld [vmem:[%s9] sm:$0xff]
        %v658 = vpack.c.bf16 %v642, %v641
        %v659 = vpack.c.bf16 %v644, %v643
        %v660 = vpack.c.bf16 %v646, %v645
        %v661 = vpack.c.bf16 %v648, %v647
        %v662 = vpack.c.bf16 %v650, %v649
        %v663 = vpack.c.bf16 %v652, %v651
        %v664 = vpack.c.bf16 %v654, %v653
        %v665 = vpack.c.bf16 %v656, %v655
        %v666 = vld [vmem:[%s3] sm:$0xff]
        %v667 = vld [vmem:[%s3 + $0x8] sm:$0xf]
        %v668 = vld [vmem:[%s3 + $0xc] sm:$0xff]
        %v669 = vld [vmem:[%s3 + $0x14] sm:$0xf]
        %v670 = vld [vmem:[%s3 + $0x18] sm:$0xff]
        %v671 = vld [vmem:[%s3 + $0x20] sm:$0xf]
        %v672 = vld [vmem:[%s3 + $0x24] sm:$0xff]
        %v673 = vld [vmem:[%s3 + $0x2c] sm:$0xf]
        %v674 = vld [vmem:[%s3 + $0x30] sm:$0xff]
        %v675 = vld [vmem:[%s3 + $0x38] sm:$0xf]
        %v676 = vld [vmem:[%s3 + $0x3c] sm:$0xff]
        %v677 = vld [vmem:[%s3 + $0x44] sm:$0xf]
        %v678 = vld [vmem:[%s3 + $0x48] sm:$0xff]
        %v679 = vld [vmem:[%s3 + $0x50] sm:$0xf]
        %v680 = vld [vmem:[%s3 + $0x54] sm:$0xff]
        %v681 = vld [vmem:[%s3 + $0x5c] sm:$0xf]
        %v682 = vld [vmem:[%s3 + $0x60] sm:$0xff]
        %v683 = vld [vmem:[%s3 + $0x68] sm:$0xf]
        %v684 = vld [vmem:[%s3 + $0x6c] sm:$0xff]
        %v685 = vld [vmem:[%s3 + $0x74] sm:$0xf]
        %v686 = vld [vmem:[%s3 + $0x78] sm:$0xff]
        %v687 = vld [vmem:[%s3 + $0x80] sm:$0xf]
        %v688 = vld [vmem:[%s3 + $0x84] sm:$0xff]
        %v689 = vld [vmem:[%s3 + $0x8c] sm:$0xf]
        %v690 = vld [vmem:[%s3 + $0x90] sm:$0xff]
        %v691 = vld [vmem:[%s3 + $0x98] sm:$0xf]
        %v692 = vld [vmem:[%s3 + $0x9c] sm:$0xff]
        %v693 = vld [vmem:[%s3 + $0xa4] sm:$0xf]
        %v694 = vld [vmem:[%s3 + $0xa8] sm:$0xff]
        %v695 = vld [vmem:[%s3 + $0xb0] sm:$0xf]
        %v696 = vld [vmem:[%s3 + $0xb4] sm:$0xff]
        %v697 = vld [vmem:[%s3 + $0xbc] sm:$0xf]
        %v698 = vld [vmem:[%s4] sm:$0x7]
        %v700 = vlaneseq
        %v701 = vshrl.u32 %v700, 7
        %v702 = vsub.s32 0, %v701
        %v703 = vrot.slane %v698, %v702
        %v704 = vlaneseq
        %v705 = vshrl.u32 %v704, 7
        %v706 = vsub.s32 1, %v705
        %v707 = vrot.slane %v698, %v706
        %v708 = vlaneseq
        %v709 = vshrl.u32 %v708, 7
        %v710 = vsub.s32 2, %v709
        %v711 = vrot.slane %v698, %v710
        %v747 = vunpack.c.l.b16 %v666
        %v748 = vunpack.c.h.b16 %v666
        %v749 = vunpack.c.l.b16 %v667
        %v750 = vunpack.c.l.b16 %v668
        %v751 = vunpack.c.h.b16 %v668
        %v752 = vunpack.c.l.b16 %v669
        %v753 = vunpack.c.l.b16 %v670
        %v754 = vunpack.c.h.b16 %v670
        %v755 = vunpack.c.l.b16 %v671
        %v756 = vunpack.c.l.b16 %v672
        %v757 = vunpack.c.h.b16 %v672
        %v758 = vunpack.c.l.b16 %v673
        %v759 = vunpack.c.l.b16 %v674
        %v760 = vunpack.c.h.b16 %v674
        %v761 = vunpack.c.l.b16 %v675
        %v762 = vunpack.c.l.b16 %v676
        %v763 = vunpack.c.h.b16 %v676
        %v764 = vunpack.c.l.b16 %v677
        %v765 = vunpack.c.l.b16 %v678
        %v766 = vunpack.c.h.b16 %v678
        %v767 = vunpack.c.l.b16 %v679
        %v768 = vunpack.c.l.b16 %v680
        %v769 = vunpack.c.h.b16 %v680
        %v770 = vunpack.c.l.b16 %v681
        %v771 = vunpack.c.l.b16 %v682
        %v772 = vunpack.c.h.b16 %v682
        %v773 = vunpack.c.l.b16 %v683
        %v774 = vunpack.c.l.b16 %v684
        %v775 = vunpack.c.h.b16 %v684
        %v776 = vunpack.c.l.b16 %v685
        %v777 = vunpack.c.l.b16 %v686
        %v778 = vunpack.c.h.b16 %v686
        %v779 = vunpack.c.l.b16 %v687
        %v780 = vunpack.c.l.b16 %v688
        %v781 = vunpack.c.h.b16 %v688
        %v782 = vunpack.c.l.b16 %v689
        %v783 = vunpack.c.l.b16 %v690
        %v784 = vunpack.c.h.b16 %v690
        %v785 = vunpack.c.l.b16 %v691
        %v786 = vunpack.c.l.b16 %v692
        %v787 = vunpack.c.h.b16 %v692
        %v788 = vunpack.c.l.b16 %v693
        %v789 = vunpack.c.l.b16 %v694
        %v790 = vunpack.c.h.b16 %v694
        %v791 = vunpack.c.l.b16 %v695
        %v792 = vunpack.c.l.b16 %v696
        %v793 = vunpack.c.h.b16 %v696
        %v794 = vunpack.c.l.b16 %v697
        %v795 = vpack.c.b16 %v750, %v747
        %v796 = vpack.c.b16 %v751, %v748
        %v797 = vpack.c.b16 %v752, %v749
        %v798 = vpack.c.b16 %v756, %v753
        %v799 = vpack.c.b16 %v757, %v754
        %v800 = vpack.c.b16 %v758, %v755
        %v801 = vpack.c.b16 %v762, %v759
        %v802 = vpack.c.b16 %v763, %v760
        %v803 = vpack.c.b16 %v764, %v761
        %v804 = vpack.c.b16 %v768, %v765
        %v805 = vpack.c.b16 %v769, %v766
        %v806 = vpack.c.b16 %v770, %v767
        %v807 = vpack.c.b16 %v774, %v771
        %v808 = vpack.c.b16 %v775, %v772
        %v809 = vpack.c.b16 %v776, %v773
        %v810 = vpack.c.b16 %v780, %v777
        %v811 = vpack.c.b16 %v781, %v778
        %v812 = vpack.c.b16 %v782, %v779
        %v813 = vpack.c.b16 %v786, %v783
        %v814 = vpack.c.b16 %v787, %v784
        %v815 = vpack.c.b16 %v788, %v785
        %v816 = vpack.c.b16 %v792, %v789
        %v817 = vpack.c.b16 %v793, %v790
        %v818 = vpack.c.b16 %v794, %v791
        %843 = vmatprep.subr.bf16.mxu0 %v796
        %844 = vmatpush1.bf16.msra.mxu0 %v795
        %845 = vmatprep.subr.bf16.mxu0 %v799
        %846 = vmatpush1.bf16.msra.mxu0 %v798
        %847 = vmatprep.subr.bf16.mxu0 %v802
        %848 = vmatpush1.bf16.msra.mxu0 %v801
        %849 = vmatprep.subr.bf16.mxu0 %v805
        %850 = vmatpush1.bf16.msra.mxu0 %v804
        %851 = vmatprep.subr.bf16.mxu0 %v808
        %852 = vmatpush1.bf16.msra.mxu0 %v807
        %853 = vmatprep.subr.bf16.mxu0 %v811
        %854 = vmatpush1.bf16.msra.mxu0 %v810
        %855 = vmatprep.subr.bf16.mxu0 %v814
        %856 = vmatpush1.bf16.msra.mxu0 %v813
        %857 = vmatprep.subr.bf16.mxu0 %v817
        %858 = vmatpush1.bf16.msra.mxu0 %v816
        %859 = vmatprep.subr.bf16.mxu0 0
        %860 = vmatpush1.bf16.msra.mxu0 0
        %861 = vmatprep.subr.bf16.mxu0 0
        %862 = vmatpush1.bf16.msra.mxu0 0
        %863 = vmatprep.subr.bf16.mxu0 0
        %864 = vmatpush1.bf16.msra.mxu0 0
        %865 = vmatprep.subr.bf16.mxu0 0
        %866 = vmatpush1.bf16.msra.mxu0 0
        %867 = vmatprep.subr.bf16.mxu0 0
        %868 = vmatpush1.bf16.msra.mxu0 0
        %869 = vmatprep.subr.bf16.mxu0 0
        %870 = vmatpush1.bf16.msra.mxu0 0
        %871 = vmatprep.subr.bf16.mxu0 0
        %872 = vmatpush1.bf16.msra.mxu0 0
        %873 = vmatprep.subr.bf16.mxu0 0
        %874 = vmatpush1.bf16.msra.mxu0 0
        %875 = vmatprep.mubr.bf16.mxu0 0
        %876 = vmatmul.mubr.bf16.gmra.mrb[0].mxu0 %v658
        %v877 = vpop.f32.mrb[0].mxu0
        %v878 = vadd.f32 %v703, %v877
        %v879 = vpop.f32.mrb[0].mxu0
        %v880 = vadd.f32 %v707, %v879
        %v881 = vpop.f32.mrb[0].mxu0
        %v882 = vadd.f32 %v703, %v881
        %v883 = vpop.f32.mrb[0].mxu0
        %v884 = vadd.f32 %v707, %v883
        %885 = vmatprep.mubr.bf16.mxu0 0
        %886 = vmatmul.mubr.bf16.gmra.mrb[0].mxu0 %v659
        %v887 = vpop.f32.mrb[0].mxu0
        %v888 = vadd.f32 %v703, %v887
        %v889 = vpop.f32.mrb[0].mxu0
        %v890 = vadd.f32 %v707, %v889
        %v891 = vpop.f32.mrb[0].mxu0
        %v892 = vadd.f32 %v703, %v891
        %v893 = vpop.f32.mrb[0].mxu0
        %v894 = vadd.f32 %v707, %v893
        %895 = vmatprep.mubr.bf16.mxu0 0
        %896 = vmatmul.mubr.bf16.gmra.mrb[0].mxu0 %v660
        %v897 = vpop.f32.mrb[0].mxu0
        %v898 = vadd.f32 %v703, %v897
        %v899 = vpop.f32.mrb[0].mxu0
        %v900 = vadd.f32 %v707, %v899
        %v901 = vpop.f32.mrb[0].mxu0
        %v902 = vadd.f32 %v703, %v901
        %v903 = vpop.f32.mrb[0].mxu0
        %v904 = vadd.f32 %v707, %v903
        %905 = vmatprep.mubr.bf16.mxu0 0
        %906 = vmatmul.mubr.bf16.gmra.mrb[0].mxu0 %v661
        %v907 = vpop.f32.mrb[0].mxu0
        %v908 = vadd.f32 %v703, %v907
        %v909 = vpop.f32.mrb[0].mxu0
        %v910 = vadd.f32 %v707, %v909
        %v911 = vpop.f32.mrb[0].mxu0
        %v912 = vadd.f32 %v703, %v911
        %v913 = vpop.f32.mrb[0].mxu0
        %v914 = vadd.f32 %v707, %v913
        %915 = vmatprep.mubr.bf16.mxu0 0
        %916 = vmatmul.mubr.bf16.gmra.mrb[0].mxu0 %v662
        %v917 = vpop.f32.mrb[0].mxu0
        %v918 = vadd.f32 %v703, %v917
        %v919 = vpop.f32.mrb[0].mxu0
        %v920 = vadd.f32 %v707, %v919
        %v921 = vpop.f32.mrb[0].mxu0
        %v922 = vadd.f32 %v703, %v921
        %v923 = vpop.f32.mrb[0].mxu0
        %v924 = vadd.f32 %v707, %v923
        %925 = vmatprep.mubr.bf16.mxu0 0
        %926 = vmatmul.mubr.bf16.gmra.mrb[0].mxu0 %v663
        %v927 = vpop.f32.mrb[0].mxu0
        %v928 = vadd.f32 %v703, %v927
        %v929 = vpop.f32.mrb[0].mxu0
        %v930 = vadd.f32 %v707, %v929
        %v931 = vpop.f32.mrb[0].mxu0
        %v932 = vadd.f32 %v703, %v931
        %v933 = vpop.f32.mrb[0].mxu0
        %v934 = vadd.f32 %v707, %v933
        %935 = vmatprep.mubr.bf16.mxu0 0
        %936 = vmatmul.mubr.bf16.gmra.mrb[0].mxu0 %v664
        %v937 = vpop.f32.mrb[0].mxu0
        %v938 = vadd.f32 %v703, %v937
        %v939 = vpop.f32.mrb[0].mxu0
        %v940 = vadd.f32 %v707, %v939
        %v941 = vpop.f32.mrb[0].mxu0
        %v942 = vadd.f32 %v703, %v941
        %v943 = vpop.f32.mrb[0].mxu0
        %v944 = vadd.f32 %v707, %v943
        %945 = vmatprep.mubr.bf16.mxu0 0
        %946 = vmatmul.mubr.bf16.gmra.mrb[0].mxu0 %v665
        %v947 = vpop.f32.mrb[0].mxu0
        %v948 = vadd.f32 %v703, %v947
        %v949 = vpop.f32.mrb[0].mxu0
        %v950 = vadd.f32 %v707, %v949
        %v951 = vpop.f32.mrb[0].mxu0
        %v952 = vadd.f32 %v703, %v951
        %v953 = vpop.f32.mrb[0].mxu0
        %v954 = vadd.f32 %v707, %v953
        %955 = vdwg.mxu0
        %956 = vmatprep.subr.bf16.mxu0 0
        %957 = vmatpush1.bf16.msra.mxu0 %v797
        %958 = vmatprep.subr.bf16.mxu0 0
        %959 = vmatpush1.bf16.msra.mxu0 %v800
        %960 = vmatprep.subr.bf16.mxu0 0
        %961 = vmatpush1.bf16.msra.mxu0 %v803
        %962 = vmatprep.subr.bf16.mxu0 0
        %963 = vmatpush1.bf16.msra.mxu0 %v806
        %964 = vmatprep.subr.bf16.mxu0 0
        %965 = vmatpush1.bf16.msra.mxu0 %v809
        %966 = vmatprep.subr.bf16.mxu0 0
        %967 = vmatpush1.bf16.msra.mxu0 %v812
        %968 = vmatprep.subr.bf16.mxu0 0
        %969 = vmatpush1.bf16.msra.mxu0 %v815
        %970 = vmatprep.subr.bf16.mxu0 0
        %971 = vmatpush1.bf16.msra.mxu0 %v818
        %972 = vmatprep.subr.bf16.mxu0 0
        %973 = vmatpush1.bf16.msra.mxu0 0
        %974 = vmatprep.subr.bf16.mxu0 0
        %975 = vmatpush1.bf16.msra.mxu0 0
        %976 = vmatprep.subr.bf16.mxu0 0
        %977 = vmatpush1.bf16.msra.mxu0 0
        %978 = vmatprep.subr.bf16.mxu0 0
        %979 = vmatpush1.bf16.msra.mxu0 0
        %980 = vmatprep.subr.bf16.mxu0 0
        %981 = vmatpush1.bf16.msra.mxu0 0
        %982 = vmatprep.subr.bf16.mxu0 0
        %983 = vmatpush1.bf16.msra.mxu0 0
        %984 = vmatprep.subr.bf16.mxu0 0
        %985 = vmatpush1.bf16.msra.mxu0 0
        %986 = vmatprep.subr.bf16.mxu0 0
        %987 = vmatpush1.bf16.msra.mxu0 0
        %988 = vmatprep.mubr.bf16.mxu0 0
        %989 = vmatmul.mubr.bf16.gmra.mrb[0].mxu0 %v658
        %v990 = vpop.f32.mrb[0].mxu0
        %v991 = vadd.f32 %v711, %v990
        %v992 = vpop.f32.mrb[0].mxu0
        %v993 = vpop.f32.mrb[0].mxu0
        %v994 = vadd.f32 %v711, %v993
        %v995 = vpop.f32.mrb[0].mxu0
        %996 = vmatprep.mubr.bf16.mxu0 0
        %997 = vmatmul.mubr.bf16.gmra.mrb[0].mxu0 %v659
        %v998 = vpop.f32.mrb[0].mxu0
        %v999 = vadd.f32 %v711, %v998
        %v1000 = vpop.f32.mrb[0].mxu0
        %v1001 = vpop.f32.mrb[0].mxu0
        %v1002 = vadd.f32 %v711, %v1001
        %v1003 = vpop.f32.mrb[0].mxu0
        %1004 = vmatprep.mubr.bf16.mxu0 0
        %1005 = vmatmul.mubr.bf16.gmra.mrb[0].mxu0 %v660
        %v1006 = vpop.f32.mrb[0].mxu0
        %v1007 = vadd.f32 %v711, %v1006
        %v1008 = vpop.f32.mrb[0].mxu0
        %v1009 = vpop.f32.mrb[0].mxu0
        %v1010 = vadd.f32 %v711, %v1009
        %v1011 = vpop.f32.mrb[0].mxu0
        %1012 = vmatprep.mubr.bf16.mxu0 0
        %1013 = vmatmul.mubr.bf16.gmra.mrb[0].mxu0 %v661
        %v1014 = vpop.f32.mrb[0].mxu0
        %v1015 = vadd.f32 %v711, %v1014
        %v1016 = vpop.f32.mrb[0].mxu0
        %v1017 = vpop.f32.mrb[0].mxu0
        %v1018 = vadd.f32 %v711, %v1017
        %v1019 = vpop.f32.mrb[0].mxu0
        %1020 = vmatprep.mubr.bf16.mxu0 0
        %1021 = vmatmul.mubr.bf16.gmra.mrb[0].mxu0 %v662
        %v1022 = vpop.f32.mrb[0].mxu0
        %v1023 = vadd.f32 %v711, %v1022
        %v1024 = vpop.f32.mrb[0].mxu0
        %v1025 = vpop.f32.mrb[0].mxu0
        %v1026 = vadd.f32 %v711, %v1025
        %v1027 = vpop.f32.mrb[0].mxu0
        %1028 = vmatprep.mubr.bf16.mxu0 0
        %1029 = vmatmul.mubr.bf16.gmra.mrb[0].mxu0 %v663
        %v1030 = vpop.f32.mrb[0].mxu0
        %v1031 = vadd.f32 %v711, %v1030
        %v1032 = vpop.f32.mrb[0].mxu0
        %v1033 = vpop.f32.mrb[0].mxu0
        %v1034 = vadd.f32 %v711, %v1033
        %v1035 = vpop.f32.mrb[0].mxu0
        %1036 = vmatprep.mubr.bf16.mxu0 0
        %1037 = vmatmul.mubr.bf16.gmra.mrb[0].mxu0 %v664
        %v1038 = vpop.f32.mrb[0].mxu0
        %v1039 = vadd.f32 %v711, %v1038
        %v1040 = vpop.f32.mrb[0].mxu0
        %v1041 = vpop.f32.mrb[0].mxu0
        %v1042 = vadd.f32 %v711, %v1041
        %v1043 = vpop.f32.mrb[0].mxu0
        %1044 = vmatprep.mubr.bf16.mxu0 0
        %1045 = vmatmul.mubr.bf16.gmra.mrb[0].mxu0 %v665
        %v1046 = vpop.f32.mrb[0].mxu0
        %v1047 = vadd.f32 %v711, %v1046
        %v1048 = vpop.f32.mrb[0].mxu0
        %v1049 = vpop.f32.mrb[0].mxu0
        %v1050 = vadd.f32 %v711, %v1049
        %v1051 = vpop.f32.mrb[0].mxu0
        %1052 = vdwg.mxu0
        %v1053 = vpack.c.bf16 %v884, %v880
        %v1054 = vld [vmem:[%s404] sm:$0x1]
        %v1055 = vlaneseq
        %v1056 = vshrl.u32 %v1055, 7
        %v1057 = vsub.s32 5, %v1056
        %v1058 = vrot.slane %v407, %v1057
        %v1059 = vmul.f32 %v878, %v1058
        %v1060 = vmul.f32 %v882, %v1058
        %v1061 = vpack.c.bf16 %v1060, %v1059
        %v1063 = vlaneseq
        %v1064 = vshrl.u32 %v1063, 7
        %v1065 = vsub.s32 0, %v1064
        %v1066 = vrot.slane %v1054, %v1065
        %1068 = vmatprep.subr.bf16.mxu0 0
        %1069 = vmatpush1.bf16.xpose.msra.mxu0 %v1053
        %1070 = vmatprep.subr.bf16.mxu0 0
        %1071 = vmatpush1.bf16.xpose.msra.mxu0 0
        %1072 = vmatprep.subr.bf16.mxu0 0
        %1073 = vmatpush1.bf16.xpose.msra.mxu0 0
        %1074 = vmatprep.subr.bf16.mxu0 0
        %1075 = vmatpush1.bf16.xpose.msra.mxu0 0
        %1076 = vmatprep.subr.bf16.mxu0 0
        %1077 = vmatpush1.bf16.xpose.msra.mxu0 0
        %1078 = vmatprep.subr.bf16.mxu0 0
        %1079 = vmatpush1.bf16.xpose.msra.mxu0 0
        %1080 = vmatprep.subr.bf16.mxu0 0
        %1081 = vmatpush1.bf16.xpose.msra.mxu0 0
        %1082 = vmatprep.subr.bf16.mxu0 0
        %1083 = vmatpush1.bf16.xpose.msra.mxu0 0
        %1084 = vmatprep.subr.bf16.mxu0 0
        %1085 = vmatpush1.bf16.xpose.msra.mxu0 0
        %1086 = vmatprep.subr.bf16.mxu0 0
        %1087 = vmatpush1.bf16.xpose.msra.mxu0 0
        %1088 = vmatprep.subr.bf16.mxu0 0
        %1089 = vmatpush1.bf16.xpose.msra.mxu0 0
        %1090 = vmatprep.subr.bf16.mxu0 0
        %1091 = vmatpush1.bf16.xpose.msra.mxu0 0
        %1092 = vmatprep.subr.bf16.mxu0 0
        %1093 = vmatpush1.bf16.xpose.msra.mxu0 0
        %1094 = vmatprep.subr.bf16.mxu0 0
        %1095 = vmatpush1.bf16.xpose.msra.mxu0 0
        %1096 = vmatprep.subr.bf16.mxu0 0
        %1097 = vmatpush1.bf16.xpose.msra.mxu0 0
        %1098 = vmatprep.subr.bf16.mxu0 0
        %1099 = vmatpush1.bf16.xpose.msra.mxu0 0
        %1100 = vmatprep.mubr.bf16.mxu0 0
        %1101 = vmatmul.mubr.bf16.gmra.mrb[0].mxu0 %v1061
        %v1102 = vpop.f32.mrb[0].mxu0
        %v1103 = vadd.f32 %v1066, %v1102
        %v1104 = vpop.f32.mrb[0].mxu0
        %v1105 = vpop.f32.mrb[0].mxu0
        %v1106 = vadd.f32 %v1066, %v1105
        %v1107 = vpop.f32.mrb[0].mxu0
        %1108 = vdwg.mxu0
        %vm1109 = vcmask 130048
        %v1110 = vsel %vm1109, %v1103, -inf
        %1111 = vmax.xlane.f32.xlu0 %v1110
        %v1112 = vpop.xlane.xlu0 %1111
        %v1113 = vsel %vm1109, %v1106, -inf
        %1114 = vmax.xlane.f32.xlu0 %v1113
        %v1115 = vpop.xlane.xlu0 %1114
        %v1116 = vsub.f32 %v1103, %v1112
        %v1117 = vsub.f32 %v1106, %v1115
        %v1118 = vmul.f32 %v1116, 1.442695
        %v1119 = vpow.pop %v1118
        %v1120 = vmul.f32 %v1117, 1.442695
        %v1121 = vpow.pop %v1120
        %v1122 = vsel %vm1109, %v1119, 0.0
        %1123 = vadd.xlane.f32.xlu0 %v1122
        %v1124 = vpop.xlane.xlu0 %1123
        %v1125 = vsel %vm1109, %v1121, 0.0
        %1126 = vadd.xlane.f32.xlu0 %v1125
        %v1127 = vpop.xlane.xlu0 %1126
        %v1128 = vrcp.pop %v1124
        %v1129 = vrcp.pop %v1127
        %v1130 = vmul.f32 %v1119, %v1128
        %v1131 = vmul.f32 %v1121, %v1129
        %v1132 = vmul.f32 %v991, %v1058
        %v1133 = vmul.f32 %v994, %v1058
        %v1134 = vpack.c.bf16 %v1131, %v1130
        %v1135 = vpack.c.bf16 %v1133, %v1132
        %v1136 = vlaneseq
        %v1137 = vshrl.u32 %v1136, 7
        %v1138 = vsub.s32 6, %v1137
        %v1139 = vrot.slane %v407, %v1138
        %v1140 = vmul.f32 %v878, %v1139
        %v1141 = vmul.f32 %v882, %v1139
        %v1142 = vpack.c.bf16 %v1141, %v1140
        %1143 = vmatprep.subr.bf16.mxu0 0
        %1144 = vmatpush1.bf16.xpose.msra.mxu0 %v1053
        %1145 = vmatprep.subr.bf16.mxu0 0
        %1146 = vmatpush1.bf16.xpose.msra.mxu0 0
        %1147 = vmatprep.subr.bf16.mxu0 0
        %1148 = vmatpush1.bf16.xpose.msra.mxu0 0
        %1149 = vmatprep.subr.bf16.mxu0 0
        %1150 = vmatpush1.bf16.xpose.msra.mxu0 0
        %1151 = vmatprep.subr.bf16.mxu0 0
        %1152 = vmatpush1.bf16.xpose.msra.mxu0 0
        %1153 = vmatprep.subr.bf16.mxu0 0
        %1154 = vmatpush1.bf16.xpose.msra.mxu0 0
        %1155 = vmatprep.subr.bf16.mxu0 0
        %1156 = vmatpush1.bf16.xpose.msra.mxu0 0
        %1157 = vmatprep.subr.bf16.mxu0 0
        %1158 = vmatpush1.bf16.xpose.msra.mxu0 0
        %1159 = vmatprep.subr.bf16.mxu0 0
        %1160 = vmatpush1.bf16.xpose.msra.mxu0 0
        %1161 = vmatprep.subr.bf16.mxu0 0
        %1162 = vmatpush1.bf16.xpose.msra.mxu0 0
        %1163 = vmatprep.subr.bf16.mxu0 0
        %1164 = vmatpush1.bf16.xpose.msra.mxu0 0
        %1165 = vmatprep.subr.bf16.mxu0 0
        %1166 = vmatpush1.bf16.xpose.msra.mxu0 0
        %1167 = vmatprep.subr.bf16.mxu0 0
        %1168 = vmatpush1.bf16.xpose.msra.mxu0 0
        %1169 = vmatprep.subr.bf16.mxu0 0
        %1170 = vmatpush1.bf16.xpose.msra.mxu0 0
        %1171 = vmatprep.subr.bf16.mxu0 0
        %1172 = vmatpush1.bf16.xpose.msra.mxu0 0
        %1173 = vmatprep.subr.bf16.mxu0 0
        %1174 = vmatpush1.bf16.xpose.msra.mxu0 0
        %1175 = vmatprep.mubr.bf16.mxu0 0
        %1176 = vmatmul.mubr.bf16.gmra.mrb[0].mxu0 %v1142
        %v1177 = vpop.f32.mrb[0].mxu0
        %v1178 = vadd.f32 %v1066, %v1177
        %v1179 = vpop.f32.mrb[0].mxu0
        %v1180 = vpop.f32.mrb[0].mxu0
        %v1181 = vadd.f32 %v1066, %v1180
        %v1182 = vpop.f32.mrb[0].mxu0
        %1183 = vdwg.mxu0
        %v1184 = vsel %vm1109, %v1178, -inf
        %1185 = vmax.xlane.f32.xlu0 %v1184
        %v1186 = vpop.xlane.xlu0 %1185
        %v1187 = vsel %vm1109, %v1181, -inf
        %1188 = vmax.xlane.f32.xlu0 %v1187
        %v1189 = vpop.xlane.xlu0 %1188
        %v1190 = vsub.f32 %v1178, %v1186
        %v1191 = vsub.f32 %v1181, %v1189
        %v1192 = vmul.f32 %v1190, 1.442695
        %v1193 = vpow.pop %v1192
        %v1194 = vmul.f32 %v1191, 1.442695
        %v1195 = vpow.pop %v1194
        %v1196 = vsel %vm1109, %v1193, 0.0
        %1197 = vadd.xlane.f32.xlu0 %v1196
        %v1198 = vpop.xlane.xlu0 %1197
        %v1199 = vsel %vm1109, %v1195, 0.0
        %1200 = vadd.xlane.f32.xlu0 %v1199
        %v1201 = vpop.xlane.xlu0 %1200
        %v1202 = vrcp.pop %v1198
        %v1203 = vrcp.pop %v1201
        %v1204 = vmul.f32 %v1193, %v1202
        %v1205 = vmul.f32 %v1195, %v1203
        %v1206 = vmul.f32 %v991, %v1139
        %v1207 = vmul.f32 %v994, %v1139
        %v1208 = vpack.c.bf16 %v1205, %v1204
        %v1209 = vpack.c.bf16 %v1207, %v1206
        %v1211 = vsel %vm1109, %v1208, 0
        %1213 = vmatprep.subr.bf16.mxu0 0
        %1214 = vmatpush1.bf16.msra.mxu0 %v1209
        %1215 = vmatprep.subr.bf16.mxu0 0
        %1216 = vmatpush1.bf16.msra.mxu0 0
        %1217 = vmatprep.subr.bf16.mxu0 0
        %1218 = vmatpush1.bf16.msra.mxu0 0
        %1219 = vmatprep.subr.bf16.mxu0 0
        %1220 = vmatpush1.bf16.msra.mxu0 0
        %1221 = vmatprep.subr.bf16.mxu0 0
        %1222 = vmatpush1.bf16.msra.mxu0 0
        %1223 = vmatprep.subr.bf16.mxu0 0
        %1224 = vmatpush1.bf16.msra.mxu0 0
        %1225 = vmatprep.subr.bf16.mxu0 0
        %1226 = vmatpush1.bf16.msra.mxu0 0
        %1227 = vmatprep.subr.bf16.mxu0 0
        %1228 = vmatpush1.bf16.msra.mxu0 0
        %1229 = vmatprep.subr.bf16.mxu0 0
        %1230 = vmatpush1.bf16.msra.mxu0 0
        %1231 = vmatprep.subr.bf16.mxu0 0
        %1232 = vmatpush1.bf16.msra.mxu0 0
        %1233 = vmatprep.subr.bf16.mxu0 0
        %1234 = vmatpush1.bf16.msra.mxu0 0
        %1235 = vmatprep.subr.bf16.mxu0 0
        %1236 = vmatpush1.bf16.msra.mxu0 0
        %1237 = vmatprep.subr.bf16.mxu0 0
        %1238 = vmatpush1.bf16.msra.mxu0 0
        %1239 = vmatprep.subr.bf16.mxu0 0
        %1240 = vmatpush1.bf16.msra.mxu0 0
        %1241 = vmatprep.subr.bf16.mxu0 0
        %1242 = vmatpush1.bf16.msra.mxu0 0
        %1243 = vmatprep.subr.bf16.mxu0 0
        %1244 = vmatpush1.bf16.msra.mxu0 0
        %1245 = vmatprep.mubr.bf16.mxu0 0
        %1246 = vmatmul.mubr.bf16.gmra.mrb[0].mxu0 %v1211
        %v1247 = vpop.f32.mrb[0].mxu0
        %v1248 = vadd.f32 0.0, %v1247
        %v1249 = vpop.f32.mrb[0].mxu0
        %v1250 = vpop.f32.mrb[0].mxu0
        %v1251 = vadd.f32 0.0, %v1250
        %v1252 = vpop.f32.mrb[0].mxu0
        %1253 = vdwg.mxu0
        %v1255 = vsel %vm1109, %v1134, 0
        %1257 = vmatprep.subr.bf16.mxu0 0
        %1258 = vmatpush1.bf16.msra.mxu0 %v1135
        %1259 = vmatprep.subr.bf16.mxu0 0
        %1260 = vmatpush1.bf16.msra.mxu0 0
        %1261 = vmatprep.subr.bf16.mxu0 0
        %1262 = vmatpush1.bf16.msra.mxu0 0
        %1263 = vmatprep.subr.bf16.mxu0 0
        %1264 = vmatpush1.bf16.msra.mxu0 0
        %1265 = vmatprep.subr.bf16.mxu0 0
        %1266 = vmatpush1.bf16.msra.mxu0 0
        %1267 = vmatprep.subr.bf16.mxu0 0
        %1268 = vmatpush1.bf16.msra.mxu0 0
        %1269 = vmatprep.subr.bf16.mxu0 0
        %1270 = vmatpush1.bf16.msra.mxu0 0
        %1271 = vmatprep.subr.bf16.mxu0 0
        %1272 = vmatpush1.bf16.msra.mxu0 0
        %1273 = vmatprep.subr.bf16.mxu0 0
        %1274 = vmatpush1.bf16.msra.mxu0 0
        %1275 = vmatprep.subr.bf16.mxu0 0
        %1276 = vmatpush1.bf16.msra.mxu0 0
        %1277 = vmatprep.subr.bf16.mxu0 0
        %1278 = vmatpush1.bf16.msra.mxu0 0
        %1279 = vmatprep.subr.bf16.mxu0 0
        %1280 = vmatpush1.bf16.msra.mxu0 0
        %1281 = vmatprep.subr.bf16.mxu0 0
        %1282 = vmatpush1.bf16.msra.mxu0 0
        %1283 = vmatprep.subr.bf16.mxu0 0
        %1284 = vmatpush1.bf16.msra.mxu0 0
        %1285 = vmatprep.subr.bf16.mxu0 0
        %1286 = vmatpush1.bf16.msra.mxu0 0
        %1287 = vmatprep.subr.bf16.mxu0 0
        %1288 = vmatpush1.bf16.msra.mxu0 0
        %1289 = vmatprep.mubr.bf16.mxu0 0
        %1290 = vmatmul.mubr.bf16.gmra.mrb[0].mxu0 %v1255
        %v1291 = vpop.f32.mrb[0].mxu0
        %v1292 = vadd.f32 %v1248, %v1291
        %v1293 = vpop.f32.mrb[0].mxu0
        %v1294 = vpop.f32.mrb[0].mxu0
        %v1295 = vadd.f32 %v1251, %v1294
        %v1296 = vpop.f32.mrb[0].mxu0
        %1297 = vdwg.mxu0
        %v1298 = vpack.c.bf16 %v894, %v890
        %s1299 = scalar_lea.vmem %s404, 1
        %v1300 = vld [vmem:[%s1299] sm:$0x1]
        %v1301 = vmul.f32 %v888, %v1058
        %v1302 = vmul.f32 %v892, %v1058
        %v1303 = vpack.c.bf16 %v1302, %v1301
        %v1305 = vlaneseq
        %v1306 = vshrl.u32 %v1305, 7
        %v1307 = vsub.s32 0, %v1306
        %v1308 = vrot.slane %v1300, %v1307
        %1310 = vmatprep.subr.bf16.mxu0 0
        %1311 = vmatpush1.bf16.xpose.msra.mxu0 %v1298
        %1312 = vmatprep.subr.bf16.mxu0 0
        %1313 = vmatpush1.bf16.xpose.msra.mxu0 0
        %1314 = vmatprep.subr.bf16.mxu0 0
        %1315 = vmatpush1.bf16.xpose.msra.mxu0 0
        %1316 = vmatprep.subr.bf16.mxu0 0
        %1317 = vmatpush1.bf16.xpose.msra.mxu0 0
        %1318 = vmatprep.subr.bf16.mxu0 0
        %1319 = vmatpush1.bf16.xpose.msra.mxu0 0
        %1320 = vmatprep.subr.bf16.mxu0 0
        %1321 = vmatpush1.bf16.xpose.msra.mxu0 0
        %1322 = vmatprep.subr.bf16.mxu0 0
        %1323 = vmatpush1.bf16.xpose.msra.mxu0 0
        %1324 = vmatprep.subr.bf16.mxu0 0
        %1325 = vmatpush1.bf16.xpose.msra.mxu0 0
        %1326 = vmatprep.subr.bf16.mxu0 0
        %1327 = vmatpush1.bf16.xpose.msra.mxu0 0
        %1328 = vmatprep.subr.bf16.mxu0 0
        %1329 = vmatpush1.bf16.xpose.msra.mxu0 0
        %1330 = vmatprep.subr.bf16.mxu0 0
        %1331 = vmatpush1.bf16.xpose.msra.mxu0 0
        %1332 = vmatprep.subr.bf16.mxu0 0
        %1333 = vmatpush1.bf16.xpose.msra.mxu0 0
        %1334 = vmatprep.subr.bf16.mxu0 0
        %1335 = vmatpush1.bf16.xpose.msra.mxu0 0
        %1336 = vmatprep.subr.bf16.mxu0 0
        %1337 = vmatpush1.bf16.xpose.msra.mxu0 0
        %1338 = vmatprep.subr.bf16.mxu0 0
        %1339 = vmatpush1.bf16.xpose.msra.mxu0 0
        %1340 = vmatprep.subr.bf16.mxu0 0
        %1341 = vmatpush1.bf16.xpose.msra.mxu0 0
        %1342 = vmatprep.mubr.bf16.mxu0 0
        %1343 = vmatmul.mubr.bf16.gmra.mrb[0].mxu0 %v1303
        %v1344 = vpop.f32.mrb[0].mxu0
        %v1345 = vadd.f32 %v1308, %v1344
        %v1346 = vpop.f32.mrb[0].mxu0
        %v1347 = vpop.f32.mrb[0].mxu0
        %v1348 = vadd.f32 %v1308, %v1347
        %v1349 = vpop.f32.mrb[0].mxu0
        %1350 = vdwg.mxu0
        %v1351 = vsel %vm1109, %v1345, -inf
        %1352 = vmax.xlane.f32.xlu0 %v1351
        %v1353 = vpop.xlane.xlu0 %1352
        %v1354 = vsel %vm1109, %v1348, -inf
        %1355 = vmax.xlane.f32.xlu0 %v1354
        %v1356 = vpop.xlane.xlu0 %1355
        %v1357 = vsub.f32 %v1345, %v1353
        %v1358 = vsub.f32 %v1348, %v1356
        %v1359 = vmul.f32 %v1357, 1.442695
        %v1360 = vpow.pop %v1359
        %v1361 = vmul.f32 %v1358, 1.442695
        %v1362 = vpow.pop %v1361
        %v1363 = vsel %vm1109, %v1360, 0.0
        %1364 = vadd.xlane.f32.xlu0 %v1363
        %v1365 = vpop.xlane.xlu0 %1364
        %v1366 = vsel %vm1109, %v1362, 0.0
        %1367 = vadd.xlane.f32.xlu0 %v1366
        %v1368 = vpop.xlane.xlu0 %1367
        %v1369 = vrcp.pop %v1365
        %v1370 = vrcp.pop %v1368
        %v1371 = vmul.f32 %v1360, %v1369
        %v1372 = vmul.f32 %v1362, %v1370
        %v1373 = vmul.f32 %v999, %v1058
        %v1374 = vmul.f32 %v1002, %v1058
        %v1375 = vpack.c.bf16 %v1372, %v1371
        %v1376 = vpack.c.bf16 %v1374, %v1373
        %v1377 = vmul.f32 %v888, %v1139
        %v1378 = vmul.f32 %v892, %v1139
        %v1379 = vpack.c.bf16 %v1378, %v1377
        %1380 = vmatprep.subr.bf16.mxu0 0
        %1381 = vmatpush1.bf16.xpose.msra.mxu0 %v1298
        %1382 = vmatprep.subr.bf16.mxu0 0
        %1383 = vmatpush1.bf16.xpose.msra.mxu0 0
        %1384 = vmatprep.subr.bf16.mxu0 0
        %1385 = vmatpush1.bf16.xpose.msra.mxu0 0
        %1386 = vmatprep.subr.bf16.mxu0 0
        %1387 = vmatpush1.bf16.xpose.msra.mxu0 0
        %1388 = vmatprep.subr.bf16.mxu0 0
        %1389 = vmatpush1.bf16.xpose.msra.mxu0 0
        %1390 = vmatprep.subr.bf16.mxu0 0
        %1391 = vmatpush1.bf16.xpose.msra.mxu0 0
        %1392 = vmatprep.subr.bf16.mxu0 0
        %1393 = vmatpush1.bf16.xpose.msra.mxu0 0
        %1394 = vmatprep.subr.bf16.mxu0 0
        %1395 = vmatpush1.bf16.xpose.msra.mxu0 0
        %1396 = vmatprep.subr.bf16.mxu0 0
        %1397 = vmatpush1.bf16.xpose.msra.mxu0 0
        %1398 = vmatprep.subr.bf16.mxu0 0
        %1399 = vmatpush1.bf16.xpose.msra.mxu0 0
        %1400 = vmatprep.subr.bf16.mxu0 0
        %1401 = vmatpush1.bf16.xpose.msra.mxu0 0
        %1402 = vmatprep.subr.bf16.mxu0 0
        %1403 = vmatpush1.bf16.xpose.msra.mxu0 0
        %1404 = vmatprep.subr.bf16.mxu0 0
        %1405 = vmatpush1.bf16.xpose.msra.mxu0 0
        %1406 = vmatprep.subr.bf16.mxu0 0
        %1407 = vmatpush1.bf16.xpose.msra.mxu0 0
        %1408 = vmatprep.subr.bf16.mxu0 0
        %1409 = vmatpush1.bf16.xpose.msra.mxu0 0
        %1410 = vmatprep.subr.bf16.mxu0 0
        %1411 = vmatpush1.bf16.xpose.msra.mxu0 0
        %1412 = vmatprep.mubr.bf16.mxu0 0
        %1413 = vmatmul.mubr.bf16.gmra.mrb[0].mxu0 %v1379
        %v1414 = vpop.f32.mrb[0].mxu0
        %v1415 = vadd.f32 %v1308, %v1414
        %v1416 = vpop.f32.mrb[0].mxu0
        %v1417 = vpop.f32.mrb[0].mxu0
        %v1418 = vadd.f32 %v1308, %v1417
        %v1419 = vpop.f32.mrb[0].mxu0
        %1420 = vdwg.mxu0
        %v1421 = vsel %vm1109, %v1415, -inf
        %1422 = vmax.xlane.f32.xlu0 %v1421
        %v1423 = vpop.xlane.xlu0 %1422
        %v1424 = vsel %vm1109, %v1418, -inf
        %1425 = vmax.xlane.f32.xlu0 %v1424
        %v1426 = vpop.xlane.xlu0 %1425
        %v1427 = vsub.f32 %v1415, %v1423
        %v1428 = vsub.f32 %v1418, %v1426
        %v1429 = vmul.f32 %v1427, 1.442695
        %v1430 = vpow.pop %v1429
        %v1431 = vmul.f32 %v1428, 1.442695
        %v1432 = vpow.pop %v1431
        %v1433 = vsel %vm1109, %v1430, 0.0
        %1434 = vadd.xlane.f32.xlu0 %v1433
        %v1435 = vpop.xlane.xlu0 %1434
        %v1436 = vsel %vm1109, %v1432, 0.0
        %1437 = vadd.xlane.f32.xlu0 %v1436
        %v1438 = vpop.xlane.xlu0 %1437
        %v1439 = vrcp.pop %v1435
        %v1440 = vrcp.pop %v1438
        %v1441 = vmul.f32 %v1430, %v1439
        %v1442 = vmul.f32 %v1432, %v1440
        %v1443 = vmul.f32 %v999, %v1139
        %v1444 = vmul.f32 %v1002, %v1139
        %v1445 = vpack.c.bf16 %v1442, %v1441
        %v1446 = vpack.c.bf16 %v1444, %v1443
        %v1448 = vsel %vm1109, %v1445, 0
        %1450 = vmatprep.subr.bf16.mxu0 0
        %1451 = vmatpush1.bf16.msra.mxu0 %v1446
        %1452 = vmatprep.subr.bf16.mxu0 0
        %1453 = vmatpush1.bf16.msra.mxu0 0
        %1454 = vmatprep.subr.bf16.mxu0 0
        %1455 = vmatpush1.bf16.msra.mxu0 0
        %1456 = vmatprep.subr.bf16.mxu0 0
        %1457 = vmatpush1.bf16.msra.mxu0 0
        %1458 = vmatprep.subr.bf16.mxu0 0
        %1459 = vmatpush1.bf16.msra.mxu0 0
        %1460 = vmatprep.subr.bf16.mxu0 0
        %1461 = vmatpush1.bf16.msra.mxu0 0
        %1462 = vmatprep.subr.bf16.mxu0 0
        %1463 = vmatpush1.bf16.msra.mxu0 0
        %1464 = vmatprep.subr.bf16.mxu0 0
        %1465 = vmatpush1.bf16.msra.mxu0 0
        %1466 = vmatprep.subr.bf16.mxu0 0
        %1467 = vmatpush1.bf16.msra.mxu0 0
        %1468 = vmatprep.subr.bf16.mxu0 0
        %1469 = vmatpush1.bf16.msra.mxu0 0
        %1470 = vmatprep.subr.bf16.mxu0 0
        %1471 = vmatpush1.bf16.msra.mxu0 0
        %1472 = vmatprep.subr.bf16.mxu0 0
        %1473 = vmatpush1.bf16.msra.mxu0 0
        %1474 = vmatprep.subr.bf16.mxu0 0
        %1475 = vmatpush1.bf16.msra.mxu0 0
        %1476 = vmatprep.subr.bf16.mxu0 0
        %1477 = vmatpush1.bf16.msra.mxu0 0
        %1478 = vmatprep.subr.bf16.mxu0 0
        %1479 = vmatpush1.bf16.msra.mxu0 0
        %1480 = vmatprep.subr.bf16.mxu0 0
        %1481 = vmatpush1.bf16.msra.mxu0 0
        %1482 = vmatprep.mubr.bf16.mxu0 0
        %1483 = vmatmul.mubr.bf16.gmra.mrb[0].mxu0 %v1448
        %v1484 = vpop.f32.mrb[0].mxu0
        %v1485 = vadd.f32 0.0, %v1484
        %v1486 = vpop.f32.mrb[0].mxu0
        %v1487 = vpop.f32.mrb[0].mxu0
        %v1488 = vadd.f32 0.0, %v1487
        %v1489 = vpop.f32.mrb[0].mxu0
        %1490 = vdwg.mxu0
        %v1492 = vsel %vm1109, %v1375, 0
        %1494 = vmatprep.subr.bf16.mxu0 0
        %1495 = vmatpush1.bf16.msra.mxu0 %v1376
        %1496 = vmatprep.subr.bf16.mxu0 0
        %1497 = vmatpush1.bf16.msra.mxu0 0
        %1498 = vmatprep.subr.bf16.mxu0 0
        %1499 = vmatpush1.bf16.msra.mxu0 0
        %1500 = vmatprep.subr.bf16.mxu0 0
        %1501 = vmatpush1.bf16.msra.mxu0 0
        %1502 = vmatprep.subr.bf16.mxu0 0
        %1503 = vmatpush1.bf16.msra.mxu0 0
        %1504 = vmatprep.subr.bf16.mxu0 0
        %1505 = vmatpush1.bf16.msra.mxu0 0
        %1506 = vmatprep.subr.bf16.mxu0 0
        %1507 = vmatpush1.bf16.msra.mxu0 0
        %1508 = vmatprep.subr.bf16.mxu0 0
        %1509 = vmatpush1.bf16.msra.mxu0 0
        %1510 = vmatprep.subr.bf16.mxu0 0
        %1511 = vmatpush1.bf16.msra.mxu0 0
        %1512 = vmatprep.subr.bf16.mxu0 0
        %1513 = vmatpush1.bf16.msra.mxu0 0
        %1514 = vmatprep.subr.bf16.mxu0 0
        %1515 = vmatpush1.bf16.msra.mxu0 0
        %1516 = vmatprep.subr.bf16.mxu0 0
        %1517 = vmatpush1.bf16.msra.mxu0 0
        %1518 = vmatprep.subr.bf16.mxu0 0
        %1519 = vmatpush1.bf16.msra.mxu0 0
        %1520 = vmatprep.subr.bf16.mxu0 0
        %1521 = vmatpush1.bf16.msra.mxu0 0
        %1522 = vmatprep.subr.bf16.mxu0 0
        %1523 = vmatpush1.bf16.msra.mxu0 0
        %1524 = vmatprep.subr.bf16.mxu0 0
        %1525 = vmatpush1.bf16.msra.mxu0 0
        %1526 = vmatprep.mubr.bf16.mxu0 0
        %1527 = vmatmul.mubr.bf16.gmra.mrb[0].mxu0 %v1492
        %v1528 = vpop.f32.mrb[0].mxu0
        %v1529 = vadd.f32 %v1485, %v1528
        %v1530 = vpop.f32.mrb[0].mxu0
        %v1531 = vpop.f32.mrb[0].mxu0
        %v1532 = vadd.f32 %v1488, %v1531
        %v1533 = vpop.f32.mrb[0].mxu0
        %1534 = vdwg.mxu0
        %v1535 = vpack.c.bf16 %v904, %v900
        %s1536 = scalar_lea.vmem %s404, 2
        %v1537 = vld [vmem:[%s1536] sm:$0x1]
        %v1538 = vmul.f32 %v898, %v1058
        %v1539 = vmul.f32 %v902, %v1058
        %v1540 = vpack.c.bf16 %v1539, %v1538
        %v1542 = vlaneseq
        %v1543 = vshrl.u32 %v1542, 7
        %v1544 = vsub.s32 0, %v1543
        %v1545 = vrot.slane %v1537, %v1544
        %1547 = vmatprep.subr.bf16.mxu0 0
        %1548 = vmatpush1.bf16.xpose.msra.mxu0 %v1535
        %1549 = vmatprep.subr.bf16.mxu0 0
        %1550 = vmatpush1.bf16.xpose.msra.mxu0 0
        %1551 = vmatprep.subr.bf16.mxu0 0
        %1552 = vmatpush1.bf16.xpose.msra.mxu0 0
        %1553 = vmatprep.subr.bf16.mxu0 0
        %1554 = vmatpush1.bf16.xpose.msra.mxu0 0
        %1555 = vmatprep.subr.bf16.mxu0 0
        %1556 = vmatpush1.bf16.xpose.msra.mxu0 0
        %1557 = vmatprep.subr.bf16.mxu0 0
        %1558 = vmatpush1.bf16.xpose.msra.mxu0 0
        %1559 = vmatprep.subr.bf16.mxu0 0
        %1560 = vmatpush1.bf16.xpose.msra.mxu0 0
        %1561 = vmatprep.subr.bf16.mxu0 0
        %1562 = vmatpush1.bf16.xpose.msra.mxu0 0
        %1563 = vmatprep.subr.bf16.mxu0 0
        %1564 = vmatpush1.bf16.xpose.msra.mxu0 0
        %1565 = vmatprep.subr.bf16.mxu0 0
        %1566 = vmatpush1.bf16.xpose.msra.mxu0 0
        %1567 = vmatprep.subr.bf16.mxu0 0
        %1568 = vmatpush1.bf16.xpose.msra.mxu0 0
        %1569 = vmatprep.subr.bf16.mxu0 0
        %1570 = vmatpush1.bf16.xpose.msra.mxu0 0
        %1571 = vmatprep.subr.bf16.mxu0 0
        %1572 = vmatpush1.bf16.xpose.msra.mxu0 0
        %1573 = vmatprep.subr.bf16.mxu0 0
        %1574 = vmatpush1.bf16.xpose.msra.mxu0 0
        %1575 = vmatprep.subr.bf16.mxu0 0
        %1576 = vmatpush1.bf16.xpose.msra.mxu0 0
        %1577 = vmatprep.subr.bf16.mxu0 0
        %1578 = vmatpush1.bf16.xpose.msra.mxu0 0
        %1579 = vmatprep.mubr.bf16.mxu0 0
        %1580 = vmatmul.mubr.bf16.gmra.mrb[0].mxu0 %v1540
        %v1581 = vpop.f32.mrb[0].mxu0
        %v1582 = vadd.f32 %v1545, %v1581
        %v1583 = vpop.f32.mrb[0].mxu0
        %v1584 = vpop.f32.mrb[0].mxu0
        %v1585 = vadd.f32 %v1545, %v1584
        %v1586 = vpop.f32.mrb[0].mxu0
        %1587 = vdwg.mxu0
        %v1588 = vsel %vm1109, %v1582, -inf
        %1589 = vmax.xlane.f32.xlu0 %v1588
        %v1590 = vpop.xlane.xlu0 %1589
        %v1591 = vsel %vm1109, %v1585, -inf
        %1592 = vmax.xlane.f32.xlu0 %v1591
        %v1593 = vpop.xlane.xlu0 %1592
        %v1594 = vsub.f32 %v1582, %v1590
        %v1595 = vsub.f32 %v1585, %v1593
        %v1596 = vmul.f32 %v1594, 1.442695
        %v1597 = vpow.pop %v1596
        %v1598 = vmul.f32 %v1595, 1.442695
        %v1599 = vpow.pop %v1598
        %v1600 = vsel %vm1109, %v1597, 0.0
        %1601 = vadd.xlane.f32.xlu0 %v1600
        %v1602 = vpop.xlane.xlu0 %1601
        %v1603 = vsel %vm1109, %v1599, 0.0
        %1604 = vadd.xlane.f32.xlu0 %v1603
        %v1605 = vpop.xlane.xlu0 %1604
        %v1606 = vrcp.pop %v1602
        %v1607 = vrcp.pop %v1605
        %v1608 = vmul.f32 %v1597, %v1606
        %v1609 = vmul.f32 %v1599, %v1607
        %v1610 = vmul.f32 %v1007, %v1058
        %v1611 = vmul.f32 %v1010, %v1058
        %v1612 = vpack.c.bf16 %v1609, %v1608
        %v1613 = vpack.c.bf16 %v1611, %v1610
        %v1614 = vmul.f32 %v898, %v1139
        %v1615 = vmul.f32 %v902, %v1139
        %v1616 = vpack.c.bf16 %v1615, %v1614
        %1617 = vmatprep.subr.bf16.mxu0 0
        %1618 = vmatpush1.bf16.xpose.msra.mxu0 %v1535
        %1619 = vmatprep.subr.bf16.mxu0 0
        %1620 = vmatpush1.bf16.xpose.msra.mxu0 0
        %1621 = vmatprep.subr.bf16.mxu0 0
        %1622 = vmatpush1.bf16.xpose.msra.mxu0 0
        %1623 = vmatprep.subr.bf16.mxu0 0
        %1624 = vmatpush1.bf16.xpose.msra.mxu0 0
        %1625 = vmatprep.subr.bf16.mxu0 0
        %1626 = vmatpush1.bf16.xpose.msra.mxu0 0
        %1627 = vmatprep.subr.bf16.mxu0 0
        %1628 = vmatpush1.bf16.xpose.msra.mxu0 0
        %1629 = vmatprep.subr.bf16.mxu0 0
        %1630 = vmatpush1.bf16.xpose.msra.mxu0 0
        %1631 = vmatprep.subr.bf16.mxu0 0
        %1632 = vmatpush1.bf16.xpose.msra.mxu0 0
        %1633 = vmatprep.subr.bf16.mxu0 0
        %1634 = vmatpush1.bf16.xpose.msra.mxu0 0
        %1635 = vmatprep.subr.bf16.mxu0 0
        %1636 = vmatpush1.bf16.xpose.msra.mxu0 0
        %1637 = vmatprep.subr.bf16.mxu0 0
        %1638 = vmatpush1.bf16.xpose.msra.mxu0 0
        %1639 = vmatprep.subr.bf16.mxu0 0
        %1640 = vmatpush1.bf16.xpose.msra.mxu0 0
        %1641 = vmatprep.subr.bf16.mxu0 0
        %1642 = vmatpush1.bf16.xpose.msra.mxu0 0
        %1643 = vmatprep.subr.bf16.mxu0 0
        %1644 = vmatpush1.bf16.xpose.msra.mxu0 0
        %1645 = vmatprep.subr.bf16.mxu0 0
        %1646 = vmatpush1.bf16.xpose.msra.mxu0 0
        %1647 = vmatprep.subr.bf16.mxu0 0
        %1648 = vmatpush1.bf16.xpose.msra.mxu0 0
        %1649 = vmatprep.mubr.bf16.mxu0 0
        %1650 = vmatmul.mubr.bf16.gmra.mrb[0].mxu0 %v1616
        %v1651 = vpop.f32.mrb[0].mxu0
        %v1652 = vadd.f32 %v1545, %v1651
        %v1653 = vpop.f32.mrb[0].mxu0
        %v1654 = vpop.f32.mrb[0].mxu0
        %v1655 = vadd.f32 %v1545, %v1654
        %v1656 = vpop.f32.mrb[0].mxu0
        %1657 = vdwg.mxu0
        %v1658 = vsel %vm1109, %v1652, -inf
        %1659 = vmax.xlane.f32.xlu0 %v1658
        %v1660 = vpop.xlane.xlu0 %1659
        %v1661 = vsel %vm1109, %v1655, -inf
        %1662 = vmax.xlane.f32.xlu0 %v1661
        %v1663 = vpop.xlane.xlu0 %1662
        %v1664 = vsub.f32 %v1652, %v1660
        %v1665 = vsub.f32 %v1655, %v1663
        %v1666 = vmul.f32 %v1664, 1.442695
        %v1667 = vpow.pop %v1666
        %v1668 = vmul.f32 %v1665, 1.442695
        %v1669 = vpow.pop %v1668
        %v1670 = vsel %vm1109, %v1667, 0.0
        %1671 = vadd.xlane.f32.xlu0 %v1670
        %v1672 = vpop.xlane.xlu0 %1671
        %v1673 = vsel %vm1109, %v1669, 0.0
        %1674 = vadd.xlane.f32.xlu0 %v1673
        %v1675 = vpop.xlane.xlu0 %1674
        %v1676 = vrcp.pop %v1672
        %v1677 = vrcp.pop %v1675
        %v1678 = vmul.f32 %v1667, %v1676
        %v1679 = vmul.f32 %v1669, %v1677
        %v1680 = vmul.f32 %v1007, %v1139
        %v1681 = vmul.f32 %v1010, %v1139
        %v1682 = vpack.c.bf16 %v1679, %v1678
        %v1683 = vpack.c.bf16 %v1681, %v1680
        %v1685 = vsel %vm1109, %v1682, 0
        %1687 = vmatprep.subr.bf16.mxu0 0
        %1688 = vmatpush1.bf16.msra.mxu0 %v1683
        %1689 = vmatprep.subr.bf16.mxu0 0
        %1690 = vmatpush1.bf16.msra.mxu0 0
        %1691 = vmatprep.subr.bf16.mxu0 0
        %1692 = vmatpush1.bf16.msra.mxu0 0
        %1693 = vmatprep.subr.bf16.mxu0 0
        %1694 = vmatpush1.bf16.msra.mxu0 0
        %1695 = vmatprep.subr.bf16.mxu0 0
        %1696 = vmatpush1.bf16.msra.mxu0 0
        %1697 = vmatprep.subr.bf16.mxu0 0
        %1698 = vmatpush1.bf16.msra.mxu0 0
        %1699 = vmatprep.subr.bf16.mxu0 0
        %1700 = vmatpush1.bf16.msra.mxu0 0
        %1701 = vmatprep.subr.bf16.mxu0 0
        %1702 = vmatpush1.bf16.msra.mxu0 0
        %1703 = vmatprep.subr.bf16.mxu0 0
        %1704 = vmatpush1.bf16.msra.mxu0 0
        %1705 = vmatprep.subr.bf16.mxu0 0
        %1706 = vmatpush1.bf16.msra.mxu0 0
        %1707 = vmatprep.subr.bf16.mxu0 0
        %1708 = vmatpush1.bf16.msra.mxu0 0
        %1709 = vmatprep.subr.bf16.mxu0 0
        %1710 = vmatpush1.bf16.msra.mxu0 0
        %1711 = vmatprep.subr.bf16.mxu0 0
        %1712 = vmatpush1.bf16.msra.mxu0 0
        %1713 = vmatprep.subr.bf16.mxu0 0
        %1714 = vmatpush1.bf16.msra.mxu0 0
        %1715 = vmatprep.subr.bf16.mxu0 0
        %1716 = vmatpush1.bf16.msra.mxu0 0
        %1717 = vmatprep.subr.bf16.mxu0 0
        %1718 = vmatpush1.bf16.msra.mxu0 0
        %1719 = vmatprep.mubr.bf16.mxu0 0
        %1720 = vmatmul.mubr.bf16.gmra.mrb[0].mxu0 %v1685
        %v1721 = vpop.f32.mrb[0].mxu0
        %v1722 = vadd.f32 0.0, %v1721
        %v1723 = vpop.f32.mrb[0].mxu0
        %v1724 = vpop.f32.mrb[0].mxu0
        %v1725 = vadd.f32 0.0, %v1724
        %v1726 = vpop.f32.mrb[0].mxu0
        %1727 = vdwg.mxu0
        %v1729 = vsel %vm1109, %v1612, 0
        %1731 = vmatprep.subr.bf16.mxu0 0
        %1732 = vmatpush1.bf16.msra.mxu0 %v1613
        %1733 = vmatprep.subr.bf16.mxu0 0
        %1734 = vmatpush1.bf16.msra.mxu0 0
        %1735 = vmatprep.subr.bf16.mxu0 0
        %1736 = vmatpush1.bf16.msra.mxu0 0
        %1737 = vmatprep.subr.bf16.mxu0 0
        %1738 = vmatpush1.bf16.msra.mxu0 0
        %1739 = vmatprep.subr.bf16.mxu0 0
        %1740 = vmatpush1.bf16.msra.mxu0 0
        %1741 = vmatprep.subr.bf16.mxu0 0
        %1742 = vmatpush1.bf16.msra.mxu0 0
        %1743 = vmatprep.subr.bf16.mxu0 0
        %1744 = vmatpush1.bf16.msra.mxu0 0
        %1745 = vmatprep.subr.bf16.mxu0 0
        %1746 = vmatpush1.bf16.msra.mxu0 0
        %1747 = vmatprep.subr.bf16.mxu0 0
        %1748 = vmatpush1.bf16.msra.mxu0 0
        %1749 = vmatprep.subr.bf16.mxu0 0
        %1750 = vmatpush1.bf16.msra.mxu0 0
        %1751 = vmatprep.subr.bf16.mxu0 0
        %1752 = vmatpush1.bf16.msra.mxu0 0
        %1753 = vmatprep.subr.bf16.mxu0 0
        %1754 = vmatpush1.bf16.msra.mxu0 0
        %1755 = vmatprep.subr.bf16.mxu0 0
        %1756 = vmatpush1.bf16.msra.mxu0 0
        %1757 = vmatprep.subr.bf16.mxu0 0
        %1758 = vmatpush1.bf16.msra.mxu0 0
        %1759 = vmatprep.subr.bf16.mxu0 0
        %1760 = vmatpush1.bf16.msra.mxu0 0
        %1761 = vmatprep.subr.bf16.mxu0 0
        %1762 = vmatpush1.bf16.msra.mxu0 0
        %1763 = vmatprep.mubr.bf16.mxu0 0
        %1764 = vmatmul.mubr.bf16.gmra.mrb[0].mxu0 %v1729
        %v1765 = vpop.f32.mrb[0].mxu0
        %v1766 = vadd.f32 %v1722, %v1765
        %v1767 = vpop.f32.mrb[0].mxu0
        %v1768 = vpop.f32.mrb[0].mxu0
        %v1769 = vadd.f32 %v1725, %v1768
        %v1770 = vpop.f32.mrb[0].mxu0
        %1771 = vdwg.mxu0
        %v1772 = vpack.c.bf16 %v914, %v910
        %s1773 = scalar_lea.vmem %s404, 3
        %v1774 = vld [vmem:[%s1773] sm:$0x1]
        %v1775 = vmul.f32 %v908, %v1058
        %v1776 = vmul.f32 %v912, %v1058
        %v1777 = vpack.c.bf16 %v1776, %v1775
        %v1779 = vlaneseq
        %v1780 = vshrl.u32 %v1779, 7
        %v1781 = vsub.s32 0, %v1780
        %v1782 = vrot.slane %v1774, %v1781
        %1784 = vmatprep.subr.bf16.mxu0 0
        %1785 = vmatpush1.bf16.xpose.msra.mxu0 %v1772
        %1786 = vmatprep.subr.bf16.mxu0 0
        %1787 = vmatpush1.bf16.xpose.msra.mxu0 0
        %1788 = vmatprep.subr.bf16.mxu0 0
        %1789 = vmatpush1.bf16.xpose.msra.mxu0 0
        %1790 = vmatprep.subr.bf16.mxu0 0
        %1791 = vmatpush1.bf16.xpose.msra.mxu0 0
        %1792 = vmatprep.subr.bf16.mxu0 0
        %1793 = vmatpush1.bf16.xpose.msra.mxu0 0
        %1794 = vmatprep.subr.bf16.mxu0 0
        %1795 = vmatpush1.bf16.xpose.msra.mxu0 0
        %1796 = vmatprep.subr.bf16.mxu0 0
        %1797 = vmatpush1.bf16.xpose.msra.mxu0 0
        %1798 = vmatprep.subr.bf16.mxu0 0
        %1799 = vmatpush1.bf16.xpose.msra.mxu0 0
        %1800 = vmatprep.subr.bf16.mxu0 0
        %1801 = vmatpush1.bf16.xpose.msra.mxu0 0
        %1802 = vmatprep.subr.bf16.mxu0 0
        %1803 = vmatpush1.bf16.xpose.msra.mxu0 0
        %1804 = vmatprep.subr.bf16.mxu0 0
        %1805 = vmatpush1.bf16.xpose.msra.mxu0 0
        %1806 = vmatprep.subr.bf16.mxu0 0
        %1807 = vmatpush1.bf16.xpose.msra.mxu0 0
        %1808 = vmatprep.subr.bf16.mxu0 0
        %1809 = vmatpush1.bf16.xpose.msra.mxu0 0
        %1810 = vmatprep.subr.bf16.mxu0 0
        %1811 = vmatpush1.bf16.xpose.msra.mxu0 0
        %1812 = vmatprep.subr.bf16.mxu0 0
        %1813 = vmatpush1.bf16.xpose.msra.mxu0 0
        %1814 = vmatprep.subr.bf16.mxu0 0
        %1815 = vmatpush1.bf16.xpose.msra.mxu0 0
        %1816 = vmatprep.mubr.bf16.mxu0 0
        %1817 = vmatmul.mubr.bf16.gmra.mrb[0].mxu0 %v1777
        %v1818 = vpop.f32.mrb[0].mxu0
        %v1819 = vadd.f32 %v1782, %v1818
        %v1820 = vpop.f32.mrb[0].mxu0
        %v1821 = vpop.f32.mrb[0].mxu0
        %v1822 = vadd.f32 %v1782, %v1821
        %v1823 = vpop.f32.mrb[0].mxu0
        %1824 = vdwg.mxu0
        %v1825 = vsel %vm1109, %v1819, -inf
        %1826 = vmax.xlane.f32.xlu0 %v1825
        %v1827 = vpop.xlane.xlu0 %1826
        %v1828 = vsel %vm1109, %v1822, -inf
        %1829 = vmax.xlane.f32.xlu0 %v1828
        %v1830 = vpop.xlane.xlu0 %1829
        %v1831 = vsub.f32 %v1819, %v1827
        %v1832 = vsub.f32 %v1822, %v1830
        %v1833 = vmul.f32 %v1831, 1.442695
        %v1834 = vpow.pop %v1833
        %v1835 = vmul.f32 %v1832, 1.442695
        %v1836 = vpow.pop %v1835
        %v1837 = vsel %vm1109, %v1834, 0.0
        %1838 = vadd.xlane.f32.xlu0 %v1837
        %v1839 = vpop.xlane.xlu0 %1838
        %v1840 = vsel %vm1109, %v1836, 0.0
        %1841 = vadd.xlane.f32.xlu0 %v1840
        %v1842 = vpop.xlane.xlu0 %1841
        %v1843 = vrcp.pop %v1839
        %v1844 = vrcp.pop %v1842
        %v1845 = vmul.f32 %v1834, %v1843
        %v1846 = vmul.f32 %v1836, %v1844
        %v1847 = vmul.f32 %v1015, %v1058
        %v1848 = vmul.f32 %v1018, %v1058
        %v1849 = vpack.c.bf16 %v1846, %v1845
        %v1850 = vpack.c.bf16 %v1848, %v1847
        %v1851 = vmul.f32 %v908, %v1139
        %v1852 = vmul.f32 %v912, %v1139
        %v1853 = vpack.c.bf16 %v1852, %v1851
        %1854 = vmatprep.subr.bf16.mxu0 0
        %1855 = vmatpush1.bf16.xpose.msra.mxu0 %v1772
        %1856 = vmatprep.subr.bf16.mxu0 0
        %1857 = vmatpush1.bf16.xpose.msra.mxu0 0
        %1858 = vmatprep.subr.bf16.mxu0 0
        %1859 = vmatpush1.bf16.xpose.msra.mxu0 0
        %1860 = vmatprep.subr.bf16.mxu0 0
        %1861 = vmatpush1.bf16.xpose.msra.mxu0 0
        %1862 = vmatprep.subr.bf16.mxu0 0
        %1863 = vmatpush1.bf16.xpose.msra.mxu0 0
        %1864 = vmatprep.subr.bf16.mxu0 0
        %1865 = vmatpush1.bf16.xpose.msra.mxu0 0
        %1866 = vmatprep.subr.bf16.mxu0 0
        %1867 = vmatpush1.bf16.xpose.msra.mxu0 0
        %1868 = vmatprep.subr.bf16.mxu0 0
        %1869 = vmatpush1.bf16.xpose.msra.mxu0 0
        %1870 = vmatprep.subr.bf16.mxu0 0
        %1871 = vmatpush1.bf16.xpose.msra.mxu0 0
        %1872 = vmatprep.subr.bf16.mxu0 0
        %1873 = vmatpush1.bf16.xpose.msra.mxu0 0
        %1874 = vmatprep.subr.bf16.mxu0 0
        %1875 = vmatpush1.bf16.xpose.msra.mxu0 0
        %1876 = vmatprep.subr.bf16.mxu0 0
        %1877 = vmatpush1.bf16.xpose.msra.mxu0 0
        %1878 = vmatprep.subr.bf16.mxu0 0
        %1879 = vmatpush1.bf16.xpose.msra.mxu0 0
        %1880 = vmatprep.subr.bf16.mxu0 0
        %1881 = vmatpush1.bf16.xpose.msra.mxu0 0
        %1882 = vmatprep.subr.bf16.mxu0 0
        %1883 = vmatpush1.bf16.xpose.msra.mxu0 0
        %1884 = vmatprep.subr.bf16.mxu0 0
        %1885 = vmatpush1.bf16.xpose.msra.mxu0 0
        %1886 = vmatprep.mubr.bf16.mxu0 0
        %1887 = vmatmul.mubr.bf16.gmra.mrb[0].mxu0 %v1853
        %v1888 = vpop.f32.mrb[0].mxu0
        %v1889 = vadd.f32 %v1782, %v1888
        %v1890 = vpop.f32.mrb[0].mxu0
        %v1891 = vpop.f32.mrb[0].mxu0
        %v1892 = vadd.f32 %v1782, %v1891
        %v1893 = vpop.f32.mrb[0].mxu0
        %1894 = vdwg.mxu0
        %v1895 = vsel %vm1109, %v1889, -inf
        %1896 = vmax.xlane.f32.xlu0 %v1895
        %v1897 = vpop.xlane.xlu0 %1896
        %v1898 = vsel %vm1109, %v1892, -inf
        %1899 = vmax.xlane.f32.xlu0 %v1898
        %v1900 = vpop.xlane.xlu0 %1899
        %v1901 = vsub.f32 %v1889, %v1897
        %v1902 = vsub.f32 %v1892, %v1900
        %v1903 = vmul.f32 %v1901, 1.442695
        %v1904 = vpow.pop %v1903
        %v1905 = vmul.f32 %v1902, 1.442695
        %v1906 = vpow.pop %v1905
        %v1907 = vsel %vm1109, %v1904, 0.0
        %1908 = vadd.xlane.f32.xlu0 %v1907
        %v1909 = vpop.xlane.xlu0 %1908
        %v1910 = vsel %vm1109, %v1906, 0.0
        %1911 = vadd.xlane.f32.xlu0 %v1910
        %v1912 = vpop.xlane.xlu0 %1911
        %v1913 = vrcp.pop %v1909
        %v1914 = vrcp.pop %v1912
        %v1915 = vmul.f32 %v1904, %v1913
        %v1916 = vmul.f32 %v1906, %v1914
        %v1917 = vmul.f32 %v1015, %v1139
        %v1918 = vmul.f32 %v1018, %v1139
        %v1919 = vpack.c.bf16 %v1916, %v1915
        %v1920 = vpack.c.bf16 %v1918, %v1917
        %v1922 = vsel %vm1109, %v1919, 0
        %1924 = vmatprep.subr.bf16.mxu0 0
        %1925 = vmatpush1.bf16.msra.mxu0 %v1920
        %1926 = vmatprep.subr.bf16.mxu0 0
        %1927 = vmatpush1.bf16.msra.mxu0 0
        %1928 = vmatprep.subr.bf16.mxu0 0
        %1929 = vmatpush1.bf16.msra.mxu0 0
        %1930 = vmatprep.subr.bf16.mxu0 0
        %1931 = vmatpush1.bf16.msra.mxu0 0
        %1932 = vmatprep.subr.bf16.mxu0 0
        %1933 = vmatpush1.bf16.msra.mxu0 0
        %1934 = vmatprep.subr.bf16.mxu0 0
        %1935 = vmatpush1.bf16.msra.mxu0 0
        %1936 = vmatprep.subr.bf16.mxu0 0
        %1937 = vmatpush1.bf16.msra.mxu0 0
        %1938 = vmatprep.subr.bf16.mxu0 0
        %1939 = vmatpush1.bf16.msra.mxu0 0
        %1940 = vmatprep.subr.bf16.mxu0 0
        %1941 = vmatpush1.bf16.msra.mxu0 0
        %1942 = vmatprep.subr.bf16.mxu0 0
        %1943 = vmatpush1.bf16.msra.mxu0 0
        %1944 = vmatprep.subr.bf16.mxu0 0
        %1945 = vmatpush1.bf16.msra.mxu0 0
        %1946 = vmatprep.subr.bf16.mxu0 0
        %1947 = vmatpush1.bf16.msra.mxu0 0
        %1948 = vmatprep.subr.bf16.mxu0 0
        %1949 = vmatpush1.bf16.msra.mxu0 0
        %1950 = vmatprep.subr.bf16.mxu0 0
        %1951 = vmatpush1.bf16.msra.mxu0 0
        %1952 = vmatprep.subr.bf16.mxu0 0
        %1953 = vmatpush1.bf16.msra.mxu0 0
        %1954 = vmatprep.subr.bf16.mxu0 0
        %1955 = vmatpush1.bf16.msra.mxu0 0
        %1956 = vmatprep.mubr.bf16.mxu0 0
        %1957 = vmatmul.mubr.bf16.gmra.mrb[0].mxu0 %v1922
        %v1958 = vpop.f32.mrb[0].mxu0
        %v1959 = vadd.f32 0.0, %v1958
        %v1960 = vpop.f32.mrb[0].mxu0
        %v1961 = vpop.f32.mrb[0].mxu0
        %v1962 = vadd.f32 0.0, %v1961
        %v1963 = vpop.f32.mrb[0].mxu0
        %1964 = vdwg.mxu0
        %v1966 = vsel %vm1109, %v1849, 0
        %1968 = vmatprep.subr.bf16.mxu0 0
        %1969 = vmatpush1.bf16.msra.mxu0 %v1850
        %1970 = vmatprep.subr.bf16.mxu0 0
        %1971 = vmatpush1.bf16.msra.mxu0 0
        %1972 = vmatprep.subr.bf16.mxu0 0
        %1973 = vmatpush1.bf16.msra.mxu0 0
        %1974 = vmatprep.subr.bf16.mxu0 0
        %1975 = vmatpush1.bf16.msra.mxu0 0
        %1976 = vmatprep.subr.bf16.mxu0 0
        %1977 = vmatpush1.bf16.msra.mxu0 0
        %1978 = vmatprep.subr.bf16.mxu0 0
        %1979 = vmatpush1.bf16.msra.mxu0 0
        %1980 = vmatprep.subr.bf16.mxu0 0
        %1981 = vmatpush1.bf16.msra.mxu0 0
        %1982 = vmatprep.subr.bf16.mxu0 0
        %1983 = vmatpush1.bf16.msra.mxu0 0
        %1984 = vmatprep.subr.bf16.mxu0 0
        %1985 = vmatpush1.bf16.msra.mxu0 0
        %1986 = vmatprep.subr.bf16.mxu0 0
        %1987 = vmatpush1.bf16.msra.mxu0 0
        %1988 = vmatprep.subr.bf16.mxu0 0
        %1989 = vmatpush1.bf16.msra.mxu0 0
        %1990 = vmatprep.subr.bf16.mxu0 0
        %1991 = vmatpush1.bf16.msra.mxu0 0
        %1992 = vmatprep.subr.bf16.mxu0 0
        %1993 = vmatpush1.bf16.msra.mxu0 0
        %1994 = vmatprep.subr.bf16.mxu0 0
        %1995 = vmatpush1.bf16.msra.mxu0 0
        %1996 = vmatprep.subr.bf16.mxu0 0
        %1997 = vmatpush1.bf16.msra.mxu0 0
        %1998 = vmatprep.subr.bf16.mxu0 0
        %1999 = vmatpush1.bf16.msra.mxu0 0
        %2000 = vmatprep.mubr.bf16.mxu0 0
        %2001 = vmatmul.mubr.bf16.gmra.mrb[0].mxu0 %v1966
        %v2002 = vpop.f32.mrb[0].mxu0
        %v2003 = vadd.f32 %v1959, %v2002
        %v2004 = vpop.f32.mrb[0].mxu0
        %v2005 = vpop.f32.mrb[0].mxu0
        %v2006 = vadd.f32 %v1962, %v2005
        %v2007 = vpop.f32.mrb[0].mxu0
        %2008 = vdwg.mxu0
        %v2009 = vpack.c.bf16 %v924, %v920
        %s2010 = scalar_lea.vmem %s404, 4
        %v2011 = vld [vmem:[%s2010] sm:$0x1]
        %v2012 = vmul.f32 %v918, %v1058
        %v2013 = vmul.f32 %v922, %v1058
        %v2014 = vpack.c.bf16 %v2013, %v2012
        %v2016 = vlaneseq
        %v2017 = vshrl.u32 %v2016, 7
        %v2018 = vsub.s32 0, %v2017
        %v2019 = vrot.slane %v2011, %v2018
        %2021 = vmatprep.subr.bf16.mxu0 0
        %2022 = vmatpush1.bf16.xpose.msra.mxu0 %v2009
        %2023 = vmatprep.subr.bf16.mxu0 0
        %2024 = vmatpush1.bf16.xpose.msra.mxu0 0
        %2025 = vmatprep.subr.bf16.mxu0 0
        %2026 = vmatpush1.bf16.xpose.msra.mxu0 0
        %2027 = vmatprep.subr.bf16.mxu0 0
        %2028 = vmatpush1.bf16.xpose.msra.mxu0 0
        %2029 = vmatprep.subr.bf16.mxu0 0
        %2030 = vmatpush1.bf16.xpose.msra.mxu0 0
        %2031 = vmatprep.subr.bf16.mxu0 0
        %2032 = vmatpush1.bf16.xpose.msra.mxu0 0
        %2033 = vmatprep.subr.bf16.mxu0 0
        %2034 = vmatpush1.bf16.xpose.msra.mxu0 0
        %2035 = vmatprep.subr.bf16.mxu0 0
        %2036 = vmatpush1.bf16.xpose.msra.mxu0 0
        %2037 = vmatprep.subr.bf16.mxu0 0
        %2038 = vmatpush1.bf16.xpose.msra.mxu0 0
        %2039 = vmatprep.subr.bf16.mxu0 0
        %2040 = vmatpush1.bf16.xpose.msra.mxu0 0
        %2041 = vmatprep.subr.bf16.mxu0 0
        %2042 = vmatpush1.bf16.xpose.msra.mxu0 0
        %2043 = vmatprep.subr.bf16.mxu0 0
        %2044 = vmatpush1.bf16.xpose.msra.mxu0 0
        %2045 = vmatprep.subr.bf16.mxu0 0
        %2046 = vmatpush1.bf16.xpose.msra.mxu0 0
        %2047 = vmatprep.subr.bf16.mxu0 0
        %2048 = vmatpush1.bf16.xpose.msra.mxu0 0
        %2049 = vmatprep.subr.bf16.mxu0 0
        %2050 = vmatpush1.bf16.xpose.msra.mxu0 0
        %2051 = vmatprep.subr.bf16.mxu0 0
        %2052 = vmatpush1.bf16.xpose.msra.mxu0 0
        %2053 = vmatprep.mubr.bf16.mxu0 0
        %2054 = vmatmul.mubr.bf16.gmra.mrb[0].mxu0 %v2014
        %v2055 = vpop.f32.mrb[0].mxu0
        %v2056 = vadd.f32 %v2019, %v2055
        %v2057 = vpop.f32.mrb[0].mxu0
        %v2058 = vpop.f32.mrb[0].mxu0
        %v2059 = vadd.f32 %v2019, %v2058
        %v2060 = vpop.f32.mrb[0].mxu0
        %2061 = vdwg.mxu0
        %v2062 = vsel %vm1109, %v2056, -inf
        %2063 = vmax.xlane.f32.xlu0 %v2062
        %v2064 = vpop.xlane.xlu0 %2063
        %v2065 = vsel %vm1109, %v2059, -inf
        %2066 = vmax.xlane.f32.xlu0 %v2065
        %v2067 = vpop.xlane.xlu0 %2066
        %v2068 = vsub.f32 %v2056, %v2064
        %v2069 = vsub.f32 %v2059, %v2067
        %v2070 = vmul.f32 %v2068, 1.442695
        %v2071 = vpow.pop %v2070
        %v2072 = vmul.f32 %v2069, 1.442695
        %v2073 = vpow.pop %v2072
        %v2074 = vsel %vm1109, %v2071, 0.0
        %2075 = vadd.xlane.f32.xlu0 %v2074
        %v2076 = vpop.xlane.xlu0 %2075
        %v2077 = vsel %vm1109, %v2073, 0.0
        %2078 = vadd.xlane.f32.xlu0 %v2077
        %v2079 = vpop.xlane.xlu0 %2078
        %v2080 = vrcp.pop %v2076
        %v2081 = vrcp.pop %v2079
        %v2082 = vmul.f32 %v2071, %v2080
        %v2083 = vmul.f32 %v2073, %v2081
        %v2084 = vmul.f32 %v1023, %v1058
        %v2085 = vmul.f32 %v1026, %v1058
        %v2086 = vpack.c.bf16 %v2083, %v2082
        %v2087 = vpack.c.bf16 %v2085, %v2084
        %v2088 = vmul.f32 %v918, %v1139
        %v2089 = vmul.f32 %v922, %v1139
        %v2090 = vpack.c.bf16 %v2089, %v2088
        %2091 = vmatprep.subr.bf16.mxu0 0
        %2092 = vmatpush1.bf16.xpose.msra.mxu0 %v2009
        %2093 = vmatprep.subr.bf16.mxu0 0
        %2094 = vmatpush1.bf16.xpose.msra.mxu0 0
        %2095 = vmatprep.subr.bf16.mxu0 0
        %2096 = vmatpush1.bf16.xpose.msra.mxu0 0
        %2097 = vmatprep.subr.bf16.mxu0 0
        %2098 = vmatpush1.bf16.xpose.msra.mxu0 0
        %2099 = vmatprep.subr.bf16.mxu0 0
        %2100 = vmatpush1.bf16.xpose.msra.mxu0 0
        %2101 = vmatprep.subr.bf16.mxu0 0
        %2102 = vmatpush1.bf16.xpose.msra.mxu0 0
        %2103 = vmatprep.subr.bf16.mxu0 0
        %2104 = vmatpush1.bf16.xpose.msra.mxu0 0
        %2105 = vmatprep.subr.bf16.mxu0 0
        %2106 = vmatpush1.bf16.xpose.msra.mxu0 0
        %2107 = vmatprep.subr.bf16.mxu0 0
        %2108 = vmatpush1.bf16.xpose.msra.mxu0 0
        %2109 = vmatprep.subr.bf16.mxu0 0
        %2110 = vmatpush1.bf16.xpose.msra.mxu0 0
        %2111 = vmatprep.subr.bf16.mxu0 0
        %2112 = vmatpush1.bf16.xpose.msra.mxu0 0
        %2113 = vmatprep.subr.bf16.mxu0 0
        %2114 = vmatpush1.bf16.xpose.msra.mxu0 0
        %2115 = vmatprep.subr.bf16.mxu0 0
        %2116 = vmatpush1.bf16.xpose.msra.mxu0 0
        %2117 = vmatprep.subr.bf16.mxu0 0
        %2118 = vmatpush1.bf16.xpose.msra.mxu0 0
        %2119 = vmatprep.subr.bf16.mxu0 0
        %2120 = vmatpush1.bf16.xpose.msra.mxu0 0
        %2121 = vmatprep.subr.bf16.mxu0 0
        %2122 = vmatpush1.bf16.xpose.msra.mxu0 0
        %2123 = vmatprep.mubr.bf16.mxu0 0
        %2124 = vmatmul.mubr.bf16.gmra.mrb[0].mxu0 %v2090
        %v2125 = vpop.f32.mrb[0].mxu0
        %v2126 = vadd.f32 %v2019, %v2125
        %v2127 = vpop.f32.mrb[0].mxu0
        %v2128 = vpop.f32.mrb[0].mxu0
        %v2129 = vadd.f32 %v2019, %v2128
        %v2130 = vpop.f32.mrb[0].mxu0
        %2131 = vdwg.mxu0
        %v2132 = vsel %vm1109, %v2126, -inf
        %2133 = vmax.xlane.f32.xlu0 %v2132
        %v2134 = vpop.xlane.xlu0 %2133
        %v2135 = vsel %vm1109, %v2129, -inf
        %2136 = vmax.xlane.f32.xlu0 %v2135
        %v2137 = vpop.xlane.xlu0 %2136
        %v2138 = vsub.f32 %v2126, %v2134
        %v2139 = vsub.f32 %v2129, %v2137
        %v2140 = vmul.f32 %v2138, 1.442695
        %v2141 = vpow.pop %v2140
        %v2142 = vmul.f32 %v2139, 1.442695
        %v2143 = vpow.pop %v2142
        %v2144 = vsel %vm1109, %v2141, 0.0
        %2145 = vadd.xlane.f32.xlu0 %v2144
        %v2146 = vpop.xlane.xlu0 %2145
        %v2147 = vsel %vm1109, %v2143, 0.0
        %2148 = vadd.xlane.f32.xlu0 %v2147
        %v2149 = vpop.xlane.xlu0 %2148
        %v2150 = vrcp.pop %v2146
        %v2151 = vrcp.pop %v2149
        %v2152 = vmul.f32 %v2141, %v2150
        %v2153 = vmul.f32 %v2143, %v2151
        %v2154 = vmul.f32 %v1023, %v1139
        %v2155 = vmul.f32 %v1026, %v1139
        %v2156 = vpack.c.bf16 %v2153, %v2152
        %v2157 = vpack.c.bf16 %v2155, %v2154
        %v2159 = vsel %vm1109, %v2156, 0
        %2161 = vmatprep.subr.bf16.mxu0 0
        %2162 = vmatpush1.bf16.msra.mxu0 %v2157
        %2163 = vmatprep.subr.bf16.mxu0 0
        %2164 = vmatpush1.bf16.msra.mxu0 0
        %2165 = vmatprep.subr.bf16.mxu0 0
        %2166 = vmatpush1.bf16.msra.mxu0 0
        %2167 = vmatprep.subr.bf16.mxu0 0
        %2168 = vmatpush1.bf16.msra.mxu0 0
        %2169 = vmatprep.subr.bf16.mxu0 0
        %2170 = vmatpush1.bf16.msra.mxu0 0
        %2171 = vmatprep.subr.bf16.mxu0 0
        %2172 = vmatpush1.bf16.msra.mxu0 0
        %2173 = vmatprep.subr.bf16.mxu0 0
        %2174 = vmatpush1.bf16.msra.mxu0 0
        %2175 = vmatprep.subr.bf16.mxu0 0
        %2176 = vmatpush1.bf16.msra.mxu0 0
        %2177 = vmatprep.subr.bf16.mxu0 0
        %2178 = vmatpush1.bf16.msra.mxu0 0
        %2179 = vmatprep.subr.bf16.mxu0 0
        %2180 = vmatpush1.bf16.msra.mxu0 0
        %2181 = vmatprep.subr.bf16.mxu0 0
        %2182 = vmatpush1.bf16.msra.mxu0 0
        %2183 = vmatprep.subr.bf16.mxu0 0
        %2184 = vmatpush1.bf16.msra.mxu0 0
        %2185 = vmatprep.subr.bf16.mxu0 0
        %2186 = vmatpush1.bf16.msra.mxu0 0
        %2187 = vmatprep.subr.bf16.mxu0 0
        %2188 = vmatpush1.bf16.msra.mxu0 0
        %2189 = vmatprep.subr.bf16.mxu0 0
        %2190 = vmatpush1.bf16.msra.mxu0 0
        %2191 = vmatprep.subr.bf16.mxu0 0
        %2192 = vmatpush1.bf16.msra.mxu0 0
        %2193 = vmatprep.mubr.bf16.mxu0 0
        %2194 = vmatmul.mubr.bf16.gmra.mrb[0].mxu0 %v2159
        %v2195 = vpop.f32.mrb[0].mxu0
        %v2196 = vadd.f32 0.0, %v2195
        %v2197 = vpop.f32.mrb[0].mxu0
        %v2198 = vpop.f32.mrb[0].mxu0
        %v2199 = vadd.f32 0.0, %v2198
        %v2200 = vpop.f32.mrb[0].mxu0
        %2201 = vdwg.mxu0
        %v2203 = vsel %vm1109, %v2086, 0
        %2205 = vmatprep.subr.bf16.mxu0 0
        %2206 = vmatpush1.bf16.msra.mxu0 %v2087
        %2207 = vmatprep.subr.bf16.mxu0 0
        %2208 = vmatpush1.bf16.msra.mxu0 0
        %2209 = vmatprep.subr.bf16.mxu0 0
        %2210 = vmatpush1.bf16.msra.mxu0 0
        %2211 = vmatprep.subr.bf16.mxu0 0
        %2212 = vmatpush1.bf16.msra.mxu0 0
        %2213 = vmatprep.subr.bf16.mxu0 0
        %2214 = vmatpush1.bf16.msra.mxu0 0
        %2215 = vmatprep.subr.bf16.mxu0 0
        %2216 = vmatpush1.bf16.msra.mxu0 0
        %2217 = vmatprep.subr.bf16.mxu0 0
        %2218 = vmatpush1.bf16.msra.mxu0 0
        %2219 = vmatprep.subr.bf16.mxu0 0
        %2220 = vmatpush1.bf16.msra.mxu0 0
        %2221 = vmatprep.subr.bf16.mxu0 0
        %2222 = vmatpush1.bf16.msra.mxu0 0
        %2223 = vmatprep.subr.bf16.mxu0 0
        %2224 = vmatpush1.bf16.msra.mxu0 0
        %2225 = vmatprep.subr.bf16.mxu0 0
        %2226 = vmatpush1.bf16.msra.mxu0 0
        %2227 = vmatprep.subr.bf16.mxu0 0
        %2228 = vmatpush1.bf16.msra.mxu0 0
        %2229 = vmatprep.subr.bf16.mxu0 0
        %2230 = vmatpush1.bf16.msra.mxu0 0
        %2231 = vmatprep.subr.bf16.mxu0 0
        %2232 = vmatpush1.bf16.msra.mxu0 0
        %2233 = vmatprep.subr.bf16.mxu0 0
        %2234 = vmatpush1.bf16.msra.mxu0 0
        %2235 = vmatprep.subr.bf16.mxu0 0
        %2236 = vmatpush1.bf16.msra.mxu0 0
        %2237 = vmatprep.mubr.bf16.mxu0 0
        %2238 = vmatmul.mubr.bf16.gmra.mrb[0].mxu0 %v2203
        %v2239 = vpop.f32.mrb[0].mxu0
        %v2240 = vadd.f32 %v2196, %v2239
        %v2241 = vpop.f32.mrb[0].mxu0
        %v2242 = vpop.f32.mrb[0].mxu0
        %v2243 = vadd.f32 %v2199, %v2242
        %v2244 = vpop.f32.mrb[0].mxu0
        %2245 = vdwg.mxu0
        %v2246 = vpack.c.bf16 %v934, %v930
        %s2247 = scalar_lea.vmem %s404, 5
        %v2248 = vld [vmem:[%s2247] sm:$0x1]
        %v2249 = vmul.f32 %v928, %v1058
        %v2250 = vmul.f32 %v932, %v1058
        %v2251 = vpack.c.bf16 %v2250, %v2249
        %v2253 = vlaneseq
        %v2254 = vshrl.u32 %v2253, 7
        %v2255 = vsub.s32 0, %v2254
        %v2256 = vrot.slane %v2248, %v2255
        %2258 = vmatprep.subr.bf16.mxu0 0
        %2259 = vmatpush1.bf16.xpose.msra.mxu0 %v2246
        %2260 = vmatprep.subr.bf16.mxu0 0
        %2261 = vmatpush1.bf16.xpose.msra.mxu0 0
        %2262 = vmatprep.subr.bf16.mxu0 0
        %2263 = vmatpush1.bf16.xpose.msra.mxu0 0
        %2264 = vmatprep.subr.bf16.mxu0 0
        %2265 = vmatpush1.bf16.xpose.msra.mxu0 0
        %2266 = vmatprep.subr.bf16.mxu0 0
        %2267 = vmatpush1.bf16.xpose.msra.mxu0 0
        %2268 = vmatprep.subr.bf16.mxu0 0
        %2269 = vmatpush1.bf16.xpose.msra.mxu0 0
        %2270 = vmatprep.subr.bf16.mxu0 0
        %2271 = vmatpush1.bf16.xpose.msra.mxu0 0
        %2272 = vmatprep.subr.bf16.mxu0 0
        %2273 = vmatpush1.bf16.xpose.msra.mxu0 0
        %2274 = vmatprep.subr.bf16.mxu0 0
        %2275 = vmatpush1.bf16.xpose.msra.mxu0 0
        %2276 = vmatprep.subr.bf16.mxu0 0
        %2277 = vmatpush1.bf16.xpose.msra.mxu0 0
        %2278 = vmatprep.subr.bf16.mxu0 0
        %2279 = vmatpush1.bf16.xpose.msra.mxu0 0
        %2280 = vmatprep.subr.bf16.mxu0 0
        %2281 = vmatpush1.bf16.xpose.msra.mxu0 0
        %2282 = vmatprep.subr.bf16.mxu0 0
        %2283 = vmatpush1.bf16.xpose.msra.mxu0 0
        %2284 = vmatprep.subr.bf16.mxu0 0
        %2285 = vmatpush1.bf16.xpose.msra.mxu0 0
        %2286 = vmatprep.subr.bf16.mxu0 0
        %2287 = vmatpush1.bf16.xpose.msra.mxu0 0
        %2288 = vmatprep.subr.bf16.mxu0 0
        %2289 = vmatpush1.bf16.xpose.msra.mxu0 0
        %2290 = vmatprep.mubr.bf16.mxu0 0
        %2291 = vmatmul.mubr.bf16.gmra.mrb[0].mxu0 %v2251
        %v2292 = vpop.f32.mrb[0].mxu0
        %v2293 = vadd.f32 %v2256, %v2292
        %v2294 = vpop.f32.mrb[0].mxu0
        %v2295 = vpop.f32.mrb[0].mxu0
        %v2296 = vadd.f32 %v2256, %v2295
        %v2297 = vpop.f32.mrb[0].mxu0
        %2298 = vdwg.mxu0
        %v2299 = vsel %vm1109, %v2293, -inf
        %2300 = vmax.xlane.f32.xlu0 %v2299
        %v2301 = vpop.xlane.xlu0 %2300
        %v2302 = vsel %vm1109, %v2296, -inf
        %2303 = vmax.xlane.f32.xlu0 %v2302
        %v2304 = vpop.xlane.xlu0 %2303
        %v2305 = vsub.f32 %v2293, %v2301
        %v2306 = vsub.f32 %v2296, %v2304
        %v2307 = vmul.f32 %v2305, 1.442695
        %v2308 = vpow.pop %v2307
        %v2309 = vmul.f32 %v2306, 1.442695
        %v2310 = vpow.pop %v2309
        %v2311 = vsel %vm1109, %v2308, 0.0
        %2312 = vadd.xlane.f32.xlu0 %v2311
        %v2313 = vpop.xlane.xlu0 %2312
        %v2314 = vsel %vm1109, %v2310, 0.0
        %2315 = vadd.xlane.f32.xlu0 %v2314
        %v2316 = vpop.xlane.xlu0 %2315
        %v2317 = vrcp.pop %v2313
        %v2318 = vrcp.pop %v2316
        %v2319 = vmul.f32 %v2308, %v2317
        %v2320 = vmul.f32 %v2310, %v2318
        %v2321 = vmul.f32 %v1031, %v1058
        %v2322 = vmul.f32 %v1034, %v1058
        %v2323 = vpack.c.bf16 %v2320, %v2319
        %v2324 = vpack.c.bf16 %v2322, %v2321
        %v2325 = vmul.f32 %v928, %v1139
        %v2326 = vmul.f32 %v932, %v1139
        %v2327 = vpack.c.bf16 %v2326, %v2325
        %2328 = vmatprep.subr.bf16.mxu0 0
        %2329 = vmatpush1.bf16.xpose.msra.mxu0 %v2246
        %2330 = vmatprep.subr.bf16.mxu0 0
        %2331 = vmatpush1.bf16.xpose.msra.mxu0 0
        %2332 = vmatprep.subr.bf16.mxu0 0
        %2333 = vmatpush1.bf16.xpose.msra.mxu0 0
        %2334 = vmatprep.subr.bf16.mxu0 0
        %2335 = vmatpush1.bf16.xpose.msra.mxu0 0
        %2336 = vmatprep.subr.bf16.mxu0 0
        %2337 = vmatpush1.bf16.xpose.msra.mxu0 0
        %2338 = vmatprep.subr.bf16.mxu0 0
        %2339 = vmatpush1.bf16.xpose.msra.mxu0 0
        %2340 = vmatprep.subr.bf16.mxu0 0
        %2341 = vmatpush1.bf16.xpose.msra.mxu0 0
        %2342 = vmatprep.subr.bf16.mxu0 0
        %2343 = vmatpush1.bf16.xpose.msra.mxu0 0
        %2344 = vmatprep.subr.bf16.mxu0 0
        %2345 = vmatpush1.bf16.xpose.msra.mxu0 0
        %2346 = vmatprep.subr.bf16.mxu0 0
        %2347 = vmatpush1.bf16.xpose.msra.mxu0 0
        %2348 = vmatprep.subr.bf16.mxu0 0
        %2349 = vmatpush1.bf16.xpose.msra.mxu0 0
        %2350 = vmatprep.subr.bf16.mxu0 0
        %2351 = vmatpush1.bf16.xpose.msra.mxu0 0
        %2352 = vmatprep.subr.bf16.mxu0 0
        %2353 = vmatpush1.bf16.xpose.msra.mxu0 0
        %2354 = vmatprep.subr.bf16.mxu0 0
        %2355 = vmatpush1.bf16.xpose.msra.mxu0 0
        %2356 = vmatprep.subr.bf16.mxu0 0
        %2357 = vmatpush1.bf16.xpose.msra.mxu0 0
        %2358 = vmatprep.subr.bf16.mxu0 0
        %2359 = vmatpush1.bf16.xpose.msra.mxu0 0
        %2360 = vmatprep.mubr.bf16.mxu0 0
        %2361 = vmatmul.mubr.bf16.gmra.mrb[0].mxu0 %v2327
        %v2362 = vpop.f32.mrb[0].mxu0
        %v2363 = vadd.f32 %v2256, %v2362
        %v2364 = vpop.f32.mrb[0].mxu0
        %v2365 = vpop.f32.mrb[0].mxu0
        %v2366 = vadd.f32 %v2256, %v2365
        %v2367 = vpop.f32.mrb[0].mxu0
        %2368 = vdwg.mxu0
        %v2369 = vsel %vm1109, %v2363, -inf
        %2370 = vmax.xlane.f32.xlu0 %v2369
        %v2371 = vpop.xlane.xlu0 %2370
        %v2372 = vsel %vm1109, %v2366, -inf
        %2373 = vmax.xlane.f32.xlu0 %v2372
        %v2374 = vpop.xlane.xlu0 %2373
        %v2375 = vsub.f32 %v2363, %v2371
        %v2376 = vsub.f32 %v2366, %v2374
        %v2377 = vmul.f32 %v2375, 1.442695
        %v2378 = vpow.pop %v2377
        %v2379 = vmul.f32 %v2376, 1.442695
        %v2380 = vpow.pop %v2379
        %v2381 = vsel %vm1109, %v2378, 0.0
        %2382 = vadd.xlane.f32.xlu0 %v2381
        %v2383 = vpop.xlane.xlu0 %2382
        %v2384 = vsel %vm1109, %v2380, 0.0
        %2385 = vadd.xlane.f32.xlu0 %v2384
        %v2386 = vpop.xlane.xlu0 %2385
        %v2387 = vrcp.pop %v2383
        %v2388 = vrcp.pop %v2386
        %v2389 = vmul.f32 %v2378, %v2387
        %v2390 = vmul.f32 %v2380, %v2388
        %v2391 = vmul.f32 %v1031, %v1139
        %v2392 = vmul.f32 %v1034, %v1139
        %v2393 = vpack.c.bf16 %v2390, %v2389
        %v2394 = vpack.c.bf16 %v2392, %v2391
        %v2396 = vsel %vm1109, %v2393, 0
        %2398 = vmatprep.subr.bf16.mxu0 0
        %2399 = vmatpush1.bf16.msra.mxu0 %v2394
        %2400 = vmatprep.subr.bf16.mxu0 0
        %2401 = vmatpush1.bf16.msra.mxu0 0
        %2402 = vmatprep.subr.bf16.mxu0 0
        %2403 = vmatpush1.bf16.msra.mxu0 0
        %2404 = vmatprep.subr.bf16.mxu0 0
        %2405 = vmatpush1.bf16.msra.mxu0 0
        %2406 = vmatprep.subr.bf16.mxu0 0
        %2407 = vmatpush1.bf16.msra.mxu0 0
        %2408 = vmatprep.subr.bf16.mxu0 0
        %2409 = vmatpush1.bf16.msra.mxu0 0
        %2410 = vmatprep.subr.bf16.mxu0 0
        %2411 = vmatpush1.bf16.msra.mxu0 0
        %2412 = vmatprep.subr.bf16.mxu0 0
        %2413 = vmatpush1.bf16.msra.mxu0 0
        %2414 = vmatprep.subr.bf16.mxu0 0
        %2415 = vmatpush1.bf16.msra.mxu0 0
        %2416 = vmatprep.subr.bf16.mxu0 0
        %2417 = vmatpush1.bf16.msra.mxu0 0
        %2418 = vmatprep.subr.bf16.mxu0 0
        %2419 = vmatpush1.bf16.msra.mxu0 0
        %2420 = vmatprep.subr.bf16.mxu0 0
        %2421 = vmatpush1.bf16.msra.mxu0 0
        %2422 = vmatprep.subr.bf16.mxu0 0
        %2423 = vmatpush1.bf16.msra.mxu0 0
        %2424 = vmatprep.subr.bf16.mxu0 0
        %2425 = vmatpush1.bf16.msra.mxu0 0
        %2426 = vmatprep.subr.bf16.mxu0 0
        %2427 = vmatpush1.bf16.msra.mxu0 0
        %2428 = vmatprep.subr.bf16.mxu0 0
        %2429 = vmatpush1.bf16.msra.mxu0 0
        %2430 = vmatprep.mubr.bf16.mxu0 0
        %2431 = vmatmul.mubr.bf16.gmra.mrb[0].mxu0 %v2396
        %v2432 = vpop.f32.mrb[0].mxu0
        %v2433 = vadd.f32 0.0, %v2432
        %v2434 = vpop.f32.mrb[0].mxu0
        %v2435 = vpop.f32.mrb[0].mxu0
        %v2436 = vadd.f32 0.0, %v2435
        %v2437 = vpop.f32.mrb[0].mxu0
        %2438 = vdwg.mxu0
        %v2440 = vsel %vm1109, %v2323, 0
        %2442 = vmatprep.subr.bf16.mxu0 0
        %2443 = vmatpush1.bf16.msra.mxu0 %v2324
        %2444 = vmatprep.subr.bf16.mxu0 0
        %2445 = vmatpush1.bf16.msra.mxu0 0
        %2446 = vmatprep.subr.bf16.mxu0 0
        %2447 = vmatpush1.bf16.msra.mxu0 0
        %2448 = vmatprep.subr.bf16.mxu0 0
        %2449 = vmatpush1.bf16.msra.mxu0 0
        %2450 = vmatprep.subr.bf16.mxu0 0
        %2451 = vmatpush1.bf16.msra.mxu0 0
        %2452 = vmatprep.subr.bf16.mxu0 0
        %2453 = vmatpush1.bf16.msra.mxu0 0
        %2454 = vmatprep.subr.bf16.mxu0 0
        %2455 = vmatpush1.bf16.msra.mxu0 0
        %2456 = vmatprep.subr.bf16.mxu0 0
        %2457 = vmatpush1.bf16.msra.mxu0 0
        %2458 = vmatprep.subr.bf16.mxu0 0
        %2459 = vmatpush1.bf16.msra.mxu0 0
        %2460 = vmatprep.subr.bf16.mxu0 0
        %2461 = vmatpush1.bf16.msra.mxu0 0
        %2462 = vmatprep.subr.bf16.mxu0 0
        %2463 = vmatpush1.bf16.msra.mxu0 0
        %2464 = vmatprep.subr.bf16.mxu0 0
        %2465 = vmatpush1.bf16.msra.mxu0 0
        %2466 = vmatprep.subr.bf16.mxu0 0
        %2467 = vmatpush1.bf16.msra.mxu0 0
        %2468 = vmatprep.subr.bf16.mxu0 0
        %2469 = vmatpush1.bf16.msra.mxu0 0
        %2470 = vmatprep.subr.bf16.mxu0 0
        %2471 = vmatpush1.bf16.msra.mxu0 0
        %2472 = vmatprep.subr.bf16.mxu0 0
        %2473 = vmatpush1.bf16.msra.mxu0 0
        %2474 = vmatprep.mubr.bf16.mxu0 0
        %2475 = vmatmul.mubr.bf16.gmra.mrb[0].mxu0 %v2440
        %v2476 = vpop.f32.mrb[0].mxu0
        %v2477 = vadd.f32 %v2433, %v2476
        %v2478 = vpop.f32.mrb[0].mxu0
        %v2479 = vpop.f32.mrb[0].mxu0
        %v2480 = vadd.f32 %v2436, %v2479
        %v2481 = vpop.f32.mrb[0].mxu0
        %2482 = vdwg.mxu0
        %v2483 = vpack.c.bf16 %v944, %v940
        %s2484 = scalar_lea.vmem %s404, 6
        %v2485 = vld [vmem:[%s2484] sm:$0x1]
        %v2486 = vmul.f32 %v938, %v1058
        %v2487 = vmul.f32 %v942, %v1058
        %v2488 = vpack.c.bf16 %v2487, %v2486
        %v2490 = vlaneseq
        %v2491 = vshrl.u32 %v2490, 7
        %v2492 = vsub.s32 0, %v2491
        %v2493 = vrot.slane %v2485, %v2492
        %2495 = vmatprep.subr.bf16.mxu0 0
        %2496 = vmatpush1.bf16.xpose.msra.mxu0 %v2483
        %2497 = vmatprep.subr.bf16.mxu0 0
        %2498 = vmatpush1.bf16.xpose.msra.mxu0 0
        %2499 = vmatprep.subr.bf16.mxu0 0
        %2500 = vmatpush1.bf16.xpose.msra.mxu0 0
        %2501 = vmatprep.subr.bf16.mxu0 0
        %2502 = vmatpush1.bf16.xpose.msra.mxu0 0
        %2503 = vmatprep.subr.bf16.mxu0 0
        %2504 = vmatpush1.bf16.xpose.msra.mxu0 0
        %2505 = vmatprep.subr.bf16.mxu0 0
        %2506 = vmatpush1.bf16.xpose.msra.mxu0 0
        %2507 = vmatprep.subr.bf16.mxu0 0
        %2508 = vmatpush1.bf16.xpose.msra.mxu0 0
        %2509 = vmatprep.subr.bf16.mxu0 0
        %2510 = vmatpush1.bf16.xpose.msra.mxu0 0
        %2511 = vmatprep.subr.bf16.mxu0 0
        %2512 = vmatpush1.bf16.xpose.msra.mxu0 0
        %2513 = vmatprep.subr.bf16.mxu0 0
        %2514 = vmatpush1.bf16.xpose.msra.mxu0 0
        %2515 = vmatprep.subr.bf16.mxu0 0
        %2516 = vmatpush1.bf16.xpose.msra.mxu0 0
        %2517 = vmatprep.subr.bf16.mxu0 0
        %2518 = vmatpush1.bf16.xpose.msra.mxu0 0
        %2519 = vmatprep.subr.bf16.mxu0 0
        %2520 = vmatpush1.bf16.xpose.msra.mxu0 0
        %2521 = vmatprep.subr.bf16.mxu0 0
        %2522 = vmatpush1.bf16.xpose.msra.mxu0 0
        %2523 = vmatprep.subr.bf16.mxu0 0
        %2524 = vmatpush1.bf16.xpose.msra.mxu0 0
        %2525 = vmatprep.subr.bf16.mxu0 0
        %2526 = vmatpush1.bf16.xpose.msra.mxu0 0
        %2527 = vmatprep.mubr.bf16.mxu0 0
        %2528 = vmatmul.mubr.bf16.gmra.mrb[0].mxu0 %v2488
        %v2529 = vpop.f32.mrb[0].mxu0
        %v2530 = vadd.f32 %v2493, %v2529
        %v2531 = vpop.f32.mrb[0].mxu0
        %v2532 = vpop.f32.mrb[0].mxu0
        %v2533 = vadd.f32 %v2493, %v2532
        %v2534 = vpop.f32.mrb[0].mxu0
        %2535 = vdwg.mxu0
        %v2536 = vsel %vm1109, %v2530, -inf
        %2537 = vmax.xlane.f32.xlu0 %v2536
        %v2538 = vpop.xlane.xlu0 %2537
        %v2539 = vsel %vm1109, %v2533, -inf
        %2540 = vmax.xlane.f32.xlu0 %v2539
        %v2541 = vpop.xlane.xlu0 %2540
        %v2542 = vsub.f32 %v2530, %v2538
        %v2543 = vsub.f32 %v2533, %v2541
        %v2544 = vmul.f32 %v2542, 1.442695
        %v2545 = vpow.pop %v2544
        %v2546 = vmul.f32 %v2543, 1.442695
        %v2547 = vpow.pop %v2546
        %v2548 = vsel %vm1109, %v2545, 0.0
        %2549 = vadd.xlane.f32.xlu0 %v2548
        %v2550 = vpop.xlane.xlu0 %2549
        %v2551 = vsel %vm1109, %v2547, 0.0
        %2552 = vadd.xlane.f32.xlu0 %v2551
        %v2553 = vpop.xlane.xlu0 %2552
        %v2554 = vrcp.pop %v2550
        %v2555 = vrcp.pop %v2553
        %v2556 = vmul.f32 %v2545, %v2554
        %v2557 = vmul.f32 %v2547, %v2555
        %v2558 = vmul.f32 %v1039, %v1058
        %v2559 = vmul.f32 %v1042, %v1058
        %v2560 = vpack.c.bf16 %v2557, %v2556
        %v2561 = vpack.c.bf16 %v2559, %v2558
        %v2562 = vmul.f32 %v938, %v1139
        %v2563 = vmul.f32 %v942, %v1139
        %v2564 = vpack.c.bf16 %v2563, %v2562
        %2565 = vmatprep.subr.bf16.mxu0 0
        %2566 = vmatpush1.bf16.xpose.msra.mxu0 %v2483
        %2567 = vmatprep.subr.bf16.mxu0 0
        %2568 = vmatpush1.bf16.xpose.msra.mxu0 0
        %2569 = vmatprep.subr.bf16.mxu0 0
        %2570 = vmatpush1.bf16.xpose.msra.mxu0 0
        %2571 = vmatprep.subr.bf16.mxu0 0
        %2572 = vmatpush1.bf16.xpose.msra.mxu0 0
        %2573 = vmatprep.subr.bf16.mxu0 0
        %2574 = vmatpush1.bf16.xpose.msra.mxu0 0
        %2575 = vmatprep.subr.bf16.mxu0 0
        %2576 = vmatpush1.bf16.xpose.msra.mxu0 0
        %2577 = vmatprep.subr.bf16.mxu0 0
        %2578 = vmatpush1.bf16.xpose.msra.mxu0 0
        %2579 = vmatprep.subr.bf16.mxu0 0
        %2580 = vmatpush1.bf16.xpose.msra.mxu0 0
        %2581 = vmatprep.subr.bf16.mxu0 0
        %2582 = vmatpush1.bf16.xpose.msra.mxu0 0
        %2583 = vmatprep.subr.bf16.mxu0 0
        %2584 = vmatpush1.bf16.xpose.msra.mxu0 0
        %2585 = vmatprep.subr.bf16.mxu0 0
        %2586 = vmatpush1.bf16.xpose.msra.mxu0 0
        %2587 = vmatprep.subr.bf16.mxu0 0
        %2588 = vmatpush1.bf16.xpose.msra.mxu0 0
        %2589 = vmatprep.subr.bf16.mxu0 0
        %2590 = vmatpush1.bf16.xpose.msra.mxu0 0
        %2591 = vmatprep.subr.bf16.mxu0 0
        %2592 = vmatpush1.bf16.xpose.msra.mxu0 0
        %2593 = vmatprep.subr.bf16.mxu0 0
        %2594 = vmatpush1.bf16.xpose.msra.mxu0 0
        %2595 = vmatprep.subr.bf16.mxu0 0
        %2596 = vmatpush1.bf16.xpose.msra.mxu0 0
        %2597 = vmatprep.mubr.bf16.mxu0 0
        %2598 = vmatmul.mubr.bf16.gmra.mrb[0].mxu0 %v2564
        %v2599 = vpop.f32.mrb[0].mxu0
        %v2600 = vadd.f32 %v2493, %v2599
        %v2601 = vpop.f32.mrb[0].mxu0
        %v2602 = vpop.f32.mrb[0].mxu0
        %v2603 = vadd.f32 %v2493, %v2602
        %v2604 = vpop.f32.mrb[0].mxu0
        %2605 = vdwg.mxu0
        %v2606 = vsel %vm1109, %v2600, -inf
        %2607 = vmax.xlane.f32.xlu0 %v2606
        %v2608 = vpop.xlane.xlu0 %2607
        %v2609 = vsel %vm1109, %v2603, -inf
        %2610 = vmax.xlane.f32.xlu0 %v2609
        %v2611 = vpop.xlane.xlu0 %2610
        %v2612 = vsub.f32 %v2600, %v2608
        %v2613 = vsub.f32 %v2603, %v2611
        %v2614 = vmul.f32 %v2612, 1.442695
        %v2615 = vpow.pop %v2614
        %v2616 = vmul.f32 %v2613, 1.442695
        %v2617 = vpow.pop %v2616
        %v2618 = vsel %vm1109, %v2615, 0.0
        %2619 = vadd.xlane.f32.xlu0 %v2618
        %v2620 = vpop.xlane.xlu0 %2619
        %v2621 = vsel %vm1109, %v2617, 0.0
        %2622 = vadd.xlane.f32.xlu0 %v2621
        %v2623 = vpop.xlane.xlu0 %2622
        %v2624 = vrcp.pop %v2620
        %v2625 = vrcp.pop %v2623
        %v2626 = vmul.f32 %v2615, %v2624
        %v2627 = vmul.f32 %v2617, %v2625
        %v2628 = vmul.f32 %v1039, %v1139
        %v2629 = vmul.f32 %v1042, %v1139
        %v2630 = vpack.c.bf16 %v2627, %v2626
        %v2631 = vpack.c.bf16 %v2629, %v2628
        %v2633 = vsel %vm1109, %v2630, 0
        %2635 = vmatprep.subr.bf16.mxu0 0
        %2636 = vmatpush1.bf16.msra.mxu0 %v2631
        %2637 = vmatprep.subr.bf16.mxu0 0
        %2638 = vmatpush1.bf16.msra.mxu0 0
        %2639 = vmatprep.subr.bf16.mxu0 0
        %2640 = vmatpush1.bf16.msra.mxu0 0
        %2641 = vmatprep.subr.bf16.mxu0 0
        %2642 = vmatpush1.bf16.msra.mxu0 0
        %2643 = vmatprep.subr.bf16.mxu0 0
        %2644 = vmatpush1.bf16.msra.mxu0 0
        %2645 = vmatprep.subr.bf16.mxu0 0
        %2646 = vmatpush1.bf16.msra.mxu0 0
        %2647 = vmatprep.subr.bf16.mxu0 0
        %2648 = vmatpush1.bf16.msra.mxu0 0
        %2649 = vmatprep.subr.bf16.mxu0 0
        %2650 = vmatpush1.bf16.msra.mxu0 0
        %2651 = vmatprep.subr.bf16.mxu0 0
        %2652 = vmatpush1.bf16.msra.mxu0 0
        %2653 = vmatprep.subr.bf16.mxu0 0
        %2654 = vmatpush1.bf16.msra.mxu0 0
        %2655 = vmatprep.subr.bf16.mxu0 0
        %2656 = vmatpush1.bf16.msra.mxu0 0
        %2657 = vmatprep.subr.bf16.mxu0 0
        %2658 = vmatpush1.bf16.msra.mxu0 0
        %2659 = vmatprep.subr.bf16.mxu0 0
        %2660 = vmatpush1.bf16.msra.mxu0 0
        %2661 = vmatprep.subr.bf16.mxu0 0
        %2662 = vmatpush1.bf16.msra.mxu0 0
        %2663 = vmatprep.subr.bf16.mxu0 0
        %2664 = vmatpush1.bf16.msra.mxu0 0
        %2665 = vmatprep.subr.bf16.mxu0 0
        %2666 = vmatpush1.bf16.msra.mxu0 0
        %2667 = vmatprep.mubr.bf16.mxu0 0
        %2668 = vmatmul.mubr.bf16.gmra.mrb[0].mxu0 %v2633
        %v2669 = vpop.f32.mrb[0].mxu0
        %v2670 = vadd.f32 0.0, %v2669
        %v2671 = vpop.f32.mrb[0].mxu0
        %v2672 = vpop.f32.mrb[0].mxu0
        %v2673 = vadd.f32 0.0, %v2672
        %v2674 = vpop.f32.mrb[0].mxu0
        %2675 = vdwg.mxu0
        %v2677 = vsel %vm1109, %v2560, 0
        %2679 = vmatprep.subr.bf16.mxu0 0
        %2680 = vmatpush1.bf16.msra.mxu0 %v2561
        %2681 = vmatprep.subr.bf16.mxu0 0
        %2682 = vmatpush1.bf16.msra.mxu0 0
        %2683 = vmatprep.subr.bf16.mxu0 0
        %2684 = vmatpush1.bf16.msra.mxu0 0
        %2685 = vmatprep.subr.bf16.mxu0 0
        %2686 = vmatpush1.bf16.msra.mxu0 0
        %2687 = vmatprep.subr.bf16.mxu0 0
        %2688 = vmatpush1.bf16.msra.mxu0 0
        %2689 = vmatprep.subr.bf16.mxu0 0
        %2690 = vmatpush1.bf16.msra.mxu0 0
        %2691 = vmatprep.subr.bf16.mxu0 0
        %2692 = vmatpush1.bf16.msra.mxu0 0
        %2693 = vmatprep.subr.bf16.mxu0 0
        %2694 = vmatpush1.bf16.msra.mxu0 0
        %2695 = vmatprep.subr.bf16.mxu0 0
        %2696 = vmatpush1.bf16.msra.mxu0 0
        %2697 = vmatprep.subr.bf16.mxu0 0
        %2698 = vmatpush1.bf16.msra.mxu0 0
        %2699 = vmatprep.subr.bf16.mxu0 0
        %2700 = vmatpush1.bf16.msra.mxu0 0
        %2701 = vmatprep.subr.bf16.mxu0 0
        %2702 = vmatpush1.bf16.msra.mxu0 0
        %2703 = vmatprep.subr.bf16.mxu0 0
        %2704 = vmatpush1.bf16.msra.mxu0 0
        %2705 = vmatprep.subr.bf16.mxu0 0
        %2706 = vmatpush1.bf16.msra.mxu0 0
        %2707 = vmatprep.subr.bf16.mxu0 0
        %2708 = vmatpush1.bf16.msra.mxu0 0
        %2709 = vmatprep.subr.bf16.mxu0 0
        %2710 = vmatpush1.bf16.msra.mxu0 0
        %2711 = vmatprep.mubr.bf16.mxu0 0
        %2712 = vmatmul.mubr.bf16.gmra.mrb[0].mxu0 %v2677
        %v2713 = vpop.f32.mrb[0].mxu0
        %v2714 = vadd.f32 %v2670, %v2713
        %v2715 = vpop.f32.mrb[0].mxu0
        %v2716 = vpop.f32.mrb[0].mxu0
        %v2717 = vadd.f32 %v2673, %v2716
        %v2718 = vpop.f32.mrb[0].mxu0
        %2719 = vdwg.mxu0
        %v2720 = vpack.c.bf16 %v954, %v950
        %s2721 = scalar_lea.vmem %s404, 7
        %v2722 = vld [vmem:[%s2721] sm:$0x1]
        %v2723 = vmul.f32 %v948, %v1058
        %v2724 = vmul.f32 %v952, %v1058
        %v2725 = vpack.c.bf16 %v2724, %v2723
        %v2727 = vlaneseq
        %v2728 = vshrl.u32 %v2727, 7
        %v2729 = vsub.s32 0, %v2728
        %v2730 = vrot.slane %v2722, %v2729
        %2732 = vmatprep.subr.bf16.mxu0 0
        %2733 = vmatpush1.bf16.xpose.msra.mxu0 %v2720
        %2734 = vmatprep.subr.bf16.mxu0 0
        %2735 = vmatpush1.bf16.xpose.msra.mxu0 0
        %2736 = vmatprep.subr.bf16.mxu0 0
        %2737 = vmatpush1.bf16.xpose.msra.mxu0 0
        %2738 = vmatprep.subr.bf16.mxu0 0
        %2739 = vmatpush1.bf16.xpose.msra.mxu0 0
        %2740 = vmatprep.subr.bf16.mxu0 0
        %2741 = vmatpush1.bf16.xpose.msra.mxu0 0
        %2742 = vmatprep.subr.bf16.mxu0 0
        %2743 = vmatpush1.bf16.xpose.msra.mxu0 0
        %2744 = vmatprep.subr.bf16.mxu0 0
        %2745 = vmatpush1.bf16.xpose.msra.mxu0 0
        %2746 = vmatprep.subr.bf16.mxu0 0
        %2747 = vmatpush1.bf16.xpose.msra.mxu0 0
        %2748 = vmatprep.subr.bf16.mxu0 0
        %2749 = vmatpush1.bf16.xpose.msra.mxu0 0
        %2750 = vmatprep.subr.bf16.mxu0 0
        %2751 = vmatpush1.bf16.xpose.msra.mxu0 0
        %2752 = vmatprep.subr.bf16.mxu0 0
        %2753 = vmatpush1.bf16.xpose.msra.mxu0 0
        %2754 = vmatprep.subr.bf16.mxu0 0
        %2755 = vmatpush1.bf16.xpose.msra.mxu0 0
        %2756 = vmatprep.subr.bf16.mxu0 0
        %2757 = vmatpush1.bf16.xpose.msra.mxu0 0
        %2758 = vmatprep.subr.bf16.mxu0 0
        %2759 = vmatpush1.bf16.xpose.msra.mxu0 0
        %2760 = vmatprep.subr.bf16.mxu0 0
        %2761 = vmatpush1.bf16.xpose.msra.mxu0 0
        %2762 = vmatprep.subr.bf16.mxu0 0
        %2763 = vmatpush1.bf16.xpose.msra.mxu0 0
        %2764 = vmatprep.mubr.bf16.mxu0 0
        %2765 = vmatmul.mubr.bf16.gmra.mrb[0].mxu0 %v2725
        %v2766 = vpop.f32.mrb[0].mxu0
        %v2767 = vadd.f32 %v2730, %v2766
        %v2768 = vpop.f32.mrb[0].mxu0
        %v2769 = vpop.f32.mrb[0].mxu0
        %v2770 = vadd.f32 %v2730, %v2769
        %v2771 = vpop.f32.mrb[0].mxu0
        %2772 = vdwg.mxu0
        %v2773 = vsel %vm1109, %v2767, -inf
        %2774 = vmax.xlane.f32.xlu0 %v2773
        %v2775 = vpop.xlane.xlu0 %2774
        %v2776 = vsel %vm1109, %v2770, -inf
        %2777 = vmax.xlane.f32.xlu0 %v2776
        %v2778 = vpop.xlane.xlu0 %2777
        %v2779 = vsub.f32 %v2767, %v2775
        %v2780 = vsub.f32 %v2770, %v2778
        %v2781 = vmul.f32 %v2779, 1.442695
        %v2782 = vpow.pop %v2781
        %v2783 = vmul.f32 %v2780, 1.442695
        %v2784 = vpow.pop %v2783
        %v2785 = vsel %vm1109, %v2782, 0.0
        %2786 = vadd.xlane.f32.xlu0 %v2785
        %v2787 = vpop.xlane.xlu0 %2786
        %v2788 = vsel %vm1109, %v2784, 0.0
        %2789 = vadd.xlane.f32.xlu0 %v2788
        %v2790 = vpop.xlane.xlu0 %2789
        %v2791 = vrcp.pop %v2787
        %v2792 = vrcp.pop %v2790
        %v2793 = vmul.f32 %v2782, %v2791
        %v2794 = vmul.f32 %v2784, %v2792
        %v2795 = vmul.f32 %v1047, %v1058
        %v2796 = vmul.f32 %v1050, %v1058
        %v2797 = vpack.c.bf16 %v2794, %v2793
        %v2798 = vpack.c.bf16 %v2796, %v2795
        %v2799 = vmul.f32 %v948, %v1139
        %v2800 = vmul.f32 %v952, %v1139
        %v2801 = vpack.c.bf16 %v2800, %v2799
        %2802 = vmatprep.subr.bf16.mxu0 0
        %2803 = vmatpush1.bf16.xpose.msra.mxu0 %v2720
        %2804 = vmatprep.subr.bf16.mxu0 0
        %2805 = vmatpush1.bf16.xpose.msra.mxu0 0
        %2806 = vmatprep.subr.bf16.mxu0 0
        %2807 = vmatpush1.bf16.xpose.msra.mxu0 0
        %2808 = vmatprep.subr.bf16.mxu0 0
        %2809 = vmatpush1.bf16.xpose.msra.mxu0 0
        %2810 = vmatprep.subr.bf16.mxu0 0
        %2811 = vmatpush1.bf16.xpose.msra.mxu0 0
        %2812 = vmatprep.subr.bf16.mxu0 0
        %2813 = vmatpush1.bf16.xpose.msra.mxu0 0
        %2814 = vmatprep.subr.bf16.mxu0 0
        %2815 = vmatpush1.bf16.xpose.msra.mxu0 0
        %2816 = vmatprep.subr.bf16.mxu0 0
        %2817 = vmatpush1.bf16.xpose.msra.mxu0 0
        %2818 = vmatprep.subr.bf16.mxu0 0
        %2819 = vmatpush1.bf16.xpose.msra.mxu0 0
        %2820 = vmatprep.subr.bf16.mxu0 0
        %2821 = vmatpush1.bf16.xpose.msra.mxu0 0
        %2822 = vmatprep.subr.bf16.mxu0 0
        %2823 = vmatpush1.bf16.xpose.msra.mxu0 0
        %2824 = vmatprep.subr.bf16.mxu0 0
        %2825 = vmatpush1.bf16.xpose.msra.mxu0 0
        %2826 = vmatprep.subr.bf16.mxu0 0
        %2827 = vmatpush1.bf16.xpose.msra.mxu0 0
        %2828 = vmatprep.subr.bf16.mxu0 0
        %2829 = vmatpush1.bf16.xpose.msra.mxu0 0
        %2830 = vmatprep.subr.bf16.mxu0 0
        %2831 = vmatpush1.bf16.xpose.msra.mxu0 0
        %2832 = vmatprep.subr.bf16.mxu0 0
        %2833 = vmatpush1.bf16.xpose.msra.mxu0 0
        %2834 = vmatprep.mubr.bf16.mxu0 0
        %2835 = vmatmul.mubr.bf16.gmra.mrb[0].mxu0 %v2801
        %v2836 = vpop.f32.mrb[0].mxu0
        %v2837 = vadd.f32 %v2730, %v2836
        %v2838 = vpop.f32.mrb[0].mxu0
        %v2839 = vpop.f32.mrb[0].mxu0
        %v2840 = vadd.f32 %v2730, %v2839
        %v2841 = vpop.f32.mrb[0].mxu0
        %2842 = vdwg.mxu0
        %v2843 = vsel %vm1109, %v2837, -inf
        %2844 = vmax.xlane.f32.xlu0 %v2843
        %v2845 = vpop.xlane.xlu0 %2844
        %v2846 = vsel %vm1109, %v2840, -inf
        %2847 = vmax.xlane.f32.xlu0 %v2846
        %v2848 = vpop.xlane.xlu0 %2847
        %v2849 = vsub.f32 %v2837, %v2845
        %v2850 = vsub.f32 %v2840, %v2848
        %v2851 = vmul.f32 %v2849, 1.442695
        %v2852 = vpow.pop %v2851
        %v2853 = vmul.f32 %v2850, 1.442695
        %v2854 = vpow.pop %v2853
        %v2855 = vsel %vm1109, %v2852, 0.0
        %2856 = vadd.xlane.f32.xlu0 %v2855
        %v2857 = vpop.xlane.xlu0 %2856
        %v2858 = vsel %vm1109, %v2854, 0.0
        %2859 = vadd.xlane.f32.xlu0 %v2858
        %v2860 = vpop.xlane.xlu0 %2859
        %v2861 = vrcp.pop %v2857
        %v2862 = vrcp.pop %v2860
        %v2863 = vmul.f32 %v2852, %v2861
        %v2864 = vmul.f32 %v2854, %v2862
        %v2865 = vmul.f32 %v1047, %v1139
        %v2866 = vmul.f32 %v1050, %v1139
        %v2867 = vpack.c.bf16 %v2864, %v2863
        %v2868 = vpack.c.bf16 %v2866, %v2865
        %v2870 = vsel %vm1109, %v2867, 0
        %2872 = vmatprep.subr.bf16.mxu0 0
        %2873 = vmatpush1.bf16.msra.mxu0 %v2868
        %2874 = vmatprep.subr.bf16.mxu0 0
        %2875 = vmatpush1.bf16.msra.mxu0 0
        %2876 = vmatprep.subr.bf16.mxu0 0
        %2877 = vmatpush1.bf16.msra.mxu0 0
        %2878 = vmatprep.subr.bf16.mxu0 0
        %2879 = vmatpush1.bf16.msra.mxu0 0
        %2880 = vmatprep.subr.bf16.mxu0 0
        %2881 = vmatpush1.bf16.msra.mxu0 0
        %2882 = vmatprep.subr.bf16.mxu0 0
        %2883 = vmatpush1.bf16.msra.mxu0 0
        %2884 = vmatprep.subr.bf16.mxu0 0
        %2885 = vmatpush1.bf16.msra.mxu0 0
        %2886 = vmatprep.subr.bf16.mxu0 0
        %2887 = vmatpush1.bf16.msra.mxu0 0
        %2888 = vmatprep.subr.bf16.mxu0 0
        %2889 = vmatpush1.bf16.msra.mxu0 0
        %2890 = vmatprep.subr.bf16.mxu0 0
        %2891 = vmatpush1.bf16.msra.mxu0 0
        %2892 = vmatprep.subr.bf16.mxu0 0
        %2893 = vmatpush1.bf16.msra.mxu0 0
        %2894 = vmatprep.subr.bf16.mxu0 0
        %2895 = vmatpush1.bf16.msra.mxu0 0
        %2896 = vmatprep.subr.bf16.mxu0 0
        %2897 = vmatpush1.bf16.msra.mxu0 0
        %2898 = vmatprep.subr.bf16.mxu0 0
        %2899 = vmatpush1.bf16.msra.mxu0 0
        %2900 = vmatprep.subr.bf16.mxu0 0
        %2901 = vmatpush1.bf16.msra.mxu0 0
        %2902 = vmatprep.subr.bf16.mxu0 0
        %2903 = vmatpush1.bf16.msra.mxu0 0
        %2904 = vmatprep.mubr.bf16.mxu0 0
        %2905 = vmatmul.mubr.bf16.gmra.mrb[0].mxu0 %v2870
        %v2906 = vpop.f32.mrb[0].mxu0
        %v2907 = vadd.f32 0.0, %v2906
        %v2908 = vpop.f32.mrb[0].mxu0
        %v2909 = vpop.f32.mrb[0].mxu0
        %v2910 = vadd.f32 0.0, %v2909
        %v2911 = vpop.f32.mrb[0].mxu0
        %2912 = vdwg.mxu0
        %v2914 = vsel %vm1109, %v2797, 0
        %2916 = vmatprep.subr.bf16.mxu0 0
        %2917 = vmatpush1.bf16.msra.mxu0 %v2798
        %2918 = vmatprep.subr.bf16.mxu0 0
        %2919 = vmatpush1.bf16.msra.mxu0 0
        %2920 = vmatprep.subr.bf16.mxu0 0
        %2921 = vmatpush1.bf16.msra.mxu0 0
        %2922 = vmatprep.subr.bf16.mxu0 0
        %2923 = vmatpush1.bf16.msra.mxu0 0
        %2924 = vmatprep.subr.bf16.mxu0 0
        %2925 = vmatpush1.bf16.msra.mxu0 0
        %2926 = vmatprep.subr.bf16.mxu0 0
        %2927 = vmatpush1.bf16.msra.mxu0 0
        %2928 = vmatprep.subr.bf16.mxu0 0
        %2929 = vmatpush1.bf16.msra.mxu0 0
        %2930 = vmatprep.subr.bf16.mxu0 0
        %2931 = vmatpush1.bf16.msra.mxu0 0
        %2932 = vmatprep.subr.bf16.mxu0 0
        %2933 = vmatpush1.bf16.msra.mxu0 0
        %2934 = vmatprep.subr.bf16.mxu0 0
        %2935 = vmatpush1.bf16.msra.mxu0 0
        %2936 = vmatprep.subr.bf16.mxu0 0
        %2937 = vmatpush1.bf16.msra.mxu0 0
        %2938 = vmatprep.subr.bf16.mxu0 0
        %2939 = vmatpush1.bf16.msra.mxu0 0
        %2940 = vmatprep.subr.bf16.mxu0 0
        %2941 = vmatpush1.bf16.msra.mxu0 0
        %2942 = vmatprep.subr.bf16.mxu0 0
        %2943 = vmatpush1.bf16.msra.mxu0 0
        %2944 = vmatprep.subr.bf16.mxu0 0
        %2945 = vmatpush1.bf16.msra.mxu0 0
        %2946 = vmatprep.subr.bf16.mxu0 0
        %2947 = vmatpush1.bf16.msra.mxu0 0
        %2948 = vmatprep.mubr.bf16.mxu0 0
        %2949 = vmatmul.mubr.bf16.gmra.mrb[0].mxu0 %v2914
        %v2950 = vpop.f32.mrb[0].mxu0
        %v2951 = vadd.f32 %v2907, %v2950
        %v2952 = vpop.f32.mrb[0].mxu0
        %v2953 = vpop.f32.mrb[0].mxu0
        %v2954 = vadd.f32 %v2910, %v2953
        %v2955 = vpop.f32.mrb[0].mxu0
        %2956 = vdwg.mxu0
        %v2957 = vld [vmem:[%s5] sm:$0xf]
        %v2958 = vld [vmem:[%s5 + $0x4] sm:$0xf]
        %v2959 = vld [vmem:[%s5 + $0x8] sm:$0xf]
        %v2960 = vld [vmem:[%s5 + $0xc] sm:$0xf]
        %v2961 = vld [vmem:[%s5 + $0x10] sm:$0xf]
        %v2962 = vld [vmem:[%s5 + $0x14] sm:$0xf]
        %v2963 = vld [vmem:[%s5 + $0x18] sm:$0xf]
        %v2964 = vld [vmem:[%s5 + $0x1c] sm:$0xf]
        %v2965 = vld [vmem:[%s5 + $0x20] sm:$0xf]
        %v2966 = vld [vmem:[%s5 + $0x24] sm:$0xf]
        %v2967 = vld [vmem:[%s5 + $0x28] sm:$0xf]
        %v2968 = vld [vmem:[%s5 + $0x2c] sm:$0xf]
        %v2969 = vld [vmem:[%s5 + $0x30] sm:$0xf]
        %v2970 = vld [vmem:[%s5 + $0x34] sm:$0xf]
        %v2971 = vld [vmem:[%s5 + $0x38] sm:$0xf]
        %v2972 = vld [vmem:[%s5 + $0x3c] sm:$0xf]
        %v2973 = vpack.c.bf16 %v1295, %v1292
        %v2974 = vpack.c.bf16 %v1532, %v1529
        %v2975 = vpack.c.bf16 %v1769, %v1766
        %v2976 = vpack.c.bf16 %v2006, %v2003
        %v2977 = vpack.c.bf16 %v2243, %v2240
        %v2978 = vpack.c.bf16 %v2480, %v2477
        %v2979 = vpack.c.bf16 %v2717, %v2714
        %v2980 = vpack.c.bf16 %v2954, %v2951
        %v2981 = vlaneseq
        %v2982 = vshrl.u32 %v2981, 7
        %v2983 = vsub.s32 0, %v2982
        %v2984 = vrot.slane %v657, %v2983
        %v3001 = vunpack.c.l.b16 %v2957
        %v3002 = vunpack.c.l.b16 %v2958
        %v3003 = vunpack.c.l.b16 %v2959
        %v3004 = vunpack.c.l.b16 %v2960
        %v3005 = vunpack.c.l.b16 %v2961
        %v3006 = vunpack.c.l.b16 %v2962
        %v3007 = vunpack.c.l.b16 %v2963
        %v3008 = vunpack.c.l.b16 %v2964
        %v3009 = vunpack.c.l.b16 %v2965
        %v3010 = vunpack.c.l.b16 %v2966
        %v3011 = vunpack.c.l.b16 %v2967
        %v3012 = vunpack.c.l.b16 %v2968
        %v3013 = vunpack.c.l.b16 %v2969
        %v3014 = vunpack.c.l.b16 %v2970
        %v3015 = vunpack.c.l.b16 %v2971
        %v3016 = vunpack.c.l.b16 %v2972
        %v3017 = vpack.c.b16 %v3002, %v3001
        %v3018 = vpack.c.b16 %v3004, %v3003
        %v3019 = vpack.c.b16 %v3006, %v3005
        %v3020 = vpack.c.b16 %v3008, %v3007
        %v3021 = vpack.c.b16 %v3010, %v3009
        %v3022 = vpack.c.b16 %v3012, %v3011
        %v3023 = vpack.c.b16 %v3014, %v3013
        %v3024 = vpack.c.b16 %v3016, %v3015
        %3033 = vmatprep.subr.bf16.mxu0 0
        %3034 = vmatpush1.bf16.msra.mxu0 %v3017
        %3035 = vmatprep.subr.bf16.mxu0 0
        %3036 = vmatpush1.bf16.msra.mxu0 %v3018
        %3037 = vmatprep.subr.bf16.mxu0 0
        %3038 = vmatpush1.bf16.msra.mxu0 %v3019
        %3039 = vmatprep.subr.bf16.mxu0 0
        %3040 = vmatpush1.bf16.msra.mxu0 %v3020
        %3041 = vmatprep.subr.bf16.mxu0 0
        %3042 = vmatpush1.bf16.msra.mxu0 %v3021
        %3043 = vmatprep.subr.bf16.mxu0 0
        %3044 = vmatpush1.bf16.msra.mxu0 %v3022
        %3045 = vmatprep.subr.bf16.mxu0 0
        %3046 = vmatpush1.bf16.msra.mxu0 %v3023
        %3047 = vmatprep.subr.bf16.mxu0 0
        %3048 = vmatpush1.bf16.msra.mxu0 %v3024
        %3049 = vmatprep.subr.bf16.mxu0 0
        %3050 = vmatpush1.bf16.msra.mxu0 0
        %3051 = vmatprep.subr.bf16.mxu0 0
        %3052 = vmatpush1.bf16.msra.mxu0 0
        %3053 = vmatprep.subr.bf16.mxu0 0
        %3054 = vmatpush1.bf16.msra.mxu0 0
        %3055 = vmatprep.subr.bf16.mxu0 0
        %3056 = vmatpush1.bf16.msra.mxu0 0
        %3057 = vmatprep.subr.bf16.mxu0 0
        %3058 = vmatpush1.bf16.msra.mxu0 0
        %3059 = vmatprep.subr.bf16.mxu0 0
        %3060 = vmatpush1.bf16.msra.mxu0 0
        %3061 = vmatprep.subr.bf16.mxu0 0
        %3062 = vmatpush1.bf16.msra.mxu0 0
        %3063 = vmatprep.subr.bf16.mxu0 0
        %3064 = vmatpush1.bf16.msra.mxu0 0
        %3065 = vmatprep.mubr.bf16.mxu0 0
        %3066 = vmatmul.mubr.bf16.gmra.mrb[0].mxu0 %v2973
        %v3067 = vpop.f32.mrb[0].mxu0
        %v3068 = vadd.f32 %v2984, %v3067
        %v3069 = vpop.f32.mrb[0].mxu0
        %v3070 = vpop.f32.mrb[0].mxu0
        %v3071 = vadd.f32 %v2984, %v3070
        %v3072 = vpop.f32.mrb[0].mxu0
        %3073 = vmatprep.mubr.bf16.mxu0 0
        %3074 = vmatmul.mubr.bf16.gmra.mrb[0].mxu0 %v2974
        %v3075 = vpop.f32.mrb[0].mxu0
        %v3076 = vadd.f32 %v2984, %v3075
        %v3077 = vpop.f32.mrb[0].mxu0
        %v3078 = vpop.f32.mrb[0].mxu0
        %v3079 = vadd.f32 %v2984, %v3078
        %v3080 = vpop.f32.mrb[0].mxu0
        %3081 = vmatprep.mubr.bf16.mxu0 0
        %3082 = vmatmul.mubr.bf16.gmra.mrb[0].mxu0 %v2975
        %v3083 = vpop.f32.mrb[0].mxu0
        %v3084 = vadd.f32 %v2984, %v3083
        %v3085 = vpop.f32.mrb[0].mxu0
        %v3086 = vpop.f32.mrb[0].mxu0
        %v3087 = vadd.f32 %v2984, %v3086
        %v3088 = vpop.f32.mrb[0].mxu0
        %3089 = vmatprep.mubr.bf16.mxu0 0
        %3090 = vmatmul.mubr.bf16.gmra.mrb[0].mxu0 %v2976
        %v3091 = vpop.f32.mrb[0].mxu0
        %v3092 = vadd.f32 %v2984, %v3091
        %v3093 = vpop.f32.mrb[0].mxu0
        %v3094 = vpop.f32.mrb[0].mxu0
        %v3095 = vadd.f32 %v2984, %v3094
        %v3096 = vpop.f32.mrb[0].mxu0
        %3097 = vmatprep.mubr.bf16.mxu0 0
        %3098 = vmatmul.mubr.bf16.gmra.mrb[0].mxu0 %v2977
        %v3099 = vpop.f32.mrb[0].mxu0
        %v3100 = vadd.f32 %v2984, %v3099
        %v3101 = vpop.f32.mrb[0].mxu0
        %v3102 = vpop.f32.mrb[0].mxu0
        %v3103 = vadd.f32 %v2984, %v3102
        %v3104 = vpop.f32.mrb[0].mxu0
        %3105 = vmatprep.mubr.bf16.mxu0 0
        %3106 = vmatmul.mubr.bf16.gmra.mrb[0].mxu0 %v2978
        %v3107 = vpop.f32.mrb[0].mxu0
        %v3108 = vadd.f32 %v2984, %v3107
        %v3109 = vpop.f32.mrb[0].mxu0
        %v3110 = vpop.f32.mrb[0].mxu0
        %v3111 = vadd.f32 %v2984, %v3110
        %v3112 = vpop.f32.mrb[0].mxu0
        %3113 = vmatprep.mubr.bf16.mxu0 0
        %3114 = vmatmul.mubr.bf16.gmra.mrb[0].mxu0 %v2979
        %v3115 = vpop.f32.mrb[0].mxu0
        %v3116 = vadd.f32 %v2984, %v3115
        %v3117 = vpop.f32.mrb[0].mxu0
        %v3118 = vpop.f32.mrb[0].mxu0
        %v3119 = vadd.f32 %v2984, %v3118
        %v3120 = vpop.f32.mrb[0].mxu0
        %3121 = vmatprep.mubr.bf16.mxu0 0
        %3122 = vmatmul.mubr.bf16.gmra.mrb[0].mxu0 %v2980
        %v3123 = vpop.f32.mrb[0].mxu0
        %v3124 = vadd.f32 %v2984, %v3123
        %v3125 = vpop.f32.mrb[0].mxu0
        %v3126 = vpop.f32.mrb[0].mxu0
        %v3127 = vadd.f32 %v2984, %v3126
        %v3128 = vpop.f32.mrb[0].mxu0
        %3129 = vdwg.mxu0
        %v3130 = vadd.f32 %v641, %v3068
        %v3131 = vadd.f32 %v642, %v3071
        %v3132 = vadd.f32 %v643, %v3076
        %v3133 = vadd.f32 %v644, %v3079
        %v3134 = vadd.f32 %v645, %v3084
        %v3135 = vadd.f32 %v646, %v3087
        %v3136 = vadd.f32 %v647, %v3092
        %v3137 = vadd.f32 %v648, %v3095
        %v3138 = vadd.f32 %v649, %v3100
        %v3139 = vadd.f32 %v650, %v3103
        %v3140 = vadd.f32 %v651, %v3108
        %v3141 = vadd.f32 %v652, %v3111
        %v3142 = vadd.f32 %v653, %v3116
        %v3143 = vadd.f32 %v654, %v3119
        %v3144 = vadd.f32 %v655, %v3124
        %v3145 = vadd.f32 %v656, %v3127
        %3146 = vadd.xlane.f32.xlu0 %v3130
        %v3147 = vpop.xlane.xlu0 %3146
        %3148 = vadd.xlane.f32.xlu0 %v3131
        %v3149 = vpop.xlane.xlu0 %3148
        %3150 = vadd.xlane.f32.xlu0 %v3132
        %v3151 = vpop.xlane.xlu0 %3150
        %3152 = vadd.xlane.f32.xlu0 %v3133
        %v3153 = vpop.xlane.xlu0 %3152
        %3154 = vadd.xlane.f32.xlu0 %v3134
        %v3155 = vpop.xlane.xlu0 %3154
        %3156 = vadd.xlane.f32.xlu0 %v3135
        %v3157 = vpop.xlane.xlu0 %3156
        %3158 = vadd.xlane.f32.xlu0 %v3136
        %v3159 = vpop.xlane.xlu0 %3158
        %3160 = vadd.xlane.f32.xlu0 %v3137
        %v3161 = vpop.xlane.xlu0 %3160
        %3162 = vadd.xlane.f32.xlu0 %v3138
        %v3163 = vpop.xlane.xlu0 %3162
        %3164 = vadd.xlane.f32.xlu0 %v3139
        %v3165 = vpop.xlane.xlu0 %3164
        %3166 = vadd.xlane.f32.xlu0 %v3140
        %v3167 = vpop.xlane.xlu0 %3166
        %3168 = vadd.xlane.f32.xlu0 %v3141
        %v3169 = vpop.xlane.xlu0 %3168
        %3170 = vadd.xlane.f32.xlu0 %v3142
        %v3171 = vpop.xlane.xlu0 %3170
        %3172 = vadd.xlane.f32.xlu0 %v3143
        %v3173 = vpop.xlane.xlu0 %3172
        %3174 = vadd.xlane.f32.xlu0 %v3144
        %v3175 = vpop.xlane.xlu0 %3174
        %3176 = vadd.xlane.f32.xlu0 %v3145
        %v3177 = vpop.xlane.xlu0 %3176
        %v3178 = vmul.f32 %v3147, %v472
        %v3179 = vmul.f32 %v3149, %v472
        %v3180 = vmul.f32 %v3151, %v472
        %v3181 = vmul.f32 %v3153, %v472
        %v3182 = vmul.f32 %v3155, %v472
        %v3183 = vmul.f32 %v3157, %v472
        %v3184 = vmul.f32 %v3159, %v472
        %v3185 = vmul.f32 %v3161, %v472
        %v3186 = vmul.f32 %v3163, %v472
        %v3187 = vmul.f32 %v3165, %v472
        %v3188 = vmul.f32 %v3167, %v472
        %v3189 = vmul.f32 %v3169, %v472
        %v3190 = vmul.f32 %v3171, %v472
        %v3191 = vmul.f32 %v3173, %v472
        %v3192 = vmul.f32 %v3175, %v472
        %v3193 = vmul.f32 %v3177, %v472
        %v3194 = vsub.f32 %v3130, %v3178
        %v3195 = vsub.f32 %v3131, %v3179
        %v3196 = vsub.f32 %v3132, %v3180
        %v3197 = vsub.f32 %v3133, %v3181
        %v3198 = vsub.f32 %v3134, %v3182
        %v3199 = vsub.f32 %v3135, %v3183
        %v3200 = vsub.f32 %v3136, %v3184
        %v3201 = vsub.f32 %v3137, %v3185
        %v3202 = vsub.f32 %v3138, %v3186
        %v3203 = vsub.f32 %v3139, %v3187
        %v3204 = vsub.f32 %v3140, %v3188
        %v3205 = vsub.f32 %v3141, %v3189
        %v3206 = vsub.f32 %v3142, %v3190
        %v3207 = vsub.f32 %v3143, %v3191
        %v3208 = vsub.f32 %v3144, %v3192
        %v3209 = vsub.f32 %v3145, %v3193
        %v3210 = vmul.f32 %v3194, %v3194
        %v3211 = vmul.f32 %v3195, %v3195
        %v3212 = vmul.f32 %v3196, %v3196
        %v3213 = vmul.f32 %v3197, %v3197
        %v3214 = vmul.f32 %v3198, %v3198
        %v3215 = vmul.f32 %v3199, %v3199
        %v3216 = vmul.f32 %v3200, %v3200
        %v3217 = vmul.f32 %v3201, %v3201
        %v3218 = vmul.f32 %v3202, %v3202
        %v3219 = vmul.f32 %v3203, %v3203
        %v3220 = vmul.f32 %v3204, %v3204
        %v3221 = vmul.f32 %v3205, %v3205
        %v3222 = vmul.f32 %v3206, %v3206
        %v3223 = vmul.f32 %v3207, %v3207
        %v3224 = vmul.f32 %v3208, %v3208
        %v3225 = vmul.f32 %v3209, %v3209
        %3226 = vadd.xlane.f32.xlu0 %v3210
        %v3227 = vpop.xlane.xlu0 %3226
        %3228 = vadd.xlane.f32.xlu0 %v3211
        %v3229 = vpop.xlane.xlu0 %3228
        %3230 = vadd.xlane.f32.xlu0 %v3212
        %v3231 = vpop.xlane.xlu0 %3230
        %3232 = vadd.xlane.f32.xlu0 %v3213
        %v3233 = vpop.xlane.xlu0 %3232
        %3234 = vadd.xlane.f32.xlu0 %v3214
        %v3235 = vpop.xlane.xlu0 %3234
        %3236 = vadd.xlane.f32.xlu0 %v3215
        %v3237 = vpop.xlane.xlu0 %3236
        %3238 = vadd.xlane.f32.xlu0 %v3216
        %v3239 = vpop.xlane.xlu0 %3238
        %3240 = vadd.xlane.f32.xlu0 %v3217
        %v3241 = vpop.xlane.xlu0 %3240
        %3242 = vadd.xlane.f32.xlu0 %v3218
        %v3243 = vpop.xlane.xlu0 %3242
        %3244 = vadd.xlane.f32.xlu0 %v3219
        %v3245 = vpop.xlane.xlu0 %3244
        %3246 = vadd.xlane.f32.xlu0 %v3220
        %v3247 = vpop.xlane.xlu0 %3246
        %3248 = vadd.xlane.f32.xlu0 %v3221
        %v3249 = vpop.xlane.xlu0 %3248
        %3250 = vadd.xlane.f32.xlu0 %v3222
        %v3251 = vpop.xlane.xlu0 %3250
        %3252 = vadd.xlane.f32.xlu0 %v3223
        %v3253 = vpop.xlane.xlu0 %3252
        %3254 = vadd.xlane.f32.xlu0 %v3224
        %v3255 = vpop.xlane.xlu0 %3254
        %3256 = vadd.xlane.f32.xlu0 %v3225
        %v3257 = vpop.xlane.xlu0 %3256
        %v3258 = vmul.f32 %v3227, %v472
        %v3259 = vmul.f32 %v3229, %v472
        %v3260 = vmul.f32 %v3231, %v472
        %v3261 = vmul.f32 %v3233, %v472
        %v3262 = vmul.f32 %v3235, %v472
        %v3263 = vmul.f32 %v3237, %v472
        %v3264 = vmul.f32 %v3239, %v472
        %v3265 = vmul.f32 %v3241, %v472
        %v3266 = vmul.f32 %v3243, %v472
        %v3267 = vmul.f32 %v3245, %v472
        %v3268 = vmul.f32 %v3247, %v472
        %v3269 = vmul.f32 %v3249, %v472
        %v3270 = vmul.f32 %v3251, %v472
        %v3271 = vmul.f32 %v3253, %v472
        %v3272 = vmul.f32 %v3255, %v472
        %v3273 = vmul.f32 %v3257, %v472
        %v3274 = vadd.f32 %v3258, 1e-05
        %v3275 = vadd.f32 %v3259, 1e-05
        %v3276 = vadd.f32 %v3260, 1e-05
        %v3277 = vadd.f32 %v3261, 1e-05
        %v3278 = vadd.f32 %v3262, 1e-05
        %v3279 = vadd.f32 %v3263, 1e-05
        %v3280 = vadd.f32 %v3264, 1e-05
        %v3281 = vadd.f32 %v3265, 1e-05
        %v3282 = vadd.f32 %v3266, 1e-05
        %v3283 = vadd.f32 %v3267, 1e-05
        %v3284 = vadd.f32 %v3268, 1e-05
        %v3285 = vadd.f32 %v3269, 1e-05
        %v3286 = vadd.f32 %v3270, 1e-05
        %v3287 = vadd.f32 %v3271, 1e-05
        %v3288 = vadd.f32 %v3272, 1e-05
        %v3289 = vadd.f32 %v3273, 1e-05
        %v3290 = vrsqrt.pop %v3274
        %v3291 = vrsqrt.pop %v3275
        %v3292 = vrsqrt.pop %v3276
        %v3293 = vrsqrt.pop %v3277
        %v3294 = vrsqrt.pop %v3278
        %v3295 = vrsqrt.pop %v3279
        %v3296 = vrsqrt.pop %v3280
        %v3297 = vrsqrt.pop %v3281
        %v3298 = vrsqrt.pop %v3282
        %v3299 = vrsqrt.pop %v3283
        %v3300 = vrsqrt.pop %v3284
        %v3301 = vrsqrt.pop %v3285
        %v3302 = vrsqrt.pop %v3286
        %v3303 = vrsqrt.pop %v3287
        %v3304 = vrsqrt.pop %v3288
        %v3305 = vrsqrt.pop %v3289
        %v3306 = vmul.f32 %v3194, %v3290
        %v3307 = vmul.f32 %v3195, %v3291
        %v3308 = vmul.f32 %v3196, %v3292
        %v3309 = vmul.f32 %v3197, %v3293
        %v3310 = vmul.f32 %v3198, %v3294
        %v3311 = vmul.f32 %v3199, %v3295
        %v3312 = vmul.f32 %v3200, %v3296
        %v3313 = vmul.f32 %v3201, %v3297
        %v3314 = vmul.f32 %v3202, %v3298
        %v3315 = vmul.f32 %v3203, %v3299
        %v3316 = vmul.f32 %v3204, %v3300
        %v3317 = vmul.f32 %v3205, %v3301
        %v3318 = vmul.f32 %v3206, %v3302
        %v3319 = vmul.f32 %v3207, %v3303
        %v3320 = vmul.f32 %v3208, %v3304
        %v3321 = vmul.f32 %v3209, %v3305
        %v3322 = vlaneseq
        %v3323 = vshrl.u32 %v3322, 7
        %v3324 = vsub.s32 2, %v3323
        %v3325 = vrot.slane %v657, %v3324
        %v3326 = vmul.f32 %v3306, %v3325
        %v3327 = vmul.f32 %v3307, %v3325
        %v3328 = vmul.f32 %v3308, %v3325
        %v3329 = vmul.f32 %v3309, %v3325
        %v3330 = vmul.f32 %v3310, %v3325
        %v3331 = vmul.f32 %v3311, %v3325
        %v3332 = vmul.f32 %v3312, %v3325
        %v3333 = vmul.f32 %v3313, %v3325
        %v3334 = vmul.f32 %v3314, %v3325
        %v3335 = vmul.f32 %v3315, %v3325
        %v3336 = vmul.f32 %v3316, %v3325
        %v3337 = vmul.f32 %v3317, %v3325
        %v3338 = vmul.f32 %v3318, %v3325
        %v3339 = vmul.f32 %v3319, %v3325
        %v3340 = vmul.f32 %v3320, %v3325
        %v3341 = vmul.f32 %v3321, %v3325
        %v3342 = vlaneseq
        %v3343 = vshrl.u32 %v3342, 7
        %v3344 = vsub.s32 3, %v3343
        %v3345 = vrot.slane %v657, %v3344
        %v3346 = vadd.f32 %v3326, %v3345
        %v3347 = vadd.f32 %v3327, %v3345
        %v3348 = vadd.f32 %v3328, %v3345
        %v3349 = vadd.f32 %v3329, %v3345
        %v3350 = vadd.f32 %v3330, %v3345
        %v3351 = vadd.f32 %v3331, %v3345
        %v3352 = vadd.f32 %v3332, %v3345
        %v3353 = vadd.f32 %v3333, %v3345
        %v3354 = vadd.f32 %v3334, %v3345
        %v3355 = vadd.f32 %v3335, %v3345
        %v3356 = vadd.f32 %v3336, %v3345
        %v3357 = vadd.f32 %v3337, %v3345
        %v3358 = vadd.f32 %v3338, %v3345
        %v3359 = vadd.f32 %v3339, %v3345
        %v3360 = vadd.f32 %v3340, %v3345
        %v3361 = vadd.f32 %v3341, %v3345
        %v3362 = vpack.c.bf16 %v3347, %v3346
        %v3363 = vpack.c.bf16 %v3349, %v3348
        %v3364 = vpack.c.bf16 %v3351, %v3350
        %v3365 = vpack.c.bf16 %v3353, %v3352
        %v3366 = vpack.c.bf16 %v3355, %v3354
        %v3367 = vpack.c.bf16 %v3357, %v3356
        %v3368 = vpack.c.bf16 %v3359, %v3358
        %v3369 = vpack.c.bf16 %v3361, %v3360
        %v3370 = vld [vmem:[%s6] sm:$0xff]
        %v3371 = vld [vmem:[%s6 + $0x8] sm:$0xff]
        %v3372 = vld [vmem:[%s6 + $0x10] sm:$0xff]
        %v3373 = vld [vmem:[%s6 + $0x18] sm:$0xff]
        %v3374 = vld [vmem:[%s6 + $0x20] sm:$0xff]
        %v3375 = vld [vmem:[%s6 + $0x28] sm:$0xff]
        %v3376 = vld [vmem:[%s6 + $0x30] sm:$0xff]
        %v3377 = vld [vmem:[%s6 + $0x38] sm:$0xff]
        %v3378 = vld [vmem:[%s6 + $0x40] sm:$0xff]
        %v3379 = vld [vmem:[%s6 + $0x48] sm:$0xff]
        %v3380 = vld [vmem:[%s6 + $0x50] sm:$0xff]
        %v3381 = vld [vmem:[%s6 + $0x58] sm:$0xff]
        %v3382 = vld [vmem:[%s6 + $0x60] sm:$0xff]
        %v3383 = vld [vmem:[%s6 + $0x68] sm:$0xff]
        %v3384 = vld [vmem:[%s6 + $0x70] sm:$0xff]
        %v3385 = vld [vmem:[%s6 + $0x78] sm:$0xff]
        %v3386 = vld [vmem:[%s7] sm:$0x3]
        %v3388 = vlaneseq
        %v3389 = vshrl.u32 %v3388, 7
        %v3390 = vsub.s32 0, %v3389
        %v3391 = vrot.slane %v3386, %v3390
        %v3392 = vlaneseq
        %v3393 = vshrl.u32 %v3392, 7
        %v3394 = vsub.s32 1, %v3393
        %v3395 = vrot.slane %v3386, %v3394
        %v3414 = vunpack.c.l.b16 %v3370
        %v3415 = vunpack.c.h.b16 %v3370
        %v3416 = vunpack.c.l.b16 %v3371
        %v3417 = vunpack.c.h.b16 %v3371
        %v3418 = vunpack.c.l.b16 %v3372
        %v3419 = vunpack.c.h.b16 %v3372
        %v3420 = vunpack.c.l.b16 %v3373
        %v3421 = vunpack.c.h.b16 %v3373
        %v3422 = vunpack.c.l.b16 %v3374
        %v3423 = vunpack.c.h.b16 %v3374
        %v3424 = vunpack.c.l.b16 %v3375
        %v3425 = vunpack.c.h.b16 %v3375
        %v3426 = vunpack.c.l.b16 %v3376
        %v3427 = vunpack.c.h.b16 %v3376
        %v3428 = vunpack.c.l.b16 %v3377
        %v3429 = vunpack.c.h.b16 %v3377
        %v3430 = vunpack.c.l.b16 %v3378
        %v3431 = vunpack.c.h.b16 %v3378
        %v3432 = vunpack.c.l.b16 %v3379
        %v3433 = vunpack.c.h.b16 %v3379
        %v3434 = vunpack.c.l.b16 %v3380
        %v3435 = vunpack.c.h.b16 %v3380
        %v3436 = vunpack.c.l.b16 %v3381
        %v3437 = vunpack.c.h.b16 %v3381
        %v3438 = vunpack.c.l.b16 %v3382
        %v3439 = vunpack.c.h.b16 %v3382
        %v3440 = vunpack.c.l.b16 %v3383
        %v3441 = vunpack.c.h.b16 %v3383
        %v3442 = vunpack.c.l.b16 %v3384
        %v3443 = vunpack.c.h.b16 %v3384
        %v3444 = vunpack.c.l.b16 %v3385
        %v3445 = vunpack.c.h.b16 %v3385
        %v3446 = vpack.c.b16 %v3416, %v3414
        %v3447 = vpack.c.b16 %v3417, %v3415
        %v3448 = vpack.c.b16 %v3420, %v3418
        %v3449 = vpack.c.b16 %v3421, %v3419
        %v3450 = vpack.c.b16 %v3424, %v3422
        %v3451 = vpack.c.b16 %v3425, %v3423
        %v3452 = vpack.c.b16 %v3428, %v3426
        %v3453 = vpack.c.b16 %v3429, %v3427
        %v3454 = vpack.c.b16 %v3432, %v3430
        %v3455 = vpack.c.b16 %v3433, %v3431
        %v3456 = vpack.c.b16 %v3436, %v3434
        %v3457 = vpack.c.b16 %v3437, %v3435
        %v3458 = vpack.c.b16 %v3440, %v3438
        %v3459 = vpack.c.b16 %v3441, %v3439
        %v3460 = vpack.c.b16 %v3444, %v3442
        %v3461 = vpack.c.b16 %v3445, %v3443
        %3478 = vmatprep.subr.bf16.mxu0 %v3447
        %3479 = vmatpush1.bf16.msra.mxu0 %v3446
        %3480 = vmatprep.subr.bf16.mxu0 %v3449
        %3481 = vmatpush1.bf16.msra.mxu0 %v3448
        %3482 = vmatprep.subr.bf16.mxu0 %v3451
        %3483 = vmatpush1.bf16.msra.mxu0 %v3450
        %3484 = vmatprep.subr.bf16.mxu0 %v3453
        %3485 = vmatpush1.bf16.msra.mxu0 %v3452
        %3486 = vmatprep.subr.bf16.mxu0 %v3455
        %3487 = vmatpush1.bf16.msra.mxu0 %v3454
        %3488 = vmatprep.subr.bf16.mxu0 %v3457
        %3489 = vmatpush1.bf16.msra.mxu0 %v3456
        %3490 = vmatprep.subr.bf16.mxu0 %v3459
        %3491 = vmatpush1.bf16.msra.mxu0 %v3458
        %3492 = vmatprep.subr.bf16.mxu0 %v3461
        %3493 = vmatpush1.bf16.msra.mxu0 %v3460
        %3494 = vmatprep.subr.bf16.mxu0 0
        %3495 = vmatpush1.bf16.msra.mxu0 0
        %3496 = vmatprep.subr.bf16.mxu0 0
        %3497 = vmatpush1.bf16.msra.mxu0 0
        %3498 = vmatprep.subr.bf16.mxu0 0
        %3499 = vmatpush1.bf16.msra.mxu0 0
        %3500 = vmatprep.subr.bf16.mxu0 0
        %3501 = vmatpush1.bf16.msra.mxu0 0
        %3502 = vmatprep.subr.bf16.mxu0 0
        %3503 = vmatpush1.bf16.msra.mxu0 0
        %3504 = vmatprep.subr.bf16.mxu0 0
        %3505 = vmatpush1.bf16.msra.mxu0 0
        %3506 = vmatprep.subr.bf16.mxu0 0
        %3507 = vmatpush1.bf16.msra.mxu0 0
        %3508 = vmatprep.subr.bf16.mxu0 0
        %3509 = vmatpush1.bf16.msra.mxu0 0
        %3510 = vmatprep.mubr.bf16.mxu0 0
        %3511 = vmatmul.mubr.bf16.gmra.mrb[0].mxu0 %v3362
        %v3512 = vpop.f32.mrb[0].mxu0
        %v3513 = vadd.f32 %v3391, %v3512
        %v3514 = vpop.f32.mrb[0].mxu0
        %v3515 = vadd.f32 %v3395, %v3514
        %v3516 = vpop.f32.mrb[0].mxu0
        %v3517 = vadd.f32 %v3391, %v3516
        %v3518 = vpop.f32.mrb[0].mxu0
        %v3519 = vadd.f32 %v3395, %v3518
        %3520 = vmatprep.mubr.bf16.mxu0 0
        %3521 = vmatmul.mubr.bf16.gmra.mrb[0].mxu0 %v3363
        %v3522 = vpop.f32.mrb[0].mxu0
        %v3523 = vadd.f32 %v3391, %v3522
        %v3524 = vpop.f32.mrb[0].mxu0
        %v3525 = vadd.f32 %v3395, %v3524
        %v3526 = vpop.f32.mrb[0].mxu0
        %v3527 = vadd.f32 %v3391, %v3526
        %v3528 = vpop.f32.mrb[0].mxu0
        %v3529 = vadd.f32 %v3395, %v3528
        %3530 = vmatprep.mubr.bf16.mxu0 0
        %3531 = vmatmul.mubr.bf16.gmra.mrb[0].mxu0 %v3364
        %v3532 = vpop.f32.mrb[0].mxu0
        %v3533 = vadd.f32 %v3391, %v3532
        %v3534 = vpop.f32.mrb[0].mxu0
        %v3535 = vadd.f32 %v3395, %v3534
        %v3536 = vpop.f32.mrb[0].mxu0
        %v3537 = vadd.f32 %v3391, %v3536
        %v3538 = vpop.f32.mrb[0].mxu0
        %v3539 = vadd.f32 %v3395, %v3538
        %3540 = vmatprep.mubr.bf16.mxu0 0
        %3541 = vmatmul.mubr.bf16.gmra.mrb[0].mxu0 %v3365
        %v3542 = vpop.f32.mrb[0].mxu0
        %v3543 = vadd.f32 %v3391, %v3542
        %v3544 = vpop.f32.mrb[0].mxu0
        %v3545 = vadd.f32 %v3395, %v3544
        %v3546 = vpop.f32.mrb[0].mxu0
        %v3547 = vadd.f32 %v3391, %v3546
        %v3548 = vpop.f32.mrb[0].mxu0
        %v3549 = vadd.f32 %v3395, %v3548
        %3550 = vmatprep.mubr.bf16.mxu0 0
        %3551 = vmatmul.mubr.bf16.gmra.mrb[0].mxu0 %v3366
        %v3552 = vpop.f32.mrb[0].mxu0
        %v3553 = vadd.f32 %v3391, %v3552
        %v3554 = vpop.f32.mrb[0].mxu0
        %v3555 = vadd.f32 %v3395, %v3554
        %v3556 = vpop.f32.mrb[0].mxu0
        %v3557 = vadd.f32 %v3391, %v3556
        %v3558 = vpop.f32.mrb[0].mxu0
        %v3559 = vadd.f32 %v3395, %v3558
        %3560 = vmatprep.mubr.bf16.mxu0 0
        %3561 = vmatmul.mubr.bf16.gmra.mrb[0].mxu0 %v3367
        %v3562 = vpop.f32.mrb[0].mxu0
        %v3563 = vadd.f32 %v3391, %v3562
        %v3564 = vpop.f32.mrb[0].mxu0
        %v3565 = vadd.f32 %v3395, %v3564
        %v3566 = vpop.f32.mrb[0].mxu0
        %v3567 = vadd.f32 %v3391, %v3566
        %v3568 = vpop.f32.mrb[0].mxu0
        %v3569 = vadd.f32 %v3395, %v3568
        %3570 = vmatprep.mubr.bf16.mxu0 0
        %3571 = vmatmul.mubr.bf16.gmra.mrb[0].mxu0 %v3368
        %v3572 = vpop.f32.mrb[0].mxu0
        %v3573 = vadd.f32 %v3391, %v3572
        %v3574 = vpop.f32.mrb[0].mxu0
        %v3575 = vadd.f32 %v3395, %v3574
        %v3576 = vpop.f32.mrb[0].mxu0
        %v3577 = vadd.f32 %v3391, %v3576
        %v3578 = vpop.f32.mrb[0].mxu0
        %v3579 = vadd.f32 %v3395, %v3578
        %3580 = vmatprep.mubr.bf16.mxu0 0
        %3581 = vmatmul.mubr.bf16.gmra.mrb[0].mxu0 %v3369
        %v3582 = vpop.f32.mrb[0].mxu0
        %v3583 = vadd.f32 %v3391, %v3582
        %v3584 = vpop.f32.mrb[0].mxu0
        %v3585 = vadd.f32 %v3395, %v3584
        %v3586 = vpop.f32.mrb[0].mxu0
        %v3587 = vadd.f32 %v3391, %v3586
        %v3588 = vpop.f32.mrb[0].mxu0
        %v3589 = vadd.f32 %v3395, %v3588
        %3590 = vdwg.mxu0
        %v3591 = vmul.f32 %v3513, %v3513
        %v3592 = vmul.f32 %v3515, %v3515
        %v3593 = vmul.f32 %v3517, %v3517
        %v3594 = vmul.f32 %v3519, %v3519
        %v3595 = vmul.f32 %v3523, %v3523
        %v3596 = vmul.f32 %v3525, %v3525
        %v3597 = vmul.f32 %v3527, %v3527
        %v3598 = vmul.f32 %v3529, %v3529
        %v3599 = vmul.f32 %v3533, %v3533
        %v3600 = vmul.f32 %v3535, %v3535
        %v3601 = vmul.f32 %v3537, %v3537
        %v3602 = vmul.f32 %v3539, %v3539
        %v3603 = vmul.f32 %v3543, %v3543
        %v3604 = vmul.f32 %v3545, %v3545
        %v3605 = vmul.f32 %v3547, %v3547
        %v3606 = vmul.f32 %v3549, %v3549
        %v3607 = vmul.f32 %v3553, %v3553
        %v3608 = vmul.f32 %v3555, %v3555
        %v3609 = vmul.f32 %v3557, %v3557
        %v3610 = vmul.f32 %v3559, %v3559
        %v3611 = vmul.f32 %v3563, %v3563
        %v3612 = vmul.f32 %v3565, %v3565
        %v3613 = vmul.f32 %v3567, %v3567
        %v3614 = vmul.f32 %v3569, %v3569
        %v3615 = vmul.f32 %v3573, %v3573
        %v3616 = vmul.f32 %v3575, %v3575
        %v3617 = vmul.f32 %v3577, %v3577
        %v3618 = vmul.f32 %v3579, %v3579
        %v3619 = vmul.f32 %v3583, %v3583
        %v3620 = vmul.f32 %v3585, %v3585
        %v3621 = vmul.f32 %v3587, %v3587
        %v3622 = vmul.f32 %v3589, %v3589
        %v3623 = vmul.f32 %v3513, %v3591
        %v3624 = vmul.f32 %v3515, %v3592
        %v3625 = vmul.f32 %v3517, %v3593
        %v3626 = vmul.f32 %v3519, %v3594
        %v3627 = vmul.f32 %v3523, %v3595
        %v3628 = vmul.f32 %v3525, %v3596
        %v3629 = vmul.f32 %v3527, %v3597
        %v3630 = vmul.f32 %v3529, %v3598
        %v3631 = vmul.f32 %v3533, %v3599
        %v3632 = vmul.f32 %v3535, %v3600
        %v3633 = vmul.f32 %v3537, %v3601
        %v3634 = vmul.f32 %v3539, %v3602
        %v3635 = vmul.f32 %v3543, %v3603
        %v3636 = vmul.f32 %v3545, %v3604
        %v3637 = vmul.f32 %v3547, %v3605
        %v3638 = vmul.f32 %v3549, %v3606
        %v3639 = vmul.f32 %v3553, %v3607
        %v3640 = vmul.f32 %v3555, %v3608
        %v3641 = vmul.f32 %v3557, %v3609
        %v3642 = vmul.f32 %v3559, %v3610
        %v3643 = vmul.f32 %v3563, %v3611
        %v3644 = vmul.f32 %v3565, %v3612
        %v3645 = vmul.f32 %v3567, %v3613
        %v3646 = vmul.f32 %v3569, %v3614
        %v3647 = vmul.f32 %v3573, %v3615
        %v3648 = vmul.f32 %v3575, %v3616
        %v3649 = vmul.f32 %v3577, %v3617
        %v3650 = vmul.f32 %v3579, %v3618
        %v3651 = vmul.f32 %v3583, %v3619
        %v3652 = vmul.f32 %v3585, %v3620
        %v3653 = vmul.f32 %v3587, %v3621
        %v3654 = vmul.f32 %v3589, %v3622
        %v3655 = vmul.f32 %v3623, 0.044715
        %v3656 = vmul.f32 %v3624, 0.044715
        %v3657 = vmul.f32 %v3625, 0.044715
        %v3658 = vmul.f32 %v3626, 0.044715
        %v3659 = vmul.f32 %v3627, 0.044715
        %v3660 = vmul.f32 %v3628, 0.044715
        %v3661 = vmul.f32 %v3629, 0.044715
        %v3662 = vmul.f32 %v3630, 0.044715
        %v3663 = vmul.f32 %v3631, 0.044715
        %v3664 = vmul.f32 %v3632, 0.044715
        %v3665 = vmul.f32 %v3633, 0.044715
        %v3666 = vmul.f32 %v3634, 0.044715
        %v3667 = vmul.f32 %v3635, 0.044715
        %v3668 = vmul.f32 %v3636, 0.044715
        %v3669 = vmul.f32 %v3637, 0.044715
        %v3670 = vmul.f32 %v3638, 0.044715
        %v3671 = vmul.f32 %v3639, 0.044715
        %v3672 = vmul.f32 %v3640, 0.044715
        %v3673 = vmul.f32 %v3641, 0.044715
        %v3674 = vmul.f32 %v3642, 0.044715
        %v3675 = vmul.f32 %v3643, 0.044715
        %v3676 = vmul.f32 %v3644, 0.044715
        %v3677 = vmul.f32 %v3645, 0.044715
        %v3678 = vmul.f32 %v3646, 0.044715
        %v3679 = vmul.f32 %v3647, 0.044715
        %v3680 = vmul.f32 %v3648, 0.044715
        %v3681 = vmul.f32 %v3649, 0.044715
        %v3682 = vmul.f32 %v3650, 0.044715
        %v3683 = vmul.f32 %v3651, 0.044715
        %v3684 = vmul.f32 %v3652, 0.044715
        %v3685 = vmul.f32 %v3653, 0.044715
        %v3686 = vmul.f32 %v3654, 0.044715
        %v3687 = vadd.f32 %v3513, %v3655
        %v3688 = vadd.f32 %v3515, %v3656
        %v3689 = vadd.f32 %v3517, %v3657
        %v3690 = vadd.f32 %v3519, %v3658
        %v3691 = vadd.f32 %v3523, %v3659
        %v3692 = vadd.f32 %v3525, %v3660
        %v3693 = vadd.f32 %v3527, %v3661
        %v3694 = vadd.f32 %v3529, %v3662
        %v3695 = vadd.f32 %v3533, %v3663
        %v3696 = vadd.f32 %v3535, %v3664
        %v3697 = vadd.f32 %v3537, %v3665
        %v3698 = vadd.f32 %v3539, %v3666
        %v3699 = vadd.f32 %v3543, %v3667
        %v3700 = vadd.f32 %v3545, %v3668
        %v3701 = vadd.f32 %v3547, %v3669
        %v3702 = vadd.f32 %v3549, %v3670
        %v3703 = vadd.f32 %v3553, %v3671
        %v3704 = vadd.f32 %v3555, %v3672
        %v3705 = vadd.f32 %v3557, %v3673
        %v3706 = vadd.f32 %v3559, %v3674
        %v3707 = vadd.f32 %v3563, %v3675
        %v3708 = vadd.f32 %v3565, %v3676
        %v3709 = vadd.f32 %v3567, %v3677
        %v3710 = vadd.f32 %v3569, %v3678
        %v3711 = vadd.f32 %v3573, %v3679
        %v3712 = vadd.f32 %v3575, %v3680
        %v3713 = vadd.f32 %v3577, %v3681
        %v3714 = vadd.f32 %v3579, %v3682
        %v3715 = vadd.f32 %v3583, %v3683
        %v3716 = vadd.f32 %v3585, %v3684
        %v3717 = vadd.f32 %v3587, %v3685
        %v3718 = vadd.f32 %v3589, %v3686
        %v3719 = vmul.f32 %v3687, 0.7978846
        %v3720 = vmul.f32 %v3688, 0.7978846
        %v3721 = vmul.f32 %v3689, 0.7978846
        %v3722 = vmul.f32 %v3690, 0.7978846
        %v3723 = vmul.f32 %v3691, 0.7978846
        %v3724 = vmul.f32 %v3692, 0.7978846
        %v3725 = vmul.f32 %v3693, 0.7978846
        %v3726 = vmul.f32 %v3694, 0.7978846
        %v3727 = vmul.f32 %v3695, 0.7978846
        %v3728 = vmul.f32 %v3696, 0.7978846
        %v3729 = vmul.f32 %v3697, 0.7978846
        %v3730 = vmul.f32 %v3698, 0.7978846
        %v3731 = vmul.f32 %v3699, 0.7978846
        %v3732 = vmul.f32 %v3700, 0.7978846
        %v3733 = vmul.f32 %v3701, 0.7978846
        %v3734 = vmul.f32 %v3702, 0.7978846
        %v3735 = vmul.f32 %v3703, 0.7978846
        %v3736 = vmul.f32 %v3704, 0.7978846
        %v3737 = vmul.f32 %v3705, 0.7978846
        %v3738 = vmul.f32 %v3706, 0.7978846
        %v3739 = vmul.f32 %v3707, 0.7978846
        %v3740 = vmul.f32 %v3708, 0.7978846
        %v3741 = vmul.f32 %v3709, 0.7978846
        %v3742 = vmul.f32 %v3710, 0.7978846
        %v3743 = vmul.f32 %v3711, 0.7978846
        %v3744 = vmul.f32 %v3712, 0.7978846
        %v3745 = vmul.f32 %v3713, 0.7978846
        %v3746 = vmul.f32 %v3714, 0.7978846
        %v3747 = vmul.f32 %v3715, 0.7978846
        %v3748 = vmul.f32 %v3716, 0.7978846
        %v3749 = vmul.f32 %v3717, 0.7978846
        %v3750 = vmul.f32 %v3718, 0.7978846
        %v3751 = vtanh.pop %v3719
        %v3752 = vtanh.pop %v3720
        %v3753 = vtanh.pop %v3721
        %v3754 = vtanh.pop %v3722
        %v3755 = vtanh.pop %v3723
        %v3756 = vtanh.pop %v3724
        %v3757 = vtanh.pop %v3725
        %v3758 = vtanh.pop %v3726
        %v3759 = vtanh.pop %v3727
        %v3760 = vtanh.pop %v3728
        %v3761 = vtanh.pop %v3729
        %v3762 = vtanh.pop %v3730
        %v3763 = vtanh.pop %v3731
        %v3764 = vtanh.pop %v3732
        %v3765 = vtanh.pop %v3733
        %v3766 = vtanh.pop %v3734
        %v3767 = vtanh.pop %v3735
        %v3768 = vtanh.pop %v3736
        %v3769 = vtanh.pop %v3737
        %v3770 = vtanh.pop %v3738
        %v3771 = vtanh.pop %v3739
        %v3772 = vtanh.pop %v3740
        %v3773 = vtanh.pop %v3741
        %v3774 = vtanh.pop %v3742
        %v3775 = vtanh.pop %v3743
        %v3776 = vtanh.pop %v3744
        %v3777 = vtanh.pop %v3745
        %v3778 = vtanh.pop %v3746
        %v3779 = vtanh.pop %v3747
        %v3780 = vtanh.pop %v3748
        %v3781 = vtanh.pop %v3749
        %v3782 = vtanh.pop %v3750
        %v3783 = vadd.f32 %v3751, 1.0
        %v3784 = vadd.f32 %v3752, 1.0
        %v3785 = vadd.f32 %v3753, 1.0
        %v3786 = vadd.f32 %v3754, 1.0
        %v3787 = vadd.f32 %v3755, 1.0
        %v3788 = vadd.f32 %v3756, 1.0
        %v3789 = vadd.f32 %v3757, 1.0
        %v3790 = vadd.f32 %v3758, 1.0
        %v3791 = vadd.f32 %v3759, 1.0
        %v3792 = vadd.f32 %v3760, 1.0
        %v3793 = vadd.f32 %v3761, 1.0
        %v3794 = vadd.f32 %v3762, 1.0
        %v3795 = vadd.f32 %v3763, 1.0
        %v3796 = vadd.f32 %v3764, 1.0
        %v3797 = vadd.f32 %v3765, 1.0
        %v3798 = vadd.f32 %v3766, 1.0
        %v3799 = vadd.f32 %v3767, 1.0
        %v3800 = vadd.f32 %v3768, 1.0
        %v3801 = vadd.f32 %v3769, 1.0
        %v3802 = vadd.f32 %v3770, 1.0
        %v3803 = vadd.f32 %v3771, 1.0
        %v3804 = vadd.f32 %v3772, 1.0
        %v3805 = vadd.f32 %v3773, 1.0
        %v3806 = vadd.f32 %v3774, 1.0
        %v3807 = vadd.f32 %v3775, 1.0
        %v3808 = vadd.f32 %v3776, 1.0
        %v3809 = vadd.f32 %v3777, 1.0
        %v3810 = vadd.f32 %v3778, 1.0
        %v3811 = vadd.f32 %v3779, 1.0
        %v3812 = vadd.f32 %v3780, 1.0
        %v3813 = vadd.f32 %v3781, 1.0
        %v3814 = vadd.f32 %v3782, 1.0
        %v3815 = vmul.f32 %v3783, 0.5
        %v3816 = vmul.f32 %v3784, 0.5
        %v3817 = vmul.f32 %v3785, 0.5
        %v3818 = vmul.f32 %v3786, 0.5
        %v3819 = vmul.f32 %v3787, 0.5
        %v3820 = vmul.f32 %v3788, 0.5
        %v3821 = vmul.f32 %v3789, 0.5
        %v3822 = vmul.f32 %v3790, 0.5
        %v3823 = vmul.f32 %v3791, 0.5
        %v3824 = vmul.f32 %v3792, 0.5
        %v3825 = vmul.f32 %v3793, 0.5
        %v3826 = vmul.f32 %v3794, 0.5
        %v3827 = vmul.f32 %v3795, 0.5
        %v3828 = vmul.f32 %v3796, 0.5
        %v3829 = vmul.f32 %v3797, 0.5
        %v3830 = vmul.f32 %v3798, 0.5
        %v3831 = vmul.f32 %v3799, 0.5
        %v3832 = vmul.f32 %v3800, 0.5
        %v3833 = vmul.f32 %v3801, 0.5
        %v3834 = vmul.f32 %v3802, 0.5
        %v3835 = vmul.f32 %v3803, 0.5
        %v3836 = vmul.f32 %v3804, 0.5
        %v3837 = vmul.f32 %v3805, 0.5
        %v3838 = vmul.f32 %v3806, 0.5
        %v3839 = vmul.f32 %v3807, 0.5
        %v3840 = vmul.f32 %v3808, 0.5
        %v3841 = vmul.f32 %v3809, 0.5
        %v3842 = vmul.f32 %v3810, 0.5
        %v3843 = vmul.f32 %v3811, 0.5
        %v3844 = vmul.f32 %v3812, 0.5
        %v3845 = vmul.f32 %v3813, 0.5
        %v3846 = vmul.f32 %v3814, 0.5
        %v3847 = vmul.f32 %v3513, %v3815
        %v3848 = vmul.f32 %v3515, %v3816
        %v3849 = vmul.f32 %v3517, %v3817
        %v3850 = vmul.f32 %v3519, %v3818
        %v3851 = vmul.f32 %v3523, %v3819
        %v3852 = vmul.f32 %v3525, %v3820
        %v3853 = vmul.f32 %v3527, %v3821
        %v3854 = vmul.f32 %v3529, %v3822
        %v3855 = vmul.f32 %v3533, %v3823
        %v3856 = vmul.f32 %v3535, %v3824
        %v3857 = vmul.f32 %v3537, %v3825
        %v3858 = vmul.f32 %v3539, %v3826
        %v3859 = vmul.f32 %v3543, %v3827
        %v3860 = vmul.f32 %v3545, %v3828
        %v3861 = vmul.f32 %v3547, %v3829
        %v3862 = vmul.f32 %v3549, %v3830
        %v3863 = vmul.f32 %v3553, %v3831
        %v3864 = vmul.f32 %v3555, %v3832
        %v3865 = vmul.f32 %v3557, %v3833
        %v3866 = vmul.f32 %v3559, %v3834
        %v3867 = vmul.f32 %v3563, %v3835
        %v3868 = vmul.f32 %v3565, %v3836
        %v3869 = vmul.f32 %v3567, %v3837
        %v3870 = vmul.f32 %v3569, %v3838
        %v3871 = vmul.f32 %v3573, %v3839
        %v3872 = vmul.f32 %v3575, %v3840
        %v3873 = vmul.f32 %v3577, %v3841
        %v3874 = vmul.f32 %v3579, %v3842
        %v3875 = vmul.f32 %v3583, %v3843
        %v3876 = vmul.f32 %v3585, %v3844
        %v3877 = vmul.f32 %v3587, %v3845
        %v3878 = vmul.f32 %v3589, %v3846
        %v3879 = vld [vmem:[%s8] sm:$0xf]
        %v3880 = vld [vmem:[%s8 + $0x4] sm:$0xf]
        %v3881 = vld [vmem:[%s8 + $0x8] sm:$0xf]
        %v3882 = vld [vmem:[%s8 + $0xc] sm:$0xf]
        %v3883 = vld [vmem:[%s8 + $0x10] sm:$0xf]
        %v3884 = vld [vmem:[%s8 + $0x14] sm:$0xf]
        %v3885 = vld [vmem:[%s8 + $0x18] sm:$0xf]
        %v3886 = vld [vmem:[%s8 + $0x1c] sm:$0xf]
        %v3887 = vld [vmem:[%s8 + $0x20] sm:$0xf]
        %v3888 = vld [vmem:[%s8 + $0x24] sm:$0xf]
        %v3889 = vld [vmem:[%s8 + $0x28] sm:$0xf]
        %v3890 = vld [vmem:[%s8 + $0x2c] sm:$0xf]
        %v3891 = vld [vmem:[%s8 + $0x30] sm:$0xf]
        %v3892 = vld [vmem:[%s8 + $0x34] sm:$0xf]
        %v3893 = vld [vmem:[%s8 + $0x38] sm:$0xf]
        %v3894 = vld [vmem:[%s8 + $0x3c] sm:$0xf]
        %v3895 = vld [vmem:[%s8 + $0x40] sm:$0xf]
        %v3896 = vld [vmem:[%s8 + $0x44] sm:$0xf]
        %v3897 = vld [vmem:[%s8 + $0x48] sm:$0xf]
        %v3898 = vld [vmem:[%s8 + $0x4c] sm:$0xf]
        %v3899 = vld [vmem:[%s8 + $0x50] sm:$0xf]
        %v3900 = vld [vmem:[%s8 + $0x54] sm:$0xf]
        %v3901 = vld [vmem:[%s8 + $0x58] sm:$0xf]
        %v3902 = vld [vmem:[%s8 + $0x5c] sm:$0xf]
        %v3903 = vld [vmem:[%s8 + $0x60] sm:$0xf]
        %v3904 = vld [vmem:[%s8 + $0x64] sm:$0xf]
        %v3905 = vld [vmem:[%s8 + $0x68] sm:$0xf]
        %v3906 = vld [vmem:[%s8 + $0x6c] sm:$0xf]
        %v3907 = vld [vmem:[%s8 + $0x70] sm:$0xf]
        %v3908 = vld [vmem:[%s8 + $0x74] sm:$0xf]
        %v3909 = vld [vmem:[%s8 + $0x78] sm:$0xf]
        %v3910 = vld [vmem:[%s8 + $0x7c] sm:$0xf]
        %v3911 = vpack.c.bf16 %v3849, %v3847
        %v3912 = vpack.c.bf16 %v3850, %v3848
        %v3913 = vpack.c.bf16 %v3853, %v3851
        %v3914 = vpack.c.bf16 %v3854, %v3852
        %v3915 = vpack.c.bf16 %v3857, %v3855
        %v3916 = vpack.c.bf16 %v3858, %v3856
        %v3917 = vpack.c.bf16 %v3861, %v3859
        %v3918 = vpack.c.bf16 %v3862, %v3860
        %v3919 = vpack.c.bf16 %v3865, %v3863
        %v3920 = vpack.c.bf16 %v3866, %v3864
        %v3921 = vpack.c.bf16 %v3869, %v3867
        %v3922 = vpack.c.bf16 %v3870, %v3868
        %v3923 = vpack.c.bf16 %v3873, %v3871
        %v3924 = vpack.c.bf16 %v3874, %v3872
        %v3925 = vpack.c.bf16 %v3877, %v3875
        %v3926 = vpack.c.bf16 %v3878, %v3876
        %v3927 = vlaneseq
        %v3928 = vshrl.u32 %v3927, 7
        %v3929 = vsub.s32 1, %v3928
        %v3930 = vrot.slane %v657, %v3929
        %v3963 = vunpack.c.l.b16 %v3879
        %v3964 = vunpack.c.l.b16 %v3880
        %v3965 = vunpack.c.l.b16 %v3881
        %v3966 = vunpack.c.l.b16 %v3882
        %v3967 = vunpack.c.l.b16 %v3883
        %v3968 = vunpack.c.l.b16 %v3884
        %v3969 = vunpack.c.l.b16 %v3885
        %v3970 = vunpack.c.l.b16 %v3886
        %v3971 = vunpack.c.l.b16 %v3887
        %v3972 = vunpack.c.l.b16 %v3888
        %v3973 = vunpack.c.l.b16 %v3889
        %v3974 = vunpack.c.l.b16 %v3890
        %v3975 = vunpack.c.l.b16 %v3891
        %v3976 = vunpack.c.l.b16 %v3892
        %v3977 = vunpack.c.l.b16 %v3893
        %v3978 = vunpack.c.l.b16 %v3894
        %v3979 = vunpack.c.l.b16 %v3895
        %v3980 = vunpack.c.l.b16 %v3896
        %v3981 = vunpack.c.l.b16 %v3897
        %v3982 = vunpack.c.l.b16 %v3898
        %v3983 = vunpack.c.l.b16 %v3899
        %v3984 = vunpack.c.l.b16 %v3900
        %v3985 = vunpack.c.l.b16 %v3901
        %v3986 = vunpack.c.l.b16 %v3902
        %v3987 = vunpack.c.l.b16 %v3903
        %v3988 = vunpack.c.l.b16 %v3904
        %v3989 = vunpack.c.l.b16 %v3905
        %v3990 = vunpack.c.l.b16 %v3906
        %v3991 = vunpack.c.l.b16 %v3907
        %v3992 = vunpack.c.l.b16 %v3908
        %v3993 = vunpack.c.l.b16 %v3909
        %v3994 = vunpack.c.l.b16 %v3910
        %v3995 = vpack.c.b16 %v3964, %v3963
        %v3996 = vpack.c.b16 %v3966, %v3965
        %v3997 = vpack.c.b16 %v3968, %v3967
        %v3998 = vpack.c.b16 %v3970, %v3969
        %v3999 = vpack.c.b16 %v3972, %v3971
        %v4000 = vpack.c.b16 %v3974, %v3973
        %v4001 = vpack.c.b16 %v3976, %v3975
        %v4002 = vpack.c.b16 %v3978, %v3977
        %v4003 = vpack.c.b16 %v3980, %v3979
        %v4004 = vpack.c.b16 %v3982, %v3981
        %v4005 = vpack.c.b16 %v3984, %v3983
        %v4006 = vpack.c.b16 %v3986, %v3985
        %v4007 = vpack.c.b16 %v3988, %v3987
        %v4008 = vpack.c.b16 %v3990, %v3989
        %v4009 = vpack.c.b16 %v3992, %v3991
        %v4010 = vpack.c.b16 %v3994, %v3993
        %4027 = vmatprep.subr.bf16.mxu0 0
        %4028 = vmatpush1.bf16.msra.mxu0 %v3995
        %4029 = vmatprep.subr.bf16.mxu0 0
        %4030 = vmatpush1.bf16.msra.mxu0 %v3996
        %4031 = vmatprep.subr.bf16.mxu0 0
        %4032 = vmatpush1.bf16.msra.mxu0 %v3997
        %4033 = vmatprep.subr.bf16.mxu0 0
        %4034 = vmatpush1.bf16.msra.mxu0 %v3998
        %4035 = vmatprep.subr.bf16.mxu0 0
        %4036 = vmatpush1.bf16.msra.mxu0 %v3999
        %4037 = vmatprep.subr.bf16.mxu0 0
        %4038 = vmatpush1.bf16.msra.mxu0 %v4000
        %4039 = vmatprep.subr.bf16.mxu0 0
        %4040 = vmatpush1.bf16.msra.mxu0 %v4001
        %4041 = vmatprep.subr.bf16.mxu0 0
        %4042 = vmatpush1.bf16.msra.mxu0 %v4002
        %4043 = vmatprep.subr.bf16.mxu0 0
        %4044 = vmatpush1.bf16.msra.mxu0 %v4003
        %4045 = vmatprep.subr.bf16.mxu0 0
        %4046 = vmatpush1.bf16.msra.mxu0 %v4004
        %4047 = vmatprep.subr.bf16.mxu0 0
        %4048 = vmatpush1.bf16.msra.mxu0 %v4005
        %4049 = vmatprep.subr.bf16.mxu0 0
        %4050 = vmatpush1.bf16.msra.mxu0 %v4006
        %4051 = vmatprep.subr.bf16.mxu0 0
        %4052 = vmatpush1.bf16.msra.mxu0 %v4007
        %4053 = vmatprep.subr.bf16.mxu0 0
        %4054 = vmatpush1.bf16.msra.mxu0 %v4008
        %4055 = vmatprep.subr.bf16.mxu0 0
        %4056 = vmatpush1.bf16.msra.mxu0 %v4009
        %4057 = vmatprep.subr.bf16.mxu0 0
        %4058 = vmatpush1.bf16.msra.mxu0 %v4010
        %4059 = vmatprep.mubr.bf16.mxu0 %v3912
        %4060 = vmatmul.mubr.bf16.gmra.mrb[0].mxu0 %v3911
        %v4061 = vpop.f32.mrb[0].mxu0
        %v4062 = vadd.f32 %v3930, %v4061
        %v4063 = vpop.f32.mrb[0].mxu0
        %v4064 = vpop.f32.mrb[0].mxu0
        %v4065 = vadd.f32 %v3930, %v4064
        %v4066 = vpop.f32.mrb[0].mxu0
        %4067 = vmatprep.mubr.bf16.mxu0 %v3914
        %4068 = vmatmul.mubr.bf16.gmra.mrb[0].mxu0 %v3913
        %v4069 = vpop.f32.mrb[0].mxu0
        %v4070 = vadd.f32 %v3930, %v4069
        %v4071 = vpop.f32.mrb[0].mxu0
        %v4072 = vpop.f32.mrb[0].mxu0
        %v4073 = vadd.f32 %v3930, %v4072
        %v4074 = vpop.f32.mrb[0].mxu0
        %4075 = vmatprep.mubr.bf16.mxu0 %v3916
        %4076 = vmatmul.mubr.bf16.gmra.mrb[0].mxu0 %v3915
        %v4077 = vpop.f32.mrb[0].mxu0
        %v4078 = vadd.f32 %v3930, %v4077
        %v4079 = vpop.f32.mrb[0].mxu0
        %v4080 = vpop.f32.mrb[0].mxu0
        %v4081 = vadd.f32 %v3930, %v4080
        %v4082 = vpop.f32.mrb[0].mxu0
        %4083 = vmatprep.mubr.bf16.mxu0 %v3918
        %4084 = vmatmul.mubr.bf16.gmra.mrb[0].mxu0 %v3917
        %v4085 = vpop.f32.mrb[0].mxu0
        %v4086 = vadd.f32 %v3930, %v4085
        %v4087 = vpop.f32.mrb[0].mxu0
        %v4088 = vpop.f32.mrb[0].mxu0
        %v4089 = vadd.f32 %v3930, %v4088
        %v4090 = vpop.f32.mrb[0].mxu0
        %4091 = vmatprep.mubr.bf16.mxu0 %v3920
        %4092 = vmatmul.mubr.bf16.gmra.mrb[0].mxu0 %v3919
        %v4093 = vpop.f32.mrb[0].mxu0
        %v4094 = vadd.f32 %v3930, %v4093
        %v4095 = vpop.f32.mrb[0].mxu0
        %v4096 = vpop.f32.mrb[0].mxu0
        %v4097 = vadd.f32 %v3930, %v4096
        %v4098 = vpop.f32.mrb[0].mxu0
        %4099 = vmatprep.mubr.bf16.mxu0 %v3922
        %4100 = vmatmul.mubr.bf16.gmra.mrb[0].mxu0 %v3921
        %v4101 = vpop.f32.mrb[0].mxu0
        %v4102 = vadd.f32 %v3930, %v4101
        %v4103 = vpop.f32.mrb[0].mxu0
        %v4104 = vpop.f32.mrb[0].mxu0
        %v4105 = vadd.f32 %v3930, %v4104
        %v4106 = vpop.f32.mrb[0].mxu0
        %4107 = vmatprep.mubr.bf16.mxu0 %v3924
        %4108 = vmatmul.mubr.bf16.gmra.mrb[0].mxu0 %v3923
        %v4109 = vpop.f32.mrb[0].mxu0
        %v4110 = vadd.f32 %v3930, %v4109
        %v4111 = vpop.f32.mrb[0].mxu0
        %v4112 = vpop.f32.mrb[0].mxu0
        %v4113 = vadd.f32 %v3930, %v4112
        %v4114 = vpop.f32.mrb[0].mxu0
        %4115 = vmatprep.mubr.bf16.mxu0 %v3926
        %4116 = vmatmul.mubr.bf16.gmra.mrb[0].mxu0 %v3925
        %v4117 = vpop.f32.mrb[0].mxu0
        %v4118 = vadd.f32 %v3930, %v4117
        %v4119 = vpop.f32.mrb[0].mxu0
        %v4120 = vpop.f32.mrb[0].mxu0
        %v4121 = vadd.f32 %v3930, %v4120
        %v4122 = vpop.f32.mrb[0].mxu0
        %4123 = vdwg.mxu0
        %v4124 = vadd.f32 %v3346, %v4062
        %v4125 = vadd.f32 %v3347, %v4065
        %v4126 = vadd.f32 %v3348, %v4070
        %v4127 = vadd.f32 %v3349, %v4073
        %v4128 = vadd.f32 %v3350, %v4078
        %v4129 = vadd.f32 %v3351, %v4081
        %v4130 = vadd.f32 %v3352, %v4086
        %v4131 = vadd.f32 %v3353, %v4089
        %v4132 = vadd.f32 %v3354, %v4094
        %v4133 = vadd.f32 %v3355, %v4097
        %v4134 = vadd.f32 %v3356, %v4102
        %v4135 = vadd.f32 %v3357, %v4105
        %v4136 = vadd.f32 %v3358, %v4110
        %v4137 = vadd.f32 %v3359, %v4113
        %v4138 = vadd.f32 %v3360, %v4118
        %v4139 = vadd.f32 %v3361, %v4121
        %4140 = vadd.xlane.f32.xlu0 %v4124
        %v4141 = vpop.xlane.xlu0 %4140
        %4142 = vadd.xlane.f32.xlu0 %v4125
        %v4143 = vpop.xlane.xlu0 %4142
        %4144 = vadd.xlane.f32.xlu0 %v4126
        %v4145 = vpop.xlane.xlu0 %4144
        %4146 = vadd.xlane.f32.xlu0 %v4127
        %v4147 = vpop.xlane.xlu0 %4146
        %4148 = vadd.xlane.f32.xlu0 %v4128
        %v4149 = vpop.xlane.xlu0 %4148
        %4150 = vadd.xlane.f32.xlu0 %v4129
        %v4151 = vpop.xlane.xlu0 %4150
        %4152 = vadd.xlane.f32.xlu0 %v4130
        %v4153 = vpop.xlane.xlu0 %4152
        %4154 = vadd.xlane.f32.xlu0 %v4131
        %v4155 = vpop.xlane.xlu0 %4154
        %4156 = vadd.xlane.f32.xlu0 %v4132
        %v4157 = vpop.xlane.xlu0 %4156
        %4158 = vadd.xlane.f32.xlu0 %v4133
        %v4159 = vpop.xlane.xlu0 %4158
        %4160 = vadd.xlane.f32.xlu0 %v4134
        %v4161 = vpop.xlane.xlu0 %4160
        %4162 = vadd.xlane.f32.xlu0 %v4135
        %v4163 = vpop.xlane.xlu0 %4162
        %4164 = vadd.xlane.f32.xlu0 %v4136
        %v4165 = vpop.xlane.xlu0 %4164
        %4166 = vadd.xlane.f32.xlu0 %v4137
        %v4167 = vpop.xlane.xlu0 %4166
        %4168 = vadd.xlane.f32.xlu0 %v4138
        %v4169 = vpop.xlane.xlu0 %4168
        %4170 = vadd.xlane.f32.xlu0 %v4139
        %v4171 = vpop.xlane.xlu0 %4170
        %v4172 = vmul.f32 %v4141, %v472
        %v4173 = vmul.f32 %v4143, %v472
        %v4174 = vmul.f32 %v4145, %v472
        %v4175 = vmul.f32 %v4147, %v472
        %v4176 = vmul.f32 %v4149, %v472
        %v4177 = vmul.f32 %v4151, %v472
        %v4178 = vmul.f32 %v4153, %v472
        %v4179 = vmul.f32 %v4155, %v472
        %v4180 = vmul.f32 %v4157, %v472
        %v4181 = vmul.f32 %v4159, %v472
        %v4182 = vmul.f32 %v4161, %v472
        %v4183 = vmul.f32 %v4163, %v472
        %v4184 = vmul.f32 %v4165, %v472
        %v4185 = vmul.f32 %v4167, %v472
        %v4186 = vmul.f32 %v4169, %v472
        %v4187 = vmul.f32 %v4171, %v472
        %v4188 = vsub.f32 %v4124, %v4172
        %v4189 = vsub.f32 %v4125, %v4173
        %v4190 = vsub.f32 %v4126, %v4174
        %v4191 = vsub.f32 %v4127, %v4175
        %v4192 = vsub.f32 %v4128, %v4176
        %v4193 = vsub.f32 %v4129, %v4177
        %v4194 = vsub.f32 %v4130, %v4178
        %v4195 = vsub.f32 %v4131, %v4179
        %v4196 = vsub.f32 %v4132, %v4180
        %v4197 = vsub.f32 %v4133, %v4181
        %v4198 = vsub.f32 %v4134, %v4182
        %v4199 = vsub.f32 %v4135, %v4183
        %v4200 = vsub.f32 %v4136, %v4184
        %v4201 = vsub.f32 %v4137, %v4185
        %v4202 = vsub.f32 %v4138, %v4186
        %v4203 = vsub.f32 %v4139, %v4187
        %v4204 = vmul.f32 %v4188, %v4188
        %v4205 = vmul.f32 %v4189, %v4189
        %v4206 = vmul.f32 %v4190, %v4190
        %v4207 = vmul.f32 %v4191, %v4191
        %v4208 = vmul.f32 %v4192, %v4192
        %v4209 = vmul.f32 %v4193, %v4193
        %v4210 = vmul.f32 %v4194, %v4194
        %v4211 = vmul.f32 %v4195, %v4195
        %v4212 = vmul.f32 %v4196, %v4196
        %v4213 = vmul.f32 %v4197, %v4197
        %v4214 = vmul.f32 %v4198, %v4198
        %v4215 = vmul.f32 %v4199, %v4199
        %v4216 = vmul.f32 %v4200, %v4200
        %v4217 = vmul.f32 %v4201, %v4201
        %v4218 = vmul.f32 %v4202, %v4202
        %v4219 = vmul.f32 %v4203, %v4203
        %4220 = vadd.xlane.f32.xlu0 %v4204
        %v4221 = vpop.xlane.xlu0 %4220
        %4222 = vadd.xlane.f32.xlu0 %v4205
        %v4223 = vpop.xlane.xlu0 %4222
        %4224 = vadd.xlane.f32.xlu0 %v4206
        %v4225 = vpop.xlane.xlu0 %4224
        %4226 = vadd.xlane.f32.xlu0 %v4207
        %v4227 = vpop.xlane.xlu0 %4226
        %4228 = vadd.xlane.f32.xlu0 %v4208
        %v4229 = vpop.xlane.xlu0 %4228
        %4230 = vadd.xlane.f32.xlu0 %v4209
        %v4231 = vpop.xlane.xlu0 %4230
        %4232 = vadd.xlane.f32.xlu0 %v4210
        %v4233 = vpop.xlane.xlu0 %4232
        %4234 = vadd.xlane.f32.xlu0 %v4211
        %v4235 = vpop.xlane.xlu0 %4234
        %4236 = vadd.xlane.f32.xlu0 %v4212
        %v4237 = vpop.xlane.xlu0 %4236
        %4238 = vadd.xlane.f32.xlu0 %v4213
        %v4239 = vpop.xlane.xlu0 %4238
        %4240 = vadd.xlane.f32.xlu0 %v4214
        %v4241 = vpop.xlane.xlu0 %4240
        %4242 = vadd.xlane.f32.xlu0 %v4215
        %v4243 = vpop.xlane.xlu0 %4242
        %4244 = vadd.xlane.f32.xlu0 %v4216
        %v4245 = vpop.xlane.xlu0 %4244
        %4246 = vadd.xlane.f32.xlu0 %v4217
        %v4247 = vpop.xlane.xlu0 %4246
        %4248 = vadd.xlane.f32.xlu0 %v4218
        %v4249 = vpop.xlane.xlu0 %4248
        %4250 = vadd.xlane.f32.xlu0 %v4219
        %v4251 = vpop.xlane.xlu0 %4250
        %v4252 = vmul.f32 %v4221, %v472
        %v4253 = vmul.f32 %v4223, %v472
        %v4254 = vmul.f32 %v4225, %v472
        %v4255 = vmul.f32 %v4227, %v472
        %v4256 = vmul.f32 %v4229, %v472
        %v4257 = vmul.f32 %v4231, %v472
        %v4258 = vmul.f32 %v4233, %v472
        %v4259 = vmul.f32 %v4235, %v472
        %v4260 = vmul.f32 %v4237, %v472
        %v4261 = vmul.f32 %v4239, %v472
        %v4262 = vmul.f32 %v4241, %v472
        %v4263 = vmul.f32 %v4243, %v472
        %v4264 = vmul.f32 %v4245, %v472
        %v4265 = vmul.f32 %v4247, %v472
        %v4266 = vmul.f32 %v4249, %v472
        %v4267 = vmul.f32 %v4251, %v472
        %v4268 = vadd.f32 %v4252, 1e-05
        %v4269 = vadd.f32 %v4253, 1e-05
        %v4270 = vadd.f32 %v4254, 1e-05
        %v4271 = vadd.f32 %v4255, 1e-05
        %v4272 = vadd.f32 %v4256, 1e-05
        %v4273 = vadd.f32 %v4257, 1e-05
        %v4274 = vadd.f32 %v4258, 1e-05
        %v4275 = vadd.f32 %v4259, 1e-05
        %v4276 = vadd.f32 %v4260, 1e-05
        %v4277 = vadd.f32 %v4261, 1e-05
        %v4278 = vadd.f32 %v4262, 1e-05
        %v4279 = vadd.f32 %v4263, 1e-05
        %v4280 = vadd.f32 %v4264, 1e-05
        %v4281 = vadd.f32 %v4265, 1e-05
        %v4282 = vadd.f32 %v4266, 1e-05
        %v4283 = vadd.f32 %v4267, 1e-05
        %v4284 = vrsqrt.pop %v4268
        %v4285 = vrsqrt.pop %v4269
        %v4286 = vrsqrt.pop %v4270
        %v4287 = vrsqrt.pop %v4271
        %v4288 = vrsqrt.pop %v4272
        %v4289 = vrsqrt.pop %v4273
        %v4290 = vrsqrt.pop %v4274
        %v4291 = vrsqrt.pop %v4275
        %v4292 = vrsqrt.pop %v4276
        %v4293 = vrsqrt.pop %v4277
        %v4294 = vrsqrt.pop %v4278
        %v4295 = vrsqrt.pop %v4279
        %v4296 = vrsqrt.pop %v4280
        %v4297 = vrsqrt.pop %v4281
        %v4298 = vrsqrt.pop %v4282
        %v4299 = vrsqrt.pop %v4283
        %v4300 = vmul.f32 %v4188, %v4284
        %v4301 = vmul.f32 %v4189, %v4285
        %v4302 = vmul.f32 %v4190, %v4286
        %v4303 = vmul.f32 %v4191, %v4287
        %v4304 = vmul.f32 %v4192, %v4288
        %v4305 = vmul.f32 %v4193, %v4289
        %v4306 = vmul.f32 %v4194, %v4290
        %v4307 = vmul.f32 %v4195, %v4291
        %v4308 = vmul.f32 %v4196, %v4292
        %v4309 = vmul.f32 %v4197, %v4293
        %v4310 = vmul.f32 %v4198, %v4294
        %v4311 = vmul.f32 %v4199, %v4295
        %v4312 = vmul.f32 %v4200, %v4296
        %v4313 = vmul.f32 %v4201, %v4297
        %v4314 = vmul.f32 %v4202, %v4298
        %v4315 = vmul.f32 %v4203, %v4299
        %v4316 = vlaneseq
        %v4317 = vshrl.u32 %v4316, 7
        %v4318 = vsub.s32 4, %v4317
        %v4319 = vrot.slane %v657, %v4318
        %v4320 = vmul.f32 %v4300, %v4319
        %v4321 = vmul.f32 %v4301, %v4319
        %v4322 = vmul.f32 %v4302, %v4319
        %v4323 = vmul.f32 %v4303, %v4319
        %v4324 = vmul.f32 %v4304, %v4319
        %v4325 = vmul.f32 %v4305, %v4319
        %v4326 = vmul.f32 %v4306, %v4319
        %v4327 = vmul.f32 %v4307, %v4319
        %v4328 = vmul.f32 %v4308, %v4319
        %v4329 = vmul.f32 %v4309, %v4319
        %v4330 = vmul.f32 %v4310, %v4319
        %v4331 = vmul.f32 %v4311, %v4319
        %v4332 = vmul.f32 %v4312, %v4319
        %v4333 = vmul.f32 %v4313, %v4319
        %v4334 = vmul.f32 %v4314, %v4319
        %v4335 = vmul.f32 %v4315, %v4319
        %v4336 = vlaneseq
        %v4337 = vshrl.u32 %v4336, 7
        %v4338 = vsub.s32 5, %v4337
        %v4339 = vrot.slane %v657, %v4338
        %v4340 = vadd.f32 %v4320, %v4339
        %v4341 = vadd.f32 %v4321, %v4339
        %v4342 = vadd.f32 %v4322, %v4339
        %v4343 = vadd.f32 %v4323, %v4339
        %v4344 = vadd.f32 %v4324, %v4339
        %v4345 = vadd.f32 %v4325, %v4339
        %v4346 = vadd.f32 %v4326, %v4339
        %v4347 = vadd.f32 %v4327, %v4339
        %v4348 = vadd.f32 %v4328, %v4339
        %v4349 = vadd.f32 %v4329, %v4339
        %v4350 = vadd.f32 %v4330, %v4339
        %v4351 = vadd.f32 %v4331, %v4339
        %v4352 = vadd.f32 %v4332, %v4339
        %v4353 = vadd.f32 %v4333, %v4339
        %v4354 = vadd.f32 %v4334, %v4339
        %v4355 = vadd.f32 %v4335, %v4339
        %s4356 = scalar_lea.vmem %s9, 8
        %v4357 = vld [vmem:[%s4356] sm:$0xff]
        %v4358 = vpack.c.bf16 %v4341, %v4340
        %v4359 = vpack.c.bf16 %v4343, %v4342
        %v4360 = vpack.c.bf16 %v4345, %v4344
        %v4361 = vpack.c.bf16 %v4347, %v4346
        %v4362 = vpack.c.bf16 %v4349, %v4348
        %v4363 = vpack.c.bf16 %v4351, %v4350
        %v4364 = vpack.c.bf16 %v4353, %v4352
        %v4365 = vpack.c.bf16 %v4355, %v4354
        %s4366 = scalar_lea.vmem %s3, 192
        %v4367 = vld [vmem:[%s4366] sm:$0xff]
        %v4368 = vld [vmem:[%s4366 + $0x8] sm:$0xf]
        %v4369 = vld [vmem:[%s4366 + $0xc] sm:$0xff]
        %v4370 = vld [vmem:[%s4366 + $0x14] sm:$0xf]
        %v4371 = vld [vmem:[%s4366 + $0x18] sm:$0xff]
        %v4372 = vld [vmem:[%s4366 + $0x20] sm:$0xf]
        %v4373 = vld [vmem:[%s4366 + $0x24] sm:$0xff]
        %v4374 = vld [vmem:[%s4366 + $0x2c] sm:$0xf]
        %v4375 = vld [vmem:[%s4366 + $0x30] sm:$0xff]
        %v4376 = vld [vmem:[%s4366 + $0x38] sm:$0xf]
        %v4377 = vld [vmem:[%s4366 + $0x3c] sm:$0xff]
        %v4378 = vld [vmem:[%s4366 + $0x44] sm:$0xf]
        %v4379 = vld [vmem:[%s4366 + $0x48] sm:$0xff]
        %v4380 = vld [vmem:[%s4366 + $0x50] sm:$0xf]
        %v4381 = vld [vmem:[%s4366 + $0x54] sm:$0xff]
        %v4382 = vld [vmem:[%s4366 + $0x5c] sm:$0xf]
        %v4383 = vld [vmem:[%s4366 + $0x60] sm:$0xff]
        %v4384 = vld [vmem:[%s4366 + $0x68] sm:$0xf]
        %v4385 = vld [vmem:[%s4366 + $0x6c] sm:$0xff]
        %v4386 = vld [vmem:[%s4366 + $0x74] sm:$0xf]
        %v4387 = vld [vmem:[%s4366 + $0x78] sm:$0xff]
        %v4388 = vld [vmem:[%s4366 + $0x80] sm:$0xf]
        %v4389 = vld [vmem:[%s4366 + $0x84] sm:$0xff]
        %v4390 = vld [vmem:[%s4366 + $0x8c] sm:$0xf]
        %v4391 = vld [vmem:[%s4366 + $0x90] sm:$0xff]
        %v4392 = vld [vmem:[%s4366 + $0x98] sm:$0xf]
        %v4393 = vld [vmem:[%s4366 + $0x9c] sm:$0xff]
        %v4394 = vld [vmem:[%s4366 + $0xa4] sm:$0xf]
        %v4395 = vld [vmem:[%s4366 + $0xa8] sm:$0xff]
        %v4396 = vld [vmem:[%s4366 + $0xb0] sm:$0xf]
        %v4397 = vld [vmem:[%s4366 + $0xb4] sm:$0xff]
        %v4398 = vld [vmem:[%s4366 + $0xbc] sm:$0xf]
        %s4399 = scalar_lea.vmem %s4, 3
        %v4400 = vld [vmem:[%s4399] sm:$0x7]
        %v4402 = vlaneseq
        %v4403 = vshrl.u32 %v4402, 7
        %v4404 = vsub.s32 0, %v4403
        %v4405 = vrot.slane %v4400, %v4404
        %v4406 = vlaneseq
        %v4407 = vshrl.u32 %v4406, 7
        %v4408 = vsub.s32 1, %v4407
        %v4409 = vrot.slane %v4400, %v4408
        %v4410 = vlaneseq
        %v4411 = vshrl.u32 %v4410, 7
        %v4412 = vsub.s32 2, %v4411
        %v4413 = vrot.slane %v4400, %v4412
        %v4449 = vunpack.c.l.b16 %v4367
        %v4450 = vunpack.c.h.b16 %v4367
        %v4451 = vunpack.c.l.b16 %v4368
        %v4452 = vunpack.c.l.b16 %v4369
        %v4453 = vunpack.c.h.b16 %v4369
        %v4454 = vunpack.c.l.b16 %v4370
        %v4455 = vunpack.c.l.b16 %v4371
        %v4456 = vunpack.c.h.b16 %v4371
        %v4457 = vunpack.c.l.b16 %v4372
        %v4458 = vunpack.c.l.b16 %v4373
        %v4459 = vunpack.c.h.b16 %v4373
        %v4460 = vunpack.c.l.b16 %v4374
        %v4461 = vunpack.c.l.b16 %v4375
        %v4462 = vunpack.c.h.b16 %v4375
        %v4463 = vunpack.c.l.b16 %v4376
        %v4464 = vunpack.c.l.b16 %v4377
        %v4465 = vunpack.c.h.b16 %v4377
        %v4466 = vunpack.c.l.b16 %v4378
        %v4467 = vunpack.c.l.b16 %v4379
        %v4468 = vunpack.c.h.b16 %v4379
        %v4469 = vunpack.c.l.b16 %v4380
        %v4470 = vunpack.c.l.b16 %v4381
        %v4471 = vunpack.c.h.b16 %v4381
        %v4472 = vunpack.c.l.b16 %v4382
        %v4473 = vunpack.c.l.b16 %v4383
        %v4474 = vunpack.c.h.b16 %v4383
        %v4475 = vunpack.c.l.b16 %v4384
        %v4476 = vunpack.c.l.b16 %v4385
        %v4477 = vunpack.c.h.b16 %v4385
        %v4478 = vunpack.c.l.b16 %v4386
        %v4479 = vunpack.c.l.b16 %v4387
        %v4480 = vunpack.c.h.b16 %v4387
        %v4481 = vunpack.c.l.b16 %v4388
        %v4482 = vunpack.c.l.b16 %v4389
        %v4483 = vunpack.c.h.b16 %v4389
        %v4484 = vunpack.c.l.b16 %v4390
        %v4485 = vunpack.c.l.b16 %v4391
        %v4486 = vunpack.c.h.b16 %v4391
        %v4487 = vunpack.c.l.b16 %v4392
        %v4488 = vunpack.c.l.b16 %v4393
        %v4489 = vunpack.c.h.b16 %v4393
        %v4490 = vunpack.c.l.b16 %v4394
        %v4491 = vunpack.c.l.b16 %v4395
        %v4492 = vunpack.c.h.b16 %v4395
        %v4493 = vunpack.c.l.b16 %v4396
        %v4494 = vunpack.c.l.b16 %v4397
        %v4495 = vunpack.c.h.b16 %v4397
        %v4496 = vunpack.c.l.b16 %v4398
        %v4497 = vpack.c.b16 %v4452, %v4449
        %v4498 = vpack.c.b16 %v4453, %v4450
        %v4499 = vpack.c.b16 %v4454, %v4451
        %v4500 = vpack.c.b16 %v4458, %v4455
        %v4501 = vpack.c.b16 %v4459, %v4456
        %v4502 = vpack.c.b16 %v4460, %v4457
        %v4503 = vpack.c.b16 %v4464, %v4461
        %v4504 = vpack.c.b16 %v4465, %v4462
        %v4505 = vpack.c.b16 %v4466, %v4463
        %v4506 = vpack.c.b16 %v4470, %v4467
        %v4507 = vpack.c.b16 %v4471, %v4468
        %v4508 = vpack.c.b16 %v4472, %v4469
        %v4509 = vpack.c.b16 %v4476, %v4473
        %v4510 = vpack.c.b16 %v4477, %v4474
        %v4511 = vpack.c.b16 %v4478, %v4475
        %v4512 = vpack.c.b16 %v4482, %v4479
        %v4513 = vpack.c.b16 %v4483, %v4480
        %v4514 = vpack.c.b16 %v4484, %v4481
        %v4515 = vpack.c.b16 %v4488, %v4485
        %v4516 = vpack.c.b16 %v4489, %v4486
        %v4517 = vpack.c.b16 %v4490, %v4487
        %v4518 = vpack.c.b16 %v4494, %v4491
        %v4519 = vpack.c.b16 %v4495, %v4492
        %v4520 = vpack.c.b16 %v4496, %v4493
        %4545 = vmatprep.subr.bf16.mxu0 %v4498
        %4546 = vmatpush1.bf16.msra.mxu0 %v4497
        %4547 = vmatprep.subr.bf16.mxu0 %v4501
        %4548 = vmatpush1.bf16.msra.mxu0 %v4500
        %4549 = vmatprep.subr.bf16.mxu0 %v4504
        %4550 = vmatpush1.bf16.msra.mxu0 %v4503
        %4551 = vmatprep.subr.bf16.mxu0 %v4507
        %4552 = vmatpush1.bf16.msra.mxu0 %v4506
        %4553 = vmatprep.subr.bf16.mxu0 %v4510
        %4554 = vmatpush1.bf16.msra.mxu0 %v4509
        %4555 = vmatprep.subr.bf16.mxu0 %v4513
        %4556 = vmatpush1.bf16.msra.mxu0 %v4512
        %4557 = vmatprep.subr.bf16.mxu0 %v4516
        %4558 = vmatpush1.bf16.msra.mxu0 %v4515
        %4559 = vmatprep.subr.bf16.mxu0 %v4519
        %4560 = vmatpush1.bf16.msra.mxu0 %v4518
        %4561 = vmatprep.subr.bf16.mxu0 0
        %4562 = vmatpush1.bf16.msra.mxu0 0
        %4563 = vmatprep.subr.bf16.mxu0 0
        %4564 = vmatpush1.bf16.msra.mxu0 0
        %4565 = vmatprep.subr.bf16.mxu0 0
        %4566 = vmatpush1.bf16.msra.mxu0 0
        %4567 = vmatprep.subr.bf16.mxu0 0
        %4568 = vmatpush1.bf16.msra.mxu0 0
        %4569 = vmatprep.subr.bf16.mxu0 0
        %4570 = vmatpush1.bf16.msra.mxu0 0
        %4571 = vmatprep.subr.bf16.mxu0 0
        %4572 = vmatpush1.bf16.msra.mxu0 0
        %4573 = vmatprep.subr.bf16.mxu0 0
        %4574 = vmatpush1.bf16.msra.mxu0 0
        %4575 = vmatprep.subr.bf16.mxu0 0
        %4576 = vmatpush1.bf16.msra.mxu0 0
        %4577 = vmatprep.mubr.bf16.mxu0 0
        %4578 = vmatmul.mubr.bf16.gmra.mrb[0].mxu0 %v4358
        %v4579 = vpop.f32.mrb[0].mxu0
        %v4580 = vadd.f32 %v4405, %v4579
        %v4581 = vpop.f32.mrb[0].mxu0
        %v4582 = vadd.f32 %v4409, %v4581
        %v4583 = vpop.f32.mrb[0].mxu0
        %v4584 = vadd.f32 %v4405, %v4583
        %v4585 = vpop.f32.mrb[0].mxu0
        %v4586 = vadd.f32 %v4409, %v4585
        %4587 = vmatprep.mubr.bf16.mxu0 0
        %4588 = vmatmul.mubr.bf16.gmra.mrb[0].mxu0 %v4359
        %v4589 = vpop.f32.mrb[0].mxu0
        %v4590 = vadd.f32 %v4405, %v4589
        %v4591 = vpop.f32.mrb[0].mxu0
        %v4592 = vadd.f32 %v4409, %v4591
        %v4593 = vpop.f32.mrb[0].mxu0
        %v4594 = vadd.f32 %v4405, %v4593
        %v4595 = vpop.f32.mrb[0].mxu0
        %v4596 = vadd.f32 %v4409, %v4595
        %4597 = vmatprep.mubr.bf16.mxu0 0
        %4598 = vmatmul.mubr.bf16.gmra.mrb[0].mxu0 %v4360
        %v4599 = vpop.f32.mrb[0].mxu0
        %v4600 = vadd.f32 %v4405, %v4599
        %v4601 = vpop.f32.mrb[0].mxu0
        %v4602 = vadd.f32 %v4409, %v4601
        %v4603 = vpop.f32.mrb[0].mxu0
        %v4604 = vadd.f32 %v4405, %v4603
        %v4605 = vpop.f32.mrb[0].mxu0
        %v4606 = vadd.f32 %v4409, %v4605
        %4607 = vmatprep.mubr.bf16.mxu0 0
        %4608 = vmatmul.mubr.bf16.gmra.mrb[0].mxu0 %v4361
        %v4609 = vpop.f32.mrb[0].mxu0
        %v4610 = vadd.f32 %v4405, %v4609
        %v4611 = vpop.f32.mrb[0].mxu0
        %v4612 = vadd.f32 %v4409, %v4611
        %v4613 = vpop.f32.mrb[0].mxu0
        %v4614 = vadd.f32 %v4405, %v4613
        %v4615 = vpop.f32.mrb[0].mxu0
        %v4616 = vadd.f32 %v4409, %v4615
        %4617 = vmatprep.mubr.bf16.mxu0 0
        %4618 = vmatmul.mubr.bf16.gmra.mrb[0].mxu0 %v4362
        %v4619 = vpop.f32.mrb[0].mxu0
        %v4620 = vadd.f32 %v4405, %v4619
        %v4621 = vpop.f32.mrb[0].mxu0
        %v4622 = vadd.f32 %v4409, %v4621
        %v4623 = vpop.f32.mrb[0].mxu0
        %v4624 = vadd.f32 %v4405, %v4623
        %v4625 = vpop.f32.mrb[0].mxu0
        %v4626 = vadd.f32 %v4409, %v4625
        %4627 = vmatprep.mubr.bf16.mxu0 0
        %4628 = vmatmul.mubr.bf16.gmra.mrb[0].mxu0 %v4363
        %v4629 = vpop.f32.mrb[0].mxu0
        %v4630 = vadd.f32 %v4405, %v4629
        %v4631 = vpop.f32.mrb[0].mxu0
        %v4632 = vadd.f32 %v4409, %v4631
        %v4633 = vpop.f32.mrb[0].mxu0
        %v4634 = vadd.f32 %v4405, %v4633
        %v4635 = vpop.f32.mrb[0].mxu0
        %v4636 = vadd.f32 %v4409, %v4635
        %4637 = vmatprep.mubr.bf16.mxu0 0
        %4638 = vmatmul.mubr.bf16.gmra.mrb[0].mxu0 %v4364
        %v4639 = vpop.f32.mrb[0].mxu0
        %v4640 = vadd.f32 %v4405, %v4639
        %v4641 = vpop.f32.mrb[0].mxu0
        %v4642 = vadd.f32 %v4409, %v4641
        %v4643 = vpop.f32.mrb[0].mxu0
        %v4644 = vadd.f32 %v4405, %v4643
        %v4645 = vpop.f32.mrb[0].mxu0
        %v4646 = vadd.f32 %v4409, %v4645
        %4647 = vmatprep.mubr.bf16.mxu0 0
        %4648 = vmatmul.mubr.bf16.gmra.mrb[0].mxu0 %v4365
        %v4649 = vpop.f32.mrb[0].mxu0
        %v4650 = vadd.f32 %v4405, %v4649
        %v4651 = vpop.f32.mrb[0].mxu0
        %v4652 = vadd.f32 %v4409, %v4651
        %v4653 = vpop.f32.mrb[0].mxu0
        %v4654 = vadd.f32 %v4405, %v4653
        %v4655 = vpop.f32.mrb[0].mxu0
        %v4656 = vadd.f32 %v4409, %v4655
        %4657 = vdwg.mxu0
        %4658 = vmatprep.subr.bf16.mxu0 0
        %4659 = vmatpush1.bf16.msra.mxu0 %v4499
        %4660 = vmatprep.subr.bf16.mxu0 0
        %4661 = vmatpush1.bf16.msra.mxu0 %v4502
        %4662 = vmatprep.subr.bf16.mxu0 0
        %4663 = vmatpush1.bf16.msra.mxu0 %v4505
        %4664 = vmatprep.subr.bf16.mxu0 0
        %4665 = vmatpush1.bf16.msra.mxu0 %v4508
        %4666 = vmatprep.subr.bf16.mxu0 0
        %4667 = vmatpush1.bf16.msra.mxu0 %v4511
        %4668 = vmatprep.subr.bf16.mxu0 0
        %4669 = vmatpush1.bf16.msra.mxu0 %v4514
        %4670 = vmatprep.subr.bf16.mxu0 0
        %4671 = vmatpush1.bf16.msra.mxu0 %v4517
        %4672 = vmatprep.subr.bf16.mxu0 0
        %4673 = vmatpush1.bf16.msra.mxu0 %v4520
        %4674 = vmatprep.subr.bf16.mxu0 0
        %4675 = vmatpush1.bf16.msra.mxu0 0
        %4676 = vmatprep.subr.bf16.mxu0 0
        %4677 = vmatpush1.bf16.msra.mxu0 0
        %4678 = vmatprep.subr.bf16.mxu0 0
        %4679 = vmatpush1.bf16.msra.mxu0 0
        %4680 = vmatprep.subr.bf16.mxu0 0
        %4681 = vmatpush1.bf16.msra.mxu0 0
        %4682 = vmatprep.subr.bf16.mxu0 0
        %4683 = vmatpush1.bf16.msra.mxu0 0
        %4684 = vmatprep.subr.bf16.mxu0 0
        %4685 = vmatpush1.bf16.msra.mxu0 0
        %4686 = vmatprep.subr.bf16.mxu0 0
        %4687 = vmatpush1.bf16.msra.mxu0 0
        %4688 = vmatprep.subr.bf16.mxu0 0
        %4689 = vmatpush1.bf16.msra.mxu0 0
        %4690 = vmatprep.mubr.bf16.mxu0 0
        %4691 = vmatmul.mubr.bf16.gmra.mrb[0].mxu0 %v4358
        %v4692 = vpop.f32.mrb[0].mxu0
        %v4693 = vadd.f32 %v4413, %v4692
        %v4694 = vpop.f32.mrb[0].mxu0
        %v4695 = vpop.f32.mrb[0].mxu0
        %v4696 = vadd.f32 %v4413, %v4695
        %v4697 = vpop.f32.mrb[0].mxu0
        %4698 = vmatprep.mubr.bf16.mxu0 0
        %4699 = vmatmul.mubr.bf16.gmra.mrb[0].mxu0 %v4359
        %v4700 = vpop.f32.mrb[0].mxu0
        %v4701 = vadd.f32 %v4413, %v4700
        %v4702 = vpop.f32.mrb[0].mxu0
        %v4703 = vpop.f32.mrb[0].mxu0
        %v4704 = vadd.f32 %v4413, %v4703
        %v4705 = vpop.f32.mrb[0].mxu0
        %4706 = vmatprep.mubr.bf16.mxu0 0
        %4707 = vmatmul.mubr.bf16.gmra.mrb[0].mxu0 %v4360
        %v4708 = vpop.f32.mrb[0].mxu0
        %v4709 = vadd.f32 %v4413, %v4708
        %v4710 = vpop.f32.mrb[0].mxu0
        %v4711 = vpop.f32.mrb[0].mxu0
        %v4712 = vadd.f32 %v4413, %v4711
        %v4713 = vpop.f32.mrb[0].mxu0
        %4714 = vmatprep.mubr.bf16.mxu0 0
        %4715 = vmatmul.mubr.bf16.gmra.mrb[0].mxu0 %v4361
        %v4716 = vpop.f32.mrb[0].mxu0
        %v4717 = vadd.f32 %v4413, %v4716
        %v4718 = vpop.f32.mrb[0].mxu0
        %v4719 = vpop.f32.mrb[0].mxu0
        %v4720 = vadd.f32 %v4413, %v4719
        %v4721 = vpop.f32.mrb[0].mxu0
        %4722 = vmatprep.mubr.bf16.mxu0 0
        %4723 = vmatmul.mubr.bf16.gmra.mrb[0].mxu0 %v4362
        %v4724 = vpop.f32.mrb[0].mxu0
        %v4725 = vadd.f32 %v4413, %v4724
        %v4726 = vpop.f32.mrb[0].mxu0
        %v4727 = vpop.f32.mrb[0].mxu0
        %v4728 = vadd.f32 %v4413, %v4727
        %v4729 = vpop.f32.mrb[0].mxu0
        %4730 = vmatprep.mubr.bf16.mxu0 0
        %4731 = vmatmul.mubr.bf16.gmra.mrb[0].mxu0 %v4363
        %v4732 = vpop.f32.mrb[0].mxu0
        %v4733 = vadd.f32 %v4413, %v4732
        %v4734 = vpop.f32.mrb[0].mxu0
        %v4735 = vpop.f32.mrb[0].mxu0
        %v4736 = vadd.f32 %v4413, %v4735
        %v4737 = vpop.f32.mrb[0].mxu0
        %4738 = vmatprep.mubr.bf16.mxu0 0
        %4739 = vmatmul.mubr.bf16.gmra.mrb[0].mxu0 %v4364
        %v4740 = vpop.f32.mrb[0].mxu0
        %v4741 = vadd.f32 %v4413, %v4740
        %v4742 = vpop.f32.mrb[0].mxu0
        %v4743 = vpop.f32.mrb[0].mxu0
        %v4744 = vadd.f32 %v4413, %v4743
        %v4745 = vpop.f32.mrb[0].mxu0
        %4746 = vmatprep.mubr.bf16.mxu0 0
        %4747 = vmatmul.mubr.bf16.gmra.mrb[0].mxu0 %v4365
        %v4748 = vpop.f32.mrb[0].mxu0
        %v4749 = vadd.f32 %v4413, %v4748
        %v4750 = vpop.f32.mrb[0].mxu0
        %v4751 = vpop.f32.mrb[0].mxu0
        %v4752 = vadd.f32 %v4413, %v4751
        %v4753 = vpop.f32.mrb[0].mxu0
        %4754 = vdwg.mxu0
        %v4755 = vpack.c.bf16 %v4586, %v4582
        %v4756 = vmul.f32 %v4580, %v1058
        %v4757 = vmul.f32 %v4584, %v1058
        %v4758 = vpack.c.bf16 %v4757, %v4756
        %4759 = vmatprep.subr.bf16.mxu0 0
        %4760 = vmatpush1.bf16.xpose.msra.mxu0 %v4755
        %4761 = vmatprep.subr.bf16.mxu0 0
        %4762 = vmatpush1.bf16.xpose.msra.mxu0 0
        %4763 = vmatprep.subr.bf16.mxu0 0
        %4764 = vmatpush1.bf16.xpose.msra.mxu0 0
        %4765 = vmatprep.subr.bf16.mxu0 0
        %4766 = vmatpush1.bf16.xpose.msra.mxu0 0
        %4767 = vmatprep.subr.bf16.mxu0 0
        %4768 = vmatpush1.bf16.xpose.msra.mxu0 0
        %4769 = vmatprep.subr.bf16.mxu0 0
        %4770 = vmatpush1.bf16.xpose.msra.mxu0 0
        %4771 = vmatprep.subr.bf16.mxu0 0
        %4772 = vmatpush1.bf16.xpose.msra.mxu0 0
        %4773 = vmatprep.subr.bf16.mxu0 0
        %4774 = vmatpush1.bf16.xpose.msra.mxu0 0
        %4775 = vmatprep.subr.bf16.mxu0 0
        %4776 = vmatpush1.bf16.xpose.msra.mxu0 0
        %4777 = vmatprep.subr.bf16.mxu0 0
        %4778 = vmatpush1.bf16.xpose.msra.mxu0 0
        %4779 = vmatprep.subr.bf16.mxu0 0
        %4780 = vmatpush1.bf16.xpose.msra.mxu0 0
        %4781 = vmatprep.subr.bf16.mxu0 0
        %4782 = vmatpush1.bf16.xpose.msra.mxu0 0
        %4783 = vmatprep.subr.bf16.mxu0 0
        %4784 = vmatpush1.bf16.xpose.msra.mxu0 0
        %4785 = vmatprep.subr.bf16.mxu0 0
        %4786 = vmatpush1.bf16.xpose.msra.mxu0 0
        %4787 = vmatprep.subr.bf16.mxu0 0
        %4788 = vmatpush1.bf16.xpose.msra.mxu0 0
        %4789 = vmatprep.subr.bf16.mxu0 0
        %4790 = vmatpush1.bf16.xpose.msra.mxu0 0
        %4791 = vmatprep.mubr.bf16.mxu0 0
        %4792 = vmatmul.mubr.bf16.gmra.mrb[0].mxu0 %v4758
        %v4793 = vpop.f32.mrb[0].mxu0
        %v4794 = vadd.f32 %v1066, %v4793
        %v4795 = vpop.f32.mrb[0].mxu0
        %v4796 = vpop.f32.mrb[0].mxu0
        %v4797 = vadd.f32 %v1066, %v4796
        %v4798 = vpop.f32.mrb[0].mxu0
        %4799 = vdwg.mxu0
        %v4800 = vsel %vm1109, %v4794, -inf
        %4801 = vmax.xlane.f32.xlu0 %v4800
        %v4802 = vpop.xlane.xlu0 %4801
        %v4803 = vsel %vm1109, %v4797, -inf
        %4804 = vmax.xlane.f32.xlu0 %v4803
        %v4805 = vpop.xlane.xlu0 %4804
        %v4806 = vsub.f32 %v4794, %v4802
        %v4807 = vsub.f32 %v4797, %v4805
        %v4808 = vmul.f32 %v4806, 1.442695
        %v4809 = vpow.pop %v4808
        %v4810 = vmul.f32 %v4807, 1.442695
        %v4811 = vpow.pop %v4810
        %v4812 = vsel %vm1109, %v4809, 0.0
        %4813 = vadd.xlane.f32.xlu0 %v4812
        %v4814 = vpop.xlane.xlu0 %4813
        %v4815 = vsel %vm1109, %v4811, 0.0
        %4816 = vadd.xlane.f32.xlu0 %v4815
        %v4817 = vpop.xlane.xlu0 %4816
        %v4818 = vrcp.pop %v4814
        %v4819 = vrcp.pop %v4817
        %v4820 = vmul.f32 %v4809, %v4818
        %v4821 = vmul.f32 %v4811, %v4819
        %v4822 = vmul.f32 %v4693, %v1058
        %v4823 = vmul.f32 %v4696, %v1058
        %v4824 = vpack.c.bf16 %v4821, %v4820
        %v4825 = vpack.c.bf16 %v4823, %v4822
        %v4826 = vmul.f32 %v4580, %v1139
        %v4827 = vmul.f32 %v4584, %v1139
        %v4828 = vpack.c.bf16 %v4827, %v4826
        %4829 = vmatprep.subr.bf16.mxu0 0
        %4830 = vmatpush1.bf16.xpose.msra.mxu0 %v4755
        %4831 = vmatprep.subr.bf16.mxu0 0
        %4832 = vmatpush1.bf16.xpose.msra.mxu0 0
        %4833 = vmatprep.subr.bf16.mxu0 0
        %4834 = vmatpush1.bf16.xpose.msra.mxu0 0
        %4835 = vmatprep.subr.bf16.mxu0 0
        %4836 = vmatpush1.bf16.xpose.msra.mxu0 0
        %4837 = vmatprep.subr.bf16.mxu0 0
        %4838 = vmatpush1.bf16.xpose.msra.mxu0 0
        %4839 = vmatprep.subr.bf16.mxu0 0
        %4840 = vmatpush1.bf16.xpose.msra.mxu0 0
        %4841 = vmatprep.subr.bf16.mxu0 0
        %4842 = vmatpush1.bf16.xpose.msra.mxu0 0
        %4843 = vmatprep.subr.bf16.mxu0 0
        %4844 = vmatpush1.bf16.xpose.msra.mxu0 0
        %4845 = vmatprep.subr.bf16.mxu0 0
        %4846 = vmatpush1.bf16.xpose.msra.mxu0 0
        %4847 = vmatprep.subr.bf16.mxu0 0
        %4848 = vmatpush1.bf16.xpose.msra.mxu0 0
        %4849 = vmatprep.subr.bf16.mxu0 0
        %4850 = vmatpush1.bf16.xpose.msra.mxu0 0
        %4851 = vmatprep.subr.bf16.mxu0 0
        %4852 = vmatpush1.bf16.xpose.msra.mxu0 0
        %4853 = vmatprep.subr.bf16.mxu0 0
        %4854 = vmatpush1.bf16.xpose.msra.mxu0 0
        %4855 = vmatprep.subr.bf16.mxu0 0
        %4856 = vmatpush1.bf16.xpose.msra.mxu0 0
        %4857 = vmatprep.subr.bf16.mxu0 0
        %4858 = vmatpush1.bf16.xpose.msra.mxu0 0
        %4859 = vmatprep.subr.bf16.mxu0 0
        %4860 = vmatpush1.bf16.xpose.msra.mxu0 0
        %4861 = vmatprep.mubr.bf16.mxu0 0
        %4862 = vmatmul.mubr.bf16.gmra.mrb[0].mxu0 %v4828
        %v4863 = vpop.f32.mrb[0].mxu0
        %v4864 = vadd.f32 %v1066, %v4863
        %v4865 = vpop.f32.mrb[0].mxu0
        %v4866 = vpop.f32.mrb[0].mxu0
        %v4867 = vadd.f32 %v1066, %v4866
        %v4868 = vpop.f32.mrb[0].mxu0
        %4869 = vdwg.mxu0
        %v4870 = vsel %vm1109, %v4864, -inf
        %4871 = vmax.xlane.f32.xlu0 %v4870
        %v4872 = vpop.xlane.xlu0 %4871
        %v4873 = vsel %vm1109, %v4867, -inf
        %4874 = vmax.xlane.f32.xlu0 %v4873
        %v4875 = vpop.xlane.xlu0 %4874
        %v4876 = vsub.f32 %v4864, %v4872
        %v4877 = vsub.f32 %v4867, %v4875
        %v4878 = vmul.f32 %v4876, 1.442695
        %v4879 = vpow.pop %v4878
        %v4880 = vmul.f32 %v4877, 1.442695
        %v4881 = vpow.pop %v4880
        %v4882 = vsel %vm1109, %v4879, 0.0
        %4883 = vadd.xlane.f32.xlu0 %v4882
        %v4884 = vpop.xlane.xlu0 %4883
        %v4885 = vsel %vm1109, %v4881, 0.0
        %4886 = vadd.xlane.f32.xlu0 %v4885
        %v4887 = vpop.xlane.xlu0 %4886
        %v4888 = vrcp.pop %v4884
        %v4889 = vrcp.pop %v4887
        %v4890 = vmul.f32 %v4879, %v4888
        %v4891 = vmul.f32 %v4881, %v4889
        %v4892 = vmul.f32 %v4693, %v1139
        %v4893 = vmul.f32 %v4696, %v1139
        %v4894 = vpack.c.bf16 %v4891, %v4890
        %v4895 = vpack.c.bf16 %v4893, %v4892
        %v4897 = vsel %vm1109, %v4894, 0
        %4899 = vmatprep.subr.bf16.mxu0 0
        %4900 = vmatpush1.bf16.msra.mxu0 %v4895
        %4901 = vmatprep.subr.bf16.mxu0 0
        %4902 = vmatpush1.bf16.msra.mxu0 0
        %4903 = vmatprep.subr.bf16.mxu0 0
        %4904 = vmatpush1.bf16.msra.mxu0 0
        %4905 = vmatprep.subr.bf16.mxu0 0
        %4906 = vmatpush1.bf16.msra.mxu0 0
        %4907 = vmatprep.subr.bf16.mxu0 0
        %4908 = vmatpush1.bf16.msra.mxu0 0
        %4909 = vmatprep.subr.bf16.mxu0 0
        %4910 = vmatpush1.bf16.msra.mxu0 0
        %4911 = vmatprep.subr.bf16.mxu0 0
        %4912 = vmatpush1.bf16.msra.mxu0 0
        %4913 = vmatprep.subr.bf16.mxu0 0
        %4914 = vmatpush1.bf16.msra.mxu0 0
        %4915 = vmatprep.subr.bf16.mxu0 0
        %4916 = vmatpush1.bf16.msra.mxu0 0
        %4917 = vmatprep.subr.bf16.mxu0 0
        %4918 = vmatpush1.bf16.msra.mxu0 0
        %4919 = vmatprep.subr.bf16.mxu0 0
        %4920 = vmatpush1.bf16.msra.mxu0 0
        %4921 = vmatprep.subr.bf16.mxu0 0
        %4922 = vmatpush1.bf16.msra.mxu0 0
        %4923 = vmatprep.subr.bf16.mxu0 0
        %4924 = vmatpush1.bf16.msra.mxu0 0
        %4925 = vmatprep.subr.bf16.mxu0 0
        %4926 = vmatpush1.bf16.msra.mxu0 0
        %4927 = vmatprep.subr.bf16.mxu0 0
        %4928 = vmatpush1.bf16.msra.mxu0 0
        %4929 = vmatprep.subr.bf16.mxu0 0
        %4930 = vmatpush1.bf16.msra.mxu0 0
        %4931 = vmatprep.mubr.bf16.mxu0 0
        %4932 = vmatmul.mubr.bf16.gmra.mrb[0].mxu0 %v4897
        %v4933 = vpop.f32.mrb[0].mxu0
        %v4934 = vadd.f32 0.0, %v4933
        %v4935 = vpop.f32.mrb[0].mxu0
        %v4936 = vpop.f32.mrb[0].mxu0
        %v4937 = vadd.f32 0.0, %v4936
        %v4938 = vpop.f32.mrb[0].mxu0
        %4939 = vdwg.mxu0
        %v4941 = vsel %vm1109, %v4824, 0
        %4943 = vmatprep.subr.bf16.mxu0 0
        %4944 = vmatpush1.bf16.msra.mxu0 %v4825
        %4945 = vmatprep.subr.bf16.mxu0 0
        %4946 = vmatpush1.bf16.msra.mxu0 0
        %4947 = vmatprep.subr.bf16.mxu0 0
        %4948 = vmatpush1.bf16.msra.mxu0 0
        %4949 = vmatprep.subr.bf16.mxu0 0
        %4950 = vmatpush1.bf16.msra.mxu0 0
        %4951 = vmatprep.subr.bf16.mxu0 0
        %4952 = vmatpush1.bf16.msra.mxu0 0
        %4953 = vmatprep.subr.bf16.mxu0 0
        %4954 = vmatpush1.bf16.msra.mxu0 0
        %4955 = vmatprep.subr.bf16.mxu0 0
        %4956 = vmatpush1.bf16.msra.mxu0 0
        %4957 = vmatprep.subr.bf16.mxu0 0
        %4958 = vmatpush1.bf16.msra.mxu0 0
        %4959 = vmatprep.subr.bf16.mxu0 0
        %4960 = vmatpush1.bf16.msra.mxu0 0
        %4961 = vmatprep.subr.bf16.mxu0 0
        %4962 = vmatpush1.bf16.msra.mxu0 0
        %4963 = vmatprep.subr.bf16.mxu0 0
        %4964 = vmatpush1.bf16.msra.mxu0 0
        %4965 = vmatprep.subr.bf16.mxu0 0
        %4966 = vmatpush1.bf16.msra.mxu0 0
        %4967 = vmatprep.subr.bf16.mxu0 0
        %4968 = vmatpush1.bf16.msra.mxu0 0
        %4969 = vmatprep.subr.bf16.mxu0 0
        %4970 = vmatpush1.bf16.msra.mxu0 0
        %4971 = vmatprep.subr.bf16.mxu0 0
        %4972 = vmatpush1.bf16.msra.mxu0 0
        %4973 = vmatprep.subr.bf16.mxu0 0
        %4974 = vmatpush1.bf16.msra.mxu0 0
        %4975 = vmatprep.mubr.bf16.mxu0 0
        %4976 = vmatmul.mubr.bf16.gmra.mrb[0].mxu0 %v4941
        %v4977 = vpop.f32.mrb[0].mxu0
        %v4978 = vadd.f32 %v4934, %v4977
        %v4979 = vpop.f32.mrb[0].mxu0
        %v4980 = vpop.f32.mrb[0].mxu0
        %v4981 = vadd.f32 %v4937, %v4980
        %v4982 = vpop.f32.mrb[0].mxu0
        %4983 = vdwg.mxu0
        %v4984 = vpack.c.bf16 %v4596, %v4592
        %v4985 = vmul.f32 %v4590, %v1058
        %v4986 = vmul.f32 %v4594, %v1058
        %v4987 = vpack.c.bf16 %v4986, %v4985
        %4988 = vmatprep.subr.bf16.mxu0 0
        %4989 = vmatpush1.bf16.xpose.msra.mxu0 %v4984
        %4990 = vmatprep.subr.bf16.mxu0 0
        %4991 = vmatpush1.bf16.xpose.msra.mxu0 0
        %4992 = vmatprep.subr.bf16.mxu0 0
        %4993 = vmatpush1.bf16.xpose.msra.mxu0 0
        %4994 = vmatprep.subr.bf16.mxu0 0
        %4995 = vmatpush1.bf16.xpose.msra.mxu0 0
        %4996 = vmatprep.subr.bf16.mxu0 0
        %4997 = vmatpush1.bf16.xpose.msra.mxu0 0
        %4998 = vmatprep.subr.bf16.mxu0 0
        %4999 = vmatpush1.bf16.xpose.msra.mxu0 0
        %5000 = vmatprep.subr.bf16.mxu0 0
        %5001 = vmatpush1.bf16.xpose.msra.mxu0 0
        %5002 = vmatprep.subr.bf16.mxu0 0
        %5003 = vmatpush1.bf16.xpose.msra.mxu0 0
        %5004 = vmatprep.subr.bf16.mxu0 0
        %5005 = vmatpush1.bf16.xpose.msra.mxu0 0
        %5006 = vmatprep.subr.bf16.mxu0 0
        %5007 = vmatpush1.bf16.xpose.msra.mxu0 0
        %5008 = vmatprep.subr.bf16.mxu0 0
        %5009 = vmatpush1.bf16.xpose.msra.mxu0 0
        %5010 = vmatprep.subr.bf16.mxu0 0
        %5011 = vmatpush1.bf16.xpose.msra.mxu0 0
        %5012 = vmatprep.subr.bf16.mxu0 0
        %5013 = vmatpush1.bf16.xpose.msra.mxu0 0
        %5014 = vmatprep.subr.bf16.mxu0 0
        %5015 = vmatpush1.bf16.xpose.msra.mxu0 0
        %5016 = vmatprep.subr.bf16.mxu0 0
        %5017 = vmatpush1.bf16.xpose.msra.mxu0 0
        %5018 = vmatprep.subr.bf16.mxu0 0
        %5019 = vmatpush1.bf16.xpose.msra.mxu0 0
        %5020 = vmatprep.mubr.bf16.mxu0 0
        %5021 = vmatmul.mubr.bf16.gmra.mrb[0].mxu0 %v4987
        %v5022 = vpop.f32.mrb[0].mxu0
        %v5023 = vadd.f32 %v1308, %v5022
        %v5024 = vpop.f32.mrb[0].mxu0
        %v5025 = vpop.f32.mrb[0].mxu0
        %v5026 = vadd.f32 %v1308, %v5025
        %v5027 = vpop.f32.mrb[0].mxu0
        %5028 = vdwg.mxu0
        %v5029 = vsel %vm1109, %v5023, -inf
        %5030 = vmax.xlane.f32.xlu0 %v5029
        %v5031 = vpop.xlane.xlu0 %5030
        %v5032 = vsel %vm1109, %v5026, -inf
        %5033 = vmax.xlane.f32.xlu0 %v5032
        %v5034 = vpop.xlane.xlu0 %5033
        %v5035 = vsub.f32 %v5023, %v5031
        %v5036 = vsub.f32 %v5026, %v5034
        %v5037 = vmul.f32 %v5035, 1.442695
        %v5038 = vpow.pop %v5037
        %v5039 = vmul.f32 %v5036, 1.442695
        %v5040 = vpow.pop %v5039
        %v5041 = vsel %vm1109, %v5038, 0.0
        %5042 = vadd.xlane.f32.xlu0 %v5041
        %v5043 = vpop.xlane.xlu0 %5042
        %v5044 = vsel %vm1109, %v5040, 0.0
        %5045 = vadd.xlane.f32.xlu0 %v5044
        %v5046 = vpop.xlane.xlu0 %5045
        %v5047 = vrcp.pop %v5043
        %v5048 = vrcp.pop %v5046
        %v5049 = vmul.f32 %v5038, %v5047
        %v5050 = vmul.f32 %v5040, %v5048
        %v5051 = vmul.f32 %v4701, %v1058
        %v5052 = vmul.f32 %v4704, %v1058
        %v5053 = vpack.c.bf16 %v5050, %v5049
        %v5054 = vpack.c.bf16 %v5052, %v5051
        %v5055 = vmul.f32 %v4590, %v1139
        %v5056 = vmul.f32 %v4594, %v1139
        %v5057 = vpack.c.bf16 %v5056, %v5055
        %5058 = vmatprep.subr.bf16.mxu0 0
        %5059 = vmatpush1.bf16.xpose.msra.mxu0 %v4984
        %5060 = vmatprep.subr.bf16.mxu0 0
        %5061 = vmatpush1.bf16.xpose.msra.mxu0 0
        %5062 = vmatprep.subr.bf16.mxu0 0
        %5063 = vmatpush1.bf16.xpose.msra.mxu0 0
        %5064 = vmatprep.subr.bf16.mxu0 0
        %5065 = vmatpush1.bf16.xpose.msra.mxu0 0
        %5066 = vmatprep.subr.bf16.mxu0 0
        %5067 = vmatpush1.bf16.xpose.msra.mxu0 0
        %5068 = vmatprep.subr.bf16.mxu0 0
        %5069 = vmatpush1.bf16.xpose.msra.mxu0 0
        %5070 = vmatprep.subr.bf16.mxu0 0
        %5071 = vmatpush1.bf16.xpose.msra.mxu0 0
        %5072 = vmatprep.subr.bf16.mxu0 0
        %5073 = vmatpush1.bf16.xpose.msra.mxu0 0
        %5074 = vmatprep.subr.bf16.mxu0 0
        %5075 = vmatpush1.bf16.xpose.msra.mxu0 0
        %5076 = vmatprep.subr.bf16.mxu0 0
        %5077 = vmatpush1.bf16.xpose.msra.mxu0 0
        %5078 = vmatprep.subr.bf16.mxu0 0
        %5079 = vmatpush1.bf16.xpose.msra.mxu0 0
        %5080 = vmatprep.subr.bf16.mxu0 0
        %5081 = vmatpush1.bf16.xpose.msra.mxu0 0
        %5082 = vmatprep.subr.bf16.mxu0 0
        %5083 = vmatpush1.bf16.xpose.msra.mxu0 0
        %5084 = vmatprep.subr.bf16.mxu0 0
        %5085 = vmatpush1.bf16.xpose.msra.mxu0 0
        %5086 = vmatprep.subr.bf16.mxu0 0
        %5087 = vmatpush1.bf16.xpose.msra.mxu0 0
        %5088 = vmatprep.subr.bf16.mxu0 0
        %5089 = vmatpush1.bf16.xpose.msra.mxu0 0
        %5090 = vmatprep.mubr.bf16.mxu0 0
        %5091 = vmatmul.mubr.bf16.gmra.mrb[0].mxu0 %v5057
        %v5092 = vpop.f32.mrb[0].mxu0
        %v5093 = vadd.f32 %v1308, %v5092
        %v5094 = vpop.f32.mrb[0].mxu0
        %v5095 = vpop.f32.mrb[0].mxu0
        %v5096 = vadd.f32 %v1308, %v5095
        %v5097 = vpop.f32.mrb[0].mxu0
        %5098 = vdwg.mxu0
        %v5099 = vsel %vm1109, %v5093, -inf
        %5100 = vmax.xlane.f32.xlu0 %v5099
        %v5101 = vpop.xlane.xlu0 %5100
        %v5102 = vsel %vm1109, %v5096, -inf
        %5103 = vmax.xlane.f32.xlu0 %v5102
        %v5104 = vpop.xlane.xlu0 %5103
        %v5105 = vsub.f32 %v5093, %v5101
        %v5106 = vsub.f32 %v5096, %v5104
        %v5107 = vmul.f32 %v5105, 1.442695
        %v5108 = vpow.pop %v5107
        %v5109 = vmul.f32 %v5106, 1.442695
        %v5110 = vpow.pop %v5109
        %v5111 = vsel %vm1109, %v5108, 0.0
        %5112 = vadd.xlane.f32.xlu0 %v5111
        %v5113 = vpop.xlane.xlu0 %5112
        %v5114 = vsel %vm1109, %v5110, 0.0
        %5115 = vadd.xlane.f32.xlu0 %v5114
        %v5116 = vpop.xlane.xlu0 %5115
        %v5117 = vrcp.pop %v5113
        %v5118 = vrcp.pop %v5116
        %v5119 = vmul.f32 %v5108, %v5117
        %v5120 = vmul.f32 %v5110, %v5118
        %v5121 = vmul.f32 %v4701, %v1139
        %v5122 = vmul.f32 %v4704, %v1139
        %v5123 = vpack.c.bf16 %v5120, %v5119
        %v5124 = vpack.c.bf16 %v5122, %v5121
        %v5126 = vsel %vm1109, %v5123, 0
        %5128 = vmatprep.subr.bf16.mxu0 0
        %5129 = vmatpush1.bf16.msra.mxu0 %v5124
        %5130 = vmatprep.subr.bf16.mxu0 0
        %5131 = vmatpush1.bf16.msra.mxu0 0
        %5132 = vmatprep.subr.bf16.mxu0 0
        %5133 = vmatpush1.bf16.msra.mxu0 0
        %5134 = vmatprep.subr.bf16.mxu0 0
        %5135 = vmatpush1.bf16.msra.mxu0 0
        %5136 = vmatprep.subr.bf16.mxu0 0
        %5137 = vmatpush1.bf16.msra.mxu0 0
        %5138 = vmatprep.subr.bf16.mxu0 0
        %5139 = vmatpush1.bf16.msra.mxu0 0
        %5140 = vmatprep.subr.bf16.mxu0 0
        %5141 = vmatpush1.bf16.msra.mxu0 0
        %5142 = vmatprep.subr.bf16.mxu0 0
        %5143 = vmatpush1.bf16.msra.mxu0 0
        %5144 = vmatprep.subr.bf16.mxu0 0
        %5145 = vmatpush1.bf16.msra.mxu0 0
        %5146 = vmatprep.subr.bf16.mxu0 0
        %5147 = vmatpush1.bf16.msra.mxu0 0
        %5148 = vmatprep.subr.bf16.mxu0 0
        %5149 = vmatpush1.bf16.msra.mxu0 0
        %5150 = vmatprep.subr.bf16.mxu0 0
        %5151 = vmatpush1.bf16.msra.mxu0 0
        %5152 = vmatprep.subr.bf16.mxu0 0
        %5153 = vmatpush1.bf16.msra.mxu0 0
        %5154 = vmatprep.subr.bf16.mxu0 0
        %5155 = vmatpush1.bf16.msra.mxu0 0
        %5156 = vmatprep.subr.bf16.mxu0 0
        %5157 = vmatpush1.bf16.msra.mxu0 0
        %5158 = vmatprep.subr.bf16.mxu0 0
        %5159 = vmatpush1.bf16.msra.mxu0 0
        %5160 = vmatprep.mubr.bf16.mxu0 0
        %5161 = vmatmul.mubr.bf16.gmra.mrb[0].mxu0 %v5126
        %v5162 = vpop.f32.mrb[0].mxu0
        %v5163 = vadd.f32 0.0, %v5162
        %v5164 = vpop.f32.mrb[0].mxu0
        %v5165 = vpop.f32.mrb[0].mxu0
        %v5166 = vadd.f32 0.0, %v5165
        %v5167 = vpop.f32.mrb[0].mxu0
        %5168 = vdwg.mxu0
        %v5170 = vsel %vm1109, %v5053, 0
        %5172 = vmatprep.subr.bf16.mxu0 0
        %5173 = vmatpush1.bf16.msra.mxu0 %v5054
        %5174 = vmatprep.subr.bf16.mxu0 0
        %5175 = vmatpush1.bf16.msra.mxu0 0
        %5176 = vmatprep.subr.bf16.mxu0 0
        %5177 = vmatpush1.bf16.msra.mxu0 0
        %5178 = vmatprep.subr.bf16.mxu0 0
        %5179 = vmatpush1.bf16.msra.mxu0 0
        %5180 = vmatprep.subr.bf16.mxu0 0
        %5181 = vmatpush1.bf16.msra.mxu0 0
        %5182 = vmatprep.subr.bf16.mxu0 0
        %5183 = vmatpush1.bf16.msra.mxu0 0
        %5184 = vmatprep.subr.bf16.mxu0 0
        %5185 = vmatpush1.bf16.msra.mxu0 0
        %5186 = vmatprep.subr.bf16.mxu0 0
        %5187 = vmatpush1.bf16.msra.mxu0 0
        %5188 = vmatprep.subr.bf16.mxu0 0
        %5189 = vmatpush1.bf16.msra.mxu0 0
        %5190 = vmatprep.subr.bf16.mxu0 0
        %5191 = vmatpush1.bf16.msra.mxu0 0
        %5192 = vmatprep.subr.bf16.mxu0 0
        %5193 = vmatpush1.bf16.msra.mxu0 0
        %5194 = vmatprep.subr.bf16.mxu0 0
        %5195 = vmatpush1.bf16.msra.mxu0 0
        %5196 = vmatprep.subr.bf16.mxu0 0
        %5197 = vmatpush1.bf16.msra.mxu0 0
        %5198 = vmatprep.subr.bf16.mxu0 0
        %5199 = vmatpush1.bf16.msra.mxu0 0
        %5200 = vmatprep.subr.bf16.mxu0 0
        %5201 = vmatpush1.bf16.msra.mxu0 0
        %5202 = vmatprep.subr.bf16.mxu0 0
        %5203 = vmatpush1.bf16.msra.mxu0 0
        %5204 = vmatprep.mubr.bf16.mxu0 0
        %5205 = vmatmul.mubr.bf16.gmra.mrb[0].mxu0 %v5170
        %v5206 = vpop.f32.mrb[0].mxu0
        %v5207 = vadd.f32 %v5163, %v5206
        %v5208 = vpop.f32.mrb[0].mxu0
        %v5209 = vpop.f32.mrb[0].mxu0
        %v5210 = vadd.f32 %v5166, %v5209
        %v5211 = vpop.f32.mrb[0].mxu0
        %5212 = vdwg.mxu0
        %v5213 = vpack.c.bf16 %v4606, %v4602
        %v5214 = vmul.f32 %v4600, %v1058
        %v5215 = vmul.f32 %v4604, %v1058
        %v5216 = vpack.c.bf16 %v5215, %v5214
        %5217 = vmatprep.subr.bf16.mxu0 0
        %5218 = vmatpush1.bf16.xpose.msra.mxu0 %v5213
        %5219 = vmatprep.subr.bf16.mxu0 0
        %5220 = vmatpush1.bf16.xpose.msra.mxu0 0
        %5221 = vmatprep.subr.bf16.mxu0 0
        %5222 = vmatpush1.bf16.xpose.msra.mxu0 0
        %5223 = vmatprep.subr.bf16.mxu0 0
        %5224 = vmatpush1.bf16.xpose.msra.mxu0 0
        %5225 = vmatprep.subr.bf16.mxu0 0
        %5226 = vmatpush1.bf16.xpose.msra.mxu0 0
        %5227 = vmatprep.subr.bf16.mxu0 0
        %5228 = vmatpush1.bf16.xpose.msra.mxu0 0
        %5229 = vmatprep.subr.bf16.mxu0 0
        %5230 = vmatpush1.bf16.xpose.msra.mxu0 0
        %5231 = vmatprep.subr.bf16.mxu0 0
        %5232 = vmatpush1.bf16.xpose.msra.mxu0 0
        %5233 = vmatprep.subr.bf16.mxu0 0
        %5234 = vmatpush1.bf16.xpose.msra.mxu0 0
        %5235 = vmatprep.subr.bf16.mxu0 0
        %5236 = vmatpush1.bf16.xpose.msra.mxu0 0
        %5237 = vmatprep.subr.bf16.mxu0 0
        %5238 = vmatpush1.bf16.xpose.msra.mxu0 0
        %5239 = vmatprep.subr.bf16.mxu0 0
        %5240 = vmatpush1.bf16.xpose.msra.mxu0 0
        %5241 = vmatprep.subr.bf16.mxu0 0
        %5242 = vmatpush1.bf16.xpose.msra.mxu0 0
        %5243 = vmatprep.subr.bf16.mxu0 0
        %5244 = vmatpush1.bf16.xpose.msra.mxu0 0
        %5245 = vmatprep.subr.bf16.mxu0 0
        %5246 = vmatpush1.bf16.xpose.msra.mxu0 0
        %5247 = vmatprep.subr.bf16.mxu0 0
        %5248 = vmatpush1.bf16.xpose.msra.mxu0 0
        %5249 = vmatprep.mubr.bf16.mxu0 0
        %5250 = vmatmul.mubr.bf16.gmra.mrb[0].mxu0 %v5216
        %v5251 = vpop.f32.mrb[0].mxu0
        %v5252 = vadd.f32 %v1545, %v5251
        %v5253 = vpop.f32.mrb[0].mxu0
        %v5254 = vpop.f32.mrb[0].mxu0
        %v5255 = vadd.f32 %v1545, %v5254
        %v5256 = vpop.f32.mrb[0].mxu0
        %5257 = vdwg.mxu0
        %v5258 = vsel %vm1109, %v5252, -inf
        %5259 = vmax.xlane.f32.xlu0 %v5258
        %v5260 = vpop.xlane.xlu0 %5259
        %v5261 = vsel %vm1109, %v5255, -inf
        %5262 = vmax.xlane.f32.xlu0 %v5261
        %v5263 = vpop.xlane.xlu0 %5262
        %v5264 = vsub.f32 %v5252, %v5260
        %v5265 = vsub.f32 %v5255, %v5263
        %v5266 = vmul.f32 %v5264, 1.442695
        %v5267 = vpow.pop %v5266
        %v5268 = vmul.f32 %v5265, 1.442695
        %v5269 = vpow.pop %v5268
        %v5270 = vsel %vm1109, %v5267, 0.0
        %5271 = vadd.xlane.f32.xlu0 %v5270
        %v5272 = vpop.xlane.xlu0 %5271
        %v5273 = vsel %vm1109, %v5269, 0.0
        %5274 = vadd.xlane.f32.xlu0 %v5273
        %v5275 = vpop.xlane.xlu0 %5274
        %v5276 = vrcp.pop %v5272
        %v5277 = vrcp.pop %v5275
        %v5278 = vmul.f32 %v5267, %v5276
        %v5279 = vmul.f32 %v5269, %v5277
        %v5280 = vmul.f32 %v4709, %v1058
        %v5281 = vmul.f32 %v4712, %v1058
        %v5282 = vpack.c.bf16 %v5279, %v5278
        %v5283 = vpack.c.bf16 %v5281, %v5280
        %v5284 = vmul.f32 %v4600, %v1139
        %v5285 = vmul.f32 %v4604, %v1139
        %v5286 = vpack.c.bf16 %v5285, %v5284
        %5287 = vmatprep.subr.bf16.mxu0 0
        %5288 = vmatpush1.bf16.xpose.msra.mxu0 %v5213
        %5289 = vmatprep.subr.bf16.mxu0 0
        %5290 = vmatpush1.bf16.xpose.msra.mxu0 0
        %5291 = vmatprep.subr.bf16.mxu0 0
        %5292 = vmatpush1.bf16.xpose.msra.mxu0 0
        %5293 = vmatprep.subr.bf16.mxu0 0
        %5294 = vmatpush1.bf16.xpose.msra.mxu0 0
        %5295 = vmatprep.subr.bf16.mxu0 0
        %5296 = vmatpush1.bf16.xpose.msra.mxu0 0
        %5297 = vmatprep.subr.bf16.mxu0 0
        %5298 = vmatpush1.bf16.xpose.msra.mxu0 0
        %5299 = vmatprep.subr.bf16.mxu0 0
        %5300 = vmatpush1.bf16.xpose.msra.mxu0 0
        %5301 = vmatprep.subr.bf16.mxu0 0
        %5302 = vmatpush1.bf16.xpose.msra.mxu0 0
        %5303 = vmatprep.subr.bf16.mxu0 0
        %5304 = vmatpush1.bf16.xpose.msra.mxu0 0
        %5305 = vmatprep.subr.bf16.mxu0 0
        %5306 = vmatpush1.bf16.xpose.msra.mxu0 0
        %5307 = vmatprep.subr.bf16.mxu0 0
        %5308 = vmatpush1.bf16.xpose.msra.mxu0 0
        %5309 = vmatprep.subr.bf16.mxu0 0
        %5310 = vmatpush1.bf16.xpose.msra.mxu0 0
        %5311 = vmatprep.subr.bf16.mxu0 0
        %5312 = vmatpush1.bf16.xpose.msra.mxu0 0
        %5313 = vmatprep.subr.bf16.mxu0 0
        %5314 = vmatpush1.bf16.xpose.msra.mxu0 0
        %5315 = vmatprep.subr.bf16.mxu0 0
        %5316 = vmatpush1.bf16.xpose.msra.mxu0 0
        %5317 = vmatprep.subr.bf16.mxu0 0
        %5318 = vmatpush1.bf16.xpose.msra.mxu0 0
        %5319 = vmatprep.mubr.bf16.mxu0 0
        %5320 = vmatmul.mubr.bf16.gmra.mrb[0].mxu0 %v5286
        %v5321 = vpop.f32.mrb[0].mxu0
        %v5322 = vadd.f32 %v1545, %v5321
        %v5323 = vpop.f32.mrb[0].mxu0
        %v5324 = vpop.f32.mrb[0].mxu0
        %v5325 = vadd.f32 %v1545, %v5324
        %v5326 = vpop.f32.mrb[0].mxu0
        %5327 = vdwg.mxu0
        %v5328 = vsel %vm1109, %v5322, -inf
        %5329 = vmax.xlane.f32.xlu0 %v5328
        %v5330 = vpop.xlane.xlu0 %5329
        %v5331 = vsel %vm1109, %v5325, -inf
        %5332 = vmax.xlane.f32.xlu0 %v5331
        %v5333 = vpop.xlane.xlu0 %5332
        %v5334 = vsub.f32 %v5322, %v5330
        %v5335 = vsub.f32 %v5325, %v5333
        %v5336 = vmul.f32 %v5334, 1.442695
        %v5337 = vpow.pop %v5336
        %v5338 = vmul.f32 %v5335, 1.442695
        %v5339 = vpow.pop %v5338
        %v5340 = vsel %vm1109, %v5337, 0.0
        %5341 = vadd.xlane.f32.xlu0 %v5340
        %v5342 = vpop.xlane.xlu0 %5341
        %v5343 = vsel %vm1109, %v5339, 0.0
        %5344 = vadd.xlane.f32.xlu0 %v5343
        %v5345 = vpop.xlane.xlu0 %5344
        %v5346 = vrcp.pop %v5342
        %v5347 = vrcp.pop %v5345
        %v5348 = vmul.f32 %v5337, %v5346
        %v5349 = vmul.f32 %v5339, %v5347
        %v5350 = vmul.f32 %v4709, %v1139
        %v5351 = vmul.f32 %v4712, %v1139
        %v5352 = vpack.c.bf16 %v5349, %v5348
        %v5353 = vpack.c.bf16 %v5351, %v5350
        %v5355 = vsel %vm1109, %v5352, 0
        %5357 = vmatprep.subr.bf16.mxu0 0
        %5358 = vmatpush1.bf16.msra.mxu0 %v5353
        %5359 = vmatprep.subr.bf16.mxu0 0
        %5360 = vmatpush1.bf16.msra.mxu0 0
        %5361 = vmatprep.subr.bf16.mxu0 0
        %5362 = vmatpush1.bf16.msra.mxu0 0
        %5363 = vmatprep.subr.bf16.mxu0 0
        %5364 = vmatpush1.bf16.msra.mxu0 0
        %5365 = vmatprep.subr.bf16.mxu0 0
        %5366 = vmatpush1.bf16.msra.mxu0 0
        %5367 = vmatprep.subr.bf16.mxu0 0
        %5368 = vmatpush1.bf16.msra.mxu0 0
        %5369 = vmatprep.subr.bf16.mxu0 0
        %5370 = vmatpush1.bf16.msra.mxu0 0
        %5371 = vmatprep.subr.bf16.mxu0 0
        %5372 = vmatpush1.bf16.msra.mxu0 0
        %5373 = vmatprep.subr.bf16.mxu0 0
        %5374 = vmatpush1.bf16.msra.mxu0 0
        %5375 = vmatprep.subr.bf16.mxu0 0
        %5376 = vmatpush1.bf16.msra.mxu0 0
        %5377 = vmatprep.subr.bf16.mxu0 0
        %5378 = vmatpush1.bf16.msra.mxu0 0
        %5379 = vmatprep.subr.bf16.mxu0 0
        %5380 = vmatpush1.bf16.msra.mxu0 0
        %5381 = vmatprep.subr.bf16.mxu0 0
        %5382 = vmatpush1.bf16.msra.mxu0 0
        %5383 = vmatprep.subr.bf16.mxu0 0
        %5384 = vmatpush1.bf16.msra.mxu0 0
        %5385 = vmatprep.subr.bf16.mxu0 0
        %5386 = vmatpush1.bf16.msra.mxu0 0
        %5387 = vmatprep.subr.bf16.mxu0 0
        %5388 = vmatpush1.bf16.msra.mxu0 0
        %5389 = vmatprep.mubr.bf16.mxu0 0
        %5390 = vmatmul.mubr.bf16.gmra.mrb[0].mxu0 %v5355
        %v5391 = vpop.f32.mrb[0].mxu0
        %v5392 = vadd.f32 0.0, %v5391
        %v5393 = vpop.f32.mrb[0].mxu0
        %v5394 = vpop.f32.mrb[0].mxu0
        %v5395 = vadd.f32 0.0, %v5394
        %v5396 = vpop.f32.mrb[0].mxu0
        %5397 = vdwg.mxu0
        %v5399 = vsel %vm1109, %v5282, 0
        %5401 = vmatprep.subr.bf16.mxu0 0
        %5402 = vmatpush1.bf16.msra.mxu0 %v5283
        %5403 = vmatprep.subr.bf16.mxu0 0
        %5404 = vmatpush1.bf16.msra.mxu0 0
        %5405 = vmatprep.subr.bf16.mxu0 0
        %5406 = vmatpush1.bf16.msra.mxu0 0
        %5407 = vmatprep.subr.bf16.mxu0 0
        %5408 = vmatpush1.bf16.msra.mxu0 0
        %5409 = vmatprep.subr.bf16.mxu0 0
        %5410 = vmatpush1.bf16.msra.mxu0 0
        %5411 = vmatprep.subr.bf16.mxu0 0
        %5412 = vmatpush1.bf16.msra.mxu0 0
        %5413 = vmatprep.subr.bf16.mxu0 0
        %5414 = vmatpush1.bf16.msra.mxu0 0
        %5415 = vmatprep.subr.bf16.mxu0 0
        %5416 = vmatpush1.bf16.msra.mxu0 0
        %5417 = vmatprep.subr.bf16.mxu0 0
        %5418 = vmatpush1.bf16.msra.mxu0 0
        %5419 = vmatprep.subr.bf16.mxu0 0
        %5420 = vmatpush1.bf16.msra.mxu0 0
        %5421 = vmatprep.subr.bf16.mxu0 0
        %5422 = vmatpush1.bf16.msra.mxu0 0
        %5423 = vmatprep.subr.bf16.mxu0 0
        %5424 = vmatpush1.bf16.msra.mxu0 0
        %5425 = vmatprep.subr.bf16.mxu0 0
        %5426 = vmatpush1.bf16.msra.mxu0 0
        %5427 = vmatprep.subr.bf16.mxu0 0
        %5428 = vmatpush1.bf16.msra.mxu0 0
        %5429 = vmatprep.subr.bf16.mxu0 0
        %5430 = vmatpush1.bf16.msra.mxu0 0
        %5431 = vmatprep.subr.bf16.mxu0 0
        %5432 = vmatpush1.bf16.msra.mxu0 0
        %5433 = vmatprep.mubr.bf16.mxu0 0
        %5434 = vmatmul.mubr.bf16.gmra.mrb[0].mxu0 %v5399
        %v5435 = vpop.f32.mrb[0].mxu0
        %v5436 = vadd.f32 %v5392, %v5435
        %v5437 = vpop.f32.mrb[0].mxu0
        %v5438 = vpop.f32.mrb[0].mxu0
        %v5439 = vadd.f32 %v5395, %v5438
        %v5440 = vpop.f32.mrb[0].mxu0
        %5441 = vdwg.mxu0
        %v5442 = vpack.c.bf16 %v4616, %v4612
        %v5443 = vmul.f32 %v4610, %v1058
        %v5444 = vmul.f32 %v4614, %v1058
        %v5445 = vpack.c.bf16 %v5444, %v5443
        %5446 = vmatprep.subr.bf16.mxu0 0
        %5447 = vmatpush1.bf16.xpose.msra.mxu0 %v5442
        %5448 = vmatprep.subr.bf16.mxu0 0
        %5449 = vmatpush1.bf16.xpose.msra.mxu0 0
        %5450 = vmatprep.subr.bf16.mxu0 0
        %5451 = vmatpush1.bf16.xpose.msra.mxu0 0
        %5452 = vmatprep.subr.bf16.mxu0 0
        %5453 = vmatpush1.bf16.xpose.msra.mxu0 0
        %5454 = vmatprep.subr.bf16.mxu0 0
        %5455 = vmatpush1.bf16.xpose.msra.mxu0 0
        %5456 = vmatprep.subr.bf16.mxu0 0
        %5457 = vmatpush1.bf16.xpose.msra.mxu0 0
        %5458 = vmatprep.subr.bf16.mxu0 0
        %5459 = vmatpush1.bf16.xpose.msra.mxu0 0
        %5460 = vmatprep.subr.bf16.mxu0 0
        %5461 = vmatpush1.bf16.xpose.msra.mxu0 0
        %5462 = vmatprep.subr.bf16.mxu0 0
        %5463 = vmatpush1.bf16.xpose.msra.mxu0 0
        %5464 = vmatprep.subr.bf16.mxu0 0
        %5465 = vmatpush1.bf16.xpose.msra.mxu0 0
        %5466 = vmatprep.subr.bf16.mxu0 0
        %5467 = vmatpush1.bf16.xpose.msra.mxu0 0
        %5468 = vmatprep.subr.bf16.mxu0 0
        %5469 = vmatpush1.bf16.xpose.msra.mxu0 0
        %5470 = vmatprep.subr.bf16.mxu0 0
        %5471 = vmatpush1.bf16.xpose.msra.mxu0 0
        %5472 = vmatprep.subr.bf16.mxu0 0
        %5473 = vmatpush1.bf16.xpose.msra.mxu0 0
        %5474 = vmatprep.subr.bf16.mxu0 0
        %5475 = vmatpush1.bf16.xpose.msra.mxu0 0
        %5476 = vmatprep.subr.bf16.mxu0 0
        %5477 = vmatpush1.bf16.xpose.msra.mxu0 0
        %5478 = vmatprep.mubr.bf16.mxu0 0
        %5479 = vmatmul.mubr.bf16.gmra.mrb[0].mxu0 %v5445
        %v5480 = vpop.f32.mrb[0].mxu0
        %v5481 = vadd.f32 %v1782, %v5480
        %v5482 = vpop.f32.mrb[0].mxu0
        %v5483 = vpop.f32.mrb[0].mxu0
        %v5484 = vadd.f32 %v1782, %v5483
        %v5485 = vpop.f32.mrb[0].mxu0
        %5486 = vdwg.mxu0
        %v5487 = vsel %vm1109, %v5481, -inf
        %5488 = vmax.xlane.f32.xlu0 %v5487
        %v5489 = vpop.xlane.xlu0 %5488
        %v5490 = vsel %vm1109, %v5484, -inf
        %5491 = vmax.xlane.f32.xlu0 %v5490
        %v5492 = vpop.xlane.xlu0 %5491
        %v5493 = vsub.f32 %v5481, %v5489
        %v5494 = vsub.f32 %v5484, %v5492
        %v5495 = vmul.f32 %v5493, 1.442695
        %v5496 = vpow.pop %v5495
        %v5497 = vmul.f32 %v5494, 1.442695
        %v5498 = vpow.pop %v5497
        %v5499 = vsel %vm1109, %v5496, 0.0
        %5500 = vadd.xlane.f32.xlu0 %v5499
        %v5501 = vpop.xlane.xlu0 %5500
        %v5502 = vsel %vm1109, %v5498, 0.0
        %5503 = vadd.xlane.f32.xlu0 %v5502
        %v5504 = vpop.xlane.xlu0 %5503
        %v5505 = vrcp.pop %v5501
        %v5506 = vrcp.pop %v5504
        %v5507 = vmul.f32 %v5496, %v5505
        %v5508 = vmul.f32 %v5498, %v5506
        %v5509 = vmul.f32 %v4717, %v1058
        %v5510 = vmul.f32 %v4720, %v1058
        %v5511 = vpack.c.bf16 %v5508, %v5507
        %v5512 = vpack.c.bf16 %v5510, %v5509
        %v5513 = vmul.f32 %v4610, %v1139
        %v5514 = vmul.f32 %v4614, %v1139
        %v5515 = vpack.c.bf16 %v5514, %v5513
        %5516 = vmatprep.subr.bf16.mxu0 0
        %5517 = vmatpush1.bf16.xpose.msra.mxu0 %v5442
        %5518 = vmatprep.subr.bf16.mxu0 0
        %5519 = vmatpush1.bf16.xpose.msra.mxu0 0
        %5520 = vmatprep.subr.bf16.mxu0 0
        %5521 = vmatpush1.bf16.xpose.msra.mxu0 0
        %5522 = vmatprep.subr.bf16.mxu0 0
        %5523 = vmatpush1.bf16.xpose.msra.mxu0 0
        %5524 = vmatprep.subr.bf16.mxu0 0
        %5525 = vmatpush1.bf16.xpose.msra.mxu0 0
        %5526 = vmatprep.subr.bf16.mxu0 0
        %5527 = vmatpush1.bf16.xpose.msra.mxu0 0
        %5528 = vmatprep.subr.bf16.mxu0 0
        %5529 = vmatpush1.bf16.xpose.msra.mxu0 0
        %5530 = vmatprep.subr.bf16.mxu0 0
        %5531 = vmatpush1.bf16.xpose.msra.mxu0 0
        %5532 = vmatprep.subr.bf16.mxu0 0
        %5533 = vmatpush1.bf16.xpose.msra.mxu0 0
        %5534 = vmatprep.subr.bf16.mxu0 0
        %5535 = vmatpush1.bf16.xpose.msra.mxu0 0
        %5536 = vmatprep.subr.bf16.mxu0 0
        %5537 = vmatpush1.bf16.xpose.msra.mxu0 0
        %5538 = vmatprep.subr.bf16.mxu0 0
        %5539 = vmatpush1.bf16.xpose.msra.mxu0 0
        %5540 = vmatprep.subr.bf16.mxu0 0
        %5541 = vmatpush1.bf16.xpose.msra.mxu0 0
        %5542 = vmatprep.subr.bf16.mxu0 0
        %5543 = vmatpush1.bf16.xpose.msra.mxu0 0
        %5544 = vmatprep.subr.bf16.mxu0 0
        %5545 = vmatpush1.bf16.xpose.msra.mxu0 0
        %5546 = vmatprep.subr.bf16.mxu0 0
        %5547 = vmatpush1.bf16.xpose.msra.mxu0 0
        %5548 = vmatprep.mubr.bf16.mxu0 0
        %5549 = vmatmul.mubr.bf16.gmra.mrb[0].mxu0 %v5515
        %v5550 = vpop.f32.mrb[0].mxu0
        %v5551 = vadd.f32 %v1782, %v5550
        %v5552 = vpop.f32.mrb[0].mxu0
        %v5553 = vpop.f32.mrb[0].mxu0
        %v5554 = vadd.f32 %v1782, %v5553
        %v5555 = vpop.f32.mrb[0].mxu0
        %5556 = vdwg.mxu0
        %v5557 = vsel %vm1109, %v5551, -inf
        %5558 = vmax.xlane.f32.xlu0 %v5557
        %v5559 = vpop.xlane.xlu0 %5558
        %v5560 = vsel %vm1109, %v5554, -inf
        %5561 = vmax.xlane.f32.xlu0 %v5560
        %v5562 = vpop.xlane.xlu0 %5561
        %v5563 = vsub.f32 %v5551, %v5559
        %v5564 = vsub.f32 %v5554, %v5562
        %v5565 = vmul.f32 %v5563, 1.442695
        %v5566 = vpow.pop %v5565
        %v5567 = vmul.f32 %v5564, 1.442695
        %v5568 = vpow.pop %v5567
        %v5569 = vsel %vm1109, %v5566, 0.0
        %5570 = vadd.xlane.f32.xlu0 %v5569
        %v5571 = vpop.xlane.xlu0 %5570
        %v5572 = vsel %vm1109, %v5568, 0.0
        %5573 = vadd.xlane.f32.xlu0 %v5572
        %v5574 = vpop.xlane.xlu0 %5573
        %v5575 = vrcp.pop %v5571
        %v5576 = vrcp.pop %v5574
        %v5577 = vmul.f32 %v5566, %v5575
        %v5578 = vmul.f32 %v5568, %v5576
        %v5579 = vmul.f32 %v4717, %v1139
        %v5580 = vmul.f32 %v4720, %v1139
        %v5581 = vpack.c.bf16 %v5578, %v5577
        %v5582 = vpack.c.bf16 %v5580, %v5579
        %v5584 = vsel %vm1109, %v5581, 0
        %5586 = vmatprep.subr.bf16.mxu0 0
        %5587 = vmatpush1.bf16.msra.mxu0 %v5582
        %5588 = vmatprep.subr.bf16.mxu0 0
        %5589 = vmatpush1.bf16.msra.mxu0 0
        %5590 = vmatprep.subr.bf16.mxu0 0
        %5591 = vmatpush1.bf16.msra.mxu0 0
        %5592 = vmatprep.subr.bf16.mxu0 0
        %5593 = vmatpush1.bf16.msra.mxu0 0
        %5594 = vmatprep.subr.bf16.mxu0 0
        %5595 = vmatpush1.bf16.msra.mxu0 0
        %5596 = vmatprep.subr.bf16.mxu0 0
        %5597 = vmatpush1.bf16.msra.mxu0 0
        %5598 = vmatprep.subr.bf16.mxu0 0
        %5599 = vmatpush1.bf16.msra.mxu0 0
        %5600 = vmatprep.subr.bf16.mxu0 0
        %5601 = vmatpush1.bf16.msra.mxu0 0
        %5602 = vmatprep.subr.bf16.mxu0 0
        %5603 = vmatpush1.bf16.msra.mxu0 0
        %5604 = vmatprep.subr.bf16.mxu0 0
        %5605 = vmatpush1.bf16.msra.mxu0 0
        %5606 = vmatprep.subr.bf16.mxu0 0
        %5607 = vmatpush1.bf16.msra.mxu0 0
        %5608 = vmatprep.subr.bf16.mxu0 0
        %5609 = vmatpush1.bf16.msra.mxu0 0
        %5610 = vmatprep.subr.bf16.mxu0 0
        %5611 = vmatpush1.bf16.msra.mxu0 0
        %5612 = vmatprep.subr.bf16.mxu0 0
        %5613 = vmatpush1.bf16.msra.mxu0 0
        %5614 = vmatprep.subr.bf16.mxu0 0
        %5615 = vmatpush1.bf16.msra.mxu0 0
        %5616 = vmatprep.subr.bf16.mxu0 0
        %5617 = vmatpush1.bf16.msra.mxu0 0
        %5618 = vmatprep.mubr.bf16.mxu0 0
        %5619 = vmatmul.mubr.bf16.gmra.mrb[0].mxu0 %v5584
        %v5620 = vpop.f32.mrb[0].mxu0
        %v5621 = vadd.f32 0.0, %v5620
        %v5622 = vpop.f32.mrb[0].mxu0
        %v5623 = vpop.f32.mrb[0].mxu0
        %v5624 = vadd.f32 0.0, %v5623
        %v5625 = vpop.f32.mrb[0].mxu0
        %5626 = vdwg.mxu0
        %v5628 = vsel %vm1109, %v5511, 0
        %5630 = vmatprep.subr.bf16.mxu0 0
        %5631 = vmatpush1.bf16.msra.mxu0 %v5512
        %5632 = vmatprep.subr.bf16.mxu0 0
        %5633 = vmatpush1.bf16.msra.mxu0 0
        %5634 = vmatprep.subr.bf16.mxu0 0
        %5635 = vmatpush1.bf16.msra.mxu0 0
        %5636 = vmatprep.subr.bf16.mxu0 0
        %5637 = vmatpush1.bf16.msra.mxu0 0
        %5638 = vmatprep.subr.bf16.mxu0 0
        %5639 = vmatpush1.bf16.msra.mxu0 0
        %5640 = vmatprep.subr.bf16.mxu0 0
        %5641 = vmatpush1.bf16.msra.mxu0 0
        %5642 = vmatprep.subr.bf16.mxu0 0
        %5643 = vmatpush1.bf16.msra.mxu0 0
        %5644 = vmatprep.subr.bf16.mxu0 0
        %5645 = vmatpush1.bf16.msra.mxu0 0
        %5646 = vmatprep.subr.bf16.mxu0 0
        %5647 = vmatpush1.bf16.msra.mxu0 0
        %5648 = vmatprep.subr.bf16.mxu0 0
        %5649 = vmatpush1.bf16.msra.mxu0 0
        %5650 = vmatprep.subr.bf16.mxu0 0
        %5651 = vmatpush1.bf16.msra.mxu0 0
        %5652 = vmatprep.subr.bf16.mxu0 0
        %5653 = vmatpush1.bf16.msra.mxu0 0
        %5654 = vmatprep.subr.bf16.mxu0 0
        %5655 = vmatpush1.bf16.msra.mxu0 0
        %5656 = vmatprep.subr.bf16.mxu0 0
        %5657 = vmatpush1.bf16.msra.mxu0 0
        %5658 = vmatprep.subr.bf16.mxu0 0
        %5659 = vmatpush1.bf16.msra.mxu0 0
        %5660 = vmatprep.subr.bf16.mxu0 0
        %5661 = vmatpush1.bf16.msra.mxu0 0
        %5662 = vmatprep.mubr.bf16.mxu0 0
        %5663 = vmatmul.mubr.bf16.gmra.mrb[0].mxu0 %v5628
        %v5664 = vpop.f32.mrb[0].mxu0
        %v5665 = vadd.f32 %v5621, %v5664
        %v5666 = vpop.f32.mrb[0].mxu0
        %v5667 = vpop.f32.mrb[0].mxu0
        %v5668 = vadd.f32 %v5624, %v5667
        %v5669 = vpop.f32.mrb[0].mxu0
        %5670 = vdwg.mxu0
        %v5671 = vpack.c.bf16 %v4626, %v4622
        %v5672 = vmul.f32 %v4620, %v1058
        %v5673 = vmul.f32 %v4624, %v1058
        %v5674 = vpack.c.bf16 %v5673, %v5672
        %5675 = vmatprep.subr.bf16.mxu0 0
        %5676 = vmatpush1.bf16.xpose.msra.mxu0 %v5671
        %5677 = vmatprep.subr.bf16.mxu0 0
        %5678 = vmatpush1.bf16.xpose.msra.mxu0 0
        %5679 = vmatprep.subr.bf16.mxu0 0
        %5680 = vmatpush1.bf16.xpose.msra.mxu0 0
        %5681 = vmatprep.subr.bf16.mxu0 0
        %5682 = vmatpush1.bf16.xpose.msra.mxu0 0
        %5683 = vmatprep.subr.bf16.mxu0 0
        %5684 = vmatpush1.bf16.xpose.msra.mxu0 0
        %5685 = vmatprep.subr.bf16.mxu0 0
        %5686 = vmatpush1.bf16.xpose.msra.mxu0 0
        %5687 = vmatprep.subr.bf16.mxu0 0
        %5688 = vmatpush1.bf16.xpose.msra.mxu0 0
        %5689 = vmatprep.subr.bf16.mxu0 0
        %5690 = vmatpush1.bf16.xpose.msra.mxu0 0
        %5691 = vmatprep.subr.bf16.mxu0 0
        %5692 = vmatpush1.bf16.xpose.msra.mxu0 0
        %5693 = vmatprep.subr.bf16.mxu0 0
        %5694 = vmatpush1.bf16.xpose.msra.mxu0 0
        %5695 = vmatprep.subr.bf16.mxu0 0
        %5696 = vmatpush1.bf16.xpose.msra.mxu0 0
        %5697 = vmatprep.subr.bf16.mxu0 0
        %5698 = vmatpush1.bf16.xpose.msra.mxu0 0
        %5699 = vmatprep.subr.bf16.mxu0 0
        %5700 = vmatpush1.bf16.xpose.msra.mxu0 0
        %5701 = vmatprep.subr.bf16.mxu0 0
        %5702 = vmatpush1.bf16.xpose.msra.mxu0 0
        %5703 = vmatprep.subr.bf16.mxu0 0
        %5704 = vmatpush1.bf16.xpose.msra.mxu0 0
        %5705 = vmatprep.subr.bf16.mxu0 0
        %5706 = vmatpush1.bf16.xpose.msra.mxu0 0
        %5707 = vmatprep.mubr.bf16.mxu0 0
        %5708 = vmatmul.mubr.bf16.gmra.mrb[0].mxu0 %v5674
        %v5709 = vpop.f32.mrb[0].mxu0
        %v5710 = vadd.f32 %v2019, %v5709
        %v5711 = vpop.f32.mrb[0].mxu0
        %v5712 = vpop.f32.mrb[0].mxu0
        %v5713 = vadd.f32 %v2019, %v5712
        %v5714 = vpop.f32.mrb[0].mxu0
        %5715 = vdwg.mxu0
        %v5716 = vsel %vm1109, %v5710, -inf
        %5717 = vmax.xlane.f32.xlu0 %v5716
        %v5718 = vpop.xlane.xlu0 %5717
        %v5719 = vsel %vm1109, %v5713, -inf
        %5720 = vmax.xlane.f32.xlu0 %v5719
        %v5721 = vpop.xlane.xlu0 %5720
        %v5722 = vsub.f32 %v5710, %v5718
        %v5723 = vsub.f32 %v5713, %v5721
        %v5724 = vmul.f32 %v5722, 1.442695
        %v5725 = vpow.pop %v5724
        %v5726 = vmul.f32 %v5723, 1.442695
        %v5727 = vpow.pop %v5726
        %v5728 = vsel %vm1109, %v5725, 0.0
        %5729 = vadd.xlane.f32.xlu0 %v5728
        %v5730 = vpop.xlane.xlu0 %5729
        %v5731 = vsel %vm1109, %v5727, 0.0
        %5732 = vadd.xlane.f32.xlu0 %v5731
        %v5733 = vpop.xlane.xlu0 %5732
        %v5734 = vrcp.pop %v5730
        %v5735 = vrcp.pop %v5733
        %v5736 = vmul.f32 %v5725, %v5734
        %v5737 = vmul.f32 %v5727, %v5735
        %v5738 = vmul.f32 %v4725, %v1058
        %v5739 = vmul.f32 %v4728, %v1058
        %v5740 = vpack.c.bf16 %v5737, %v5736
        %v5741 = vpack.c.bf16 %v5739, %v5738
        %v5742 = vmul.f32 %v4620, %v1139
        %v5743 = vmul.f32 %v4624, %v1139
        %v5744 = vpack.c.bf16 %v5743, %v5742
        %5745 = vmatprep.subr.bf16.mxu0 0
        %5746 = vmatpush1.bf16.xpose.msra.mxu0 %v5671
        %5747 = vmatprep.subr.bf16.mxu0 0
        %5748 = vmatpush1.bf16.xpose.msra.mxu0 0
        %5749 = vmatprep.subr.bf16.mxu0 0
        %5750 = vmatpush1.bf16.xpose.msra.mxu0 0
        %5751 = vmatprep.subr.bf16.mxu0 0
        %5752 = vmatpush1.bf16.xpose.msra.mxu0 0
        %5753 = vmatprep.subr.bf16.mxu0 0
        %5754 = vmatpush1.bf16.xpose.msra.mxu0 0
        %5755 = vmatprep.subr.bf16.mxu0 0
        %5756 = vmatpush1.bf16.xpose.msra.mxu0 0
        %5757 = vmatprep.subr.bf16.mxu0 0
        %5758 = vmatpush1.bf16.xpose.msra.mxu0 0
        %5759 = vmatprep.subr.bf16.mxu0 0
        %5760 = vmatpush1.bf16.xpose.msra.mxu0 0
        %5761 = vmatprep.subr.bf16.mxu0 0
        %5762 = vmatpush1.bf16.xpose.msra.mxu0 0
        %5763 = vmatprep.subr.bf16.mxu0 0
        %5764 = vmatpush1.bf16.xpose.msra.mxu0 0
        %5765 = vmatprep.subr.bf16.mxu0 0
        %5766 = vmatpush1.bf16.xpose.msra.mxu0 0
        %5767 = vmatprep.subr.bf16.mxu0 0
        %5768 = vmatpush1.bf16.xpose.msra.mxu0 0
        %5769 = vmatprep.subr.bf16.mxu0 0
        %5770 = vmatpush1.bf16.xpose.msra.mxu0 0
        %5771 = vmatprep.subr.bf16.mxu0 0
        %5772 = vmatpush1.bf16.xpose.msra.mxu0 0
        %5773 = vmatprep.subr.bf16.mxu0 0
        %5774 = vmatpush1.bf16.xpose.msra.mxu0 0
        %5775 = vmatprep.subr.bf16.mxu0 0
        %5776 = vmatpush1.bf16.xpose.msra.mxu0 0
        %5777 = vmatprep.mubr.bf16.mxu0 0
        %5778 = vmatmul.mubr.bf16.gmra.mrb[0].mxu0 %v5744
        %v5779 = vpop.f32.mrb[0].mxu0
        %v5780 = vadd.f32 %v2019, %v5779
        %v5781 = vpop.f32.mrb[0].mxu0
        %v5782 = vpop.f32.mrb[0].mxu0
        %v5783 = vadd.f32 %v2019, %v5782
        %v5784 = vpop.f32.mrb[0].mxu0
        %5785 = vdwg.mxu0
        %v5786 = vsel %vm1109, %v5780, -inf
        %5787 = vmax.xlane.f32.xlu0 %v5786
        %v5788 = vpop.xlane.xlu0 %5787
        %v5789 = vsel %vm1109, %v5783, -inf
        %5790 = vmax.xlane.f32.xlu0 %v5789
        %v5791 = vpop.xlane.xlu0 %5790
        %v5792 = vsub.f32 %v5780, %v5788
        %v5793 = vsub.f32 %v5783, %v5791
        %v5794 = vmul.f32 %v5792, 1.442695
        %v5795 = vpow.pop %v5794
        %v5796 = vmul.f32 %v5793, 1.442695
        %v5797 = vpow.pop %v5796
        %v5798 = vsel %vm1109, %v5795, 0.0
        %5799 = vadd.xlane.f32.xlu0 %v5798
        %v5800 = vpop.xlane.xlu0 %5799
        %v5801 = vsel %vm1109, %v5797, 0.0
        %5802 = vadd.xlane.f32.xlu0 %v5801
        %v5803 = vpop.xlane.xlu0 %5802
        %v5804 = vrcp.pop %v5800
        %v5805 = vrcp.pop %v5803
        %v5806 = vmul.f32 %v5795, %v5804
        %v5807 = vmul.f32 %v5797, %v5805
        %v5808 = vmul.f32 %v4725, %v1139
        %v5809 = vmul.f32 %v4728, %v1139
        %v5810 = vpack.c.bf16 %v5807, %v5806
        %v5811 = vpack.c.bf16 %v5809, %v5808
        %v5813 = vsel %vm1109, %v5810, 0
        %5815 = vmatprep.subr.bf16.mxu0 0
        %5816 = vmatpush1.bf16.msra.mxu0 %v5811
        %5817 = vmatprep.subr.bf16.mxu0 0
        %5818 = vmatpush1.bf16.msra.mxu0 0
        %5819 = vmatprep.subr.bf16.mxu0 0
        %5820 = vmatpush1.bf16.msra.mxu0 0
        %5821 = vmatprep.subr.bf16.mxu0 0
        %5822 = vmatpush1.bf16.msra.mxu0 0
        %5823 = vmatprep.subr.bf16.mxu0 0
        %5824 = vmatpush1.bf16.msra.mxu0 0
        %5825 = vmatprep.subr.bf16.mxu0 0
        %5826 = vmatpush1.bf16.msra.mxu0 0
        %5827 = vmatprep.subr.bf16.mxu0 0
        %5828 = vmatpush1.bf16.msra.mxu0 0
        %5829 = vmatprep.subr.bf16.mxu0 0
        %5830 = vmatpush1.bf16.msra.mxu0 0
        %5831 = vmatprep.subr.bf16.mxu0 0
        %5832 = vmatpush1.bf16.msra.mxu0 0
        %5833 = vmatprep.subr.bf16.mxu0 0
        %5834 = vmatpush1.bf16.msra.mxu0 0
        %5835 = vmatprep.subr.bf16.mxu0 0
        %5836 = vmatpush1.bf16.msra.mxu0 0
        %5837 = vmatprep.subr.bf16.mxu0 0
        %5838 = vmatpush1.bf16.msra.mxu0 0
        %5839 = vmatprep.subr.bf16.mxu0 0
        %5840 = vmatpush1.bf16.msra.mxu0 0
        %5841 = vmatprep.subr.bf16.mxu0 0
        %5842 = vmatpush1.bf16.msra.mxu0 0
        %5843 = vmatprep.subr.bf16.mxu0 0
        %5844 = vmatpush1.bf16.msra.mxu0 0
        %5845 = vmatprep.subr.bf16.mxu0 0
        %5846 = vmatpush1.bf16.msra.mxu0 0
        %5847 = vmatprep.mubr.bf16.mxu0 0
        %5848 = vmatmul.mubr.bf16.gmra.mrb[0].mxu0 %v5813
        %v5849 = vpop.f32.mrb[0].mxu0
        %v5850 = vadd.f32 0.0, %v5849
        %v5851 = vpop.f32.mrb[0].mxu0
        %v5852 = vpop.f32.mrb[0].mxu0
        %v5853 = vadd.f32 0.0, %v5852
        %v5854 = vpop.f32.mrb[0].mxu0
        %5855 = vdwg.mxu0
        %v5857 = vsel %vm1109, %v5740, 0
        %5859 = vmatprep.subr.bf16.mxu0 0
        %5860 = vmatpush1.bf16.msra.mxu0 %v5741
        %5861 = vmatprep.subr.bf16.mxu0 0
        %5862 = vmatpush1.bf16.msra.mxu0 0
        %5863 = vmatprep.subr.bf16.mxu0 0
        %5864 = vmatpush1.bf16.msra.mxu0 0
        %5865 = vmatprep.subr.bf16.mxu0 0
        %5866 = vmatpush1.bf16.msra.mxu0 0
        %5867 = vmatprep.subr.bf16.mxu0 0
        %5868 = vmatpush1.bf16.msra.mxu0 0
        %5869 = vmatprep.subr.bf16.mxu0 0
        %5870 = vmatpush1.bf16.msra.mxu0 0
        %5871 = vmatprep.subr.bf16.mxu0 0
        %5872 = vmatpush1.bf16.msra.mxu0 0
        %5873 = vmatprep.subr.bf16.mxu0 0
        %5874 = vmatpush1.bf16.msra.mxu0 0
        %5875 = vmatprep.subr.bf16.mxu0 0
        %5876 = vmatpush1.bf16.msra.mxu0 0
        %5877 = vmatprep.subr.bf16.mxu0 0
        %5878 = vmatpush1.bf16.msra.mxu0 0
        %5879 = vmatprep.subr.bf16.mxu0 0
        %5880 = vmatpush1.bf16.msra.mxu0 0
        %5881 = vmatprep.subr.bf16.mxu0 0
        %5882 = vmatpush1.bf16.msra.mxu0 0
        %5883 = vmatprep.subr.bf16.mxu0 0
        %5884 = vmatpush1.bf16.msra.mxu0 0
        %5885 = vmatprep.subr.bf16.mxu0 0
        %5886 = vmatpush1.bf16.msra.mxu0 0
        %5887 = vmatprep.subr.bf16.mxu0 0
        %5888 = vmatpush1.bf16.msra.mxu0 0
        %5889 = vmatprep.subr.bf16.mxu0 0
        %5890 = vmatpush1.bf16.msra.mxu0 0
        %5891 = vmatprep.mubr.bf16.mxu0 0
        %5892 = vmatmul.mubr.bf16.gmra.mrb[0].mxu0 %v5857
        %v5893 = vpop.f32.mrb[0].mxu0
        %v5894 = vadd.f32 %v5850, %v5893
        %v5895 = vpop.f32.mrb[0].mxu0
        %v5896 = vpop.f32.mrb[0].mxu0
        %v5897 = vadd.f32 %v5853, %v5896
        %v5898 = vpop.f32.mrb[0].mxu0
        %5899 = vdwg.mxu0
        %v5900 = vpack.c.bf16 %v4636, %v4632
        %v5901 = vmul.f32 %v4630, %v1058
        %v5902 = vmul.f32 %v4634, %v1058
        %v5903 = vpack.c.bf16 %v5902, %v5901
        %5904 = vmatprep.subr.bf16.mxu0 0
        %5905 = vmatpush1.bf16.xpose.msra.mxu0 %v5900
        %5906 = vmatprep.subr.bf16.mxu0 0
        %5907 = vmatpush1.bf16.xpose.msra.mxu0 0
        %5908 = vmatprep.subr.bf16.mxu0 0
        %5909 = vmatpush1.bf16.xpose.msra.mxu0 0
        %5910 = vmatprep.subr.bf16.mxu0 0
        %5911 = vmatpush1.bf16.xpose.msra.mxu0 0
        %5912 = vmatprep.subr.bf16.mxu0 0
        %5913 = vmatpush1.bf16.xpose.msra.mxu0 0
        %5914 = vmatprep.subr.bf16.mxu0 0
        %5915 = vmatpush1.bf16.xpose.msra.mxu0 0
        %5916 = vmatprep.subr.bf16.mxu0 0
        %5917 = vmatpush1.bf16.xpose.msra.mxu0 0
        %5918 = vmatprep.subr.bf16.mxu0 0
        %5919 = vmatpush1.bf16.xpose.msra.mxu0 0
        %5920 = vmatprep.subr.bf16.mxu0 0
        %5921 = vmatpush1.bf16.xpose.msra.mxu0 0
        %5922 = vmatprep.subr.bf16.mxu0 0
        %5923 = vmatpush1.bf16.xpose.msra.mxu0 0
        %5924 = vmatprep.subr.bf16.mxu0 0
        %5925 = vmatpush1.bf16.xpose.msra.mxu0 0
        %5926 = vmatprep.subr.bf16.mxu0 0
        %5927 = vmatpush1.bf16.xpose.msra.mxu0 0
        %5928 = vmatprep.subr.bf16.mxu0 0
        %5929 = vmatpush1.bf16.xpose.msra.mxu0 0
        %5930 = vmatprep.subr.bf16.mxu0 0
        %5931 = vmatpush1.bf16.xpose.msra.mxu0 0
        %5932 = vmatprep.subr.bf16.mxu0 0
        %5933 = vmatpush1.bf16.xpose.msra.mxu0 0
        %5934 = vmatprep.subr.bf16.mxu0 0
        %5935 = vmatpush1.bf16.xpose.msra.mxu0 0
        %5936 = vmatprep.mubr.bf16.mxu0 0
        %5937 = vmatmul.mubr.bf16.gmra.mrb[0].mxu0 %v5903
        %v5938 = vpop.f32.mrb[0].mxu0
        %v5939 = vadd.f32 %v2256, %v5938
        %v5940 = vpop.f32.mrb[0].mxu0
        %v5941 = vpop.f32.mrb[0].mxu0
        %v5942 = vadd.f32 %v2256, %v5941
        %v5943 = vpop.f32.mrb[0].mxu0
        %5944 = vdwg.mxu0
        %v5945 = vsel %vm1109, %v5939, -inf
        %5946 = vmax.xlane.f32.xlu0 %v5945
        %v5947 = vpop.xlane.xlu0 %5946
        %v5948 = vsel %vm1109, %v5942, -inf
        %5949 = vmax.xlane.f32.xlu0 %v5948
        %v5950 = vpop.xlane.xlu0 %5949
        %v5951 = vsub.f32 %v5939, %v5947
        %v5952 = vsub.f32 %v5942, %v5950
        %v5953 = vmul.f32 %v5951, 1.442695
        %v5954 = vpow.pop %v5953
        %v5955 = vmul.f32 %v5952, 1.442695
        %v5956 = vpow.pop %v5955
        %v5957 = vsel %vm1109, %v5954, 0.0
        %5958 = vadd.xlane.f32.xlu0 %v5957
        %v5959 = vpop.xlane.xlu0 %5958
        %v5960 = vsel %vm1109, %v5956, 0.0
        %5961 = vadd.xlane.f32.xlu0 %v5960
        %v5962 = vpop.xlane.xlu0 %5961
        %v5963 = vrcp.pop %v5959
        %v5964 = vrcp.pop %v5962
        %v5965 = vmul.f32 %v5954, %v5963
        %v5966 = vmul.f32 %v5956, %v5964
        %v5967 = vmul.f32 %v4733, %v1058
        %v5968 = vmul.f32 %v4736, %v1058
        %v5969 = vpack.c.bf16 %v5966, %v5965
        %v5970 = vpack.c.bf16 %v5968, %v5967
        %v5971 = vmul.f32 %v4630, %v1139
        %v5972 = vmul.f32 %v4634, %v1139
        %v5973 = vpack.c.bf16 %v5972, %v5971
        %5974 = vmatprep.subr.bf16.mxu0 0
        %5975 = vmatpush1.bf16.xpose.msra.mxu0 %v5900
        %5976 = vmatprep.subr.bf16.mxu0 0
        %5977 = vmatpush1.bf16.xpose.msra.mxu0 0
        %5978 = vmatprep.subr.bf16.mxu0 0
        %5979 = vmatpush1.bf16.xpose.msra.mxu0 0
        %5980 = vmatprep.subr.bf16.mxu0 0
        %5981 = vmatpush1.bf16.xpose.msra.mxu0 0
        %5982 = vmatprep.subr.bf16.mxu0 0
        %5983 = vmatpush1.bf16.xpose.msra.mxu0 0
        %5984 = vmatprep.subr.bf16.mxu0 0
        %5985 = vmatpush1.bf16.xpose.msra.mxu0 0
        %5986 = vmatprep.subr.bf16.mxu0 0
        %5987 = vmatpush1.bf16.xpose.msra.mxu0 0
        %5988 = vmatprep.subr.bf16.mxu0 0
        %5989 = vmatpush1.bf16.xpose.msra.mxu0 0
        %5990 = vmatprep.subr.bf16.mxu0 0
        %5991 = vmatpush1.bf16.xpose.msra.mxu0 0
        %5992 = vmatprep.subr.bf16.mxu0 0
        %5993 = vmatpush1.bf16.xpose.msra.mxu0 0
        %5994 = vmatprep.subr.bf16.mxu0 0
        %5995 = vmatpush1.bf16.xpose.msra.mxu0 0
        %5996 = vmatprep.subr.bf16.mxu0 0
        %5997 = vmatpush1.bf16.xpose.msra.mxu0 0
        %5998 = vmatprep.subr.bf16.mxu0 0
        %5999 = vmatpush1.bf16.xpose.msra.mxu0 0
        %6000 = vmatprep.subr.bf16.mxu0 0
        %6001 = vmatpush1.bf16.xpose.msra.mxu0 0
        %6002 = vmatprep.subr.bf16.mxu0 0
        %6003 = vmatpush1.bf16.xpose.msra.mxu0 0
        %6004 = vmatprep.subr.bf16.mxu0 0
        %6005 = vmatpush1.bf16.xpose.msra.mxu0 0
        %6006 = vmatprep.mubr.bf16.mxu0 0
        %6007 = vmatmul.mubr.bf16.gmra.mrb[0].mxu0 %v5973
        %v6008 = vpop.f32.mrb[0].mxu0
        %v6009 = vadd.f32 %v2256, %v6008
        %v6010 = vpop.f32.mrb[0].mxu0
        %v6011 = vpop.f32.mrb[0].mxu0
        %v6012 = vadd.f32 %v2256, %v6011
        %v6013 = vpop.f32.mrb[0].mxu0
        %6014 = vdwg.mxu0
        %v6015 = vsel %vm1109, %v6009, -inf
        %6016 = vmax.xlane.f32.xlu0 %v6015
        %v6017 = vpop.xlane.xlu0 %6016
        %v6018 = vsel %vm1109, %v6012, -inf
        %6019 = vmax.xlane.f32.xlu0 %v6018
        %v6020 = vpop.xlane.xlu0 %6019
        %v6021 = vsub.f32 %v6009, %v6017
        %v6022 = vsub.f32 %v6012, %v6020
        %v6023 = vmul.f32 %v6021, 1.442695
        %v6024 = vpow.pop %v6023
        %v6025 = vmul.f32 %v6022, 1.442695
        %v6026 = vpow.pop %v6025
        %v6027 = vsel %vm1109, %v6024, 0.0
        %6028 = vadd.xlane.f32.xlu0 %v6027
        %v6029 = vpop.xlane.xlu0 %6028
        %v6030 = vsel %vm1109, %v6026, 0.0
        %6031 = vadd.xlane.f32.xlu0 %v6030
        %v6032 = vpop.xlane.xlu0 %6031
        %v6033 = vrcp.pop %v6029
        %v6034 = vrcp.pop %v6032
        %v6035 = vmul.f32 %v6024, %v6033
        %v6036 = vmul.f32 %v6026, %v6034
        %v6037 = vmul.f32 %v4733, %v1139
        %v6038 = vmul.f32 %v4736, %v1139
        %v6039 = vpack.c.bf16 %v6036, %v6035
        %v6040 = vpack.c.bf16 %v6038, %v6037
        %v6042 = vsel %vm1109, %v6039, 0
        %6044 = vmatprep.subr.bf16.mxu0 0
        %6045 = vmatpush1.bf16.msra.mxu0 %v6040
        %6046 = vmatprep.subr.bf16.mxu0 0
        %6047 = vmatpush1.bf16.msra.mxu0 0
        %6048 = vmatprep.subr.bf16.mxu0 0
        %6049 = vmatpush1.bf16.msra.mxu0 0
        %6050 = vmatprep.subr.bf16.mxu0 0
        %6051 = vmatpush1.bf16.msra.mxu0 0
        %6052 = vmatprep.subr.bf16.mxu0 0
        %6053 = vmatpush1.bf16.msra.mxu0 0
        %6054 = vmatprep.subr.bf16.mxu0 0
        %6055 = vmatpush1.bf16.msra.mxu0 0
        %6056 = vmatprep.subr.bf16.mxu0 0
        %6057 = vmatpush1.bf16.msra.mxu0 0
        %6058 = vmatprep.subr.bf16.mxu0 0
        %6059 = vmatpush1.bf16.msra.mxu0 0
        %6060 = vmatprep.subr.bf16.mxu0 0
        %6061 = vmatpush1.bf16.msra.mxu0 0
        %6062 = vmatprep.subr.bf16.mxu0 0
        %6063 = vmatpush1.bf16.msra.mxu0 0
        %6064 = vmatprep.subr.bf16.mxu0 0
        %6065 = vmatpush1.bf16.msra.mxu0 0
        %6066 = vmatprep.subr.bf16.mxu0 0
        %6067 = vmatpush1.bf16.msra.mxu0 0
        %6068 = vmatprep.subr.bf16.mxu0 0
        %6069 = vmatpush1.bf16.msra.mxu0 0
        %6070 = vmatprep.subr.bf16.mxu0 0
        %6071 = vmatpush1.bf16.msra.mxu0 0
        %6072 = vmatprep.subr.bf16.mxu0 0
        %6073 = vmatpush1.bf16.msra.mxu0 0
        %6074 = vmatprep.subr.bf16.mxu0 0
        %6075 = vmatpush1.bf16.msra.mxu0 0
        %6076 = vmatprep.mubr.bf16.mxu0 0
        %6077 = vmatmul.mubr.bf16.gmra.mrb[0].mxu0 %v6042
        %v6078 = vpop.f32.mrb[0].mxu0
        %v6079 = vadd.f32 0.0, %v6078
        %v6080 = vpop.f32.mrb[0].mxu0
        %v6081 = vpop.f32.mrb[0].mxu0
        %v6082 = vadd.f32 0.0, %v6081
        %v6083 = vpop.f32.mrb[0].mxu0
        %6084 = vdwg.mxu0
        %v6086 = vsel %vm1109, %v5969, 0
        %6088 = vmatprep.subr.bf16.mxu0 0
        %6089 = vmatpush1.bf16.msra.mxu0 %v5970
        %6090 = vmatprep.subr.bf16.mxu0 0
        %6091 = vmatpush1.bf16.msra.mxu0 0
        %6092 = vmatprep.subr.bf16.mxu0 0
        %6093 = vmatpush1.bf16.msra.mxu0 0
        %6094 = vmatprep.subr.bf16.mxu0 0
        %6095 = vmatpush1.bf16.msra.mxu0 0
        %6096 = vmatprep.subr.bf16.mxu0 0
        %6097 = vmatpush1.bf16.msra.mxu0 0
        %6098 = vmatprep.subr.bf16.mxu0 0
        %6099 = vmatpush1.bf16.msra.mxu0 0
        %6100 = vmatprep.subr.bf16.mxu0 0
        %6101 = vmatpush1.bf16.msra.mxu0 0
        %6102 = vmatprep.subr.bf16.mxu0 0
        %6103 = vmatpush1.bf16.msra.mxu0 0
        %6104 = vmatprep.subr.bf16.mxu0 0
        %6105 = vmatpush1.bf16.msra.mxu0 0
        %6106 = vmatprep.subr.bf16.mxu0 0
        %6107 = vmatpush1.bf16.msra.mxu0 0
        %6108 = vmatprep.subr.bf16.mxu0 0
        %6109 = vmatpush1.bf16.msra.mxu0 0
        %6110 = vmatprep.subr.bf16.mxu0 0
        %6111 = vmatpush1.bf16.msra.mxu0 0
        %6112 = vmatprep.subr.bf16.mxu0 0
        %6113 = vmatpush1.bf16.msra.mxu0 0
        %6114 = vmatprep.subr.bf16.mxu0 0
        %6115 = vmatpush1.bf16.msra.mxu0 0
        %6116 = vmatprep.subr.bf16.mxu0 0
        %6117 = vmatpush1.bf16.msra.mxu0 0
        %6118 = vmatprep.subr.bf16.mxu0 0
        %6119 = vmatpush1.bf16.msra.mxu0 0
        %6120 = vmatprep.mubr.bf16.mxu0 0
        %6121 = vmatmul.mubr.bf16.gmra.mrb[0].mxu0 %v6086
        %v6122 = vpop.f32.mrb[0].mxu0
        %v6123 = vadd.f32 %v6079, %v6122
        %v6124 = vpop.f32.mrb[0].mxu0
        %v6125 = vpop.f32.mrb[0].mxu0
        %v6126 = vadd.f32 %v6082, %v6125
        %v6127 = vpop.f32.mrb[0].mxu0
        %6128 = vdwg.mxu0
        %v6129 = vpack.c.bf16 %v4646, %v4642
        %v6130 = vmul.f32 %v4640, %v1058
        %v6131 = vmul.f32 %v4644, %v1058
        %v6132 = vpack.c.bf16 %v6131, %v6130
        %6133 = vmatprep.subr.bf16.mxu0 0
        %6134 = vmatpush1.bf16.xpose.msra.mxu0 %v6129
        %6135 = vmatprep.subr.bf16.mxu0 0
        %6136 = vmatpush1.bf16.xpose.msra.mxu0 0
        %6137 = vmatprep.subr.bf16.mxu0 0
        %6138 = vmatpush1.bf16.xpose.msra.mxu0 0
        %6139 = vmatprep.subr.bf16.mxu0 0
        %6140 = vmatpush1.bf16.xpose.msra.mxu0 0
        %6141 = vmatprep.subr.bf16.mxu0 0
        %6142 = vmatpush1.bf16.xpose.msra.mxu0 0
        %6143 = vmatprep.subr.bf16.mxu0 0
        %6144 = vmatpush1.bf16.xpose.msra.mxu0 0
        %6145 = vmatprep.subr.bf16.mxu0 0
        %6146 = vmatpush1.bf16.xpose.msra.mxu0 0
        %6147 = vmatprep.subr.bf16.mxu0 0
        %6148 = vmatpush1.bf16.xpose.msra.mxu0 0
        %6149 = vmatprep.subr.bf16.mxu0 0
        %6150 = vmatpush1.bf16.xpose.msra.mxu0 0
        %6151 = vmatprep.subr.bf16.mxu0 0
        %6152 = vmatpush1.bf16.xpose.msra.mxu0 0
        %6153 = vmatprep.subr.bf16.mxu0 0
        %6154 = vmatpush1.bf16.xpose.msra.mxu0 0
        %6155 = vmatprep.subr.bf16.mxu0 0
        %6156 = vmatpush1.bf16.xpose.msra.mxu0 0
        %6157 = vmatprep.subr.bf16.mxu0 0
        %6158 = vmatpush1.bf16.xpose.msra.mxu0 0
        %6159 = vmatprep.subr.bf16.mxu0 0
        %6160 = vmatpush1.bf16.xpose.msra.mxu0 0
        %6161 = vmatprep.subr.bf16.mxu0 0
        %6162 = vmatpush1.bf16.xpose.msra.mxu0 0
        %6163 = vmatprep.subr.bf16.mxu0 0
        %6164 = vmatpush1.bf16.xpose.msra.mxu0 0
        %6165 = vmatprep.mubr.bf16.mxu0 0
        %6166 = vmatmul.mubr.bf16.gmra.mrb[0].mxu0 %v6132
        %v6167 = vpop.f32.mrb[0].mxu0
        %v6168 = vadd.f32 %v2493, %v6167
        %v6169 = vpop.f32.mrb[0].mxu0
        %v6170 = vpop.f32.mrb[0].mxu0
        %v6171 = vadd.f32 %v2493, %v6170
        %v6172 = vpop.f32.mrb[0].mxu0
        %6173 = vdwg.mxu0
        %v6174 = vsel %vm1109, %v6168, -inf
        %6175 = vmax.xlane.f32.xlu0 %v6174
        %v6176 = vpop.xlane.xlu0 %6175
        %v6177 = vsel %vm1109, %v6171, -inf
        %6178 = vmax.xlane.f32.xlu0 %v6177
        %v6179 = vpop.xlane.xlu0 %6178
        %v6180 = vsub.f32 %v6168, %v6176
        %v6181 = vsub.f32 %v6171, %v6179
        %v6182 = vmul.f32 %v6180, 1.442695
        %v6183 = vpow.pop %v6182
        %v6184 = vmul.f32 %v6181, 1.442695
        %v6185 = vpow.pop %v6184
        %v6186 = vsel %vm1109, %v6183, 0.0
        %6187 = vadd.xlane.f32.xlu0 %v6186
        %v6188 = vpop.xlane.xlu0 %6187
        %v6189 = vsel %vm1109, %v6185, 0.0
        %6190 = vadd.xlane.f32.xlu0 %v6189
        %v6191 = vpop.xlane.xlu0 %6190
        %v6192 = vrcp.pop %v6188
        %v6193 = vrcp.pop %v6191
        %v6194 = vmul.f32 %v6183, %v6192
        %v6195 = vmul.f32 %v6185, %v6193
        %v6196 = vmul.f32 %v4741, %v1058
        %v6197 = vmul.f32 %v4744, %v1058
        %v6198 = vpack.c.bf16 %v6195, %v6194
        %v6199 = vpack.c.bf16 %v6197, %v6196
        %v6200 = vmul.f32 %v4640, %v1139
        %v6201 = vmul.f32 %v4644, %v1139
        %v6202 = vpack.c.bf16 %v6201, %v6200
        %6203 = vmatprep.subr.bf16.mxu0 0
        %6204 = vmatpush1.bf16.xpose.msra.mxu0 %v6129
        %6205 = vmatprep.subr.bf16.mxu0 0
        %6206 = vmatpush1.bf16.xpose.msra.mxu0 0
        %6207 = vmatprep.subr.bf16.mxu0 0
        %6208 = vmatpush1.bf16.xpose.msra.mxu0 0
        %6209 = vmatprep.subr.bf16.mxu0 0
        %6210 = vmatpush1.bf16.xpose.msra.mxu0 0
        %6211 = vmatprep.subr.bf16.mxu0 0
        %6212 = vmatpush1.bf16.xpose.msra.mxu0 0
        %6213 = vmatprep.subr.bf16.mxu0 0
        %6214 = vmatpush1.bf16.xpose.msra.mxu0 0
        %6215 = vmatprep.subr.bf16.mxu0 0
        %6216 = vmatpush1.bf16.xpose.msra.mxu0 0
        %6217 = vmatprep.subr.bf16.mxu0 0
        %6218 = vmatpush1.bf16.xpose.msra.mxu0 0
        %6219 = vmatprep.subr.bf16.mxu0 0
        %6220 = vmatpush1.bf16.xpose.msra.mxu0 0
        %6221 = vmatprep.subr.bf16.mxu0 0
        %6222 = vmatpush1.bf16.xpose.msra.mxu0 0
        %6223 = vmatprep.subr.bf16.mxu0 0
        %6224 = vmatpush1.bf16.xpose.msra.mxu0 0
        %6225 = vmatprep.subr.bf16.mxu0 0
        %6226 = vmatpush1.bf16.xpose.msra.mxu0 0
        %6227 = vmatprep.subr.bf16.mxu0 0
        %6228 = vmatpush1.bf16.xpose.msra.mxu0 0
        %6229 = vmatprep.subr.bf16.mxu0 0
        %6230 = vmatpush1.bf16.xpose.msra.mxu0 0
        %6231 = vmatprep.subr.bf16.mxu0 0
        %6232 = vmatpush1.bf16.xpose.msra.mxu0 0
        %6233 = vmatprep.subr.bf16.mxu0 0
        %6234 = vmatpush1.bf16.xpose.msra.mxu0 0
        %6235 = vmatprep.mubr.bf16.mxu0 0
        %6236 = vmatmul.mubr.bf16.gmra.mrb[0].mxu0 %v6202
        %v6237 = vpop.f32.mrb[0].mxu0
        %v6238 = vadd.f32 %v2493, %v6237
        %v6239 = vpop.f32.mrb[0].mxu0
        %v6240 = vpop.f32.mrb[0].mxu0
        %v6241 = vadd.f32 %v2493, %v6240
        %v6242 = vpop.f32.mrb[0].mxu0
        %6243 = vdwg.mxu0
        %v6244 = vsel %vm1109, %v6238, -inf
        %6245 = vmax.xlane.f32.xlu0 %v6244
        %v6246 = vpop.xlane.xlu0 %6245
        %v6247 = vsel %vm1109, %v6241, -inf
        %6248 = vmax.xlane.f32.xlu0 %v6247
        %v6249 = vpop.xlane.xlu0 %6248
        %v6250 = vsub.f32 %v6238, %v6246
        %v6251 = vsub.f32 %v6241, %v6249
        %v6252 = vmul.f32 %v6250, 1.442695
        %v6253 = vpow.pop %v6252
        %v6254 = vmul.f32 %v6251, 1.442695
        %v6255 = vpow.pop %v6254
        %v6256 = vsel %vm1109, %v6253, 0.0
        %6257 = vadd.xlane.f32.xlu0 %v6256
        %v6258 = vpop.xlane.xlu0 %6257
        %v6259 = vsel %vm1109, %v6255, 0.0
        %6260 = vadd.xlane.f32.xlu0 %v6259
        %v6261 = vpop.xlane.xlu0 %6260
        %v6262 = vrcp.pop %v6258
        %v6263 = vrcp.pop %v6261
        %v6264 = vmul.f32 %v6253, %v6262
        %v6265 = vmul.f32 %v6255, %v6263
        %v6266 = vmul.f32 %v4741, %v1139
        %v6267 = vmul.f32 %v4744, %v1139
        %v6268 = vpack.c.bf16 %v6265, %v6264
        %v6269 = vpack.c.bf16 %v6267, %v6266
        %v6271 = vsel %vm1109, %v6268, 0
        %6273 = vmatprep.subr.bf16.mxu0 0
        %6274 = vmatpush1.bf16.msra.mxu0 %v6269
        %6275 = vmatprep.subr.bf16.mxu0 0
        %6276 = vmatpush1.bf16.msra.mxu0 0
        %6277 = vmatprep.subr.bf16.mxu0 0
        %6278 = vmatpush1.bf16.msra.mxu0 0
        %6279 = vmatprep.subr.bf16.mxu0 0
        %6280 = vmatpush1.bf16.msra.mxu0 0
        %6281 = vmatprep.subr.bf16.mxu0 0
        %6282 = vmatpush1.bf16.msra.mxu0 0
        %6283 = vmatprep.subr.bf16.mxu0 0
        %6284 = vmatpush1.bf16.msra.mxu0 0
        %6285 = vmatprep.subr.bf16.mxu0 0
        %6286 = vmatpush1.bf16.msra.mxu0 0
        %6287 = vmatprep.subr.bf16.mxu0 0
        %6288 = vmatpush1.bf16.msra.mxu0 0
        %6289 = vmatprep.subr.bf16.mxu0 0
        %6290 = vmatpush1.bf16.msra.mxu0 0
        %6291 = vmatprep.subr.bf16.mxu0 0
        %6292 = vmatpush1.bf16.msra.mxu0 0
        %6293 = vmatprep.subr.bf16.mxu0 0
        %6294 = vmatpush1.bf16.msra.mxu0 0
        %6295 = vmatprep.subr.bf16.mxu0 0
        %6296 = vmatpush1.bf16.msra.mxu0 0
        %6297 = vmatprep.subr.bf16.mxu0 0
        %6298 = vmatpush1.bf16.msra.mxu0 0
        %6299 = vmatprep.subr.bf16.mxu0 0
        %6300 = vmatpush1.bf16.msra.mxu0 0
        %6301 = vmatprep.subr.bf16.mxu0 0
        %6302 = vmatpush1.bf16.msra.mxu0 0
        %6303 = vmatprep.subr.bf16.mxu0 0
        %6304 = vmatpush1.bf16.msra.mxu0 0
        %6305 = vmatprep.mubr.bf16.mxu0 0
        %6306 = vmatmul.mubr.bf16.gmra.mrb[0].mxu0 %v6271
        %v6307 = vpop.f32.mrb[0].mxu0
        %v6308 = vadd.f32 0.0, %v6307
        %v6309 = vpop.f32.mrb[0].mxu0
        %v6310 = vpop.f32.mrb[0].mxu0
        %v6311 = vadd.f32 0.0, %v6310
        %v6312 = vpop.f32.mrb[0].mxu0
        %6313 = vdwg.mxu0
        %v6315 = vsel %vm1109, %v6198, 0
        %6317 = vmatprep.subr.bf16.mxu0 0
        %6318 = vmatpush1.bf16.msra.mxu0 %v6199
        %6319 = vmatprep.subr.bf16.mxu0 0
        %6320 = vmatpush1.bf16.msra.mxu0 0
        %6321 = vmatprep.subr.bf16.mxu0 0
        %6322 = vmatpush1.bf16.msra.mxu0 0
        %6323 = vmatprep.subr.bf16.mxu0 0
        %6324 = vmatpush1.bf16.msra.mxu0 0
        %6325 = vmatprep.subr.bf16.mxu0 0
        %6326 = vmatpush1.bf16.msra.mxu0 0
        %6327 = vmatprep.subr.bf16.mxu0 0
        %6328 = vmatpush1.bf16.msra.mxu0 0
        %6329 = vmatprep.subr.bf16.mxu0 0
        %6330 = vmatpush1.bf16.msra.mxu0 0
        %6331 = vmatprep.subr.bf16.mxu0 0
        %6332 = vmatpush1.bf16.msra.mxu0 0
        %6333 = vmatprep.subr.bf16.mxu0 0
        %6334 = vmatpush1.bf16.msra.mxu0 0
        %6335 = vmatprep.subr.bf16.mxu0 0
        %6336 = vmatpush1.bf16.msra.mxu0 0
        %6337 = vmatprep.subr.bf16.mxu0 0
        %6338 = vmatpush1.bf16.msra.mxu0 0
        %6339 = vmatprep.subr.bf16.mxu0 0
        %6340 = vmatpush1.bf16.msra.mxu0 0
        %6341 = vmatprep.subr.bf16.mxu0 0
        %6342 = vmatpush1.bf16.msra.mxu0 0
        %6343 = vmatprep.subr.bf16.mxu0 0
        %6344 = vmatpush1.bf16.msra.mxu0 0
        %6345 = vmatprep.subr.bf16.mxu0 0
        %6346 = vmatpush1.bf16.msra.mxu0 0
        %6347 = vmatprep.subr.bf16.mxu0 0
        %6348 = vmatpush1.bf16.msra.mxu0 0
        %6349 = vmatprep.mubr.bf16.mxu0 0
        %6350 = vmatmul.mubr.bf16.gmra.mrb[0].mxu0 %v6315
        %v6351 = vpop.f32.mrb[0].mxu0
        %v6352 = vadd.f32 %v6308, %v6351
        %v6353 = vpop.f32.mrb[0].mxu0
        %v6354 = vpop.f32.mrb[0].mxu0
        %v6355 = vadd.f32 %v6311, %v6354
        %v6356 = vpop.f32.mrb[0].mxu0
        %6357 = vdwg.mxu0
        %v6358 = vpack.c.bf16 %v4656, %v4652
        %v6359 = vmul.f32 %v4650, %v1058
        %v6360 = vmul.f32 %v4654, %v1058
        %v6361 = vpack.c.bf16 %v6360, %v6359
        %6362 = vmatprep.subr.bf16.mxu0 0
        %6363 = vmatpush1.bf16.xpose.msra.mxu0 %v6358
        %6364 = vmatprep.subr.bf16.mxu0 0
        %6365 = vmatpush1.bf16.xpose.msra.mxu0 0
        %6366 = vmatprep.subr.bf16.mxu0 0
        %6367 = vmatpush1.bf16.xpose.msra.mxu0 0
        %6368 = vmatprep.subr.bf16.mxu0 0
        %6369 = vmatpush1.bf16.xpose.msra.mxu0 0
        %6370 = vmatprep.subr.bf16.mxu0 0
        %6371 = vmatpush1.bf16.xpose.msra.mxu0 0
        %6372 = vmatprep.subr.bf16.mxu0 0
        %6373 = vmatpush1.bf16.xpose.msra.mxu0 0
        %6374 = vmatprep.subr.bf16.mxu0 0
        %6375 = vmatpush1.bf16.xpose.msra.mxu0 0
        %6376 = vmatprep.subr.bf16.mxu0 0
        %6377 = vmatpush1.bf16.xpose.msra.mxu0 0
        %6378 = vmatprep.subr.bf16.mxu0 0
        %6379 = vmatpush1.bf16.xpose.msra.mxu0 0
        %6380 = vmatprep.subr.bf16.mxu0 0
        %6381 = vmatpush1.bf16.xpose.msra.mxu0 0
        %6382 = vmatprep.subr.bf16.mxu0 0
        %6383 = vmatpush1.bf16.xpose.msra.mxu0 0
        %6384 = vmatprep.subr.bf16.mxu0 0
        %6385 = vmatpush1.bf16.xpose.msra.mxu0 0
        %6386 = vmatprep.subr.bf16.mxu0 0
        %6387 = vmatpush1.bf16.xpose.msra.mxu0 0
        %6388 = vmatprep.subr.bf16.mxu0 0
        %6389 = vmatpush1.bf16.xpose.msra.mxu0 0
        %6390 = vmatprep.subr.bf16.mxu0 0
        %6391 = vmatpush1.bf16.xpose.msra.mxu0 0
        %6392 = vmatprep.subr.bf16.mxu0 0
        %6393 = vmatpush1.bf16.xpose.msra.mxu0 0
        %6394 = vmatprep.mubr.bf16.mxu0 0
        %6395 = vmatmul.mubr.bf16.gmra.mrb[0].mxu0 %v6361
        %v6396 = vpop.f32.mrb[0].mxu0
        %v6397 = vadd.f32 %v2730, %v6396
        %v6398 = vpop.f32.mrb[0].mxu0
        %v6399 = vpop.f32.mrb[0].mxu0
        %v6400 = vadd.f32 %v2730, %v6399
        %v6401 = vpop.f32.mrb[0].mxu0
        %6402 = vdwg.mxu0
        %v6403 = vsel %vm1109, %v6397, -inf
        %6404 = vmax.xlane.f32.xlu0 %v6403
        %v6405 = vpop.xlane.xlu0 %6404
        %v6406 = vsel %vm1109, %v6400, -inf
        %6407 = vmax.xlane.f32.xlu0 %v6406
        %v6408 = vpop.xlane.xlu0 %6407
        %v6409 = vsub.f32 %v6397, %v6405
        %v6410 = vsub.f32 %v6400, %v6408
        %v6411 = vmul.f32 %v6409, 1.442695
        %v6412 = vpow.pop %v6411
        %v6413 = vmul.f32 %v6410, 1.442695
        %v6414 = vpow.pop %v6413
        %v6415 = vsel %vm1109, %v6412, 0.0
        %6416 = vadd.xlane.f32.xlu0 %v6415
        %v6417 = vpop.xlane.xlu0 %6416
        %v6418 = vsel %vm1109, %v6414, 0.0
        %6419 = vadd.xlane.f32.xlu0 %v6418
        %v6420 = vpop.xlane.xlu0 %6419
        %v6421 = vrcp.pop %v6417
        %v6422 = vrcp.pop %v6420
        %v6423 = vmul.f32 %v6412, %v6421
        %v6424 = vmul.f32 %v6414, %v6422
        %v6425 = vmul.f32 %v4749, %v1058
        %v6426 = vmul.f32 %v4752, %v1058
        %v6427 = vpack.c.bf16 %v6424, %v6423
        %v6428 = vpack.c.bf16 %v6426, %v6425
        %v6429 = vmul.f32 %v4650, %v1139
        %v6430 = vmul.f32 %v4654, %v1139
        %v6431 = vpack.c.bf16 %v6430, %v6429
        %6432 = vmatprep.subr.bf16.mxu0 0
        %6433 = vmatpush1.bf16.xpose.msra.mxu0 %v6358
        %6434 = vmatprep.subr.bf16.mxu0 0
        %6435 = vmatpush1.bf16.xpose.msra.mxu0 0
        %6436 = vmatprep.subr.bf16.mxu0 0
        %6437 = vmatpush1.bf16.xpose.msra.mxu0 0
        %6438 = vmatprep.subr.bf16.mxu0 0
        %6439 = vmatpush1.bf16.xpose.msra.mxu0 0
        %6440 = vmatprep.subr.bf16.mxu0 0
        %6441 = vmatpush1.bf16.xpose.msra.mxu0 0
        %6442 = vmatprep.subr.bf16.mxu0 0
        %6443 = vmatpush1.bf16.xpose.msra.mxu0 0
        %6444 = vmatprep.subr.bf16.mxu0 0
        %6445 = vmatpush1.bf16.xpose.msra.mxu0 0
        %6446 = vmatprep.subr.bf16.mxu0 0
        %6447 = vmatpush1.bf16.xpose.msra.mxu0 0
        %6448 = vmatprep.subr.bf16.mxu0 0
        %6449 = vmatpush1.bf16.xpose.msra.mxu0 0
        %6450 = vmatprep.subr.bf16.mxu0 0
        %6451 = vmatpush1.bf16.xpose.msra.mxu0 0
        %6452 = vmatprep.subr.bf16.mxu0 0
        %6453 = vmatpush1.bf16.xpose.msra.mxu0 0
        %6454 = vmatprep.subr.bf16.mxu0 0
        %6455 = vmatpush1.bf16.xpose.msra.mxu0 0
        %6456 = vmatprep.subr.bf16.mxu0 0
        %6457 = vmatpush1.bf16.xpose.msra.mxu0 0
        %6458 = vmatprep.subr.bf16.mxu0 0
        %6459 = vmatpush1.bf16.xpose.msra.mxu0 0
        %6460 = vmatprep.subr.bf16.mxu0 0
        %6461 = vmatpush1.bf16.xpose.msra.mxu0 0
        %6462 = vmatprep.subr.bf16.mxu0 0
        %6463 = vmatpush1.bf16.xpose.msra.mxu0 0
        %6464 = vmatprep.mubr.bf16.mxu0 0
        %6465 = vmatmul.mubr.bf16.gmra.mrb[0].mxu0 %v6431
        %v6466 = vpop.f32.mrb[0].mxu0
        %v6467 = vadd.f32 %v2730, %v6466
        %v6468 = vpop.f32.mrb[0].mxu0
        %v6469 = vpop.f32.mrb[0].mxu0
        %v6470 = vadd.f32 %v2730, %v6469
        %v6471 = vpop.f32.mrb[0].mxu0
        %6472 = vdwg.mxu0
        %v6473 = vsel %vm1109, %v6467, -inf
        %6474 = vmax.xlane.f32.xlu0 %v6473
        %v6475 = vpop.xlane.xlu0 %6474
        %v6476 = vsel %vm1109, %v6470, -inf
        %6477 = vmax.xlane.f32.xlu0 %v6476
        %v6478 = vpop.xlane.xlu0 %6477
        %v6479 = vsub.f32 %v6467, %v6475
        %v6480 = vsub.f32 %v6470, %v6478
        %v6481 = vmul.f32 %v6479, 1.442695
        %v6482 = vpow.pop %v6481
        %v6483 = vmul.f32 %v6480, 1.442695
        %v6484 = vpow.pop %v6483
        %v6485 = vsel %vm1109, %v6482, 0.0
        %6486 = vadd.xlane.f32.xlu0 %v6485
        %v6487 = vpop.xlane.xlu0 %6486
        %v6488 = vsel %vm1109, %v6484, 0.0
        %6489 = vadd.xlane.f32.xlu0 %v6488
        %v6490 = vpop.xlane.xlu0 %6489
        %v6491 = vrcp.pop %v6487
        %v6492 = vrcp.pop %v6490
        %v6493 = vmul.f32 %v6482, %v6491
        %v6494 = vmul.f32 %v6484, %v6492
        %v6495 = vmul.f32 %v4749, %v1139
        %v6496 = vmul.f32 %v4752, %v1139
        %v6497 = vpack.c.bf16 %v6494, %v6493
        %v6498 = vpack.c.bf16 %v6496, %v6495
        %v6500 = vsel %vm1109, %v6497, 0
        %6502 = vmatprep.subr.bf16.mxu0 0
        %6503 = vmatpush1.bf16.msra.mxu0 %v6498
        %6504 = vmatprep.subr.bf16.mxu0 0
        %6505 = vmatpush1.bf16.msra.mxu0 0
        %6506 = vmatprep.subr.bf16.mxu0 0
        %6507 = vmatpush1.bf16.msra.mxu0 0
        %6508 = vmatprep.subr.bf16.mxu0 0
        %6509 = vmatpush1.bf16.msra.mxu0 0
        %6510 = vmatprep.subr.bf16.mxu0 0
        %6511 = vmatpush1.bf16.msra.mxu0 0
        %6512 = vmatprep.subr.bf16.mxu0 0
        %6513 = vmatpush1.bf16.msra.mxu0 0
        %6514 = vmatprep.subr.bf16.mxu0 0
        %6515 = vmatpush1.bf16.msra.mxu0 0
        %6516 = vmatprep.subr.bf16.mxu0 0
        %6517 = vmatpush1.bf16.msra.mxu0 0
        %6518 = vmatprep.subr.bf16.mxu0 0
        %6519 = vmatpush1.bf16.msra.mxu0 0
        %6520 = vmatprep.subr.bf16.mxu0 0
        %6521 = vmatpush1.bf16.msra.mxu0 0
        %6522 = vmatprep.subr.bf16.mxu0 0
        %6523 = vmatpush1.bf16.msra.mxu0 0
        %6524 = vmatprep.subr.bf16.mxu0 0
        %6525 = vmatpush1.bf16.msra.mxu0 0
        %6526 = vmatprep.subr.bf16.mxu0 0
        %6527 = vmatpush1.bf16.msra.mxu0 0
        %6528 = vmatprep.subr.bf16.mxu0 0
        %6529 = vmatpush1.bf16.msra.mxu0 0
        %6530 = vmatprep.subr.bf16.mxu0 0
        %6531 = vmatpush1.bf16.msra.mxu0 0
        %6532 = vmatprep.subr.bf16.mxu0 0
        %6533 = vmatpush1.bf16.msra.mxu0 0
        %6534 = vmatprep.mubr.bf16.mxu0 0
        %6535 = vmatmul.mubr.bf16.gmra.mrb[0].mxu0 %v6500
        %v6536 = vpop.f32.mrb[0].mxu0
        %v6537 = vadd.f32 0.0, %v6536
        %v6538 = vpop.f32.mrb[0].mxu0
        %v6539 = vpop.f32.mrb[0].mxu0
        %v6540 = vadd.f32 0.0, %v6539
        %v6541 = vpop.f32.mrb[0].mxu0
        %6542 = vdwg.mxu0
        %v6544 = vsel %vm1109, %v6427, 0
        %6546 = vmatprep.subr.bf16.mxu0 0
        %6547 = vmatpush1.bf16.msra.mxu0 %v6428
        %6548 = vmatprep.subr.bf16.mxu0 0
        %6549 = vmatpush1.bf16.msra.mxu0 0
        %6550 = vmatprep.subr.bf16.mxu0 0
        %6551 = vmatpush1.bf16.msra.mxu0 0
        %6552 = vmatprep.subr.bf16.mxu0 0
        %6553 = vmatpush1.bf16.msra.mxu0 0
        %6554 = vmatprep.subr.bf16.mxu0 0
        %6555 = vmatpush1.bf16.msra.mxu0 0
        %6556 = vmatprep.subr.bf16.mxu0 0
        %6557 = vmatpush1.bf16.msra.mxu0 0
        %6558 = vmatprep.subr.bf16.mxu0 0
        %6559 = vmatpush1.bf16.msra.mxu0 0
        %6560 = vmatprep.subr.bf16.mxu0 0
        %6561 = vmatpush1.bf16.msra.mxu0 0
        %6562 = vmatprep.subr.bf16.mxu0 0
        %6563 = vmatpush1.bf16.msra.mxu0 0
        %6564 = vmatprep.subr.bf16.mxu0 0
        %6565 = vmatpush1.bf16.msra.mxu0 0
        %6566 = vmatprep.subr.bf16.mxu0 0
        %6567 = vmatpush1.bf16.msra.mxu0 0
        %6568 = vmatprep.subr.bf16.mxu0 0
        %6569 = vmatpush1.bf16.msra.mxu0 0
        %6570 = vmatprep.subr.bf16.mxu0 0
        %6571 = vmatpush1.bf16.msra.mxu0 0
        %6572 = vmatprep.subr.bf16.mxu0 0
        %6573 = vmatpush1.bf16.msra.mxu0 0
        %6574 = vmatprep.subr.bf16.mxu0 0
        %6575 = vmatpush1.bf16.msra.mxu0 0
        %6576 = vmatprep.subr.bf16.mxu0 0
        %6577 = vmatpush1.bf16.msra.mxu0 0
        %6578 = vmatprep.mubr.bf16.mxu0 0
        %6579 = vmatmul.mubr.bf16.gmra.mrb[0].mxu0 %v6544
        %v6580 = vpop.f32.mrb[0].mxu0
        %v6581 = vadd.f32 %v6537, %v6580
        %v6582 = vpop.f32.mrb[0].mxu0
        %v6583 = vpop.f32.mrb[0].mxu0
        %v6584 = vadd.f32 %v6540, %v6583
        %v6585 = vpop.f32.mrb[0].mxu0
        %6586 = vdwg.mxu0
        %s6587 = scalar_lea.vmem %s5, 64
        %v6588 = vld [vmem:[%s6587] sm:$0xf]
        %v6589 = vld [vmem:[%s6587 + $0x4] sm:$0xf]
        %v6590 = vld [vmem:[%s6587 + $0x8] sm:$0xf]
        %v6591 = vld [vmem:[%s6587 + $0xc] sm:$0xf]
        %v6592 = vld [vmem:[%s6587 + $0x10] sm:$0xf]
        %v6593 = vld [vmem:[%s6587 + $0x14] sm:$0xf]
        %v6594 = vld [vmem:[%s6587 + $0x18] sm:$0xf]
        %v6595 = vld [vmem:[%s6587 + $0x1c] sm:$0xf]
        %v6596 = vld [vmem:[%s6587 + $0x20] sm:$0xf]
        %v6597 = vld [vmem:[%s6587 + $0x24] sm:$0xf]
        %v6598 = vld [vmem:[%s6587 + $0x28] sm:$0xf]
        %v6599 = vld [vmem:[%s6587 + $0x2c] sm:$0xf]
        %v6600 = vld [vmem:[%s6587 + $0x30] sm:$0xf]
        %v6601 = vld [vmem:[%s6587 + $0x34] sm:$0xf]
        %v6602 = vld [vmem:[%s6587 + $0x38] sm:$0xf]
        %v6603 = vld [vmem:[%s6587 + $0x3c] sm:$0xf]
        %v6604 = vpack.c.bf16 %v4981, %v4978
        %v6605 = vpack.c.bf16 %v5210, %v5207
        %v6606 = vpack.c.bf16 %v5439, %v5436
        %v6607 = vpack.c.bf16 %v5668, %v5665
        %v6608 = vpack.c.bf16 %v5897, %v5894
        %v6609 = vpack.c.bf16 %v6126, %v6123
        %v6610 = vpack.c.bf16 %v6355, %v6352
        %v6611 = vpack.c.bf16 %v6584, %v6581
        %v6612 = vlaneseq
        %v6613 = vshrl.u32 %v6612, 7
        %v6614 = vsub.s32 0, %v6613
        %v6615 = vrot.slane %v4357, %v6614
        %v6632 = vunpack.c.l.b16 %v6588
        %v6633 = vunpack.c.l.b16 %v6589
        %v6634 = vunpack.c.l.b16 %v6590
        %v6635 = vunpack.c.l.b16 %v6591
        %v6636 = vunpack.c.l.b16 %v6592
        %v6637 = vunpack.c.l.b16 %v6593
        %v6638 = vunpack.c.l.b16 %v6594
        %v6639 = vunpack.c.l.b16 %v6595
        %v6640 = vunpack.c.l.b16 %v6596
        %v6641 = vunpack.c.l.b16 %v6597
        %v6642 = vunpack.c.l.b16 %v6598
        %v6643 = vunpack.c.l.b16 %v6599
        %v6644 = vunpack.c.l.b16 %v6600
        %v6645 = vunpack.c.l.b16 %v6601
        %v6646 = vunpack.c.l.b16 %v6602
        %v6647 = vunpack.c.l.b16 %v6603
        %v6648 = vpack.c.b16 %v6633, %v6632
        %v6649 = vpack.c.b16 %v6635, %v6634
        %v6650 = vpack.c.b16 %v6637, %v6636
        %v6651 = vpack.c.b16 %v6639, %v6638
        %v6652 = vpack.c.b16 %v6641, %v6640
        %v6653 = vpack.c.b16 %v6643, %v6642
        %v6654 = vpack.c.b16 %v6645, %v6644
        %v6655 = vpack.c.b16 %v6647, %v6646
        %6664 = vmatprep.subr.bf16.mxu0 0
        %6665 = vmatpush1.bf16.msra.mxu0 %v6648
        %6666 = vmatprep.subr.bf16.mxu0 0
        %6667 = vmatpush1.bf16.msra.mxu0 %v6649
        %6668 = vmatprep.subr.bf16.mxu0 0
        %6669 = vmatpush1.bf16.msra.mxu0 %v6650
        %6670 = vmatprep.subr.bf16.mxu0 0
        %6671 = vmatpush1.bf16.msra.mxu0 %v6651
        %6672 = vmatprep.subr.bf16.mxu0 0
        %6673 = vmatpush1.bf16.msra.mxu0 %v6652
        %6674 = vmatprep.subr.bf16.mxu0 0
        %6675 = vmatpush1.bf16.msra.mxu0 %v6653
        %6676 = vmatprep.subr.bf16.mxu0 0
        %6677 = vmatpush1.bf16.msra.mxu0 %v6654
        %6678 = vmatprep.subr.bf16.mxu0 0
        %6679 = vmatpush1.bf16.msra.mxu0 %v6655
        %6680 = vmatprep.subr.bf16.mxu0 0
        %6681 = vmatpush1.bf16.msra.mxu0 0
        %6682 = vmatprep.subr.bf16.mxu0 0
        %6683 = vmatpush1.bf16.msra.mxu0 0
        %6684 = vmatprep.subr.bf16.mxu0 0
        %6685 = vmatpush1.bf16.msra.mxu0 0
        %6686 = vmatprep.subr.bf16.mxu0 0
        %6687 = vmatpush1.bf16.msra.mxu0 0
        %6688 = vmatprep.subr.bf16.mxu0 0
        %6689 = vmatpush1.bf16.msra.mxu0 0
        %6690 = vmatprep.subr.bf16.mxu0 0
        %6691 = vmatpush1.bf16.msra.mxu0 0
        %6692 = vmatprep.subr.bf16.mxu0 0
        %6693 = vmatpush1.bf16.msra.mxu0 0
        %6694 = vmatprep.subr.bf16.mxu0 0
        %6695 = vmatpush1.bf16.msra.mxu0 0
        %6696 = vmatprep.mubr.bf16.mxu0 0
        %6697 = vmatmul.mubr.bf16.gmra.mrb[0].mxu0 %v6604
        %v6698 = vpop.f32.mrb[0].mxu0
        %v6699 = vadd.f32 %v6615, %v6698
        %v6700 = vpop.f32.mrb[0].mxu0
        %v6701 = vpop.f32.mrb[0].mxu0
        %v6702 = vadd.f32 %v6615, %v6701
        %v6703 = vpop.f32.mrb[0].mxu0
        %6704 = vmatprep.mubr.bf16.mxu0 0
        %6705 = vmatmul.mubr.bf16.gmra.mrb[0].mxu0 %v6605
        %v6706 = vpop.f32.mrb[0].mxu0
        %v6707 = vadd.f32 %v6615, %v6706
        %v6708 = vpop.f32.mrb[0].mxu0
        %v6709 = vpop.f32.mrb[0].mxu0
        %v6710 = vadd.f32 %v6615, %v6709
        %v6711 = vpop.f32.mrb[0].mxu0
        %6712 = vmatprep.mubr.bf16.mxu0 0
        %6713 = vmatmul.mubr.bf16.gmra.mrb[0].mxu0 %v6606
        %v6714 = vpop.f32.mrb[0].mxu0
        %v6715 = vadd.f32 %v6615, %v6714
        %v6716 = vpop.f32.mrb[0].mxu0
        %v6717 = vpop.f32.mrb[0].mxu0
        %v6718 = vadd.f32 %v6615, %v6717
        %v6719 = vpop.f32.mrb[0].mxu0
        %6720 = vmatprep.mubr.bf16.mxu0 0
        %6721 = vmatmul.mubr.bf16.gmra.mrb[0].mxu0 %v6607
        %v6722 = vpop.f32.mrb[0].mxu0
        %v6723 = vadd.f32 %v6615, %v6722
        %v6724 = vpop.f32.mrb[0].mxu0
        %v6725 = vpop.f32.mrb[0].mxu0
        %v6726 = vadd.f32 %v6615, %v6725
        %v6727 = vpop.f32.mrb[0].mxu0
        %6728 = vmatprep.mubr.bf16.mxu0 0
        %6729 = vmatmul.mubr.bf16.gmra.mrb[0].mxu0 %v6608
        %v6730 = vpop.f32.mrb[0].mxu0
        %v6731 = vadd.f32 %v6615, %v6730
        %v6732 = vpop.f32.mrb[0].mxu0
        %v6733 = vpop.f32.mrb[0].mxu0
        %v6734 = vadd.f32 %v6615, %v6733
        %v6735 = vpop.f32.mrb[0].mxu0
        %6736 = vmatprep.mubr.bf16.mxu0 0
        %6737 = vmatmul.mubr.bf16.gmra.mrb[0].mxu0 %v6609
        %v6738 = vpop.f32.mrb[0].mxu0
        %v6739 = vadd.f32 %v6615, %v6738
        %v6740 = vpop.f32.mrb[0].mxu0
        %v6741 = vpop.f32.mrb[0].mxu0
        %v6742 = vadd.f32 %v6615, %v6741
        %v6743 = vpop.f32.mrb[0].mxu0
        %6744 = vmatprep.mubr.bf16.mxu0 0
        %6745 = vmatmul.mubr.bf16.gmra.mrb[0].mxu0 %v6610
        %v6746 = vpop.f32.mrb[0].mxu0
        %v6747 = vadd.f32 %v6615, %v6746
        %v6748 = vpop.f32.mrb[0].mxu0
        %v6749 = vpop.f32.mrb[0].mxu0
        %v6750 = vadd.f32 %v6615, %v6749
        %v6751 = vpop.f32.mrb[0].mxu0
        %6752 = vmatprep.mubr.bf16.mxu0 0
        %6753 = vmatmul.mubr.bf16.gmra.mrb[0].mxu0 %v6611
        %v6754 = vpop.f32.mrb[0].mxu0
        %v6755 = vadd.f32 %v6615, %v6754
        %v6756 = vpop.f32.mrb[0].mxu0
        %v6757 = vpop.f32.mrb[0].mxu0
        %v6758 = vadd.f32 %v6615, %v6757
        %v6759 = vpop.f32.mrb[0].mxu0
        %6760 = vdwg.mxu0
        %v6761 = vadd.f32 %v4340, %v6699
        %v6762 = vadd.f32 %v4341, %v6702
        %v6763 = vadd.f32 %v4342, %v6707
        %v6764 = vadd.f32 %v4343, %v6710
        %v6765 = vadd.f32 %v4344, %v6715
        %v6766 = vadd.f32 %v4345, %v6718
        %v6767 = vadd.f32 %v4346, %v6723
        %v6768 = vadd.f32 %v4347, %v6726
        %v6769 = vadd.f32 %v4348, %v6731
        %v6770 = vadd.f32 %v4349, %v6734
        %v6771 = vadd.f32 %v4350, %v6739
        %v6772 = vadd.f32 %v4351, %v6742
        %v6773 = vadd.f32 %v4352, %v6747
        %v6774 = vadd.f32 %v4353, %v6750
        %v6775 = vadd.f32 %v4354, %v6755
        %v6776 = vadd.f32 %v4355, %v6758
        %6777 = vadd.xlane.f32.xlu0 %v6761
        %v6778 = vpop.xlane.xlu0 %6777
        %6779 = vadd.xlane.f32.xlu0 %v6762
        %v6780 = vpop.xlane.xlu0 %6779
        %6781 = vadd.xlane.f32.xlu0 %v6763
        %v6782 = vpop.xlane.xlu0 %6781
        %6783 = vadd.xlane.f32.xlu0 %v6764
        %v6784 = vpop.xlane.xlu0 %6783
        %6785 = vadd.xlane.f32.xlu0 %v6765
        %v6786 = vpop.xlane.xlu0 %6785
        %6787 = vadd.xlane.f32.xlu0 %v6766
        %v6788 = vpop.xlane.xlu0 %6787
        %6789 = vadd.xlane.f32.xlu0 %v6767
        %v6790 = vpop.xlane.xlu0 %6789
        %6791 = vadd.xlane.f32.xlu0 %v6768
        %v6792 = vpop.xlane.xlu0 %6791
        %6793 = vadd.xlane.f32.xlu0 %v6769
        %v6794 = vpop.xlane.xlu0 %6793
        %6795 = vadd.xlane.f32.xlu0 %v6770
        %v6796 = vpop.xlane.xlu0 %6795
        %6797 = vadd.xlane.f32.xlu0 %v6771
        %v6798 = vpop.xlane.xlu0 %6797
        %6799 = vadd.xlane.f32.xlu0 %v6772
        %v6800 = vpop.xlane.xlu0 %6799
        %6801 = vadd.xlane.f32.xlu0 %v6773
        %v6802 = vpop.xlane.xlu0 %6801
        %6803 = vadd.xlane.f32.xlu0 %v6774
        %v6804 = vpop.xlane.xlu0 %6803
        %6805 = vadd.xlane.f32.xlu0 %v6775
        %v6806 = vpop.xlane.xlu0 %6805
        %6807 = vadd.xlane.f32.xlu0 %v6776
        %v6808 = vpop.xlane.xlu0 %6807
        %v6809 = vmul.f32 %v6778, %v472
        %v6810 = vmul.f32 %v6780, %v472
        %v6811 = vmul.f32 %v6782, %v472
        %v6812 = vmul.f32 %v6784, %v472
        %v6813 = vmul.f32 %v6786, %v472
        %v6814 = vmul.f32 %v6788, %v472
        %v6815 = vmul.f32 %v6790, %v472
        %v6816 = vmul.f32 %v6792, %v472
        %v6817 = vmul.f32 %v6794, %v472
        %v6818 = vmul.f32 %v6796, %v472
        %v6819 = vmul.f32 %v6798, %v472
        %v6820 = vmul.f32 %v6800, %v472
        %v6821 = vmul.f32 %v6802, %v472
        %v6822 = vmul.f32 %v6804, %v472
        %v6823 = vmul.f32 %v6806, %v472
        %v6824 = vmul.f32 %v6808, %v472
        %v6825 = vsub.f32 %v6761, %v6809
        %v6826 = vsub.f32 %v6762, %v6810
        %v6827 = vsub.f32 %v6763, %v6811
        %v6828 = vsub.f32 %v6764, %v6812
        %v6829 = vsub.f32 %v6765, %v6813
        %v6830 = vsub.f32 %v6766, %v6814
        %v6831 = vsub.f32 %v6767, %v6815
        %v6832 = vsub.f32 %v6768, %v6816
        %v6833 = vsub.f32 %v6769, %v6817
        %v6834 = vsub.f32 %v6770, %v6818
        %v6835 = vsub.f32 %v6771, %v6819
        %v6836 = vsub.f32 %v6772, %v6820
        %v6837 = vsub.f32 %v6773, %v6821
        %v6838 = vsub.f32 %v6774, %v6822
        %v6839 = vsub.f32 %v6775, %v6823
        %v6840 = vsub.f32 %v6776, %v6824
        %v6841 = vmul.f32 %v6825, %v6825
        %v6842 = vmul.f32 %v6826, %v6826
        %v6843 = vmul.f32 %v6827, %v6827
        %v6844 = vmul.f32 %v6828, %v6828
        %v6845 = vmul.f32 %v6829, %v6829
        %v6846 = vmul.f32 %v6830, %v6830
        %v6847 = vmul.f32 %v6831, %v6831
        %v6848 = vmul.f32 %v6832, %v6832
        %v6849 = vmul.f32 %v6833, %v6833
        %v6850 = vmul.f32 %v6834, %v6834
        %v6851 = vmul.f32 %v6835, %v6835
        %v6852 = vmul.f32 %v6836, %v6836
        %v6853 = vmul.f32 %v6837, %v6837
        %v6854 = vmul.f32 %v6838, %v6838
        %v6855 = vmul.f32 %v6839, %v6839
        %v6856 = vmul.f32 %v6840, %v6840
        %6857 = vadd.xlane.f32.xlu0 %v6841
        %v6858 = vpop.xlane.xlu0 %6857
        %6859 = vadd.xlane.f32.xlu0 %v6842
        %v6860 = vpop.xlane.xlu0 %6859
        %6861 = vadd.xlane.f32.xlu0 %v6843
        %v6862 = vpop.xlane.xlu0 %6861
        %6863 = vadd.xlane.f32.xlu0 %v6844
        %v6864 = vpop.xlane.xlu0 %6863
        %6865 = vadd.xlane.f32.xlu0 %v6845
        %v6866 = vpop.xlane.xlu0 %6865
        %6867 = vadd.xlane.f32.xlu0 %v6846
        %v6868 = vpop.xlane.xlu0 %6867
        %6869 = vadd.xlane.f32.xlu0 %v6847
        %v6870 = vpop.xlane.xlu0 %6869
        %6871 = vadd.xlane.f32.xlu0 %v6848
        %v6872 = vpop.xlane.xlu0 %6871
        %6873 = vadd.xlane.f32.xlu0 %v6849
        %v6874 = vpop.xlane.xlu0 %6873
        %6875 = vadd.xlane.f32.xlu0 %v6850
        %v6876 = vpop.xlane.xlu0 %6875
        %6877 = vadd.xlane.f32.xlu0 %v6851
        %v6878 = vpop.xlane.xlu0 %6877
        %6879 = vadd.xlane.f32.xlu0 %v6852
        %v6880 = vpop.xlane.xlu0 %6879
        %6881 = vadd.xlane.f32.xlu0 %v6853
        %v6882 = vpop.xlane.xlu0 %6881
        %6883 = vadd.xlane.f32.xlu0 %v6854
        %v6884 = vpop.xlane.xlu0 %6883
        %6885 = vadd.xlane.f32.xlu0 %v6855
        %v6886 = vpop.xlane.xlu0 %6885
        %6887 = vadd.xlane.f32.xlu0 %v6856
        %v6888 = vpop.xlane.xlu0 %6887
        %v6889 = vmul.f32 %v6858, %v472
        %v6890 = vmul.f32 %v6860, %v472
        %v6891 = vmul.f32 %v6862, %v472
        %v6892 = vmul.f32 %v6864, %v472
        %v6893 = vmul.f32 %v6866, %v472
        %v6894 = vmul.f32 %v6868, %v472
        %v6895 = vmul.f32 %v6870, %v472
        %v6896 = vmul.f32 %v6872, %v472
        %v6897 = vmul.f32 %v6874, %v472
        %v6898 = vmul.f32 %v6876, %v472
        %v6899 = vmul.f32 %v6878, %v472
        %v6900 = vmul.f32 %v6880, %v472
        %v6901 = vmul.f32 %v6882, %v472
        %v6902 = vmul.f32 %v6884, %v472
        %v6903 = vmul.f32 %v6886, %v472
        %v6904 = vmul.f32 %v6888, %v472
        %v6905 = vadd.f32 %v6889, 1e-05
        %v6906 = vadd.f32 %v6890, 1e-05
        %v6907 = vadd.f32 %v6891, 1e-05
        %v6908 = vadd.f32 %v6892, 1e-05
        %v6909 = vadd.f32 %v6893, 1e-05
        %v6910 = vadd.f32 %v6894, 1e-05
        %v6911 = vadd.f32 %v6895, 1e-05
        %v6912 = vadd.f32 %v6896, 1e-05
        %v6913 = vadd.f32 %v6897, 1e-05
        %v6914 = vadd.f32 %v6898, 1e-05
        %v6915 = vadd.f32 %v6899, 1e-05
        %v6916 = vadd.f32 %v6900, 1e-05
        %v6917 = vadd.f32 %v6901, 1e-05
        %v6918 = vadd.f32 %v6902, 1e-05
        %v6919 = vadd.f32 %v6903, 1e-05
        %v6920 = vadd.f32 %v6904, 1e-05
        %v6921 = vrsqrt.pop %v6905
        %v6922 = vrsqrt.pop %v6906
        %v6923 = vrsqrt.pop %v6907
        %v6924 = vrsqrt.pop %v6908
        %v6925 = vrsqrt.pop %v6909
        %v6926 = vrsqrt.pop %v6910
        %v6927 = vrsqrt.pop %v6911
        %v6928 = vrsqrt.pop %v6912
        %v6929 = vrsqrt.pop %v6913
        %v6930 = vrsqrt.pop %v6914
        %v6931 = vrsqrt.pop %v6915
        %v6932 = vrsqrt.pop %v6916
        %v6933 = vrsqrt.pop %v6917
        %v6934 = vrsqrt.pop %v6918
        %v6935 = vrsqrt.pop %v6919
        %v6936 = vrsqrt.pop %v6920
        %v6937 = vmul.f32 %v6825, %v6921
        %v6938 = vmul.f32 %v6826, %v6922
        %v6939 = vmul.f32 %v6827, %v6923
        %v6940 = vmul.f32 %v6828, %v6924
        %v6941 = vmul.f32 %v6829, %v6925
        %v6942 = vmul.f32 %v6830, %v6926
        %v6943 = vmul.f32 %v6831, %v6927
        %v6944 = vmul.f32 %v6832, %v6928
        %v6945 = vmul.f32 %v6833, %v6929
        %v6946 = vmul.f32 %v6834, %v6930
        %v6947 = vmul.f32 %v6835, %v6931
        %v6948 = vmul.f32 %v6836, %v6932
        %v6949 = vmul.f32 %v6837, %v6933
        %v6950 = vmul.f32 %v6838, %v6934
        %v6951 = vmul.f32 %v6839, %v6935
        %v6952 = vmul.f32 %v6840, %v6936
        %v6953 = vlaneseq
        %v6954 = vshrl.u32 %v6953, 7
        %v6955 = vsub.s32 2, %v6954
        %v6956 = vrot.slane %v4357, %v6955
        %v6957 = vmul.f32 %v6937, %v6956
        %v6958 = vmul.f32 %v6938, %v6956
        %v6959 = vmul.f32 %v6939, %v6956
        %v6960 = vmul.f32 %v6940, %v6956
        %v6961 = vmul.f32 %v6941, %v6956
        %v6962 = vmul.f32 %v6942, %v6956
        %v6963 = vmul.f32 %v6943, %v6956
        %v6964 = vmul.f32 %v6944, %v6956
        %v6965 = vmul.f32 %v6945, %v6956
        %v6966 = vmul.f32 %v6946, %v6956
        %v6967 = vmul.f32 %v6947, %v6956
        %v6968 = vmul.f32 %v6948, %v6956
        %v6969 = vmul.f32 %v6949, %v6956
        %v6970 = vmul.f32 %v6950, %v6956
        %v6971 = vmul.f32 %v6951, %v6956
        %v6972 = vmul.f32 %v6952, %v6956
        %v6973 = vlaneseq
        %v6974 = vshrl.u32 %v6973, 7
        %v6975 = vsub.s32 3, %v6974
        %v6976 = vrot.slane %v4357, %v6975
        %v6977 = vadd.f32 %v6957, %v6976
        %v6978 = vadd.f32 %v6958, %v6976
        %v6979 = vadd.f32 %v6959, %v6976
        %v6980 = vadd.f32 %v6960, %v6976
        %v6981 = vadd.f32 %v6961, %v6976
        %v6982 = vadd.f32 %v6962, %v6976
        %v6983 = vadd.f32 %v6963, %v6976
        %v6984 = vadd.f32 %v6964, %v6976
        %v6985 = vadd.f32 %v6965, %v6976
        %v6986 = vadd.f32 %v6966, %v6976
        %v6987 = vadd.f32 %v6967, %v6976
        %v6988 = vadd.f32 %v6968, %v6976
        %v6989 = vadd.f32 %v6969, %v6976
        %v6990 = vadd.f32 %v6970, %v6976
        %v6991 = vadd.f32 %v6971, %v6976
        %v6992 = vadd.f32 %v6972, %v6976
        %v6993 = vpack.c.bf16 %v6978, %v6977
        %v6994 = vpack.c.bf16 %v6980, %v6979
        %v6995 = vpack.c.bf16 %v6982, %v6981
        %v6996 = vpack.c.bf16 %v6984, %v6983
        %v6997 = vpack.c.bf16 %v6986, %v6985
        %v6998 = vpack.c.bf16 %v6988, %v6987
        %v6999 = vpack.c.bf16 %v6990, %v6989
        %v7000 = vpack.c.bf16 %v6992, %v6991
        %s7001 = scalar_lea.vmem %s6, 128
        %v7002 = vld [vmem:[%s7001] sm:$0xff]
        %v7003 = vld [vmem:[%s7001 + $0x8] sm:$0xff]
        %v7004 = vld [vmem:[%s7001 + $0x10] sm:$0xff]
        %v7005 = vld [vmem:[%s7001 + $0x18] sm:$0xff]
        %v7006 = vld [vmem:[%s7001 + $0x20] sm:$0xff]
        %v7007 = vld [vmem:[%s7001 + $0x28] sm:$0xff]
        %v7008 = vld [vmem:[%s7001 + $0x30] sm:$0xff]
        %v7009 = vld [vmem:[%s7001 + $0x38] sm:$0xff]
        %v7010 = vld [vmem:[%s7001 + $0x40] sm:$0xff]
        %v7011 = vld [vmem:[%s7001 + $0x48] sm:$0xff]
        %v7012 = vld [vmem:[%s7001 + $0x50] sm:$0xff]
        %v7013 = vld [vmem:[%s7001 + $0x58] sm:$0xff]
        %v7014 = vld [vmem:[%s7001 + $0x60] sm:$0xff]
        %v7015 = vld [vmem:[%s7001 + $0x68] sm:$0xff]
        %v7016 = vld [vmem:[%s7001 + $0x70] sm:$0xff]
        %v7017 = vld [vmem:[%s7001 + $0x78] sm:$0xff]
        %s7018 = scalar_lea.vmem %s7, 2
        %v7019 = vld [vmem:[%s7018] sm:$0x3]
        %v7021 = vlaneseq
        %v7022 = vshrl.u32 %v7021, 7
        %v7023 = vsub.s32 0, %v7022
        %v7024 = vrot.slane %v7019, %v7023
        %v7025 = vlaneseq
        %v7026 = vshrl.u32 %v7025, 7
        %v7027 = vsub.s32 1, %v7026
        %v7028 = vrot.slane %v7019, %v7027
        %v7047 = vunpack.c.l.b16 %v7002
        %v7048 = vunpack.c.h.b16 %v7002
        %v7049 = vunpack.c.l.b16 %v7003
        %v7050 = vunpack.c.h.b16 %v7003
        %v7051 = vunpack.c.l.b16 %v7004
        %v7052 = vunpack.c.h.b16 %v7004
        %v7053 = vunpack.c.l.b16 %v7005
        %v7054 = vunpack.c.h.b16 %v7005
        %v7055 = vunpack.c.l.b16 %v7006
        %v7056 = vunpack.c.h.b16 %v7006
        %v7057 = vunpack.c.l.b16 %v7007
        %v7058 = vunpack.c.h.b16 %v7007
        %v7059 = vunpack.c.l.b16 %v7008
        %v7060 = vunpack.c.h.b16 %v7008
        %v7061 = vunpack.c.l.b16 %v7009
        %v7062 = vunpack.c.h.b16 %v7009
        %v7063 = vunpack.c.l.b16 %v7010
        %v7064 = vunpack.c.h.b16 %v7010
        %v7065 = vunpack.c.l.b16 %v7011
        %v7066 = vunpack.c.h.b16 %v7011
        %v7067 = vunpack.c.l.b16 %v7012
        %v7068 = vunpack.c.h.b16 %v7012
        %v7069 = vunpack.c.l.b16 %v7013
        %v7070 = vunpack.c.h.b16 %v7013
        %v7071 = vunpack.c.l.b16 %v7014
        %v7072 = vunpack.c.h.b16 %v7014
        %v7073 = vunpack.c.l.b16 %v7015
        %v7074 = vunpack.c.h.b16 %v7015
        %v7075 = vunpack.c.l.b16 %v7016
        %v7076 = vunpack.c.h.b16 %v7016
        %v7077 = vunpack.c.l.b16 %v7017
        %v7078 = vunpack.c.h.b16 %v7017
        %v7079 = vpack.c.b16 %v7049, %v7047
        %v7080 = vpack.c.b16 %v7050, %v7048
        %v7081 = vpack.c.b16 %v7053, %v7051
        %v7082 = vpack.c.b16 %v7054, %v7052
        %v7083 = vpack.c.b16 %v7057, %v7055
        %v7084 = vpack.c.b16 %v7058, %v7056
        %v7085 = vpack.c.b16 %v7061, %v7059
        %v7086 = vpack.c.b16 %v7062, %v7060
        %v7087 = vpack.c.b16 %v7065, %v7063
        %v7088 = vpack.c.b16 %v7066, %v7064
        %v7089 = vpack.c.b16 %v7069, %v7067
        %v7090 = vpack.c.b16 %v7070, %v7068
        %v7091 = vpack.c.b16 %v7073, %v7071
        %v7092 = vpack.c.b16 %v7074, %v7072
        %v7093 = vpack.c.b16 %v7077, %v7075
        %v7094 = vpack.c.b16 %v7078, %v7076
        %7111 = vmatprep.subr.bf16.mxu0 %v7080
        %7112 = vmatpush1.bf16.msra.mxu0 %v7079
        %7113 = vmatprep.subr.bf16.mxu0 %v7082
        %7114 = vmatpush1.bf16.msra.mxu0 %v7081
        %7115 = vmatprep.subr.bf16.mxu0 %v7084
        %7116 = vmatpush1.bf16.msra.mxu0 %v7083
        %7117 = vmatprep.subr.bf16.mxu0 %v7086
        %7118 = vmatpush1.bf16.msra.mxu0 %v7085
        %7119 = vmatprep.subr.bf16.mxu0 %v7088
        %7120 = vmatpush1.bf16.msra.mxu0 %v7087
        %7121 = vmatprep.subr.bf16.mxu0 %v7090
        %7122 = vmatpush1.bf16.msra.mxu0 %v7089
        %7123 = vmatprep.subr.bf16.mxu0 %v7092
        %7124 = vmatpush1.bf16.msra.mxu0 %v7091
        %7125 = vmatprep.subr.bf16.mxu0 %v7094
        %7126 = vmatpush1.bf16.msra.mxu0 %v7093
        %7127 = vmatprep.subr.bf16.mxu0 0
        %7128 = vmatpush1.bf16.msra.mxu0 0
        %7129 = vmatprep.subr.bf16.mxu0 0
        %7130 = vmatpush1.bf16.msra.mxu0 0
        %7131 = vmatprep.subr.bf16.mxu0 0
        %7132 = vmatpush1.bf16.msra.mxu0 0
        %7133 = vmatprep.subr.bf16.mxu0 0
        %7134 = vmatpush1.bf16.msra.mxu0 0
        %7135 = vmatprep.subr.bf16.mxu0 0
        %7136 = vmatpush1.bf16.msra.mxu0 0
        %7137 = vmatprep.subr.bf16.mxu0 0
        %7138 = vmatpush1.bf16.msra.mxu0 0
        %7139 = vmatprep.subr.bf16.mxu0 0
        %7140 = vmatpush1.bf16.msra.mxu0 0
        %7141 = vmatprep.subr.bf16.mxu0 0
        %7142 = vmatpush1.bf16.msra.mxu0 0
        %7143 = vmatprep.mubr.bf16.mxu0 0
        %7144 = vmatmul.mubr.bf16.gmra.mrb[0].mxu0 %v6993
        %v7145 = vpop.f32.mrb[0].mxu0
        %v7146 = vadd.f32 %v7024, %v7145
        %v7147 = vpop.f32.mrb[0].mxu0
        %v7148 = vadd.f32 %v7028, %v7147
        %v7149 = vpop.f32.mrb[0].mxu0
        %v7150 = vadd.f32 %v7024, %v7149
        %v7151 = vpop.f32.mrb[0].mxu0
        %v7152 = vadd.f32 %v7028, %v7151
        %7153 = vmatprep.mubr.bf16.mxu0 0
        %7154 = vmatmul.mubr.bf16.gmra.mrb[0].mxu0 %v6994
        %v7155 = vpop.f32.mrb[0].mxu0
        %v7156 = vadd.f32 %v7024, %v7155
        %v7157 = vpop.f32.mrb[0].mxu0
        %v7158 = vadd.f32 %v7028, %v7157
        %v7159 = vpop.f32.mrb[0].mxu0
        %v7160 = vadd.f32 %v7024, %v7159
        %v7161 = vpop.f32.mrb[0].mxu0
        %v7162 = vadd.f32 %v7028, %v7161
        %7163 = vmatprep.mubr.bf16.mxu0 0
        %7164 = vmatmul.mubr.bf16.gmra.mrb[0].mxu0 %v6995
        %v7165 = vpop.f32.mrb[0].mxu0
        %v7166 = vadd.f32 %v7024, %v7165
        %v7167 = vpop.f32.mrb[0].mxu0
        %v7168 = vadd.f32 %v7028, %v7167
        %v7169 = vpop.f32.mrb[0].mxu0
        %v7170 = vadd.f32 %v7024, %v7169
        %v7171 = vpop.f32.mrb[0].mxu0
        %v7172 = vadd.f32 %v7028, %v7171
        %7173 = vmatprep.mubr.bf16.mxu0 0
        %7174 = vmatmul.mubr.bf16.gmra.mrb[0].mxu0 %v6996
        %v7175 = vpop.f32.mrb[0].mxu0
        %v7176 = vadd.f32 %v7024, %v7175
        %v7177 = vpop.f32.mrb[0].mxu0
        %v7178 = vadd.f32 %v7028, %v7177
        %v7179 = vpop.f32.mrb[0].mxu0
        %v7180 = vadd.f32 %v7024, %v7179
        %v7181 = vpop.f32.mrb[0].mxu0
        %v7182 = vadd.f32 %v7028, %v7181
        %7183 = vmatprep.mubr.bf16.mxu0 0
        %7184 = vmatmul.mubr.bf16.gmra.mrb[0].mxu0 %v6997
        %v7185 = vpop.f32.mrb[0].mxu0
        %v7186 = vadd.f32 %v7024, %v7185
        %v7187 = vpop.f32.mrb[0].mxu0
        %v7188 = vadd.f32 %v7028, %v7187
        %v7189 = vpop.f32.mrb[0].mxu0
        %v7190 = vadd.f32 %v7024, %v7189
        %v7191 = vpop.f32.mrb[0].mxu0
        %v7192 = vadd.f32 %v7028, %v7191
        %7193 = vmatprep.mubr.bf16.mxu0 0
        %7194 = vmatmul.mubr.bf16.gmra.mrb[0].mxu0 %v6998
        %v7195 = vpop.f32.mrb[0].mxu0
        %v7196 = vadd.f32 %v7024, %v7195
        %v7197 = vpop.f32.mrb[0].mxu0
        %v7198 = vadd.f32 %v7028, %v7197
        %v7199 = vpop.f32.mrb[0].mxu0
        %v7200 = vadd.f32 %v7024, %v7199
        %v7201 = vpop.f32.mrb[0].mxu0
        %v7202 = vadd.f32 %v7028, %v7201
        %7203 = vmatprep.mubr.bf16.mxu0 0
        %7204 = vmatmul.mubr.bf16.gmra.mrb[0].mxu0 %v6999
        %v7205 = vpop.f32.mrb[0].mxu0
        %v7206 = vadd.f32 %v7024, %v7205
        %v7207 = vpop.f32.mrb[0].mxu0
        %v7208 = vadd.f32 %v7028, %v7207
        %v7209 = vpop.f32.mrb[0].mxu0
        %v7210 = vadd.f32 %v7024, %v7209
        %v7211 = vpop.f32.mrb[0].mxu0
        %v7212 = vadd.f32 %v7028, %v7211
        %7213 = vmatprep.mubr.bf16.mxu0 0
        %7214 = vmatmul.mubr.bf16.gmra.mrb[0].mxu0 %v7000
        %v7215 = vpop.f32.mrb[0].mxu0
        %v7216 = vadd.f32 %v7024, %v7215
        %v7217 = vpop.f32.mrb[0].mxu0
        %v7218 = vadd.f32 %v7028, %v7217
        %v7219 = vpop.f32.mrb[0].mxu0
        %v7220 = vadd.f32 %v7024, %v7219
        %v7221 = vpop.f32.mrb[0].mxu0
        %v7222 = vadd.f32 %v7028, %v7221
        %7223 = vdwg.mxu0
        %v7224 = vmul.f32 %v7146, %v7146
        %v7225 = vmul.f32 %v7148, %v7148
        %v7226 = vmul.f32 %v7150, %v7150
        %v7227 = vmul.f32 %v7152, %v7152
        %v7228 = vmul.f32 %v7156, %v7156
        %v7229 = vmul.f32 %v7158, %v7158
        %v7230 = vmul.f32 %v7160, %v7160
        %v7231 = vmul.f32 %v7162, %v7162
        %v7232 = vmul.f32 %v7166, %v7166
        %v7233 = vmul.f32 %v7168, %v7168
        %v7234 = vmul.f32 %v7170, %v7170
        %v7235 = vmul.f32 %v7172, %v7172
        %v7236 = vmul.f32 %v7176, %v7176
        %v7237 = vmul.f32 %v7178, %v7178
        %v7238 = vmul.f32 %v7180, %v7180
        %v7239 = vmul.f32 %v7182, %v7182
        %v7240 = vmul.f32 %v7186, %v7186
        %v7241 = vmul.f32 %v7188, %v7188
        %v7242 = vmul.f32 %v7190, %v7190
        %v7243 = vmul.f32 %v7192, %v7192
        %v7244 = vmul.f32 %v7196, %v7196
        %v7245 = vmul.f32 %v7198, %v7198
        %v7246 = vmul.f32 %v7200, %v7200
        %v7247 = vmul.f32 %v7202, %v7202
        %v7248 = vmul.f32 %v7206, %v7206
        %v7249 = vmul.f32 %v7208, %v7208
        %v7250 = vmul.f32 %v7210, %v7210
        %v7251 = vmul.f32 %v7212, %v7212
        %v7252 = vmul.f32 %v7216, %v7216
        %v7253 = vmul.f32 %v7218, %v7218
        %v7254 = vmul.f32 %v7220, %v7220
        %v7255 = vmul.f32 %v7222, %v7222
        %v7256 = vmul.f32 %v7146, %v7224
        %v7257 = vmul.f32 %v7148, %v7225
        %v7258 = vmul.f32 %v7150, %v7226
        %v7259 = vmul.f32 %v7152, %v7227
        %v7260 = vmul.f32 %v7156, %v7228
        %v7261 = vmul.f32 %v7158, %v7229
        %v7262 = vmul.f32 %v7160, %v7230
        %v7263 = vmul.f32 %v7162, %v7231
        %v7264 = vmul.f32 %v7166, %v7232
        %v7265 = vmul.f32 %v7168, %v7233
        %v7266 = vmul.f32 %v7170, %v7234
        %v7267 = vmul.f32 %v7172, %v7235
        %v7268 = vmul.f32 %v7176, %v7236
        %v7269 = vmul.f32 %v7178, %v7237
        %v7270 = vmul.f32 %v7180, %v7238
        %v7271 = vmul.f32 %v7182, %v7239
        %v7272 = vmul.f32 %v7186, %v7240
        %v7273 = vmul.f32 %v7188, %v7241
        %v7274 = vmul.f32 %v7190, %v7242
        %v7275 = vmul.f32 %v7192, %v7243
        %v7276 = vmul.f32 %v7196, %v7244
        %v7277 = vmul.f32 %v7198, %v7245
        %v7278 = vmul.f32 %v7200, %v7246
        %v7279 = vmul.f32 %v7202, %v7247
        %v7280 = vmul.f32 %v7206, %v7248
        %v7281 = vmul.f32 %v7208, %v7249
        %v7282 = vmul.f32 %v7210, %v7250
        %v7283 = vmul.f32 %v7212, %v7251
        %v7284 = vmul.f32 %v7216, %v7252
        %v7285 = vmul.f32 %v7218, %v7253
        %v7286 = vmul.f32 %v7220, %v7254
        %v7287 = vmul.f32 %v7222, %v7255
        %v7288 = vmul.f32 %v7256, 0.044715
        %v7289 = vmul.f32 %v7257, 0.044715
        %v7290 = vmul.f32 %v7258, 0.044715
        %v7291 = vmul.f32 %v7259, 0.044715
        %v7292 = vmul.f32 %v7260, 0.044715
        %v7293 = vmul.f32 %v7261, 0.044715
        %v7294 = vmul.f32 %v7262, 0.044715
        %v7295 = vmul.f32 %v7263, 0.044715
        %v7296 = vmul.f32 %v7264, 0.044715
        %v7297 = vmul.f32 %v7265, 0.044715
        %v7298 = vmul.f32 %v7266, 0.044715
        %v7299 = vmul.f32 %v7267, 0.044715
        %v7300 = vmul.f32 %v7268, 0.044715
        %v7301 = vmul.f32 %v7269, 0.044715
        %v7302 = vmul.f32 %v7270, 0.044715
        %v7303 = vmul.f32 %v7271, 0.044715
        %v7304 = vmul.f32 %v7272, 0.044715
        %v7305 = vmul.f32 %v7273, 0.044715
        %v7306 = vmul.f32 %v7274, 0.044715
        %v7307 = vmul.f32 %v7275, 0.044715
        %v7308 = vmul.f32 %v7276, 0.044715
        %v7309 = vmul.f32 %v7277, 0.044715
        %v7310 = vmul.f32 %v7278, 0.044715
        %v7311 = vmul.f32 %v7279, 0.044715
        %v7312 = vmul.f32 %v7280, 0.044715
        %v7313 = vmul.f32 %v7281, 0.044715
        %v7314 = vmul.f32 %v7282, 0.044715
        %v7315 = vmul.f32 %v7283, 0.044715
        %v7316 = vmul.f32 %v7284, 0.044715
        %v7317 = vmul.f32 %v7285, 0.044715
        %v7318 = vmul.f32 %v7286, 0.044715
        %v7319 = vmul.f32 %v7287, 0.044715
        %v7320 = vadd.f32 %v7146, %v7288
        %v7321 = vadd.f32 %v7148, %v7289
        %v7322 = vadd.f32 %v7150, %v7290
        %v7323 = vadd.f32 %v7152, %v7291
        %v7324 = vadd.f32 %v7156, %v7292
        %v7325 = vadd.f32 %v7158, %v7293
        %v7326 = vadd.f32 %v7160, %v7294
        %v7327 = vadd.f32 %v7162, %v7295
        %v7328 = vadd.f32 %v7166, %v7296
        %v7329 = vadd.f32 %v7168, %v7297
        %v7330 = vadd.f32 %v7170, %v7298
        %v7331 = vadd.f32 %v7172, %v7299
        %v7332 = vadd.f32 %v7176, %v7300
        %v7333 = vadd.f32 %v7178, %v7301
        %v7334 = vadd.f32 %v7180, %v7302
        %v7335 = vadd.f32 %v7182, %v7303
        %v7336 = vadd.f32 %v7186, %v7304
        %v7337 = vadd.f32 %v7188, %v7305
        %v7338 = vadd.f32 %v7190, %v7306
        %v7339 = vadd.f32 %v7192, %v7307
        %v7340 = vadd.f32 %v7196, %v7308
        %v7341 = vadd.f32 %v7198, %v7309
        %v7342 = vadd.f32 %v7200, %v7310
        %v7343 = vadd.f32 %v7202, %v7311
        %v7344 = vadd.f32 %v7206, %v7312
        %v7345 = vadd.f32 %v7208, %v7313
        %v7346 = vadd.f32 %v7210, %v7314
        %v7347 = vadd.f32 %v7212, %v7315
        %v7348 = vadd.f32 %v7216, %v7316
        %v7349 = vadd.f32 %v7218, %v7317
        %v7350 = vadd.f32 %v7220, %v7318
        %v7351 = vadd.f32 %v7222, %v7319
        %v7352 = vmul.f32 %v7320, 0.7978846
        %v7353 = vmul.f32 %v7321, 0.7978846
        %v7354 = vmul.f32 %v7322, 0.7978846
        %v7355 = vmul.f32 %v7323, 0.7978846
        %v7356 = vmul.f32 %v7324, 0.7978846
        %v7357 = vmul.f32 %v7325, 0.7978846
        %v7358 = vmul.f32 %v7326, 0.7978846
        %v7359 = vmul.f32 %v7327, 0.7978846
        %v7360 = vmul.f32 %v7328, 0.7978846
        %v7361 = vmul.f32 %v7329, 0.7978846
        %v7362 = vmul.f32 %v7330, 0.7978846
        %v7363 = vmul.f32 %v7331, 0.7978846
        %v7364 = vmul.f32 %v7332, 0.7978846
        %v7365 = vmul.f32 %v7333, 0.7978846
        %v7366 = vmul.f32 %v7334, 0.7978846
        %v7367 = vmul.f32 %v7335, 0.7978846
        %v7368 = vmul.f32 %v7336, 0.7978846
        %v7369 = vmul.f32 %v7337, 0.7978846
        %v7370 = vmul.f32 %v7338, 0.7978846
        %v7371 = vmul.f32 %v7339, 0.7978846
        %v7372 = vmul.f32 %v7340, 0.7978846
        %v7373 = vmul.f32 %v7341, 0.7978846
        %v7374 = vmul.f32 %v7342, 0.7978846
        %v7375 = vmul.f32 %v7343, 0.7978846
        %v7376 = vmul.f32 %v7344, 0.7978846
        %v7377 = vmul.f32 %v7345, 0.7978846
        %v7378 = vmul.f32 %v7346, 0.7978846
        %v7379 = vmul.f32 %v7347, 0.7978846
        %v7380 = vmul.f32 %v7348, 0.7978846
        %v7381 = vmul.f32 %v7349, 0.7978846
        %v7382 = vmul.f32 %v7350, 0.7978846
        %v7383 = vmul.f32 %v7351, 0.7978846
        %v7384 = vtanh.pop %v7352
        %v7385 = vtanh.pop %v7353
        %v7386 = vtanh.pop %v7354
        %v7387 = vtanh.pop %v7355
        %v7388 = vtanh.pop %v7356
        %v7389 = vtanh.pop %v7357
        %v7390 = vtanh.pop %v7358
        %v7391 = vtanh.pop %v7359
        %v7392 = vtanh.pop %v7360
        %v7393 = vtanh.pop %v7361
        %v7394 = vtanh.pop %v7362
        %v7395 = vtanh.pop %v7363
        %v7396 = vtanh.pop %v7364
        %v7397 = vtanh.pop %v7365
        %v7398 = vtanh.pop %v7366
        %v7399 = vtanh.pop %v7367
        %v7400 = vtanh.pop %v7368
        %v7401 = vtanh.pop %v7369
        %v7402 = vtanh.pop %v7370
        %v7403 = vtanh.pop %v7371
        %v7404 = vtanh.pop %v7372
        %v7405 = vtanh.pop %v7373
        %v7406 = vtanh.pop %v7374
        %v7407 = vtanh.pop %v7375
        %v7408 = vtanh.pop %v7376
        %v7409 = vtanh.pop %v7377
        %v7410 = vtanh.pop %v7378
        %v7411 = vtanh.pop %v7379
        %v7412 = vtanh.pop %v7380
        %v7413 = vtanh.pop %v7381
        %v7414 = vtanh.pop %v7382
        %v7415 = vtanh.pop %v7383
        %v7416 = vadd.f32 %v7384, 1.0
        %v7417 = vadd.f32 %v7385, 1.0
        %v7418 = vadd.f32 %v7386, 1.0
        %v7419 = vadd.f32 %v7387, 1.0
        %v7420 = vadd.f32 %v7388, 1.0
        %v7421 = vadd.f32 %v7389, 1.0
        %v7422 = vadd.f32 %v7390, 1.0
        %v7423 = vadd.f32 %v7391, 1.0
        %v7424 = vadd.f32 %v7392, 1.0
        %v7425 = vadd.f32 %v7393, 1.0
        %v7426 = vadd.f32 %v7394, 1.0
        %v7427 = vadd.f32 %v7395, 1.0
        %v7428 = vadd.f32 %v7396, 1.0
        %v7429 = vadd.f32 %v7397, 1.0
        %v7430 = vadd.f32 %v7398, 1.0
        %v7431 = vadd.f32 %v7399, 1.0
        %v7432 = vadd.f32 %v7400, 1.0
        %v7433 = vadd.f32 %v7401, 1.0
        %v7434 = vadd.f32 %v7402, 1.0
        %v7435 = vadd.f32 %v7403, 1.0
        %v7436 = vadd.f32 %v7404, 1.0
        %v7437 = vadd.f32 %v7405, 1.0
        %v7438 = vadd.f32 %v7406, 1.0
        %v7439 = vadd.f32 %v7407, 1.0
        %v7440 = vadd.f32 %v7408, 1.0
        %v7441 = vadd.f32 %v7409, 1.0
        %v7442 = vadd.f32 %v7410, 1.0
        %v7443 = vadd.f32 %v7411, 1.0
        %v7444 = vadd.f32 %v7412, 1.0
        %v7445 = vadd.f32 %v7413, 1.0
        %v7446 = vadd.f32 %v7414, 1.0
        %v7447 = vadd.f32 %v7415, 1.0
        %v7448 = vmul.f32 %v7416, 0.5
        %v7449 = vmul.f32 %v7417, 0.5
        %v7450 = vmul.f32 %v7418, 0.5
        %v7451 = vmul.f32 %v7419, 0.5
        %v7452 = vmul.f32 %v7420, 0.5
        %v7453 = vmul.f32 %v7421, 0.5
        %v7454 = vmul.f32 %v7422, 0.5
        %v7455 = vmul.f32 %v7423, 0.5
        %v7456 = vmul.f32 %v7424, 0.5
        %v7457 = vmul.f32 %v7425, 0.5
        %v7458 = vmul.f32 %v7426, 0.5
        %v7459 = vmul.f32 %v7427, 0.5
        %v7460 = vmul.f32 %v7428, 0.5
        %v7461 = vmul.f32 %v7429, 0.5
        %v7462 = vmul.f32 %v7430, 0.5
        %v7463 = vmul.f32 %v7431, 0.5
        %v7464 = vmul.f32 %v7432, 0.5
        %v7465 = vmul.f32 %v7433, 0.5
        %v7466 = vmul.f32 %v7434, 0.5
        %v7467 = vmul.f32 %v7435, 0.5
        %v7468 = vmul.f32 %v7436, 0.5
        %v7469 = vmul.f32 %v7437, 0.5
        %v7470 = vmul.f32 %v7438, 0.5
        %v7471 = vmul.f32 %v7439, 0.5
        %v7472 = vmul.f32 %v7440, 0.5
        %v7473 = vmul.f32 %v7441, 0.5
        %v7474 = vmul.f32 %v7442, 0.5
        %v7475 = vmul.f32 %v7443, 0.5
        %v7476 = vmul.f32 %v7444, 0.5
        %v7477 = vmul.f32 %v7445, 0.5
        %v7478 = vmul.f32 %v7446, 0.5
        %v7479 = vmul.f32 %v7447, 0.5
        %v7480 = vmul.f32 %v7146, %v7448
        %v7481 = vmul.f32 %v7148, %v7449
        %v7482 = vmul.f32 %v7150, %v7450
        %v7483 = vmul.f32 %v7152, %v7451
        %v7484 = vmul.f32 %v7156, %v7452
        %v7485 = vmul.f32 %v7158, %v7453
        %v7486 = vmul.f32 %v7160, %v7454
        %v7487 = vmul.f32 %v7162, %v7455
        %v7488 = vmul.f32 %v7166, %v7456
        %v7489 = vmul.f32 %v7168, %v7457
        %v7490 = vmul.f32 %v7170, %v7458
        %v7491 = vmul.f32 %v7172, %v7459
        %v7492 = vmul.f32 %v7176, %v7460
        %v7493 = vmul.f32 %v7178, %v7461
        %v7494 = vmul.f32 %v7180, %v7462
        %v7495 = vmul.f32 %v7182, %v7463
        %v7496 = vmul.f32 %v7186, %v7464
        %v7497 = vmul.f32 %v7188, %v7465
        %v7498 = vmul.f32 %v7190, %v7466
        %v7499 = vmul.f32 %v7192, %v7467
        %v7500 = vmul.f32 %v7196, %v7468
        %v7501 = vmul.f32 %v7198, %v7469
        %v7502 = vmul.f32 %v7200, %v7470
        %v7503 = vmul.f32 %v7202, %v7471
        %v7504 = vmul.f32 %v7206, %v7472
        %v7505 = vmul.f32 %v7208, %v7473
        %v7506 = vmul.f32 %v7210, %v7474
        %v7507 = vmul.f32 %v7212, %v7475
        %v7508 = vmul.f32 %v7216, %v7476
        %v7509 = vmul.f32 %v7218, %v7477
        %v7510 = vmul.f32 %v7220, %v7478
        %v7511 = vmul.f32 %v7222, %v7479
        %s7512 = scalar_lea.vmem %s8, 128
        %v7513 = vld [vmem:[%s7512] sm:$0xf]
        %v7514 = vld [vmem:[%s7512 + $0x4] sm:$0xf]
        %v7515 = vld [vmem:[%s7512 + $0x8] sm:$0xf]
        %v7516 = vld [vmem:[%s7512 + $0xc] sm:$0xf]
        %v7517 = vld [vmem:[%s7512 + $0x10] sm:$0xf]
        %v7518 = vld [vmem:[%s7512 + $0x14] sm:$0xf]
        %v7519 = vld [vmem:[%s7512 + $0x18] sm:$0xf]
        %v7520 = vld [vmem:[%s7512 + $0x1c] sm:$0xf]
        %v7521 = vld [vmem:[%s7512 + $0x20] sm:$0xf]
        %v7522 = vld [vmem:[%s7512 + $0x24] sm:$0xf]
        %v7523 = vld [vmem:[%s7512 + $0x28] sm:$0xf]
        %v7524 = vld [vmem:[%s7512 + $0x2c] sm:$0xf]
        %v7525 = vld [vmem:[%s7512 + $0x30] sm:$0xf]
        %v7526 = vld [vmem:[%s7512 + $0x34] sm:$0xf]
        %v7527 = vld [vmem:[%s7512 + $0x38] sm:$0xf]
        %v7528 = vld [vmem:[%s7512 + $0x3c] sm:$0xf]
        %v7529 = vld [vmem:[%s7512 + $0x40] sm:$0xf]
        %v7530 = vld [vmem:[%s7512 + $0x44] sm:$0xf]
        %v7531 = vld [vmem:[%s7512 + $0x48] sm:$0xf]
        %v7532 = vld [vmem:[%s7512 + $0x4c] sm:$0xf]
        %v7533 = vld [vmem:[%s7512 + $0x50] sm:$0xf]
        %v7534 = vld [vmem:[%s7512 + $0x54] sm:$0xf]
        %v7535 = vld [vmem:[%s7512 + $0x58] sm:$0xf]
        %v7536 = vld [vmem:[%s7512 + $0x5c] sm:$0xf]
        %v7537 = vld [vmem:[%s7512 + $0x60] sm:$0xf]
        %v7538 = vld [vmem:[%s7512 + $0x64] sm:$0xf]
        %v7539 = vld [vmem:[%s7512 + $0x68] sm:$0xf]
        %v7540 = vld [vmem:[%s7512 + $0x6c] sm:$0xf]
        %v7541 = vld [vmem:[%s7512 + $0x70] sm:$0xf]
        %v7542 = vld [vmem:[%s7512 + $0x74] sm:$0xf]
        %v7543 = vld [vmem:[%s7512 + $0x78] sm:$0xf]
        %v7544 = vld [vmem:[%s7512 + $0x7c] sm:$0xf]
        %v7545 = vpack.c.bf16 %v7482, %v7480
        %v7546 = vpack.c.bf16 %v7483, %v7481
        %v7547 = vpack.c.bf16 %v7486, %v7484
        %v7548 = vpack.c.bf16 %v7487, %v7485
        %v7549 = vpack.c.bf16 %v7490, %v7488
        %v7550 = vpack.c.bf16 %v7491, %v7489
        %v7551 = vpack.c.bf16 %v7494, %v7492
        %v7552 = vpack.c.bf16 %v7495, %v7493
        %v7553 = vpack.c.bf16 %v7498, %v7496
        %v7554 = vpack.c.bf16 %v7499, %v7497
        %v7555 = vpack.c.bf16 %v7502, %v7500
        %v7556 = vpack.c.bf16 %v7503, %v7501
        %v7557 = vpack.c.bf16 %v7506, %v7504
        %v7558 = vpack.c.bf16 %v7507, %v7505
        %v7559 = vpack.c.bf16 %v7510, %v7508
        %v7560 = vpack.c.bf16 %v7511, %v7509
        %v7561 = vlaneseq
        %v7562 = vshrl.u32 %v7561, 7
        %v7563 = vsub.s32 1, %v7562
        %v7564 = vrot.slane %v4357, %v7563
        %v7597 = vunpack.c.l.b16 %v7513
        %v7598 = vunpack.c.l.b16 %v7514
        %v7599 = vunpack.c.l.b16 %v7515
        %v7600 = vunpack.c.l.b16 %v7516
        %v7601 = vunpack.c.l.b16 %v7517
        %v7602 = vunpack.c.l.b16 %v7518
        %v7603 = vunpack.c.l.b16 %v7519
        %v7604 = vunpack.c.l.b16 %v7520
        %v7605 = vunpack.c.l.b16 %v7521
        %v7606 = vunpack.c.l.b16 %v7522
        %v7607 = vunpack.c.l.b16 %v7523
        %v7608 = vunpack.c.l.b16 %v7524
        %v7609 = vunpack.c.l.b16 %v7525
        %v7610 = vunpack.c.l.b16 %v7526
        %v7611 = vunpack.c.l.b16 %v7527
        %v7612 = vunpack.c.l.b16 %v7528
        %v7613 = vunpack.c.l.b16 %v7529
        %v7614 = vunpack.c.l.b16 %v7530
        %v7615 = vunpack.c.l.b16 %v7531
        %v7616 = vunpack.c.l.b16 %v7532
        %v7617 = vunpack.c.l.b16 %v7533
        %v7618 = vunpack.c.l.b16 %v7534
        %v7619 = vunpack.c.l.b16 %v7535
        %v7620 = vunpack.c.l.b16 %v7536
        %v7621 = vunpack.c.l.b16 %v7537
        %v7622 = vunpack.c.l.b16 %v7538
        %v7623 = vunpack.c.l.b16 %v7539
        %v7624 = vunpack.c.l.b16 %v7540
        %v7625 = vunpack.c.l.b16 %v7541
        %v7626 = vunpack.c.l.b16 %v7542
        %v7627 = vunpack.c.l.b16 %v7543
        %v7628 = vunpack.c.l.b16 %v7544
        %v7629 = vpack.c.b16 %v7598, %v7597
        %v7630 = vpack.c.b16 %v7600, %v7599
        %v7631 = vpack.c.b16 %v7602, %v7601
        %v7632 = vpack.c.b16 %v7604, %v7603
        %v7633 = vpack.c.b16 %v7606, %v7605
        %v7634 = vpack.c.b16 %v7608, %v7607
        %v7635 = vpack.c.b16 %v7610, %v7609
        %v7636 = vpack.c.b16 %v7612, %v7611
        %v7637 = vpack.c.b16 %v7614, %v7613
        %v7638 = vpack.c.b16 %v7616, %v7615
        %v7639 = vpack.c.b16 %v7618, %v7617
        %v7640 = vpack.c.b16 %v7620, %v7619
        %v7641 = vpack.c.b16 %v7622, %v7621
        %v7642 = vpack.c.b16 %v7624, %v7623
        %v7643 = vpack.c.b16 %v7626, %v7625
        %v7644 = vpack.c.b16 %v7628, %v7627
        %7661 = vmatprep.subr.bf16.mxu0 0
        %7662 = vmatpush1.bf16.msra.mxu0 %v7629
        %7663 = vmatprep.subr.bf16.mxu0 0
        %7664 = vmatpush1.bf16.msra.mxu0 %v7630
        %7665 = vmatprep.subr.bf16.mxu0 0
        %7666 = vmatpush1.bf16.msra.mxu0 %v7631
        %7667 = vmatprep.subr.bf16.mxu0 0
        %7668 = vmatpush1.bf16.msra.mxu0 %v7632
        %7669 = vmatprep.subr.bf16.mxu0 0
        %7670 = vmatpush1.bf16.msra.mxu0 %v7633
        %7671 = vmatprep.subr.bf16.mxu0 0
        %7672 = vmatpush1.bf16.msra.mxu0 %v7634
        %7673 = vmatprep.subr.bf16.mxu0 0
        %7674 = vmatpush1.bf16.msra.mxu0 %v7635
        %7675 = vmatprep.subr.bf16.mxu0 0
        %7676 = vmatpush1.bf16.msra.mxu0 %v7636
        %7677 = vmatprep.subr.bf16.mxu0 0
        %7678 = vmatpush1.bf16.msra.mxu0 %v7637
        %7679 = vmatprep.subr.bf16.mxu0 0
        %7680 = vmatpush1.bf16.msra.mxu0 %v7638
        %7681 = vmatprep.subr.bf16.mxu0 0
        %7682 = vmatpush1.bf16.msra.mxu0 %v7639
        %7683 = vmatprep.subr.bf16.mxu0 0
        %7684 = vmatpush1.bf16.msra.mxu0 %v7640
        %7685 = vmatprep.subr.bf16.mxu0 0
        %7686 = vmatpush1.bf16.msra.mxu0 %v7641
        %7687 = vmatprep.subr.bf16.mxu0 0
        %7688 = vmatpush1.bf16.msra.mxu0 %v7642
        %7689 = vmatprep.subr.bf16.mxu0 0
        %7690 = vmatpush1.bf16.msra.mxu0 %v7643
        %7691 = vmatprep.subr.bf16.mxu0 0
        %7692 = vmatpush1.bf16.msra.mxu0 %v7644
        %7693 = vmatprep.mubr.bf16.mxu0 %v7546
        %7694 = vmatmul.mubr.bf16.gmra.mrb[0].mxu0 %v7545
        %v7695 = vpop.f32.mrb[0].mxu0
        %v7696 = vadd.f32 %v7564, %v7695
        %v7697 = vpop.f32.mrb[0].mxu0
        %v7698 = vpop.f32.mrb[0].mxu0
        %v7699 = vpop.f32.mrb[0].mxu0
        %7700 = vmatprep.mubr.bf16.mxu0 %v7548
        %7701 = vmatmul.mubr.bf16.gmra.mrb[0].mxu0 %v7547
        %v7702 = vpop.f32.mrb[0].mxu0
        %v7703 = vadd.f32 %v7564, %v7702
        %v7704 = vpop.f32.mrb[0].mxu0
        %v7705 = vpop.f32.mrb[0].mxu0
        %v7706 = vpop.f32.mrb[0].mxu0
        %7707 = vmatprep.mubr.bf16.mxu0 %v7550
        %7708 = vmatmul.mubr.bf16.gmra.mrb[0].mxu0 %v7549
        %v7709 = vpop.f32.mrb[0].mxu0
        %v7710 = vadd.f32 %v7564, %v7709
        %v7711 = vpop.f32.mrb[0].mxu0
        %v7712 = vpop.f32.mrb[0].mxu0
        %v7713 = vpop.f32.mrb[0].mxu0
        %7714 = vmatprep.mubr.bf16.mxu0 %v7552
        %7715 = vmatmul.mubr.bf16.gmra.mrb[0].mxu0 %v7551
        %v7716 = vpop.f32.mrb[0].mxu0
        %v7717 = vadd.f32 %v7564, %v7716
        %v7718 = vpop.f32.mrb[0].mxu0
        %v7719 = vpop.f32.mrb[0].mxu0
        %v7720 = vpop.f32.mrb[0].mxu0
        %7721 = vmatprep.mubr.bf16.mxu0 %v7554
        %7722 = vmatmul.mubr.bf16.gmra.mrb[0].mxu0 %v7553
        %v7723 = vpop.f32.mrb[0].mxu0
        %v7724 = vadd.f32 %v7564, %v7723
        %v7725 = vpop.f32.mrb[0].mxu0
        %v7726 = vpop.f32.mrb[0].mxu0
        %v7727 = vpop.f32.mrb[0].mxu0
        %7728 = vmatprep.mubr.bf16.mxu0 %v7556
        %7729 = vmatmul.mubr.bf16.gmra.mrb[0].mxu0 %v7555
        %v7730 = vpop.f32.mrb[0].mxu0
        %v7731 = vadd.f32 %v7564, %v7730
        %v7732 = vpop.f32.mrb[0].mxu0
        %v7733 = vpop.f32.mrb[0].mxu0
        %v7734 = vpop.f32.mrb[0].mxu0
        %7735 = vmatprep.mubr.bf16.mxu0 %v7558
        %7736 = vmatmul.mubr.bf16.gmra.mrb[0].mxu0 %v7557
        %v7737 = vpop.f32.mrb[0].mxu0
        %v7738 = vadd.f32 %v7564, %v7737
        %v7739 = vpop.f32.mrb[0].mxu0
        %v7740 = vpop.f32.mrb[0].mxu0
        %v7741 = vpop.f32.mrb[0].mxu0
        %7742 = vmatprep.mubr.bf16.mxu0 %v7560
        %7743 = vmatmul.mubr.bf16.gmra.mrb[0].mxu0 %v7559
        %v7744 = vpop.f32.mrb[0].mxu0
        %v7745 = vadd.f32 %v7564, %v7744
        %v7746 = vpop.f32.mrb[0].mxu0
        %v7747 = vpop.f32.mrb[0].mxu0
        %v7748 = vpop.f32.mrb[0].mxu0
        %7749 = vdwg.mxu0
        %v7750 = vadd.f32 %v6977, %v7696
        %v7751 = vadd.f32 %v6979, %v7703
        %v7752 = vadd.f32 %v6981, %v7710
        %v7753 = vadd.f32 %v6983, %v7717
        %v7754 = vadd.f32 %v6985, %v7724
        %v7755 = vadd.f32 %v6987, %v7731
        %v7756 = vadd.f32 %v6989, %v7738
        %v7757 = vadd.f32 %v6991, %v7745
        %7758 = vadd.xlane.f32.xlu0 %v7750
        %v7759 = vpop.xlane.xlu0 %7758
        %7760 = vadd.xlane.f32.xlu0 %v7751
        %v7761 = vpop.xlane.xlu0 %7760
        %7762 = vadd.xlane.f32.xlu0 %v7752
        %v7763 = vpop.xlane.xlu0 %7762
        %7764 = vadd.xlane.f32.xlu0 %v7753
        %v7765 = vpop.xlane.xlu0 %7764
        %7766 = vadd.xlane.f32.xlu0 %v7754
        %v7767 = vpop.xlane.xlu0 %7766
        %7768 = vadd.xlane.f32.xlu0 %v7755
        %v7769 = vpop.xlane.xlu0 %7768
        %7770 = vadd.xlane.f32.xlu0 %v7756
        %v7771 = vpop.xlane.xlu0 %7770
        %7772 = vadd.xlane.f32.xlu0 %v7757
        %v7773 = vpop.xlane.xlu0 %7772
        %v7774 = vmul.f32 %v7759, %v472
        %v7775 = vmul.f32 %v7761, %v472
        %v7776 = vmul.f32 %v7763, %v472
        %v7777 = vmul.f32 %v7765, %v472
        %v7778 = vmul.f32 %v7767, %v472
        %v7779 = vmul.f32 %v7769, %v472
        %v7780 = vmul.f32 %v7771, %v472
        %v7781 = vmul.f32 %v7773, %v472
        %v7782 = vsub.f32 %v7750, %v7774
        %v7783 = vsub.f32 %v7751, %v7775
        %v7784 = vsub.f32 %v7752, %v7776
        %v7785 = vsub.f32 %v7753, %v7777
        %v7786 = vsub.f32 %v7754, %v7778
        %v7787 = vsub.f32 %v7755, %v7779
        %v7788 = vsub.f32 %v7756, %v7780
        %v7789 = vsub.f32 %v7757, %v7781
        %v7790 = vmul.f32 %v7782, %v7782
        %v7791 = vmul.f32 %v7783, %v7783
        %v7792 = vmul.f32 %v7784, %v7784
        %v7793 = vmul.f32 %v7785, %v7785
        %v7794 = vmul.f32 %v7786, %v7786
        %v7795 = vmul.f32 %v7787, %v7787
        %v7796 = vmul.f32 %v7788, %v7788
        %v7797 = vmul.f32 %v7789, %v7789
        %7798 = vadd.xlane.f32.xlu0 %v7790
        %v7799 = vpop.xlane.xlu0 %7798
        %7800 = vadd.xlane.f32.xlu0 %v7791
        %v7801 = vpop.xlane.xlu0 %7800
        %7802 = vadd.xlane.f32.xlu0 %v7792
        %v7803 = vpop.xlane.xlu0 %7802
        %7804 = vadd.xlane.f32.xlu0 %v7793
        %v7805 = vpop.xlane.xlu0 %7804
        %7806 = vadd.xlane.f32.xlu0 %v7794
        %v7807 = vpop.xlane.xlu0 %7806
        %7808 = vadd.xlane.f32.xlu0 %v7795
        %v7809 = vpop.xlane.xlu0 %7808
        %7810 = vadd.xlane.f32.xlu0 %v7796
        %v7811 = vpop.xlane.xlu0 %7810
        %7812 = vadd.xlane.f32.xlu0 %v7797
        %v7813 = vpop.xlane.xlu0 %7812
        %v7814 = vmul.f32 %v7799, %v472
        %v7815 = vmul.f32 %v7801, %v472
        %v7816 = vmul.f32 %v7803, %v472
        %v7817 = vmul.f32 %v7805, %v472
        %v7818 = vmul.f32 %v7807, %v472
        %v7819 = vmul.f32 %v7809, %v472
        %v7820 = vmul.f32 %v7811, %v472
        %v7821 = vmul.f32 %v7813, %v472
        %v7822 = vadd.f32 %v7814, 1e-05
        %v7823 = vadd.f32 %v7815, 1e-05
        %v7824 = vadd.f32 %v7816, 1e-05
        %v7825 = vadd.f32 %v7817, 1e-05
        %v7826 = vadd.f32 %v7818, 1e-05
        %v7827 = vadd.f32 %v7819, 1e-05
        %v7828 = vadd.f32 %v7820, 1e-05
        %v7829 = vadd.f32 %v7821, 1e-05
        %v7830 = vrsqrt.pop %v7822
        %v7831 = vrsqrt.pop %v7823
        %v7832 = vrsqrt.pop %v7824
        %v7833 = vrsqrt.pop %v7825
        %v7834 = vrsqrt.pop %v7826
        %v7835 = vrsqrt.pop %v7827
        %v7836 = vrsqrt.pop %v7828
        %v7837 = vrsqrt.pop %v7829
        %v7838 = vmul.f32 %v7782, %v7830
        %v7839 = vmul.f32 %v7783, %v7831
        %v7840 = vmul.f32 %v7784, %v7832
        %v7841 = vmul.f32 %v7785, %v7833
        %v7842 = vmul.f32 %v7786, %v7834
        %v7843 = vmul.f32 %v7787, %v7835
        %v7844 = vmul.f32 %v7788, %v7836
        %v7845 = vmul.f32 %v7789, %v7837
        %v7846 = vlaneseq
        %v7847 = vshrl.u32 %v7846, 7
        %v7848 = vsub.s32 4, %v7847
        %v7849 = vrot.slane %v4357, %v7848
        %v7850 = vmul.f32 %v7838, %v7849
        %v7851 = vmul.f32 %v7839, %v7849
        %v7852 = vmul.f32 %v7840, %v7849
        %v7853 = vmul.f32 %v7841, %v7849
        %v7854 = vmul.f32 %v7842, %v7849
        %v7855 = vmul.f32 %v7843, %v7849
        %v7856 = vmul.f32 %v7844, %v7849
        %v7857 = vmul.f32 %v7845, %v7849
        %v7858 = vlaneseq
        %v7859 = vshrl.u32 %v7858, 7
        %v7860 = vsub.s32 5, %v7859
        %v7861 = vrot.slane %v4357, %v7860
        %v7862 = vadd.f32 %v7850, %v7861
        %v7863 = vadd.f32 %v7851, %v7861
        %v7864 = vadd.f32 %v7852, %v7861
        %v7865 = vadd.f32 %v7853, %v7861
        %v7866 = vadd.f32 %v7854, %v7861
        %v7867 = vadd.f32 %v7855, %v7861
        %v7868 = vadd.f32 %v7856, %v7861
        %v7869 = vadd.f32 %v7857, %v7861
        %v7871 = vrot.slane %v7863, 7
        %v7874 = vrot.slane %v7864, 6
        %v7877 = vrot.slane %v7865, 5
        %v7880 = vrot.slane %v7866, 4
        %v7883 = vrot.slane %v7867, 3
        %v7886 = vrot.slane %v7868, 2
        %v7889 = vrot.slane %v7869, 1
        %vm7891 = vcmask 1040384
        %v7892 = vsel %vm7891, %v7862, %v7871
        %vm7893 = vcmask 1041408
        %v7894 = vsel %vm7893, %v7892, %v7874
        %vm7895 = vcmask 1042432
        %v7896 = vsel %vm7895, %v7894, %v7877
        %vm7897 = vcmask 1043456
        %v7898 = vsel %vm7897, %v7896, %v7880
        %vm7899 = vcmask 1044480
        %v7900 = vsel %vm7899, %v7898, %v7883
        %vm7901 = vcmask 1045504
        %v7902 = vsel %vm7901, %v7900, %v7886
        %vm7903 = vcmask 1046528
        %v7904 = vsel %vm7903, %v7902, %v7889
        %v7905 = vld [vmem:[%s10] sm:$0xf]
        %v7906 = vld [vmem:[%s10 + $0x4] sm:$0xf]
        %v7907 = vld [vmem:[%s10 + $0x8] sm:$0xf]
        %v7908 = vld [vmem:[%s10 + $0xc] sm:$0xf]
        %v7909 = vld [vmem:[%s10 + $0x10] sm:$0xf]
        %v7910 = vld [vmem:[%s10 + $0x14] sm:$0xf]
        %v7911 = vld [vmem:[%s10 + $0x18] sm:$0xf]
        %v7912 = vld [vmem:[%s10 + $0x1c] sm:$0xf]
        %v7913 = vld [vmem:[%s10 + $0x20] sm:$0xf]
        %v7914 = vld [vmem:[%s10 + $0x24] sm:$0xf]
        %v7915 = vld [vmem:[%s10 + $0x28] sm:$0xf]
        %v7916 = vld [vmem:[%s10 + $0x2c] sm:$0xf]
        %v7917 = vld [vmem:[%s10 + $0x30] sm:$0xf]
        %v7918 = vld [vmem:[%s10 + $0x34] sm:$0xf]
        %v7919 = vld [vmem:[%s10 + $0x38] sm:$0xf]
        %v7920 = vld [vmem:[%s10 + $0x3c] sm:$0xf]
        %v7921 = vpack.c.bf16 %v7904, %v7904
        %v7922 = vlaneseq
        %v7923 = vshrl.u32 %v7922, 7
        %v7924 = vsub.s32 2, %v7923
        %v7925 = vrot.slane %v407, %v7924
        %v7942 = vunpack.c.l.b16 %v7905
        %v7943 = vunpack.c.l.b16 %v7906
        %v7944 = vunpack.c.l.b16 %v7907
        %v7945 = vunpack.c.l.b16 %v7908
        %v7946 = vunpack.c.l.b16 %v7909
        %v7947 = vunpack.c.l.b16 %v7910
        %v7948 = vunpack.c.l.b16 %v7911
        %v7949 = vunpack.c.l.b16 %v7912
        %v7950 = vunpack.c.l.b16 %v7913
        %v7951 = vunpack.c.l.b16 %v7914
        %v7952 = vunpack.c.l.b16 %v7915
        %v7953 = vunpack.c.l.b16 %v7916
        %v7954 = vunpack.c.l.b16 %v7917
        %v7955 = vunpack.c.l.b16 %v7918
        %v7956 = vunpack.c.l.b16 %v7919
        %v7957 = vunpack.c.l.b16 %v7920
        %v7958 = vpack.c.b16 %v7943, %v7942
        %v7959 = vpack.c.b16 %v7945, %v7944
        %v7960 = vpack.c.b16 %v7947, %v7946
        %v7961 = vpack.c.b16 %v7949, %v7948
        %v7962 = vpack.c.b16 %v7951, %v7950
        %v7963 = vpack.c.b16 %v7953, %v7952
        %v7964 = vpack.c.b16 %v7955, %v7954
        %v7965 = vpack.c.b16 %v7957, %v7956
        %7974 = vmatprep.subr.bf16.mxu0 0
        %7975 = vmatpush1.bf16.msra.mxu0 %v7958
        %7976 = vmatprep.subr.bf16.mxu0 0
        %7977 = vmatpush1.bf16.msra.mxu0 %v7959
        %7978 = vmatprep.subr.bf16.mxu0 0
        %7979 = vmatpush1.bf16.msra.mxu0 %v7960
        %7980 = vmatprep.subr.bf16.mxu0 0
        %7981 = vmatpush1.bf16.msra.mxu0 %v7961
        %7982 = vmatprep.subr.bf16.mxu0 0
        %7983 = vmatpush1.bf16.msra.mxu0 %v7962
        %7984 = vmatprep.subr.bf16.mxu0 0
        %7985 = vmatpush1.bf16.msra.mxu0 %v7963
        %7986 = vmatprep.subr.bf16.mxu0 0
        %7987 = vmatpush1.bf16.msra.mxu0 %v7964
        %7988 = vmatprep.subr.bf16.mxu0 0
        %7989 = vmatpush1.bf16.msra.mxu0 %v7965
        %7990 = vmatprep.subr.bf16.mxu0 0
        %7991 = vmatpush1.bf16.msra.mxu0 0
        %7992 = vmatprep.subr.bf16.mxu0 0
        %7993 = vmatpush1.bf16.msra.mxu0 0
        %7994 = vmatprep.subr.bf16.mxu0 0
        %7995 = vmatpush1.bf16.msra.mxu0 0
        %7996 = vmatprep.subr.bf16.mxu0 0
        %7997 = vmatpush1.bf16.msra.mxu0 0
        %7998 = vmatprep.subr.bf16.mxu0 0
        %7999 = vmatpush1.bf16.msra.mxu0 0
        %8000 = vmatprep.subr.bf16.mxu0 0
        %8001 = vmatpush1.bf16.msra.mxu0 0
        %8002 = vmatprep.subr.bf16.mxu0 0
        %8003 = vmatpush1.bf16.msra.mxu0 0
        %8004 = vmatprep.subr.bf16.mxu0 0
        %8005 = vmatpush1.bf16.msra.mxu0 0
        %8006 = vmatprep.mubr.bf16.mxu0 0
        %8007 = vmatmul.mubr.bf16.gmra.mrb[0].mxu0 %v7921
        %v8008 = vpop.f32.mrb[0].mxu0
        %v8009 = vadd.f32 %v7925, %v8008
        %v8010 = vpop.f32.mrb[0].mxu0
        %v8011 = vpop.f32.mrb[0].mxu0
        %v8012 = vpop.f32.mrb[0].mxu0
        %8013 = vdwg.mxu0
        %8014 = vadd.xlane.f32.xlu0 %v8009
        %v8015 = vpop.xlane.xlu0 %8014
        %v8016 = vmul.f32 %v8015, %v472
        %v8017 = vsub.f32 %v8009, %v8016
        %v8018 = vmul.f32 %v8017, %v8017
        %8019 = vadd.xlane.f32.xlu0 %v8018
        %v8020 = vpop.xlane.xlu0 %8019
        %v8021 = vmul.f32 %v8020, %v472
        %v8022 = vadd.f32 %v8021, 1e-05
        %v8023 = vrsqrt.pop %v8022
        %v8024 = vmul.f32 %v8017, %v8023
        %v8025 = vlaneseq
        %v8026 = vshrl.u32 %v8025, 7
        %v8027 = vsub.s32 3, %v8026
        %v8028 = vrot.slane %v407, %v8027
        %v8029 = vmul.f32 %v8024, %v8028
        %v8030 = vlaneseq
        %v8031 = vshrl.u32 %v8030, 7
        %v8032 = vsub.s32 4, %v8031
        %v8033 = vrot.slane %v407, %v8032
        %v8034 = vadd.f32 %v8029, %v8033
        %8035 = vst [vmem:[%s394] sm:$0xff] %v8034
        %s8036 = sand.u32 %s274, 1
        %s8037 = scalar_lea.sflag [#allocation3], %s8036
        %s8038 = sand.u32 %s274, 1
        %s8039 = smul.addr %s8038, 8
        %s8040 = scalar_lea.vmem [#allocation2], %s8039
        // Predicated region
        $region65: #{_text_encoder_forward.1} parent=63 // pred_check
          %p8041 = pneg %p284
        $region66: #{_text_encoder_forward.1} parent=63 // pred_check_branch
          %8043 = sbr.rel (%p8041) target = $region68
        $region67: #{_text_encoder_forward.1} parent=63 // pred_region
          %s8045 = ssub.s32 128, 128
          %8046 = vsyncadd %s8037, %s8045
          %s8047 = smul.addr %s25, 128
          %s8048 = scalar_lea.hbm %s11, %s8047
          %s8050 = sshll.u32 %s8040, 4
          %s8051 = int_to_ptr.vmem [resolvable:$true] %s8050
          %8053 = dma.vmem_to_hbm [thread:$0]  %s8051, 128, %s8048, %s8037
        $region68: #{_text_encoder_forward.1} parent=63 // pred_fallthru
          _
      $region64: #{_text_encoder_forward.1} parent=5 // pred_fallthru
        _
      %p8054 = scmp.le.s32.totalorder 2, %s20
      // Predicated region
      $region69: #{_text_encoder_forward.1} parent=5 // pred_check
        %p8055 = pneg %p8054
      $region70: #{_text_encoder_forward.1} parent=5 // pred_check_branch
        %8057 = sbr.rel (%p8055) target = $region72
      $region71: #{_text_encoder_forward.1} parent=5 // pred_region
        %s8058 = ssub.s32 %s20, 2
        // Predicated region
        $region73: #{_text_encoder_forward.1} parent=71 // pred_check
          %p8059 = pneg %p290
        $region74: #{_text_encoder_forward.1} parent=71 // pred_check_branch
          %8061 = sbr.rel (%p8059) target = $region76
        $region75: #{_text_encoder_forward.1} parent=71 // pred_region
          %s8062 = sand.u32 %s275, 1
          %s8063 = scalar_lea.sflag [#allocation3], %s8062
          %s8064 = sand.u32 %s275, 1
          %s8065 = smul.addr %s8064, 8
          %s8066 = scalar_lea.vmem [#allocation2], %s8065
          %8067 = dma.done %s8063, 128
        $region76: #{_text_encoder_forward.1} parent=71 // pred_fallthru
          _
      $region72: #{_text_encoder_forward.1} parent=5 // pred_fallthru
        _
    $region6: #{_text_encoder_forward.1} parent=1 // loop_footer
      %s24 = sadd.s32 1, %s20
    $region7: #{_text_encoder_forward.1} parent=1 // loop_footer_branch
      %19 = sbr.rel target = $region3
    $region8: #{_text_encoder_forward.1} parent=1 // loop_exit
      _
    %8068 = vsyncpa [#allocation3], 1
    %s8069 = scalar_lea.sflag [#allocation3], 1
    %8070 = vsyncpa %s8069, 1

</llo_original>
